<compile_context>
chip_gen: v6e
topology: v6e:2x2x1
jax: 0.10.0
libtpu: 0.0.40
codegen_flags: <defaults>
</compile_context>

<pallas_src>
import jax
import jax.numpy as jnp
from jax.experimental import pallas as pl
from jax.experimental.pallas import tpu as pltpu

# Full f32 matmul fidelity for both the XLA reference and the Pallas-traced dots.
jax.config.update("jax_default_matmul_precision", "highest")

# ---- static module config (mirrors __init__ args) --------------------------
EMB = 32                 # emb_dim
HEADS = 4                # num_heads
HEAD_DIM = EMB // HEADS
MLP_FACTOR = 4
HIDDEN = MLP_FACTOR * EMB
EPS = 1e-5               # layer_norm_eps
NORM_FIRST = True        # norm_first
# dropout: identity at inference time (nn.Dropout in eval mode)

LANES = 128              # packed-slab lane width
CROSS_NEG = -2e9         # cross-batch logit bias (more negative than the -1e9 padding bias)

# weight-slab row offsets
R_QK = 0                 # (EMB, LANES)  [scale*Wq^T | Wk^T | 0]
R_VO = EMB               # (EMB, LANES)  per-head Wv_h^T @ Wo_h^T, concatenated along lanes
R_W1 = 2 * EMB           # (EMB, LANES)  W1^T
R_W2 = 3 * EMB           # (HIDDEN, LANES) [W2^T | 0]
W_ROWS = 3 * EMB + HIDDEN

# bias-slab rows
ROW_G1, ROW_B1, ROW_G2, ROW_B2, ROW_BQK, ROW_BO, ROW_BM1, ROW_BM2 = range(8)
B_ROWS = 8


def encoder_layer_kernel(x_ref, pos_ref, mask_ref, w_ref, b_ref, out_ref):
    x = x_ref[...]                 # (BS, E)
    pos = pos_ref[...]             # (BS, E)
    mask = mask_ref[...]           # (BS, BS) block-diagonal additive mask (attn+padding+cross)

    # ---- unpack the two parameter slabs (static slices, loaded once) ----
    wqk = w_ref[R_QK:R_QK + EMB, :]                  # (E, 128)   [scale*Wq^T | Wk^T | 0]
    wvo = w_ref[R_VO:R_VO + EMB, :]                  # (E, H*E)   folded value->output per head
    w1 = w_ref[R_W1:R_W1 + EMB, :]                   # (E, HIDDEN)
    w2 = w_ref[R_W2:R_W2 + HIDDEN, 0:EMB]            # (HIDDEN, E)

    g1 = b_ref[ROW_G1:ROW_G1 + 1, 0:EMB]
    b1 = b_ref[ROW_B1:ROW_B1 + 1, 0:EMB]
    g2 = b_ref[ROW_G2:ROW_G2 + 1, 0:EMB]
    b2 = b_ref[ROW_B2:ROW_B2 + 1, 0:EMB]
    bqk = b_ref[ROW_BQK:ROW_BQK + 1, :]              # (1, 128) [scale*bq | bk | 0]
    bo = b_ref[ROW_BO:ROW_BO + 1, 0:EMB]             # (1, E)   bo + bv @ Wo^T (folded)
    bm1 = b_ref[ROW_BM1:ROW_BM1 + 1, 0:HIDDEN]
    bm2 = b_ref[ROW_BM2:ROW_BM2 + 1, 0:EMB]

    def layer_norm(v, g, b):
        mu = jnp.mean(v, axis=-1, keepdims=True)
        var = jnp.mean((v - mu) ** 2, axis=-1, keepdims=True)
        return (v - mu) * jax.lax.rsqrt(var + EPS) * g + b

    def attn_block(qk_in, v_in):
        # fused (pre-scaled) Q|K projection and folded V->O projection, both on the full slab
        qk = jnp.dot(qk_in, wqk, preferred_element_type=jnp.float32) + bqk    # (BS, 128)
        vp = jnp.dot(v_in, wvo, preferred_element_type=jnp.float32)           # (BS, H*E)

        ctx = None
        for h in range(HEADS):                       # H=4, statically unrolled
            qs = h * HEAD_DIM
            ks = EMB + h * HEAD_DIM
            # per-head scores over the whole flattened batch; cross-batch pairs are killed
            # by the -2e9 entries in `mask` (exp underflows to exactly 0).
            s = jnp.einsum("qd,kd->qk",
                           qk[:, qs:qs + HEAD_DIM], qk[:, ks:ks + HEAD_DIM],
                           preferred_element_type=jnp.float32)                # (BS, BS)
            s = s + mask
            s = s - jnp.max(s, axis=-1, keepdims=True)
            p = jnp.exp(s)
            p = p / jnp.sum(p, axis=-1, keepdims=True)                        # exact divide
            c = jnp.dot(p, vp[:, h * EMB:(h + 1) * EMB],
                        preferred_element_type=jnp.float32)                   # (BS, E)
            ctx = c if ctx is None else ctx + c
        return ctx + bo

    def mlp_block(v):
        h = jnp.dot(v, w1, preferred_element_type=jnp.float32) + bm1          # (BS, HIDDEN)
        h = jnp.maximum(h, 0.0)                       # activation = nn.ReLU
        return jnp.dot(h, w2, preferred_element_type=jnp.float32) + bm2       # (BS, E)

    if NORM_FIRST:
        xn = layer_norm(x, g1, b1)
        x = x + attn_block(xn + pos, xn)
        x = x + mlp_block(layer_norm(x, g2, b2))
    else:
        x = layer_norm(x + attn_block(x + pos, x), g1, b1)
        x = layer_norm(x + mlp_block(x), g2, b2)

    out_ref[...] = x.astype(out_ref.dtype)


def _pack_params(params):
    """One-time wrapper-side layout plumbing: pre-transpose, pre-scale Q, fold Wv@Wo per head,
    fold bv@Wo^T into bo, and pack everything into a (224,128) weight slab + (8,128) bias slab."""
    f32 = jnp.float32
    scale = 1.0 / (HEAD_DIM ** 0.5)

    def pad_cols(m):
        m = m.astype(f32)
        assert m.shape[1] <= LANES
        return jnp.zeros((m.shape[0], LANES), f32).at[:, :m.shape[1]].set(m)

    wqkv = params["wqkv"].astype(f32)                # (3E, E) PyTorch in_proj_weight
    bqkv = params["bqkv"].astype(f32)                # (1, 3E)
    wq_t = wqkv[:EMB].T * scale                      # (E, E), 1/sqrt(hd) folded in
    wk_t = wqkv[EMB:2 * EMB].T                       # (E, E)
    wv_t = wqkv[2 * EMB:].T                          # (E, E)
    wo_t = params["wo"].astype(f32).T                # (E, E)

    wqk_pad = pad_cols(jnp.concatenate([wq_t, wk_t], axis=1))                 # (E, 128)
    wvo = jnp.concatenate(
        [wv_t[:, h * HEAD_DIM:(h + 1) * HEAD_DIM] @ wo_t[h * HEAD_DIM:(h + 1) * HEAD_DIM, :]
         for h in range(HEADS)], axis=1)                                      # (E, H*E)
    w1_t = params["w1"].astype(f32).T                                         # (E, HIDDEN)
    w2_t = params["w2"].astype(f32).T                                         # (HIDDEN, E)
    w_all = jnp.concatenate(
        [wqk_pad, pad_cols(wvo), pad_cols(w1_t), pad_cols(w2_t)], axis=0)     # (224, 128)
    assert w_all.shape == (W_ROWS, LANES)

    bq_s = bqkv[:, :EMB] * scale
    bk = bqkv[:, EMB:2 * EMB]
    bv = bqkv[:, 2 * EMB:]
    bo_total = params["bo"].astype(f32) + bv @ wo_t   # value bias folded through out-proj

    rows = [params["g1"], params["b1"], params["g2"], params["b2"],
            jnp.concatenate([bq_s, bk], axis=1), bo_total,
            params["bm1"], params["bm2"]]
    b_all = jnp.concatenate([pad_cols(r.astype(f32).reshape(1, -1)) for r in rows], axis=0)
    assert b_all.shape == (B_ROWS, LANES)
    return w_all, b_all


def transformer_encoder_layer(src, pos_emb, src_mask, src_key_padding_mask, params):
    """src, pos_emb: (S, B, E) float32 (PyTorch MHA layout).
       src_mask: (S, S) additive float mask or None.
       src_key_padding_mask: (B, S) bool (True = ignore) or None.
       params: PyTorch-layout weights (see main)."""
    S, B, E = src.shape
    assert E == EMB
    BS = B * S

    # flatten to batch-major (B*S, E) rows
    x = jnp.transpose(src, (1, 0, 2)).reshape(BS, E).astype(jnp.float32)
    p = jnp.transpose(pos_emb, (1, 0, 2)).reshape(BS, E).astype(jnp.float32)

    # combined (BS, BS) additive mask: shared attn mask + per-batch key padding + a
    # block-diagonal cross-batch bias that keeps batches independent in one score matrix.
    am = (jnp.zeros((S, S), jnp.float32) if src_mask is None
          else src_mask.astype(jnp.float32))
    kpb = (jnp.zeros((B, S), jnp.float32) if src_key_padding_mask is None
           else jnp.where(src_key_padding_mask, -1e9, 0.0).astype(jnp.float32))
    cross = (1.0 - jnp.eye(B, dtype=jnp.float32)) * CROSS_NEG                 # (B, B)
    mask_full = (cross[:, None, :, None]
                 + am[None, :, None, :]
                 + kpb[None, None, :, :]).reshape(BS, BS)

    w_all, b_all = _pack_params(params)

    def full_spec(shape):
        nd = len(shape)
        return pl.BlockSpec(shape, lambda i, _nd=nd: (0,) * _nd)

    out_flat = pl.pallas_call(
        encoder_layer_kernel,
        out_shape=jax.ShapeDtypeStruct((BS, EMB), jnp.float32),
        grid=(1,),
        in_specs=[full_spec((BS, EMB)),      # src (flattened)
                  full_spec((BS, EMB)),      # pos (flattened)
                  full_spec((BS, BS)),       # combined additive mask
                  full_spec(w_all.shape),    # packed weight slab
                  full_spec(b_all.shape)],   # packed bias slab
        out_specs=full_spec((BS, EMB)),
        compiler_params=pltpu.CompilerParams(
            dimension_semantics=("arbitrary",),
            vmem_limit_bytes=8 * 1024 * 1024),   # ~0.3 MB live; explicit, generous budget
    )(x, p, mask_full, w_all, b_all)

    return jnp.transpose(out_flat.reshape(B, S, EMB), (1, 0, 2))   # back to (S, B, E)


# ---------------------------- pure-JAX reference ----------------------------
def _reference(src, pos_emb, src_mask, src_key_padding_mask, params):
    S, B, E = src.shape
    x = jnp.transpose(src, (1, 0, 2))
    p = jnp.transpose(pos_emb, (1, 0, 2))
    mask = jnp.zeros((B, S, S), jnp.float32)
    if src_mask is not None:
        mask = mask + src_mask[None]
    if src_key_padding_mask is not None:
        mask = mask + jnp.where(src_key_padding_mask[:, None, :], -1e9, 0.0)

    g1, b1, g2, b2 = params["g1"], params["b1"], params["g2"], params["b2"]
    wqkv, bqkv, wo, bo = params["wqkv"], params["bqkv"], params["wo"], params["bo"]
    w1, bm1, w2, bm2 = params["w1"], params["bm1"], params["w2"], params["bm2"]

    def ln(v, g, b):
        mu = jnp.mean(v, axis=-1, keepdims=True)
        var = jnp.mean((v - mu) ** 2, axis=-1, keepdims=True)
        return (v - mu) / jnp.sqrt(var + EPS) * g + b

    def attn(q_in, k_in, v_in, m):
        q = q_in @ wqkv[:EMB].T + bqkv[:, :EMB]
        k = k_in @ wqkv[EMB:2 * EMB].T + bqkv[:, EMB:2 * EMB]
        v = v_in @ wqkv[2 * EMB:].T + bqkv[:, 2 * EMB:]
        q = q.reshape(S, HEADS, HEAD_DIM)
        k = k.reshape(S, HEADS, HEAD_DIM)
        v = v.reshape(S, HEADS, HEAD_DIM)
        s = jnp.einsum("qhd,khd->hqk", q, k) / (HEAD_DIM ** 0.5) + m[None]
        pr = jax.nn.softmax(s, axis=-1)
        ctx = jnp.einsum("hqk,khd->qhd", pr, v).reshape(S, E)
        return ctx @ wo.T + bo

    def mlp(v):
        h = jnp.maximum(v @ w1.T + bm1, 0.0)
        return h @ w2.T + bm2

    outs = []
    for b in range(B):
        xb, pb, mb = x[b], p[b], mask[b]
        if NORM_FIRST:
            xn = ln(xb, g1, b1)
            xb = xb + attn(xn + pb, xn + pb, xn, mb)
            xb = xb + mlp(ln(xb, g2, b2))
        else:
            xb = ln(xb + attn(xb + pb, xb + pb, xb, mb), g1, b1)
            xb = ln(xb + mlp(xb), g2, b2)
        outs.append(xb)
    return jnp.transpose(jnp.stack(outs, 0), (1, 0, 2))


# --------------------------------- main --------------------------------------
if __name__ == "__main__":
    key = jax.random.PRNGKey(0)
    ks = jax.random.split(key, 16)

    S, B = 8, 2
    src = jax.random.normal(ks[0], (S, B, EMB), jnp.float32)
    pos = jax.random.normal(ks[1], (S, B, EMB), jnp.float32) * 0.1
    src_mask = jax.random.normal(ks[2], (S, S), jnp.float32) * 0.05
    key_padding = jnp.zeros((B, S), bool).at[0, -1].set(True).at[1, -2:].set(True)

    def init(k, shape, scale):
        return (jax.random.normal(k, shape, jnp.float32) * scale).astype(jnp.float32)

    params = {
        # LayerNorm affine params (2D (1, E) for TPU-friendly layout)
        "g1": 1.0 + init(ks[3], (1, EMB), 0.02),
        "b1": init(ks[4], (1, EMB), 0.02),
        "g2": 1.0 + init(ks[5], (1, EMB), 0.02),
        "b2": init(ks[6], (1, EMB), 0.02),
        # MultiheadAttention packed in_proj + out_proj (PyTorch layout)
        "wqkv": init(ks[7], (3 * EMB, EMB), 0.1),
        "bqkv": init(ks[8], (1, 3 * EMB), 0.02),
        "wo": init(ks[9], (EMB, EMB), 0.1),
        "bo": init(ks[10], (1, EMB), 0.02),
        # MLP: Linear(E->H) -> ReLU -> Linear(H->E)
        "w1": init(ks[11], (HIDDEN, EMB), 0.1),
        "bm1": init(ks[12], (1, HIDDEN), 0.02),
        "w2": init(ks[13], (EMB, HIDDEN), 0.1),
        "bm2": init(ks[14], (1, EMB), 0.02),
    }

    out = transformer_encoder_layer(src, pos, src_mask, key_padding, params)
    out = jax.block_until_ready(out)

    ref = _reference(src, pos, src_mask, key_padding, params)
    assert out.shape == (S, B, EMB)
    max_err = float(jnp.max(jnp.abs(out - ref)))
    assert jnp.allclose(out, ref, atol=2e-3, rtol=2e-3), max_err

    print("KERNEL_OK")
</pallas_src>

<mosaic_0001>
module attributes {stable_mosaic.version = 11 : i64} {
  func.func @encoder_layer_kernel(%arg0: i32, %arg1: memref<16x32xf32, #tpu.memory_space<vmem>>, %arg2: memref<16x32xf32, #tpu.memory_space<vmem>>, %arg3: memref<16x16xf32, #tpu.memory_space<vmem>>, %arg4: memref<224x128xf32, #tpu.memory_space<vmem>>, %arg5: memref<8x128xf32, #tpu.memory_space<vmem>>, %arg6: memref<16x32xf32, #tpu.memory_space<vmem>>) attributes {dimension_semantics = [#tpu.dimension_semantics<arbitrary>], iteration_bounds = array<i64: 1>, scalar_prefetch = 0 : i64, scratch_operands = 0 : i64, tpu.core_type = #tpu.core_type<tc>, window_params = [{pipeline_mode = #tpu.pipeline_mode<synchronous>, transform_indices = @transform_0, window_bounds = array<i64: 16, 32>}, {pipeline_mode = #tpu.pipeline_mode<synchronous>, transform_indices = @transform_1, window_bounds = array<i64: 16, 32>}, {pipeline_mode = #tpu.pipeline_mode<synchronous>, transform_indices = @transform_2, window_bounds = array<i64: 16, 16>}, {pipeline_mode = #tpu.pipeline_mode<synchronous>, transform_indices = @transform_3, window_bounds = array<i64: 224, 128>}, {pipeline_mode = #tpu.pipeline_mode<synchronous>, transform_indices = @transform_4, window_bounds = array<i64: 8, 128>}, {pipeline_mode = #tpu.pipeline_mode<synchronous>, transform_indices = @transform_5, window_bounds = array<i64: 16, 32>}]} {
    %c0 = arith.constant 0 : index
    %c0_0 = arith.constant 0 : index
    %0 = vector.load %arg1[%c0, %c0_0] : memref<16x32xf32, #tpu.memory_space<vmem>>, vector<16x32xf32>
    %c0_1 = arith.constant 0 : index
    %c0_2 = arith.constant 0 : index
    %1 = vector.load %arg2[%c0_1, %c0_2] : memref<16x32xf32, #tpu.memory_space<vmem>>, vector<16x32xf32>
    %c0_3 = arith.constant 0 : index
    %c0_4 = arith.constant 0 : index
    %2 = vector.load %arg3[%c0_3, %c0_4] : memref<16x16xf32, #tpu.memory_space<vmem>>, vector<16x16xf32>
    %c0_5 = arith.constant 0 : index
    %c0_6 = arith.constant 0 : index
    %3 = vector.load %arg4[%c0_5, %c0_6] : memref<224x128xf32, #tpu.memory_space<vmem>>, vector<32x128xf32>
    %c32 = arith.constant 32 : index
    %c0_7 = arith.constant 0 : index
    %4 = vector.load %arg4[%c32, %c0_7] : memref<224x128xf32, #tpu.memory_space<vmem>>, vector<32x128xf32>
    %c64 = arith.constant 64 : index
    %c0_8 = arith.constant 0 : index
    %5 = vector.load %arg4[%c64, %c0_8] : memref<224x128xf32, #tpu.memory_space<vmem>>, vector<32x128xf32>
    %c96 = arith.constant 96 : index
    %c0_9 = arith.constant 0 : index
    %6 = vector.load %arg4[%c96, %c0_9] : memref<224x128xf32, #tpu.memory_space<vmem>>, vector<128x32xf32>
    %c0_10 = arith.constant 0 : index
    %c0_11 = arith.constant 0 : index
    %7 = vector.load %arg5[%c0_10, %c0_11] : memref<8x128xf32, #tpu.memory_space<vmem>>, vector<1x32xf32>
    %c1 = arith.constant 1 : index
    %c0_12 = arith.constant 0 : index
    %8 = vector.load %arg5[%c1, %c0_12] : memref<8x128xf32, #tpu.memory_space<vmem>>, vector<1x32xf32>
    %c2 = arith.constant 2 : index
    %c0_13 = arith.constant 0 : index
    %9 = vector.load %arg5[%c2, %c0_13] : memref<8x128xf32, #tpu.memory_space<vmem>>, vector<1x32xf32>
    %c3 = arith.constant 3 : index
    %c0_14 = arith.constant 0 : index
    %10 = vector.load %arg5[%c3, %c0_14] : memref<8x128xf32, #tpu.memory_space<vmem>>, vector<1x32xf32>
    %c4 = arith.constant 4 : index
    %c0_15 = arith.constant 0 : index
    %11 = vector.load %arg5[%c4, %c0_15] : memref<8x128xf32, #tpu.memory_space<vmem>>, vector<1x128xf32>
    %c5 = arith.constant 5 : index
    %c0_16 = arith.constant 0 : index
    %12 = vector.load %arg5[%c5, %c0_16] : memref<8x128xf32, #tpu.memory_space<vmem>>, vector<1x32xf32>
    %c6 = arith.constant 6 : index
    %c0_17 = arith.constant 0 : index
    %13 = vector.load %arg5[%c6, %c0_17] : memref<8x128xf32, #tpu.memory_space<vmem>>, vector<1x128xf32>
    %c7 = arith.constant 7 : index
    %c0_18 = arith.constant 0 : index
    %14 = vector.load %arg5[%c7, %c0_18] : memref<8x128xf32, #tpu.memory_space<vmem>>, vector<1x32xf32>
    %cst = arith.constant dense<0.000000e+00> : vector<16xf32>
    %15 = vector.multi_reduction <add>, %0, %cst [1] : vector<16x32xf32> to vector<16xf32>
    %16 = vector.shape_cast %15 : vector<16xf32> to vector<16x1xf32>
    %cst_19 = arith.constant 3.200000e+01 : f32
    %17 = vector.broadcast %cst_19 : f32 to vector<16x1xf32>
    %18 = arith.divf %16, %17 : vector<16x1xf32>
    %19 = vector.broadcast %18 : vector<16x1xf32> to vector<16x32xf32>
    %20 = arith.subf %0, %19 : vector<16x32xf32>
    %21 = arith.mulf %20, %20 : vector<16x32xf32>
    %cst_20 = arith.constant dense<0.000000e+00> : vector<16xf32>
    %22 = vector.multi_reduction <add>, %21, %cst_20 [1] : vector<16x32xf32> to vector<16xf32>
    %23 = vector.shape_cast %22 : vector<16xf32> to vector<16x1xf32>
    %cst_21 = arith.constant 3.200000e+01 : f32
    %24 = vector.broadcast %cst_21 : f32 to vector<16x1xf32>
    %25 = arith.divf %23, %24 : vector<16x1xf32>
    %26 = vector.broadcast %18 : vector<16x1xf32> to vector<16x32xf32>
    %27 = arith.subf %0, %26 : vector<16x32xf32>
    %cst_22 = arith.constant 9.99999974E-6 : f32
    %28 = vector.broadcast %cst_22 : f32 to vector<16x1xf32>
    %29 = arith.addf %25, %28 : vector<16x1xf32>
    %30 = math.rsqrt %29 : vector<16x1xf32>
    %31 = vector.broadcast %30 : vector<16x1xf32> to vector<16x32xf32>
    %32 = arith.mulf %27, %31 : vector<16x32xf32>
    %33 = vector.broadcast %7 : vector<1x32xf32> to vector<16x32xf32>
    %34 = arith.mulf %32, %33 : vector<16x32xf32>
    %35 = vector.broadcast %8 : vector<1x32xf32> to vector<16x32xf32>
    %36 = arith.addf %34, %35 : vector<16x32xf32>
    %37 = arith.addf %36, %1 : vector<16x32xf32>
    %cst_23 = arith.constant dense<0.000000e+00> : vector<16x128xf32>
    %38 = tpu.matmul %37, %3, %cst_23 {dimension_numbers = #tpu.dot_dimension_numbers<[1], [0], [0], [1], [0, 0, 1, 1], [], []>, precision = #tpu.contract_precision<fp32>} : vector<16x32xf32>, vector<32x128xf32>, vector<16x128xf32> -> vector<16x128xf32>
    %39 = vector.broadcast %11 : vector<1x128xf32> to vector<16x128xf32>
    %40 = arith.addf %38, %39 : vector<16x128xf32>
    %cst_24 = arith.constant dense<0.000000e+00> : vector<16x128xf32>
    %41 = tpu.matmul %36, %4, %cst_24 {dimension_numbers = #tpu.dot_dimension_numbers<[1], [0], [0], [1], [0, 0, 1, 1], [], []>, precision = #tpu.contract_precision<fp32>} : vector<16x32xf32>, vector<32x128xf32>, vector<16x128xf32> -> vector<16x128xf32>
    %42 = vector.extract_strided_slice %40 {offsets = [0, 0], sizes = [16, 8], strides = [1, 1]} : vector<16x128xf32> to vector<16x8xf32>
    %43 = vector.extract_strided_slice %40 {offsets = [0, 32], sizes = [16, 8], strides = [1, 1]} : vector<16x128xf32> to vector<16x8xf32>
    "tpu.trace_start"() <{level = 10 : i32, message = "qd,kd->qk"}> : () -> ()
    %cst_25 = arith.constant dense<0.000000e+00> : vector<16x16xf32>
    %44 = tpu.matmul %42, %43, %cst_25 {dimension_numbers = #tpu.dot_dimension_numbers<[1], [1], [0], [0], [0, 0, 1, 0], [], []>, precision = #tpu.contract_precision<fp32>} : vector<16x8xf32>, vector<16x8xf32>, vector<16x16xf32> -> vector<16x16xf32>
    "tpu.trace_stop"() : () -> ()
    %45 = arith.addf %44, %2 : vector<16x16xf32>
    %cst_26 = arith.constant dense<0xFF800000> : vector<16xf32>
    %46 = vector.multi_reduction <maximumf>, %45, %cst_26 [1] : vector<16x16xf32> to vector<16xf32>
    %47 = vector.shape_cast %46 : vector<16xf32> to vector<16x1xf32>
    %48 = vector.broadcast %47 : vector<16x1xf32> to vector<16x16xf32>
    %49 = arith.subf %45, %48 : vector<16x16xf32>
    %50 = math.exp %49 : vector<16x16xf32>
    %cst_27 = arith.constant dense<0.000000e+00> : vector<16xf32>
    %51 = vector.multi_reduction <add>, %50, %cst_27 [1] : vector<16x16xf32> to vector<16xf32>
    %52 = vector.shape_cast %51 : vector<16xf32> to vector<16x1xf32>
    %53 = vector.broadcast %52 : vector<16x1xf32> to vector<16x16xf32>
    %54 = arith.divf %50, %53 : vector<16x16xf32>
    %55 = vector.extract_strided_slice %41 {offsets = [0, 0], sizes = [16, 32], strides = [1, 1]} : vector<16x128xf32> to vector<16x32xf32>
    %cst_28 = arith.constant dense<0.000000e+00> : vector<16x32xf32>
    %56 = tpu.matmul %54, %55, %cst_28 {dimension_numbers = #tpu.dot_dimension_numbers<[1], [0], [0], [1], [0, 0, 1, 1], [], []>, precision = #tpu.contract_precision<fp32>} : vector<16x16xf32>, vector<16x32xf32>, vector<16x32xf32> -> vector<16x32xf32>
    %57 = vector.extract_strided_slice %40 {offsets = [0, 8], sizes = [16, 8], strides = [1, 1]} : vector<16x128xf32> to vector<16x8xf32>
    %58 = vector.extract_strided_slice %40 {offsets = [0, 40], sizes = [16, 8], strides = [1, 1]} : vector<16x128xf32> to vector<16x8xf32>
    "tpu.trace_start"() <{level = 10 : i32, message = "qd,kd->qk"}> : () -> ()
    %cst_29 = arith.constant dense<0.000000e+00> : vector<16x16xf32>
    %59 = tpu.matmul %57, %58, %cst_29 {dimension_numbers = #tpu.dot_dimension_numbers<[1], [1], [0], [0], [0, 0, 1, 0], [], []>, precision = #tpu.contract_precision<fp32>} : vector<16x8xf32>, vector<16x8xf32>, vector<16x16xf32> -> vector<16x16xf32>
    "tpu.trace_stop"() : () -> ()
    %60 = arith.addf %59, %2 : vector<16x16xf32>
    %cst_30 = arith.constant dense<0xFF800000> : vector<16xf32>
    %61 = vector.multi_reduction <maximumf>, %60, %cst_30 [1] : vector<16x16xf32> to vector<16xf32>
    %62 = vector.shape_cast %61 : vector<16xf32> to vector<16x1xf32>
    %63 = vector.broadcast %62 : vector<16x1xf32> to vector<16x16xf32>
    %64 = arith.subf %60, %63 : vector<16x16xf32>
    %65 = math.exp %64 : vector<16x16xf32>
    %cst_31 = arith.constant dense<0.000000e+00> : vector<16xf32>
    %66 = vector.multi_reduction <add>, %65, %cst_31 [1] : vector<16x16xf32> to vector<16xf32>
    %67 = vector.shape_cast %66 : vector<16xf32> to vector<16x1xf32>
    %68 = vector.broadcast %67 : vector<16x1xf32> to vector<16x16xf32>
    %69 = arith.divf %65, %68 : vector<16x16xf32>
    %70 = vector.extract_strided_slice %41 {offsets = [0, 32], sizes = [16, 32], strides = [1, 1]} : vector<16x128xf32> to vector<16x32xf32>
    %cst_32 = arith.constant dense<0.000000e+00> : vector<16x32xf32>
    %71 = tpu.matmul %69, %70, %cst_32 {dimension_numbers = #tpu.dot_dimension_numbers<[1], [0], [0], [1], [0, 0, 1, 1], [], []>, precision = #tpu.contract_precision<fp32>} : vector<16x16xf32>, vector<16x32xf32>, vector<16x32xf32> -> vector<16x32xf32>
    %72 = arith.addf %56, %71 : vector<16x32xf32>
    %73 = vector.extract_strided_slice %40 {offsets = [0, 16], sizes = [16, 8], strides = [1, 1]} : vector<16x128xf32> to vector<16x8xf32>
    %74 = vector.extract_strided_slice %40 {offsets = [0, 48], sizes = [16, 8], strides = [1, 1]} : vector<16x128xf32> to vector<16x8xf32>
    "tpu.trace_start"() <{level = 10 : i32, message = "qd,kd->qk"}> : () -> ()
    %cst_33 = arith.constant dense<0.000000e+00> : vector<16x16xf32>
    %75 = tpu.matmul %73, %74, %cst_33 {dimension_numbers = #tpu.dot_dimension_numbers<[1], [1], [0], [0], [0, 0, 1, 0], [], []>, precision = #tpu.contract_precision<fp32>} : vector<16x8xf32>, vector<16x8xf32>, vector<16x16xf32> -> vector<16x16xf32>
    "tpu.trace_stop"() : () -> ()
    %76 = arith.addf %75, %2 : vector<16x16xf32>
    %cst_34 = arith.constant dense<0xFF800000> : vector<16xf32>
    %77 = vector.multi_reduction <maximumf>, %76, %cst_34 [1] : vector<16x16xf32> to vector<16xf32>
    %78 = vector.shape_cast %77 : vector<16xf32> to vector<16x1xf32>
    %79 = vector.broadcast %78 : vector<16x1xf32> to vector<16x16xf32>
    %80 = arith.subf %76, %79 : vector<16x16xf32>
    %81 = math.exp %80 : vector<16x16xf32>
    %cst_35 = arith.constant dense<0.000000e+00> : vector<16xf32>
    %82 = vector.multi_reduction <add>, %81, %cst_35 [1] : vector<16x16xf32> to vector<16xf32>
    %83 = vector.shape_cast %82 : vector<16xf32> to vector<16x1xf32>
    %84 = vector.broadcast %83 : vector<16x1xf32> to vector<16x16xf32>
    %85 = arith.divf %81, %84 : vector<16x16xf32>
    %86 = vector.extract_strided_slice %41 {offsets = [0, 64], sizes = [16, 32], strides = [1, 1]} : vector<16x128xf32> to vector<16x32xf32>
    %cst_36 = arith.constant dense<0.000000e+00> : vector<16x32xf32>
    %87 = tpu.matmul %85, %86, %cst_36 {dimension_numbers = #tpu.dot_dimension_numbers<[1], [0], [0], [1], [0, 0, 1, 1], [], []>, precision = #tpu.contract_precision<fp32>} : vector<16x16xf32>, vector<16x32xf32>, vector<16x32xf32> -> vector<16x32xf32>
    %88 = arith.addf %72, %87 : vector<16x32xf32>
    %89 = vector.extract_strided_slice %40 {offsets = [0, 24], sizes = [16, 8], strides = [1, 1]} : vector<16x128xf32> to vector<16x8xf32>
    %90 = vector.extract_strided_slice %40 {offsets = [0, 56], sizes = [16, 8], strides = [1, 1]} : vector<16x128xf32> to vector<16x8xf32>
    "tpu.trace_start"() <{level = 10 : i32, message = "qd,kd->qk"}> : () -> ()
    %cst_37 = arith.constant dense<0.000000e+00> : vector<16x16xf32>
    %91 = tpu.matmul %89, %90, %cst_37 {dimension_numbers = #tpu.dot_dimension_numbers<[1], [1], [0], [0], [0, 0, 1, 0], [], []>, precision = #tpu.contract_precision<fp32>} : vector<16x8xf32>, vector<16x8xf32>, vector<16x16xf32> -> vector<16x16xf32>
    "tpu.trace_stop"() : () -> ()
    %92 = arith.addf %91, %2 : vector<16x16xf32>
    %cst_38 = arith.constant dense<0xFF800000> : vector<16xf32>
    %93 = vector.multi_reduction <maximumf>, %92, %cst_38 [1] : vector<16x16xf32> to vector<16xf32>
    %94 = vector.shape_cast %93 : vector<16xf32> to vector<16x1xf32>
    %95 = vector.broadcast %94 : vector<16x1xf32> to vector<16x16xf32>
    %96 = arith.subf %92, %95 : vector<16x16xf32>
    %97 = math.exp %96 : vector<16x16xf32>
    %cst_39 = arith.constant dense<0.000000e+00> : vector<16xf32>
    %98 = vector.multi_reduction <add>, %97, %cst_39 [1] : vector<16x16xf32> to vector<16xf32>
    %99 = vector.shape_cast %98 : vector<16xf32> to vector<16x1xf32>
    %100 = vector.broadcast %99 : vector<16x1xf32> to vector<16x16xf32>
    %101 = arith.divf %97, %100 : vector<16x16xf32>
    %102 = vector.extract_strided_slice %41 {offsets = [0, 96], sizes = [16, 32], strides = [1, 1]} : vector<16x128xf32> to vector<16x32xf32>
    %cst_40 = arith.constant dense<0.000000e+00> : vector<16x32xf32>
    %103 = tpu.matmul %101, %102, %cst_40 {dimension_numbers = #tpu.dot_dimension_numbers<[1], [0], [0], [1], [0, 0, 1, 1], [], []>, precision = #tpu.contract_precision<fp32>} : vector<16x16xf32>, vector<16x32xf32>, vector<16x32xf32> -> vector<16x32xf32>
    %104 = arith.addf %88, %103 : vector<16x32xf32>
    %105 = vector.broadcast %12 : vector<1x32xf32> to vector<16x32xf32>
    %106 = arith.addf %104, %105 : vector<16x32xf32>
    %107 = arith.addf %0, %106 : vector<16x32xf32>
    %cst_41 = arith.constant dense<0.000000e+00> : vector<16xf32>
    %108 = vector.multi_reduction <add>, %107, %cst_41 [1] : vector<16x32xf32> to vector<16xf32>
    %109 = vector.shape_cast %108 : vector<16xf32> to vector<16x1xf32>
    %cst_42 = arith.constant 3.200000e+01 : f32
    %110 = vector.broadcast %cst_42 : f32 to vector<16x1xf32>
    %111 = arith.divf %109, %110 : vector<16x1xf32>
    %112 = vector.broadcast %111 : vector<16x1xf32> to vector<16x32xf32>
    %113 = arith.subf %107, %112 : vector<16x32xf32>
    %114 = arith.mulf %113, %113 : vector<16x32xf32>
    %cst_43 = arith.constant dense<0.000000e+00> : vector<16xf32>
    %115 = vector.multi_reduction <add>, %114, %cst_43 [1] : vector<16x32xf32> to vector<16xf32>
    %116 = vector.shape_cast %115 : vector<16xf32> to vector<16x1xf32>
    %cst_44 = arith.constant 3.200000e+01 : f32
    %117 = vector.broadcast %cst_44 : f32 to vector<16x1xf32>
    %118 = arith.divf %116, %117 : vector<16x1xf32>
    %119 = vector.broadcast %111 : vector<16x1xf32> to vector<16x32xf32>
    %120 = arith.subf %107, %119 : vector<16x32xf32>
    %cst_45 = arith.constant 9.99999974E-6 : f32
    %121 = vector.broadcast %cst_45 : f32 to vector<16x1xf32>
    %122 = arith.addf %118, %121 : vector<16x1xf32>
    %123 = math.rsqrt %122 : vector<16x1xf32>
    %124 = vector.broadcast %123 : vector<16x1xf32> to vector<16x32xf32>
    %125 = arith.mulf %120, %124 : vector<16x32xf32>
    %126 = vector.broadcast %9 : vector<1x32xf32> to vector<16x32xf32>
    %127 = arith.mulf %125, %126 : vector<16x32xf32>
    %128 = vector.broadcast %10 : vector<1x32xf32> to vector<16x32xf32>
    %129 = arith.addf %127, %128 : vector<16x32xf32>
    %cst_46 = arith.constant dense<0.000000e+00> : vector<16x128xf32>
    %130 = tpu.matmul %129, %5, %cst_46 {dimension_numbers = #tpu.dot_dimension_numbers<[1], [0], [0], [1], [0, 0, 1, 1], [], []>, precision = #tpu.contract_precision<fp32>} : vector<16x32xf32>, vector<32x128xf32>, vector<16x128xf32> -> vector<16x128xf32>
    %131 = vector.broadcast %13 : vector<1x128xf32> to vector<16x128xf32>
    %132 = arith.addf %130, %131 : vector<16x128xf32>
    %cst_47 = arith.constant 0.000000e+00 : f32
    %133 = vector.broadcast %cst_47 : f32 to vector<16x128xf32>
    %134 = arith.maximumf %132, %133 : vector<16x128xf32>
    %cst_48 = arith.constant dense<0.000000e+00> : vector<16x32xf32>
    %135 = tpu.matmul %134, %6, %cst_48 {dimension_numbers = #tpu.dot_dimension_numbers<[1], [0], [0], [1], [0, 0, 1, 1], [], []>, precision = #tpu.contract_precision<fp32>} : vector<16x128xf32>, vector<128x32xf32>, vector<16x32xf32> -> vector<16x32xf32>
    %136 = vector.broadcast %14 : vector<1x32xf32> to vector<16x32xf32>
    %137 = arith.addf %135, %136 : vector<16x32xf32>
    %138 = arith.addf %107, %137 : vector<16x32xf32>
    %c0_49 = arith.constant 0 : index
    %c0_50 = arith.constant 0 : index
    %139 = vector.load %arg6[%c0_49, %c0_50] : memref<16x32xf32, #tpu.memory_space<vmem>>, vector<16x32xf32>
    tpu.vector_store %arg6[%c0_49, %c0_50], %138 {strides = array<i32>} : memref<16x32xf32, #tpu.memory_space<vmem>>, vector<16x32xf32>,
    return
  }
  func.func @transform_0(%arg0: i32) -> (i32, i32) {
    %c0_i32 = arith.constant 0 : i32
    %c0_i32_0 = arith.constant 0 : i32
    %c0_i32_1 = arith.constant 0 : i32
    return %c0_i32, %c0_i32_0 : i32, i32
  }
  func.func @transform_1(%arg0: i32) -> (i32, i32) {
    %c0_i32 = arith.constant 0 : i32
    %c0_i32_0 = arith.constant 0 : i32
    %c0_i32_1 = arith.constant 0 : i32
    return %c0_i32, %c0_i32_0 : i32, i32
  }
  func.func @transform_2(%arg0: i32) -> (i32, i32) {
    %c0_i32 = arith.constant 0 : i32
    %c0_i32_0 = arith.constant 0 : i32
    %c0_i32_1 = arith.constant 0 : i32
    return %c0_i32, %c0_i32_0 : i32, i32
  }
  func.func @transform_3(%arg0: i32) -> (i32, i32) {
    %c0_i32 = arith.constant 0 : i32
    %c0_i32_0 = arith.constant 0 : i32
    %c0_i32_1 = arith.constant 0 : i32
    return %c0_i32, %c0_i32_0 : i32, i32
  }
  func.func @transform_4(%arg0: i32) -> (i32, i32) {
    %c0_i32 = arith.constant 0 : i32
    %c0_i32_0 = arith.constant 0 : i32
    %c0_i32_1 = arith.constant 0 : i32
    return %c0_i32, %c0_i32_0 : i32, i32
  }
  func.func @transform_5(%arg0: i32) -> (i32, i32) {
    %c0_i32 = arith.constant 0 : i32
    %c0_i32_0 = arith.constant 0 : i32
    %c0_i32_1 = arith.constant 0 : i32
    return %c0_i32, %c0_i32_0 : i32, i32
  }
}

</mosaic_0001>

<llo_original>
// kernel: tpu_custom_call.1
$region0: #{tpu_custom_call.1}
  #allocation0 [shape = 'u32[]', space=smem, size = 0x4, offset = 0x4, fixed_abs, tag = 'smem constant byte address 0x4 - core index']
  #allocation1 [shape = 'u32[144,128]{1,0:T(1,128)}', space=vmem, size = 0x12000, scoped, tag = 'internal scratch']
  %s0 = inlined_call_operand.hbm [shape: f32[16,32], index: 0, kind: input, shape index: {}]
  %s1 = inlined_call_operand.hbm [shape: f32[16,32], index: 1, kind: input, shape index: {}]
  %s2 = inlined_call_operand.hbm [shape: f32[16,16], index: 2, kind: input, shape index: {}]
  %s3 = inlined_call_operand.hbm [shape: f32[224,128], index: 3, kind: input, shape index: {}]
  %s4 = inlined_call_operand.hbm [shape: f32[8,128], index: 4, kind: input, shape index: {}]
  %s5 = inlined_call_operand.hbm [shape: f32[16,32], index: 5, kind: output, shape index: {}]
  %s6 = sld [smem:[#allocation0]]
  $region50: #{tpu_custom_call.1} parent=0
    _
  %s8 = ssub.s32 1, %s6
  %s9 = scalar_select 0, %s8, %s6
  $region1: #{tpu_custom_call.1} parent=0
    #allocation2 [shape = 'u8[8192]{0}', space=vmem, size = 0x2000, scoped, tag = 'input window, operand 0, single buffered']
    #allocation3 [shape = 's32[1]{0}', space=sflag, size = 0x4, scoped, tag = 'scoped memory for tpu_custom_call.1']
    #allocation4 [shape = 's32[1]{0}', space=sflag, size = 0x4, scoped, tag = 'scoped memory for tpu_custom_call.1']
    #allocation5 [shape = 'u8[8192]{0}', space=vmem, size = 0x2000, scoped, tag = 'input window, operand 1, single buffered']
    #allocation6 [shape = 's32[1]{0}', space=sflag, size = 0x4, scoped, tag = 'scoped memory for tpu_custom_call.1']
    #allocation7 [shape = 'u8[8192]{0}', space=vmem, size = 0x2000, scoped, tag = 'input window, operand 2, single buffered']
    #allocation8 [shape = 'u8[114688]{0}', space=vmem, size = 0x1c000, scoped, tag = 'input window, operand 3, single buffered']
    #allocation9 [shape = 's32[1]{0}', space=sflag, size = 0x4, scoped, tag = 'scoped memory for tpu_custom_call.1']
    #allocation10 [shape = 'u8[4096]{0}', space=vmem, size = 0x1000, scoped, tag = 'input window, operand 4, single buffered']
    #allocation11 [shape = 'u8[8192]{0}', space=vmem, size = 0x2000, scoped, tag = 'output window, operand 0, single buffered']
    %10 = vsyncpa [#allocation3], 0
    %11 = vsyncpa [#allocation6], 0
    %12 = vsyncpa [#allocation9], 0
    %13 = vsyncpa [#allocation4], 0
    // Predicated region
    $region2: #{tpu_custom_call.1} parent=1 // pred_check
      _
    $region3: #{tpu_custom_call.1} parent=1 // pred_check_branch
      %15 = sbr.rel (0) target = $region5
    $region4: #{tpu_custom_call.1} parent=1 // pred_region
      %s17 = ssub.s32 256, 256
      %18 = vsyncadd [#allocation3], %s17
      %s19 = sshll.u32 [#allocation2], 4
      %s20 = int_to_ptr.vmem [resolvable:$true] %s19
      %25 = dma.hbm_to_vmem [thread:$0]  %s0, 256, %s20, [#allocation3], 128, 128, 8
    $region5: #{tpu_custom_call.1} parent=1 // pred_fallthru
      _
    // Predicated region
    $region6: #{tpu_custom_call.1} parent=1 // pred_check
      _
    $region7: #{tpu_custom_call.1} parent=1 // pred_check_branch
      %27 = sbr.rel (0) target = $region9
    $region8: #{tpu_custom_call.1} parent=1 // pred_region
      %s29 = ssub.s32 256, 256
      %30 = vsyncadd [#allocation6], %s29
      %s31 = sshll.u32 [#allocation5], 4
      %s32 = int_to_ptr.vmem [resolvable:$true] %s31
      %37 = dma.hbm_to_vmem [thread:$0]  %s1, 256, %s32, [#allocation6], 128, 128, 8
    $region9: #{tpu_custom_call.1} parent=1 // pred_fallthru
      _
    // Predicated region
    $region10: #{tpu_custom_call.1} parent=1 // pred_check
      _
    $region11: #{tpu_custom_call.1} parent=1 // pred_check_branch
      %39 = sbr.rel (0) target = $region13
    $region12: #{tpu_custom_call.1} parent=1 // pred_region
      %s41 = ssub.s32 256, 256
      %42 = vsyncadd [#allocation6], %s41
      %s43 = sshll.u32 [#allocation7], 4
      %s44 = int_to_ptr.vmem [resolvable:$true] %s43
      %49 = dma.hbm_to_vmem [thread:$0]  %s2, 256, %s44, [#allocation6], 128, 128, 8
    $region13: #{tpu_custom_call.1} parent=1 // pred_fallthru
      _
    // Predicated region
    $region14: #{tpu_custom_call.1} parent=1 // pred_check
      _
    $region15: #{tpu_custom_call.1} parent=1 // pred_check_branch
      %51 = sbr.rel (0) target = $region17
    $region16: #{tpu_custom_call.1} parent=1 // pred_region
      %s53 = ssub.s32 3584, 3584
      %54 = vsyncadd [#allocation9], %s53
      %s55 = sshll.u32 [#allocation8], 4
      %s56 = int_to_ptr.vmem [resolvable:$true] %s55
      %61 = dma.hbm_to_vmem [thread:$0]  %s3, 3584, %s56, [#allocation9], 128, 128, 8
    $region17: #{tpu_custom_call.1} parent=1 // pred_fallthru
      _
    // Predicated region
    $region18: #{tpu_custom_call.1} parent=1 // pred_check
      _
    $region19: #{tpu_custom_call.1} parent=1 // pred_check_branch
      %63 = sbr.rel (0) target = $region21
    $region20: #{tpu_custom_call.1} parent=1 // pred_region
      %s65 = ssub.s32 128, 128
      %66 = vsyncadd [#allocation9], %s65
      %s68 = sshll.u32 [#allocation10], 4
      %s69 = int_to_ptr.vmem [resolvable:$true] %s68
      %71 = dma.hbm_to_vmem [thread:$0]  %s4, 128, %s69, [#allocation9]
    $region21: #{tpu_custom_call.1} parent=1 // pred_fallthru
      _
    // Predicated region
    $region22: #{tpu_custom_call.1} parent=1 // pred_check
      _
    $region23: #{tpu_custom_call.1} parent=1 // pred_check_branch
      %73 = sbr.rel (0) target = $region25
    $region24: #{tpu_custom_call.1} parent=1 // pred_region
      %74 = dma.done [#allocation3], 256
    $region25: #{tpu_custom_call.1} parent=1 // pred_fallthru
      _
    // Predicated region
    $region26: #{tpu_custom_call.1} parent=1 // pred_check
      _
    $region27: #{tpu_custom_call.1} parent=1 // pred_check_branch
      %76 = sbr.rel (0) target = $region29
    $region28: #{tpu_custom_call.1} parent=1 // pred_region
      %77 = dma.done [#allocation6], 256
    $region29: #{tpu_custom_call.1} parent=1 // pred_fallthru
      _
    // Predicated region
    $region30: #{tpu_custom_call.1} parent=1 // pred_check
      _
    $region31: #{tpu_custom_call.1} parent=1 // pred_check_branch
      %79 = sbr.rel (0) target = $region33
    $region32: #{tpu_custom_call.1} parent=1 // pred_region
      %80 = dma.done [#allocation6], 256
    $region33: #{tpu_custom_call.1} parent=1 // pred_fallthru
      _
    // Predicated region
    $region34: #{tpu_custom_call.1} parent=1 // pred_check
      _
    $region35: #{tpu_custom_call.1} parent=1 // pred_check_branch
      %82 = sbr.rel (0) target = $region37
    $region36: #{tpu_custom_call.1} parent=1 // pred_region
      %83 = dma.done [#allocation9], 3584
    $region37: #{tpu_custom_call.1} parent=1 // pred_fallthru
      _
    // Predicated region
    $region38: #{tpu_custom_call.1} parent=1 // pred_check
      _
    $region39: #{tpu_custom_call.1} parent=1 // pred_check_branch
      %85 = sbr.rel (0) target = $region41
    $region40: #{tpu_custom_call.1} parent=1 // pred_region
      %86 = dma.done [#allocation9], 128
    $region41: #{tpu_custom_call.1} parent=1 // pred_fallthru
      _
    %v87 = vld [vmem:[#allocation2] sm:$0xff]
    %v88 = vld [vmem:[#allocation2 + $0x8] sm:$0xff]
    %v89 = vld [vmem:[#allocation5] sm:$0xff]
    %v90 = vld [vmem:[#allocation5 + $0x8] sm:$0xff]
    %v91 = vld [vmem:[#allocation7] sm:$0xff]
    %v92 = vld [vmem:[#allocation7 + $0x8] sm:$0xff]
    %v93 = vld [vmem:[#allocation8] sm:$0xff]
    %v94 = vld [vmem:[#allocation8 + $0x8] sm:$0xff]
    %v95 = vld [vmem:[#allocation8 + $0x10] sm:$0xff]
    %v96 = vld [vmem:[#allocation8 + $0x18] sm:$0xff]
    %v97 = vld [vmem:[#allocation8 + $0x20] sm:$0xff]
    %v98 = vld [vmem:[#allocation8 + $0x28] sm:$0xff]
    %v99 = vld [vmem:[#allocation8 + $0x30] sm:$0xff]
    %v100 = vld [vmem:[#allocation8 + $0x38] sm:$0xff]
    %v101 = vld [vmem:[#allocation8 + $0x40] sm:$0xff]
    %v102 = vld [vmem:[#allocation8 + $0x48] sm:$0xff]
    %v103 = vld [vmem:[#allocation8 + $0x50] sm:$0xff]
    %v104 = vld [vmem:[#allocation8 + $0x58] sm:$0xff]
    %v105 = vld [vmem:[#allocation8 + $0x60] sm:$0xff]
    %v106 = vld [vmem:[#allocation8 + $0x68] sm:$0xff]
    %v107 = vld [vmem:[#allocation8 + $0x70] sm:$0xff]
    %v108 = vld [vmem:[#allocation8 + $0x78] sm:$0xff]
    %v109 = vld [vmem:[#allocation8 + $0x80] sm:$0xff]
    %v110 = vld [vmem:[#allocation8 + $0x88] sm:$0xff]
    %v111 = vld [vmem:[#allocation8 + $0x90] sm:$0xff]
    %v112 = vld [vmem:[#allocation8 + $0x98] sm:$0xff]
    %v113 = vld [vmem:[#allocation8 + $0xa0] sm:$0xff]
    %v114 = vld [vmem:[#allocation8 + $0xa8] sm:$0xff]
    %v115 = vld [vmem:[#allocation8 + $0xb0] sm:$0xff]
    %v116 = vld [vmem:[#allocation8 + $0xb8] sm:$0xff]
    %v117 = vld [vmem:[#allocation8 + $0xc0] sm:$0xff]
    %v118 = vld [vmem:[#allocation8 + $0xc8] sm:$0xff]
    %v119 = vld [vmem:[#allocation8 + $0xd0] sm:$0xff]
    %v120 = vld [vmem:[#allocation8 + $0xd8] sm:$0xff]
    %v121 = vld [vmem:[#allocation10] sm:$0x1]
    %v122 = vld [vmem:[#allocation10 + $0x1] sm:$0x1]
    %v123 = vld [vmem:[#allocation10 + $0x2] sm:$0x1]
    %v124 = vld [vmem:[#allocation10 + $0x3] sm:$0x1]
    %v125 = vld [vmem:[#allocation10 + $0x4] sm:$0x1]
    %v126 = vld [vmem:[#allocation10 + $0x5] sm:$0x1]
    %v127 = vld [vmem:[#allocation10 + $0x6] sm:$0x1]
    %v128 = vld [vmem:[#allocation10 + $0x7] sm:$0x1]
    %vm129 = vcmask 261120
    %v130 = vsel %vm129, %v87, 0.0
    %131 = vadd.xlane.f32.xlu0 %v130
    %v132 = vpop.xlane.xlu0 %131
    %v133 = vsel %vm129, %v88, 0.0
    %134 = vadd.xlane.f32.xlu0 %v133
    %v135 = vpop.xlane.xlu0 %134
    %v136 = vrcp.pop 32.0
    %v137 = vmul.f32 %v132, %v136
    %v138 = vmul.f32 %v135, %v136
    %v139 = vsub.f32 %v87, %v137
    %v140 = vsub.f32 %v88, %v138
    %v141 = vmul.f32 %v139, %v139
    %v142 = vmul.f32 %v140, %v140
    %v143 = vsel %vm129, %v141, 0.0
    %144 = vadd.xlane.f32.xlu0 %v143
    %v145 = vpop.xlane.xlu0 %144
    %v146 = vsel %vm129, %v142, 0.0
    %147 = vadd.xlane.f32.xlu0 %v146
    %v148 = vpop.xlane.xlu0 %147
    %v149 = vmul.f32 %v145, %v136
    %v150 = vmul.f32 %v148, %v136
    %v151 = vadd.f32 %v149, 1e-05
    %v152 = vadd.f32 %v150, 1e-05
    %v153 = vrsqrt.pop %v151
    %v154 = vrsqrt.pop %v152
    %v155 = vmul.f32 %v139, %v153
    %v156 = vmul.f32 %v140, %v154
    %v157 = vlaneseq
    %v158 = vshrl.u32 %v157, 7
    %v159 = vsub.s32 0, %v158
    %v160 = vrot.slane %v121, %v159
    %v161 = vmul.f32 %v155, %v160
    %v162 = vmul.f32 %v156, %v160
    %v163 = vlaneseq
    %v164 = vshrl.u32 %v163, 7
    %v165 = vsub.s32 0, %v164
    %v166 = vrot.slane %v122, %v165
    %v167 = vadd.f32 %v161, %v166
    %v168 = vadd.f32 %v162, %v166
    %v169 = vadd.f32 %v167, %v89
    %v170 = vadd.f32 %v168, %v90
    %v171 = vlaneseq
    %v172 = vshrl.u32 %v171, 7
    %v173 = vsub.s32 0, %v172
    %v174 = vrot.slane %v125, %v173
    %v176 = vsel %vm129, %v169, 0
    %v179 = vsel %vm129, %v170, 0
    %181 = vmatprep.subr.mxu0 0.0
    %182 = vmatpush1.msra.mxu0 0.0
    %183 = vmatprep.subr.mxu0 0.0
    %184 = vmatpush1.msra.mxu0 0.0
    %185 = vmatprep.subr.mxu0 0.0
    %186 = vmatpush1.msra.mxu0 0.0
    %187 = vmatprep.subr.mxu0 0.0
    %188 = vmatpush1.msra.mxu0 0.0
    %189 = vmatprep.subr.mxu0 0.0
    %190 = vmatpush1.msra.mxu0 0.0
    %191 = vmatprep.subr.mxu0 0.0
    %192 = vmatpush1.msra.mxu0 0.0
    %193 = vmatprep.subr.mxu0 0.0
    %194 = vmatpush1.msra.mxu0 0.0
    %195 = vmatprep.subr.mxu0 0.0
    %196 = vmatpush1.msra.mxu0 0.0
    %197 = vmatprep.subr.mxu0 0.0
    %198 = vmatpush1.msra.mxu0 0.0
    %199 = vmatprep.subr.mxu0 0.0
    %200 = vmatpush1.msra.mxu0 0.0
    %201 = vmatprep.subr.mxu0 0.0
    %202 = vmatpush1.msra.mxu0 0.0
    %203 = vmatprep.subr.mxu0 0.0
    %204 = vmatpush1.msra.mxu0 0.0
    %205 = vmatprep.subr.mxu0 0.0
    %v206 = vand.u32 %v96, 4294901760
    %207 = vmatpush1.msra.mxu0 %v206
    %208 = vmatprep.subr.mxu0 0.0
    %v209 = vand.u32 %v95, 4294901760
    %210 = vmatpush1.msra.mxu0 %v209
    %211 = vmatprep.subr.mxu0 0.0
    %v212 = vand.u32 %v94, 4294901760
    %213 = vmatpush1.msra.mxu0 %v212
    %214 = vmatprep.subr.mxu0 0.0
    %v215 = vand.u32 %v93, 4294901760
    %216 = vmatpush1.msra.mxu0 %v215
    %217 = vmatprep.subr.mxu0 0.0
    %218 = vmatpush2.msra.mxu0 0.0
    %219 = vmatprep.subr.mxu0 0.0
    %220 = vmatpush2.msra.mxu0 0.0
    %221 = vmatprep.subr.mxu0 0.0
    %222 = vmatpush2.msra.mxu0 0.0
    %223 = vmatprep.subr.mxu0 0.0
    %224 = vmatpush2.msra.mxu0 0.0
    %225 = vmatprep.subr.mxu0 0.0
    %226 = vmatpush2.msra.mxu0 0.0
    %227 = vmatprep.subr.mxu0 0.0
    %228 = vmatpush2.msra.mxu0 0.0
    %229 = vmatprep.subr.mxu0 0.0
    %230 = vmatpush2.msra.mxu0 0.0
    %231 = vmatprep.subr.mxu0 0.0
    %232 = vmatpush2.msra.mxu0 0.0
    %233 = vmatprep.subr.mxu0 0.0
    %234 = vmatpush2.msra.mxu0 0.0
    %235 = vmatprep.subr.mxu0 0.0
    %236 = vmatpush2.msra.mxu0 0.0
    %237 = vmatprep.subr.mxu0 0.0
    %238 = vmatpush2.msra.mxu0 0.0
    %239 = vmatprep.subr.mxu0 0.0
    %240 = vmatpush2.msra.mxu0 0.0
    %241 = vmatprep.subr.mxu0 0.0
    %242 = vmatpush2.msra.mxu0 0.0
    %243 = vmatprep.subr.mxu0 0.0
    %244 = vmatpush2.msra.mxu0 0.0
    %245 = vmatprep.subr.mxu0 0.0
    %246 = vmatpush2.msra.mxu0 0.0
    %247 = vmatprep.subr.mxu0 0.0
    %248 = vmatpush2.msra.mxu0 0.0
    %249 = vmatprep.mubr.f32.mxu0 0.0
    %v250 = vand.u32 %v176, 4294901760
    %v251 = vsub.f32 %v176, %v250
    %v252 = vand.u32 %v251, 4294901760
    %v253 = vsub.f32 %v251, %v252
    %v254 = vand.u32 %v253, 4294901760
    %255 = vmatmul.mubr.f32.gmra.mxu0 %v254
    %v256 = vpop.f32.mrf.mxu0
    %v257 = vadd.f32 %v174, %v256
    %v258 = vpop.f32.mrf.mxu0
    %259 = vmatprep.mubr.f32.mxu0 0.0
    %v260 = vand.u32 %v179, 4294901760
    %v261 = vsub.f32 %v179, %v260
    %v262 = vand.u32 %v261, 4294901760
    %v263 = vsub.f32 %v261, %v262
    %v264 = vand.u32 %v263, 4294901760
    %265 = vmatmul.mubr.f32.gmra.mxu0 %v264
    %v266 = vpop.f32.mrf.mxu0
    %v267 = vadd.f32 %v174, %v266
    %v268 = vpop.f32.mrf.mxu0
    %269 = vdwg.mxu0
    %270 = vmatprep.subr.mxu0 0.0
    %271 = vmatpush1.msra.mxu0 0.0
    %272 = vmatprep.subr.mxu0 0.0
    %273 = vmatpush1.msra.mxu0 0.0
    %274 = vmatprep.subr.mxu0 0.0
    %275 = vmatpush1.msra.mxu0 0.0
    %276 = vmatprep.subr.mxu0 0.0
    %277 = vmatpush1.msra.mxu0 0.0
    %278 = vmatprep.subr.mxu0 0.0
    %279 = vmatpush1.msra.mxu0 0.0
    %280 = vmatprep.subr.mxu0 0.0
    %281 = vmatpush1.msra.mxu0 0.0
    %282 = vmatprep.subr.mxu0 0.0
    %283 = vmatpush1.msra.mxu0 0.0
    %284 = vmatprep.subr.mxu0 0.0
    %285 = vmatpush1.msra.mxu0 0.0
    %286 = vmatprep.subr.mxu0 0.0
    %287 = vmatpush1.msra.mxu0 0.0
    %288 = vmatprep.subr.mxu0 0.0
    %289 = vmatpush1.msra.mxu0 0.0
    %290 = vmatprep.subr.mxu0 0.0
    %291 = vmatpush1.msra.mxu0 0.0
    %292 = vmatprep.subr.mxu0 0.0
    %293 = vmatpush1.msra.mxu0 0.0
    %294 = vmatprep.subr.mxu0 0.0
    %v295 = vand.u32 %v96, 4294901760
    %v296 = vsub.f32 %v96, %v295
    %v297 = vand.u32 %v296, 4294901760
    %v298 = vsub.f32 %v296, %v297
    %v299 = vand.u32 %v298, 4294901760
    %300 = vmatpush1.msra.mxu0 %v299
    %301 = vmatprep.subr.mxu0 0.0
    %v302 = vand.u32 %v95, 4294901760
    %v303 = vsub.f32 %v95, %v302
    %v304 = vand.u32 %v303, 4294901760
    %v305 = vsub.f32 %v303, %v304
    %v306 = vand.u32 %v305, 4294901760
    %307 = vmatpush1.msra.mxu0 %v306
    %308 = vmatprep.subr.mxu0 0.0
    %v309 = vand.u32 %v94, 4294901760
    %v310 = vsub.f32 %v94, %v309
    %v311 = vand.u32 %v310, 4294901760
    %v312 = vsub.f32 %v310, %v311
    %v313 = vand.u32 %v312, 4294901760
    %314 = vmatpush1.msra.mxu0 %v313
    %315 = vmatprep.subr.mxu0 0.0
    %v316 = vand.u32 %v93, 4294901760
    %v317 = vsub.f32 %v93, %v316
    %v318 = vand.u32 %v317, 4294901760
    %v319 = vsub.f32 %v317, %v318
    %v320 = vand.u32 %v319, 4294901760
    %321 = vmatpush1.msra.mxu0 %v320
    %322 = vmatprep.subr.mxu0 0.0
    %323 = vmatpush2.msra.mxu0 0.0
    %324 = vmatprep.subr.mxu0 0.0
    %325 = vmatpush2.msra.mxu0 0.0
    %326 = vmatprep.subr.mxu0 0.0
    %327 = vmatpush2.msra.mxu0 0.0
    %328 = vmatprep.subr.mxu0 0.0
    %329 = vmatpush2.msra.mxu0 0.0
    %330 = vmatprep.subr.mxu0 0.0
    %331 = vmatpush2.msra.mxu0 0.0
    %332 = vmatprep.subr.mxu0 0.0
    %333 = vmatpush2.msra.mxu0 0.0
    %334 = vmatprep.subr.mxu0 0.0
    %335 = vmatpush2.msra.mxu0 0.0
    %336 = vmatprep.subr.mxu0 0.0
    %337 = vmatpush2.msra.mxu0 0.0
    %338 = vmatprep.subr.mxu0 0.0
    %339 = vmatpush2.msra.mxu0 0.0
    %340 = vmatprep.subr.mxu0 0.0
    %341 = vmatpush2.msra.mxu0 0.0
    %342 = vmatprep.subr.mxu0 0.0
    %343 = vmatpush2.msra.mxu0 0.0
    %344 = vmatprep.subr.mxu0 0.0
    %345 = vmatpush2.msra.mxu0 0.0
    %346 = vmatprep.subr.mxu0 0.0
    %347 = vmatpush2.msra.mxu0 0.0
    %348 = vmatprep.subr.mxu0 0.0
    %349 = vmatpush2.msra.mxu0 0.0
    %350 = vmatprep.subr.mxu0 0.0
    %351 = vmatpush2.msra.mxu0 0.0
    %352 = vmatprep.subr.mxu0 0.0
    %353 = vmatpush2.msra.mxu0 0.0
    %354 = vmatprep.mubr.f32.mxu0 0.0
    %v355 = vand.u32 %v176, 4294901760
    %356 = vmatmul.mubr.f32.gmra.mxu0 %v355
    %v357 = vpop.f32.mrf.mxu0
    %v358 = vadd.f32 %v257, %v357
    %v359 = vpop.f32.mrf.mxu0
    %360 = vmatprep.mubr.f32.mxu0 0.0
    %v361 = vand.u32 %v179, 4294901760
    %362 = vmatmul.mubr.f32.gmra.mxu0 %v361
    %v363 = vpop.f32.mrf.mxu0
    %v364 = vadd.f32 %v267, %v363
    %v365 = vpop.f32.mrf.mxu0
    %366 = vdwg.mxu0
    %367 = vmatprep.subr.mxu0 0.0
    %368 = vmatpush1.msra.mxu0 0.0
    %369 = vmatprep.subr.mxu0 0.0
    %370 = vmatpush1.msra.mxu0 0.0
    %371 = vmatprep.subr.mxu0 0.0
    %372 = vmatpush1.msra.mxu0 0.0
    %373 = vmatprep.subr.mxu0 0.0
    %374 = vmatpush1.msra.mxu0 0.0
    %375 = vmatprep.subr.mxu0 0.0
    %376 = vmatpush1.msra.mxu0 0.0
    %377 = vmatprep.subr.mxu0 0.0
    %378 = vmatpush1.msra.mxu0 0.0
    %379 = vmatprep.subr.mxu0 0.0
    %380 = vmatpush1.msra.mxu0 0.0
    %381 = vmatprep.subr.mxu0 0.0
    %382 = vmatpush1.msra.mxu0 0.0
    %383 = vmatprep.subr.mxu0 0.0
    %384 = vmatpush1.msra.mxu0 0.0
    %385 = vmatprep.subr.mxu0 0.0
    %386 = vmatpush1.msra.mxu0 0.0
    %387 = vmatprep.subr.mxu0 0.0
    %388 = vmatpush1.msra.mxu0 0.0
    %389 = vmatprep.subr.mxu0 0.0
    %390 = vmatpush1.msra.mxu0 0.0
    %391 = vmatprep.subr.mxu0 0.0
    %v392 = vand.u32 %v96, 4294901760
    %v393 = vsub.f32 %v96, %v392
    %394 = vmatpush1.msra.mxu0 %v393
    %395 = vmatprep.subr.mxu0 0.0
    %v396 = vand.u32 %v95, 4294901760
    %v397 = vsub.f32 %v95, %v396
    %398 = vmatpush1.msra.mxu0 %v397
    %399 = vmatprep.subr.mxu0 0.0
    %v400 = vand.u32 %v94, 4294901760
    %v401 = vsub.f32 %v94, %v400
    %402 = vmatpush1.msra.mxu0 %v401
    %403 = vmatprep.subr.mxu0 0.0
    %v404 = vand.u32 %v93, 4294901760
    %v405 = vsub.f32 %v93, %v404
    %406 = vmatpush1.msra.mxu0 %v405
    %407 = vmatprep.subr.mxu0 0.0
    %408 = vmatpush2.msra.mxu0 0.0
    %409 = vmatprep.subr.mxu0 0.0
    %410 = vmatpush2.msra.mxu0 0.0
    %411 = vmatprep.subr.mxu0 0.0
    %412 = vmatpush2.msra.mxu0 0.0
    %413 = vmatprep.subr.mxu0 0.0
    %414 = vmatpush2.msra.mxu0 0.0
    %415 = vmatprep.subr.mxu0 0.0
    %416 = vmatpush2.msra.mxu0 0.0
    %417 = vmatprep.subr.mxu0 0.0
    %418 = vmatpush2.msra.mxu0 0.0
    %419 = vmatprep.subr.mxu0 0.0
    %420 = vmatpush2.msra.mxu0 0.0
    %421 = vmatprep.subr.mxu0 0.0
    %422 = vmatpush2.msra.mxu0 0.0
    %423 = vmatprep.subr.mxu0 0.0
    %424 = vmatpush2.msra.mxu0 0.0
    %425 = vmatprep.subr.mxu0 0.0
    %426 = vmatpush2.msra.mxu0 0.0
    %427 = vmatprep.subr.mxu0 0.0
    %428 = vmatpush2.msra.mxu0 0.0
    %429 = vmatprep.subr.mxu0 0.0
    %430 = vmatpush2.msra.mxu0 0.0
    %431 = vmatprep.subr.mxu0 0.0
    %432 = vmatpush2.msra.mxu0 0.0
    %433 = vmatprep.subr.mxu0 0.0
    %434 = vmatpush2.msra.mxu0 0.0
    %435 = vmatprep.subr.mxu0 0.0
    %436 = vmatpush2.msra.mxu0 0.0
    %437 = vmatprep.subr.mxu0 0.0
    %438 = vmatpush2.msra.mxu0 0.0
    %439 = vmatprep.mubr.f32.mxu0 0.0
    %v440 = vand.u32 %v176, 4294901760
    %v441 = vsub.f32 %v176, %v440
    %442 = vmatmul.mubr.f32.gmra.mxu0 %v441
    %v443 = vpop.f32.mrf.mxu0
    %v444 = vadd.f32 %v358, %v443
    %v445 = vpop.f32.mrf.mxu0
    %446 = vmatprep.mubr.f32.mxu0 0.0
    %v447 = vand.u32 %v179, 4294901760
    %v448 = vsub.f32 %v179, %v447
    %449 = vmatmul.mubr.f32.gmra.mxu0 %v448
    %v450 = vpop.f32.mrf.mxu0
    %v451 = vadd.f32 %v364, %v450
    %v452 = vpop.f32.mrf.mxu0
    %453 = vdwg.mxu0
    %454 = vmatprep.subr.mxu0 0.0
    %455 = vmatpush1.msra.mxu0 0.0
    %456 = vmatprep.subr.mxu0 0.0
    %457 = vmatpush1.msra.mxu0 0.0
    %458 = vmatprep.subr.mxu0 0.0
    %459 = vmatpush1.msra.mxu0 0.0
    %460 = vmatprep.subr.mxu0 0.0
    %461 = vmatpush1.msra.mxu0 0.0
    %462 = vmatprep.subr.mxu0 0.0
    %463 = vmatpush1.msra.mxu0 0.0
    %464 = vmatprep.subr.mxu0 0.0
    %465 = vmatpush1.msra.mxu0 0.0
    %466 = vmatprep.subr.mxu0 0.0
    %467 = vmatpush1.msra.mxu0 0.0
    %468 = vmatprep.subr.mxu0 0.0
    %469 = vmatpush1.msra.mxu0 0.0
    %470 = vmatprep.subr.mxu0 0.0
    %471 = vmatpush1.msra.mxu0 0.0
    %472 = vmatprep.subr.mxu0 0.0
    %473 = vmatpush1.msra.mxu0 0.0
    %474 = vmatprep.subr.mxu0 0.0
    %475 = vmatpush1.msra.mxu0 0.0
    %476 = vmatprep.subr.mxu0 0.0
    %477 = vmatpush1.msra.mxu0 0.0
    %478 = vmatprep.subr.mxu0 0.0
    %v479 = vand.u32 %v96, 4294901760
    %480 = vmatpush1.msra.mxu0 %v479
    %481 = vmatprep.subr.mxu0 0.0
    %v482 = vand.u32 %v95, 4294901760
    %483 = vmatpush1.msra.mxu0 %v482
    %484 = vmatprep.subr.mxu0 0.0
    %v485 = vand.u32 %v94, 4294901760
    %486 = vmatpush1.msra.mxu0 %v485
    %487 = vmatprep.subr.mxu0 0.0
    %v488 = vand.u32 %v93, 4294901760
    %489 = vmatpush1.msra.mxu0 %v488
    %490 = vmatprep.subr.mxu0 0.0
    %491 = vmatpush2.msra.mxu0 0.0
    %492 = vmatprep.subr.mxu0 0.0
    %493 = vmatpush2.msra.mxu0 0.0
    %494 = vmatprep.subr.mxu0 0.0
    %495 = vmatpush2.msra.mxu0 0.0
    %496 = vmatprep.subr.mxu0 0.0
    %497 = vmatpush2.msra.mxu0 0.0
    %498 = vmatprep.subr.mxu0 0.0
    %499 = vmatpush2.msra.mxu0 0.0
    %500 = vmatprep.subr.mxu0 0.0
    %501 = vmatpush2.msra.mxu0 0.0
    %502 = vmatprep.subr.mxu0 0.0
    %503 = vmatpush2.msra.mxu0 0.0
    %504 = vmatprep.subr.mxu0 0.0
    %505 = vmatpush2.msra.mxu0 0.0
    %506 = vmatprep.subr.mxu0 0.0
    %507 = vmatpush2.msra.mxu0 0.0
    %508 = vmatprep.subr.mxu0 0.0
    %509 = vmatpush2.msra.mxu0 0.0
    %510 = vmatprep.subr.mxu0 0.0
    %511 = vmatpush2.msra.mxu0 0.0
    %512 = vmatprep.subr.mxu0 0.0
    %513 = vmatpush2.msra.mxu0 0.0
    %514 = vmatprep.subr.mxu0 0.0
    %515 = vmatpush2.msra.mxu0 0.0
    %516 = vmatprep.subr.mxu0 0.0
    %517 = vmatpush2.msra.mxu0 0.0
    %518 = vmatprep.subr.mxu0 0.0
    %519 = vmatpush2.msra.mxu0 0.0
    %520 = vmatprep.subr.mxu0 0.0
    %521 = vmatpush2.msra.mxu0 0.0
    %522 = vmatprep.mubr.f32.mxu0 0.0
    %v523 = vand.u32 %v176, 4294901760
    %v524 = vsub.f32 %v176, %v523
    %v525 = vand.u32 %v524, 4294901760
    %526 = vmatmul.mubr.f32.gmra.mxu0 %v525
    %v527 = vpop.f32.mrf.mxu0
    %v528 = vadd.f32 %v444, %v527
    %v529 = vpop.f32.mrf.mxu0
    %530 = vmatprep.mubr.f32.mxu0 0.0
    %v531 = vand.u32 %v179, 4294901760
    %v532 = vsub.f32 %v179, %v531
    %v533 = vand.u32 %v532, 4294901760
    %534 = vmatmul.mubr.f32.gmra.mxu0 %v533
    %v535 = vpop.f32.mrf.mxu0
    %v536 = vadd.f32 %v451, %v535
    %v537 = vpop.f32.mrf.mxu0
    %538 = vdwg.mxu0
    %539 = vmatprep.subr.mxu0 0.0
    %540 = vmatpush1.msra.mxu0 0.0
    %541 = vmatprep.subr.mxu0 0.0
    %542 = vmatpush1.msra.mxu0 0.0
    %543 = vmatprep.subr.mxu0 0.0
    %544 = vmatpush1.msra.mxu0 0.0
    %545 = vmatprep.subr.mxu0 0.0
    %546 = vmatpush1.msra.mxu0 0.0
    %547 = vmatprep.subr.mxu0 0.0
    %548 = vmatpush1.msra.mxu0 0.0
    %549 = vmatprep.subr.mxu0 0.0
    %550 = vmatpush1.msra.mxu0 0.0
    %551 = vmatprep.subr.mxu0 0.0
    %552 = vmatpush1.msra.mxu0 0.0
    %553 = vmatprep.subr.mxu0 0.0
    %554 = vmatpush1.msra.mxu0 0.0
    %555 = vmatprep.subr.mxu0 0.0
    %556 = vmatpush1.msra.mxu0 0.0
    %557 = vmatprep.subr.mxu0 0.0
    %558 = vmatpush1.msra.mxu0 0.0
    %559 = vmatprep.subr.mxu0 0.0
    %560 = vmatpush1.msra.mxu0 0.0
    %561 = vmatprep.subr.mxu0 0.0
    %562 = vmatpush1.msra.mxu0 0.0
    %563 = vmatprep.subr.mxu0 0.0
    %v564 = vand.u32 %v96, 4294901760
    %v565 = vsub.f32 %v96, %v564
    %v566 = vand.u32 %v565, 4294901760
    %567 = vmatpush1.msra.mxu0 %v566
    %568 = vmatprep.subr.mxu0 0.0
    %v569 = vand.u32 %v95, 4294901760
    %v570 = vsub.f32 %v95, %v569
    %v571 = vand.u32 %v570, 4294901760
    %572 = vmatpush1.msra.mxu0 %v571
    %573 = vmatprep.subr.mxu0 0.0
    %v574 = vand.u32 %v94, 4294901760
    %v575 = vsub.f32 %v94, %v574
    %v576 = vand.u32 %v575, 4294901760
    %577 = vmatpush1.msra.mxu0 %v576
    %578 = vmatprep.subr.mxu0 0.0
    %v579 = vand.u32 %v93, 4294901760
    %v580 = vsub.f32 %v93, %v579
    %v581 = vand.u32 %v580, 4294901760
    %582 = vmatpush1.msra.mxu0 %v581
    %583 = vmatprep.subr.mxu0 0.0
    %584 = vmatpush2.msra.mxu0 0.0
    %585 = vmatprep.subr.mxu0 0.0
    %586 = vmatpush2.msra.mxu0 0.0
    %587 = vmatprep.subr.mxu0 0.0
    %588 = vmatpush2.msra.mxu0 0.0
    %589 = vmatprep.subr.mxu0 0.0
    %590 = vmatpush2.msra.mxu0 0.0
    %591 = vmatprep.subr.mxu0 0.0
    %592 = vmatpush2.msra.mxu0 0.0
    %593 = vmatprep.subr.mxu0 0.0
    %594 = vmatpush2.msra.mxu0 0.0
    %595 = vmatprep.subr.mxu0 0.0
    %596 = vmatpush2.msra.mxu0 0.0
    %597 = vmatprep.subr.mxu0 0.0
    %598 = vmatpush2.msra.mxu0 0.0
    %599 = vmatprep.subr.mxu0 0.0
    %600 = vmatpush2.msra.mxu0 0.0
    %601 = vmatprep.subr.mxu0 0.0
    %602 = vmatpush2.msra.mxu0 0.0
    %603 = vmatprep.subr.mxu0 0.0
    %604 = vmatpush2.msra.mxu0 0.0
    %605 = vmatprep.subr.mxu0 0.0
    %606 = vmatpush2.msra.mxu0 0.0
    %607 = vmatprep.subr.mxu0 0.0
    %608 = vmatpush2.msra.mxu0 0.0
    %609 = vmatprep.subr.mxu0 0.0
    %610 = vmatpush2.msra.mxu0 0.0
    %611 = vmatprep.subr.mxu0 0.0
    %612 = vmatpush2.msra.mxu0 0.0
    %613 = vmatprep.subr.mxu0 0.0
    %614 = vmatpush2.msra.mxu0 0.0
    %615 = vmatprep.mubr.f32.mxu0 0.0
    %v616 = vand.u32 %v176, 4294901760
    %617 = vmatmul.mubr.f32.gmra.mxu0 %v616
    %v618 = vpop.f32.mrf.mxu0
    %v619 = vadd.f32 %v528, %v618
    %v620 = vpop.f32.mrf.mxu0
    %621 = vmatprep.mubr.f32.mxu0 0.0
    %v622 = vand.u32 %v179, 4294901760
    %623 = vmatmul.mubr.f32.gmra.mxu0 %v622
    %v624 = vpop.f32.mrf.mxu0
    %v625 = vadd.f32 %v536, %v624
    %v626 = vpop.f32.mrf.mxu0
    %627 = vdwg.mxu0
    %628 = vmatprep.subr.mxu0 0.0
    %629 = vmatpush1.msra.mxu0 0.0
    %630 = vmatprep.subr.mxu0 0.0
    %631 = vmatpush1.msra.mxu0 0.0
    %632 = vmatprep.subr.mxu0 0.0
    %633 = vmatpush1.msra.mxu0 0.0
    %634 = vmatprep.subr.mxu0 0.0
    %635 = vmatpush1.msra.mxu0 0.0
    %636 = vmatprep.subr.mxu0 0.0
    %637 = vmatpush1.msra.mxu0 0.0
    %638 = vmatprep.subr.mxu0 0.0
    %639 = vmatpush1.msra.mxu0 0.0
    %640 = vmatprep.subr.mxu0 0.0
    %641 = vmatpush1.msra.mxu0 0.0
    %642 = vmatprep.subr.mxu0 0.0
    %643 = vmatpush1.msra.mxu0 0.0
    %644 = vmatprep.subr.mxu0 0.0
    %645 = vmatpush1.msra.mxu0 0.0
    %646 = vmatprep.subr.mxu0 0.0
    %647 = vmatpush1.msra.mxu0 0.0
    %648 = vmatprep.subr.mxu0 0.0
    %649 = vmatpush1.msra.mxu0 0.0
    %650 = vmatprep.subr.mxu0 0.0
    %651 = vmatpush1.msra.mxu0 0.0
    %652 = vmatprep.subr.mxu0 0.0
    %v653 = vand.u32 %v96, 4294901760
    %654 = vmatpush1.msra.mxu0 %v653
    %655 = vmatprep.subr.mxu0 0.0
    %v656 = vand.u32 %v95, 4294901760
    %657 = vmatpush1.msra.mxu0 %v656
    %658 = vmatprep.subr.mxu0 0.0
    %v659 = vand.u32 %v94, 4294901760
    %660 = vmatpush1.msra.mxu0 %v659
    %661 = vmatprep.subr.mxu0 0.0
    %v662 = vand.u32 %v93, 4294901760
    %663 = vmatpush1.msra.mxu0 %v662
    %664 = vmatprep.subr.mxu0 0.0
    %665 = vmatpush2.msra.mxu0 0.0
    %666 = vmatprep.subr.mxu0 0.0
    %667 = vmatpush2.msra.mxu0 0.0
    %668 = vmatprep.subr.mxu0 0.0
    %669 = vmatpush2.msra.mxu0 0.0
    %670 = vmatprep.subr.mxu0 0.0
    %671 = vmatpush2.msra.mxu0 0.0
    %672 = vmatprep.subr.mxu0 0.0
    %673 = vmatpush2.msra.mxu0 0.0
    %674 = vmatprep.subr.mxu0 0.0
    %675 = vmatpush2.msra.mxu0 0.0
    %676 = vmatprep.subr.mxu0 0.0
    %677 = vmatpush2.msra.mxu0 0.0
    %678 = vmatprep.subr.mxu0 0.0
    %679 = vmatpush2.msra.mxu0 0.0
    %680 = vmatprep.subr.mxu0 0.0
    %681 = vmatpush2.msra.mxu0 0.0
    %682 = vmatprep.subr.mxu0 0.0
    %683 = vmatpush2.msra.mxu0 0.0
    %684 = vmatprep.subr.mxu0 0.0
    %685 = vmatpush2.msra.mxu0 0.0
    %686 = vmatprep.subr.mxu0 0.0
    %687 = vmatpush2.msra.mxu0 0.0
    %688 = vmatprep.subr.mxu0 0.0
    %689 = vmatpush2.msra.mxu0 0.0
    %690 = vmatprep.subr.mxu0 0.0
    %691 = vmatpush2.msra.mxu0 0.0
    %692 = vmatprep.subr.mxu0 0.0
    %693 = vmatpush2.msra.mxu0 0.0
    %694 = vmatprep.subr.mxu0 0.0
    %695 = vmatpush2.msra.mxu0 0.0
    %696 = vmatprep.mubr.f32.mxu0 0.0
    %v697 = vand.u32 %v176, 4294901760
    %698 = vmatmul.mubr.f32.gmra.mxu0 %v697
    %v699 = vpop.f32.mrf.mxu0
    %v700 = vadd.f32 %v619, %v699
    %v701 = vpop.f32.mrf.mxu0
    %702 = vmatprep.mubr.f32.mxu0 0.0
    %v703 = vand.u32 %v179, 4294901760
    %704 = vmatmul.mubr.f32.gmra.mxu0 %v703
    %v705 = vpop.f32.mrf.mxu0
    %v706 = vadd.f32 %v625, %v705
    %v707 = vpop.f32.mrf.mxu0
    %708 = vdwg.mxu0
    %v710 = vsel %vm129, %v167, 0
    %v713 = vsel %vm129, %v168, 0
    %715 = vmatprep.subr.mxu0 0.0
    %716 = vmatpush1.msra.mxu0 0.0
    %717 = vmatprep.subr.mxu0 0.0
    %718 = vmatpush1.msra.mxu0 0.0
    %719 = vmatprep.subr.mxu0 0.0
    %720 = vmatpush1.msra.mxu0 0.0
    %721 = vmatprep.subr.mxu0 0.0
    %722 = vmatpush1.msra.mxu0 0.0
    %723 = vmatprep.subr.mxu0 0.0
    %724 = vmatpush1.msra.mxu0 0.0
    %725 = vmatprep.subr.mxu0 0.0
    %726 = vmatpush1.msra.mxu0 0.0
    %727 = vmatprep.subr.mxu0 0.0
    %728 = vmatpush1.msra.mxu0 0.0
    %729 = vmatprep.subr.mxu0 0.0
    %730 = vmatpush1.msra.mxu0 0.0
    %731 = vmatprep.subr.mxu0 0.0
    %732 = vmatpush1.msra.mxu0 0.0
    %733 = vmatprep.subr.mxu0 0.0
    %734 = vmatpush1.msra.mxu0 0.0
    %735 = vmatprep.subr.mxu0 0.0
    %736 = vmatpush1.msra.mxu0 0.0
    %737 = vmatprep.subr.mxu0 0.0
    %738 = vmatpush1.msra.mxu0 0.0
    %739 = vmatprep.subr.mxu0 0.0
    %v740 = vand.u32 %v100, 4294901760
    %741 = vmatpush1.msra.mxu0 %v740
    %742 = vmatprep.subr.mxu0 0.0
    %v743 = vand.u32 %v99, 4294901760
    %744 = vmatpush1.msra.mxu0 %v743
    %745 = vmatprep.subr.mxu0 0.0
    %v746 = vand.u32 %v98, 4294901760
    %747 = vmatpush1.msra.mxu0 %v746
    %748 = vmatprep.subr.mxu0 0.0
    %v749 = vand.u32 %v97, 4294901760
    %750 = vmatpush1.msra.mxu0 %v749
    %751 = vmatprep.subr.mxu0 0.0
    %752 = vmatpush2.msra.mxu0 0.0
    %753 = vmatprep.subr.mxu0 0.0
    %754 = vmatpush2.msra.mxu0 0.0
    %755 = vmatprep.subr.mxu0 0.0
    %756 = vmatpush2.msra.mxu0 0.0
    %757 = vmatprep.subr.mxu0 0.0
    %758 = vmatpush2.msra.mxu0 0.0
    %759 = vmatprep.subr.mxu0 0.0
    %760 = vmatpush2.msra.mxu0 0.0
    %761 = vmatprep.subr.mxu0 0.0
    %762 = vmatpush2.msra.mxu0 0.0
    %763 = vmatprep.subr.mxu0 0.0
    %764 = vmatpush2.msra.mxu0 0.0
    %765 = vmatprep.subr.mxu0 0.0
    %766 = vmatpush2.msra.mxu0 0.0
    %767 = vmatprep.subr.mxu0 0.0
    %768 = vmatpush2.msra.mxu0 0.0
    %769 = vmatprep.subr.mxu0 0.0
    %770 = vmatpush2.msra.mxu0 0.0
    %771 = vmatprep.subr.mxu0 0.0
    %772 = vmatpush2.msra.mxu0 0.0
    %773 = vmatprep.subr.mxu0 0.0
    %774 = vmatpush2.msra.mxu0 0.0
    %775 = vmatprep.subr.mxu0 0.0
    %776 = vmatpush2.msra.mxu0 0.0
    %777 = vmatprep.subr.mxu0 0.0
    %778 = vmatpush2.msra.mxu0 0.0
    %779 = vmatprep.subr.mxu0 0.0
    %780 = vmatpush2.msra.mxu0 0.0
    %781 = vmatprep.subr.mxu0 0.0
    %782 = vmatpush2.msra.mxu0 0.0
    %783 = vmatprep.mubr.f32.mxu0 0.0
    %v784 = vand.u32 %v710, 4294901760
    %v785 = vsub.f32 %v710, %v784
    %v786 = vand.u32 %v785, 4294901760
    %v787 = vsub.f32 %v785, %v786
    %v788 = vand.u32 %v787, 4294901760
    %789 = vmatmul.mubr.f32.gmra.mxu0 %v788
    %v790 = vpop.f32.mrf.mxu0
    %v791 = vadd.f32 0.0, %v790
    %v792 = vpop.f32.mrf.mxu0
    %793 = vmatprep.mubr.f32.mxu0 0.0
    %v794 = vand.u32 %v713, 4294901760
    %v795 = vsub.f32 %v713, %v794
    %v796 = vand.u32 %v795, 4294901760
    %v797 = vsub.f32 %v795, %v796
    %v798 = vand.u32 %v797, 4294901760
    %799 = vmatmul.mubr.f32.gmra.mxu0 %v798
    %v800 = vpop.f32.mrf.mxu0
    %v801 = vadd.f32 0.0, %v800
    %v802 = vpop.f32.mrf.mxu0
    %803 = vdwg.mxu0
    %804 = vmatprep.subr.mxu0 0.0
    %805 = vmatpush1.msra.mxu0 0.0
    %806 = vmatprep.subr.mxu0 0.0
    %807 = vmatpush1.msra.mxu0 0.0
    %808 = vmatprep.subr.mxu0 0.0
    %809 = vmatpush1.msra.mxu0 0.0
    %810 = vmatprep.subr.mxu0 0.0
    %811 = vmatpush1.msra.mxu0 0.0
    %812 = vmatprep.subr.mxu0 0.0
    %813 = vmatpush1.msra.mxu0 0.0
    %814 = vmatprep.subr.mxu0 0.0
    %815 = vmatpush1.msra.mxu0 0.0
    %816 = vmatprep.subr.mxu0 0.0
    %817 = vmatpush1.msra.mxu0 0.0
    %818 = vmatprep.subr.mxu0 0.0
    %819 = vmatpush1.msra.mxu0 0.0
    %820 = vmatprep.subr.mxu0 0.0
    %821 = vmatpush1.msra.mxu0 0.0
    %822 = vmatprep.subr.mxu0 0.0
    %823 = vmatpush1.msra.mxu0 0.0
    %824 = vmatprep.subr.mxu0 0.0
    %825 = vmatpush1.msra.mxu0 0.0
    %826 = vmatprep.subr.mxu0 0.0
    %827 = vmatpush1.msra.mxu0 0.0
    %828 = vmatprep.subr.mxu0 0.0
    %v829 = vand.u32 %v100, 4294901760
    %v830 = vsub.f32 %v100, %v829
    %v831 = vand.u32 %v830, 4294901760
    %v832 = vsub.f32 %v830, %v831
    %v833 = vand.u32 %v832, 4294901760
    %834 = vmatpush1.msra.mxu0 %v833
    %835 = vmatprep.subr.mxu0 0.0
    %v836 = vand.u32 %v99, 4294901760
    %v837 = vsub.f32 %v99, %v836
    %v838 = vand.u32 %v837, 4294901760
    %v839 = vsub.f32 %v837, %v838
    %v840 = vand.u32 %v839, 4294901760
    %841 = vmatpush1.msra.mxu0 %v840
    %842 = vmatprep.subr.mxu0 0.0
    %v843 = vand.u32 %v98, 4294901760
    %v844 = vsub.f32 %v98, %v843
    %v845 = vand.u32 %v844, 4294901760
    %v846 = vsub.f32 %v844, %v845
    %v847 = vand.u32 %v846, 4294901760
    %848 = vmatpush1.msra.mxu0 %v847
    %849 = vmatprep.subr.mxu0 0.0
    %v850 = vand.u32 %v97, 4294901760
    %v851 = vsub.f32 %v97, %v850
    %v852 = vand.u32 %v851, 4294901760
    %v853 = vsub.f32 %v851, %v852
    %v854 = vand.u32 %v853, 4294901760
    %855 = vmatpush1.msra.mxu0 %v854
    %856 = vmatprep.subr.mxu0 0.0
    %857 = vmatpush2.msra.mxu0 0.0
    %858 = vmatprep.subr.mxu0 0.0
    %859 = vmatpush2.msra.mxu0 0.0
    %860 = vmatprep.subr.mxu0 0.0
    %861 = vmatpush2.msra.mxu0 0.0
    %862 = vmatprep.subr.mxu0 0.0
    %863 = vmatpush2.msra.mxu0 0.0
    %864 = vmatprep.subr.mxu0 0.0
    %865 = vmatpush2.msra.mxu0 0.0
    %866 = vmatprep.subr.mxu0 0.0
    %867 = vmatpush2.msra.mxu0 0.0
    %868 = vmatprep.subr.mxu0 0.0
    %869 = vmatpush2.msra.mxu0 0.0
    %870 = vmatprep.subr.mxu0 0.0
    %871 = vmatpush2.msra.mxu0 0.0
    %872 = vmatprep.subr.mxu0 0.0
    %873 = vmatpush2.msra.mxu0 0.0
    %874 = vmatprep.subr.mxu0 0.0
    %875 = vmatpush2.msra.mxu0 0.0
    %876 = vmatprep.subr.mxu0 0.0
    %877 = vmatpush2.msra.mxu0 0.0
    %878 = vmatprep.subr.mxu0 0.0
    %879 = vmatpush2.msra.mxu0 0.0
    %880 = vmatprep.subr.mxu0 0.0
    %881 = vmatpush2.msra.mxu0 0.0
    %882 = vmatprep.subr.mxu0 0.0
    %883 = vmatpush2.msra.mxu0 0.0
    %884 = vmatprep.subr.mxu0 0.0
    %885 = vmatpush2.msra.mxu0 0.0
    %886 = vmatprep.subr.mxu0 0.0
    %887 = vmatpush2.msra.mxu0 0.0
    %888 = vmatprep.mubr.f32.mxu0 0.0
    %v889 = vand.u32 %v710, 4294901760
    %890 = vmatmul.mubr.f32.gmra.mxu0 %v889
    %v891 = vpop.f32.mrf.mxu0
    %v892 = vadd.f32 %v791, %v891
    %v893 = vpop.f32.mrf.mxu0
    %894 = vmatprep.mubr.f32.mxu0 0.0
    %v895 = vand.u32 %v713, 4294901760
    %896 = vmatmul.mubr.f32.gmra.mxu0 %v895
    %v897 = vpop.f32.mrf.mxu0
    %v898 = vadd.f32 %v801, %v897
    %v899 = vpop.f32.mrf.mxu0
    %900 = vdwg.mxu0
    %901 = vmatprep.subr.mxu0 0.0
    %902 = vmatpush1.msra.mxu0 0.0
    %903 = vmatprep.subr.mxu0 0.0
    %904 = vmatpush1.msra.mxu0 0.0
    %905 = vmatprep.subr.mxu0 0.0
    %906 = vmatpush1.msra.mxu0 0.0
    %907 = vmatprep.subr.mxu0 0.0
    %908 = vmatpush1.msra.mxu0 0.0
    %909 = vmatprep.subr.mxu0 0.0
    %910 = vmatpush1.msra.mxu0 0.0
    %911 = vmatprep.subr.mxu0 0.0
    %912 = vmatpush1.msra.mxu0 0.0
    %913 = vmatprep.subr.mxu0 0.0
    %914 = vmatpush1.msra.mxu0 0.0
    %915 = vmatprep.subr.mxu0 0.0
    %916 = vmatpush1.msra.mxu0 0.0
    %917 = vmatprep.subr.mxu0 0.0
    %918 = vmatpush1.msra.mxu0 0.0
    %919 = vmatprep.subr.mxu0 0.0
    %920 = vmatpush1.msra.mxu0 0.0
    %921 = vmatprep.subr.mxu0 0.0
    %922 = vmatpush1.msra.mxu0 0.0
    %923 = vmatprep.subr.mxu0 0.0
    %924 = vmatpush1.msra.mxu0 0.0
    %925 = vmatprep.subr.mxu0 0.0
    %v926 = vand.u32 %v100, 4294901760
    %v927 = vsub.f32 %v100, %v926
    %928 = vmatpush1.msra.mxu0 %v927
    %929 = vmatprep.subr.mxu0 0.0
    %v930 = vand.u32 %v99, 4294901760
    %v931 = vsub.f32 %v99, %v930
    %932 = vmatpush1.msra.mxu0 %v931
    %933 = vmatprep.subr.mxu0 0.0
    %v934 = vand.u32 %v98, 4294901760
    %v935 = vsub.f32 %v98, %v934
    %936 = vmatpush1.msra.mxu0 %v935
    %937 = vmatprep.subr.mxu0 0.0
    %v938 = vand.u32 %v97, 4294901760
    %v939 = vsub.f32 %v97, %v938
    %940 = vmatpush1.msra.mxu0 %v939
    %941 = vmatprep.subr.mxu0 0.0
    %942 = vmatpush2.msra.mxu0 0.0
    %943 = vmatprep.subr.mxu0 0.0
    %944 = vmatpush2.msra.mxu0 0.0
    %945 = vmatprep.subr.mxu0 0.0
    %946 = vmatpush2.msra.mxu0 0.0
    %947 = vmatprep.subr.mxu0 0.0
    %948 = vmatpush2.msra.mxu0 0.0
    %949 = vmatprep.subr.mxu0 0.0
    %950 = vmatpush2.msra.mxu0 0.0
    %951 = vmatprep.subr.mxu0 0.0
    %952 = vmatpush2.msra.mxu0 0.0
    %953 = vmatprep.subr.mxu0 0.0
    %954 = vmatpush2.msra.mxu0 0.0
    %955 = vmatprep.subr.mxu0 0.0
    %956 = vmatpush2.msra.mxu0 0.0
    %957 = vmatprep.subr.mxu0 0.0
    %958 = vmatpush2.msra.mxu0 0.0
    %959 = vmatprep.subr.mxu0 0.0
    %960 = vmatpush2.msra.mxu0 0.0
    %961 = vmatprep.subr.mxu0 0.0
    %962 = vmatpush2.msra.mxu0 0.0
    %963 = vmatprep.subr.mxu0 0.0
    %964 = vmatpush2.msra.mxu0 0.0
    %965 = vmatprep.subr.mxu0 0.0
    %966 = vmatpush2.msra.mxu0 0.0
    %967 = vmatprep.subr.mxu0 0.0
    %968 = vmatpush2.msra.mxu0 0.0
    %969 = vmatprep.subr.mxu0 0.0
    %970 = vmatpush2.msra.mxu0 0.0
    %971 = vmatprep.subr.mxu0 0.0
    %972 = vmatpush2.msra.mxu0 0.0
    %973 = vmatprep.mubr.f32.mxu0 0.0
    %v974 = vand.u32 %v710, 4294901760
    %v975 = vsub.f32 %v710, %v974
    %976 = vmatmul.mubr.f32.gmra.mxu0 %v975
    %v977 = vpop.f32.mrf.mxu0
    %v978 = vadd.f32 %v892, %v977
    %v979 = vpop.f32.mrf.mxu0
    %980 = vmatprep.mubr.f32.mxu0 0.0
    %v981 = vand.u32 %v713, 4294901760
    %v982 = vsub.f32 %v713, %v981
    %983 = vmatmul.mubr.f32.gmra.mxu0 %v982
    %v984 = vpop.f32.mrf.mxu0
    %v985 = vadd.f32 %v898, %v984
    %v986 = vpop.f32.mrf.mxu0
    %987 = vdwg.mxu0
    %988 = vmatprep.subr.mxu0 0.0
    %989 = vmatpush1.msra.mxu0 0.0
    %990 = vmatprep.subr.mxu0 0.0
    %991 = vmatpush1.msra.mxu0 0.0
    %992 = vmatprep.subr.mxu0 0.0
    %993 = vmatpush1.msra.mxu0 0.0
    %994 = vmatprep.subr.mxu0 0.0
    %995 = vmatpush1.msra.mxu0 0.0
    %996 = vmatprep.subr.mxu0 0.0
    %997 = vmatpush1.msra.mxu0 0.0
    %998 = vmatprep.subr.mxu0 0.0
    %999 = vmatpush1.msra.mxu0 0.0
    %1000 = vmatprep.subr.mxu0 0.0
    %1001 = vmatpush1.msra.mxu0 0.0
    %1002 = vmatprep.subr.mxu0 0.0
    %1003 = vmatpush1.msra.mxu0 0.0
    %1004 = vmatprep.subr.mxu0 0.0
    %1005 = vmatpush1.msra.mxu0 0.0
    %1006 = vmatprep.subr.mxu0 0.0
    %1007 = vmatpush1.msra.mxu0 0.0
    %1008 = vmatprep.subr.mxu0 0.0
    %1009 = vmatpush1.msra.mxu0 0.0
    %1010 = vmatprep.subr.mxu0 0.0
    %1011 = vmatpush1.msra.mxu0 0.0
    %1012 = vmatprep.subr.mxu0 0.0
    %v1013 = vand.u32 %v100, 4294901760
    %1014 = vmatpush1.msra.mxu0 %v1013
    %1015 = vmatprep.subr.mxu0 0.0
    %v1016 = vand.u32 %v99, 4294901760
    %1017 = vmatpush1.msra.mxu0 %v1016
    %1018 = vmatprep.subr.mxu0 0.0
    %v1019 = vand.u32 %v98, 4294901760
    %1020 = vmatpush1.msra.mxu0 %v1019
    %1021 = vmatprep.subr.mxu0 0.0
    %v1022 = vand.u32 %v97, 4294901760
    %1023 = vmatpush1.msra.mxu0 %v1022
    %1024 = vmatprep.subr.mxu0 0.0
    %1025 = vmatpush2.msra.mxu0 0.0
    %1026 = vmatprep.subr.mxu0 0.0
    %1027 = vmatpush2.msra.mxu0 0.0
    %1028 = vmatprep.subr.mxu0 0.0
    %1029 = vmatpush2.msra.mxu0 0.0
    %1030 = vmatprep.subr.mxu0 0.0
    %1031 = vmatpush2.msra.mxu0 0.0
    %1032 = vmatprep.subr.mxu0 0.0
    %1033 = vmatpush2.msra.mxu0 0.0
    %1034 = vmatprep.subr.mxu0 0.0
    %1035 = vmatpush2.msra.mxu0 0.0
    %1036 = vmatprep.subr.mxu0 0.0
    %1037 = vmatpush2.msra.mxu0 0.0
    %1038 = vmatprep.subr.mxu0 0.0
    %1039 = vmatpush2.msra.mxu0 0.0
    %1040 = vmatprep.subr.mxu0 0.0
    %1041 = vmatpush2.msra.mxu0 0.0
    %1042 = vmatprep.subr.mxu0 0.0
    %1043 = vmatpush2.msra.mxu0 0.0
    %1044 = vmatprep.subr.mxu0 0.0
    %1045 = vmatpush2.msra.mxu0 0.0
    %1046 = vmatprep.subr.mxu0 0.0
    %1047 = vmatpush2.msra.mxu0 0.0
    %1048 = vmatprep.subr.mxu0 0.0
    %1049 = vmatpush2.msra.mxu0 0.0
    %1050 = vmatprep.subr.mxu0 0.0
    %1051 = vmatpush2.msra.mxu0 0.0
    %1052 = vmatprep.subr.mxu0 0.0
    %1053 = vmatpush2.msra.mxu0 0.0
    %1054 = vmatprep.subr.mxu0 0.0
    %1055 = vmatpush2.msra.mxu0 0.0
    %1056 = vmatprep.mubr.f32.mxu0 0.0
    %v1057 = vand.u32 %v710, 4294901760
    %v1058 = vsub.f32 %v710, %v1057
    %v1059 = vand.u32 %v1058, 4294901760
    %1060 = vmatmul.mubr.f32.gmra.mxu0 %v1059
    %v1061 = vpop.f32.mrf.mxu0
    %v1062 = vadd.f32 %v978, %v1061
    %v1063 = vpop.f32.mrf.mxu0
    %1064 = vmatprep.mubr.f32.mxu0 0.0
    %v1065 = vand.u32 %v713, 4294901760
    %v1066 = vsub.f32 %v713, %v1065
    %v1067 = vand.u32 %v1066, 4294901760
    %1068 = vmatmul.mubr.f32.gmra.mxu0 %v1067
    %v1069 = vpop.f32.mrf.mxu0
    %v1070 = vadd.f32 %v985, %v1069
    %v1071 = vpop.f32.mrf.mxu0
    %1072 = vdwg.mxu0
    %1073 = vmatprep.subr.mxu0 0.0
    %1074 = vmatpush1.msra.mxu0 0.0
    %1075 = vmatprep.subr.mxu0 0.0
    %1076 = vmatpush1.msra.mxu0 0.0
    %1077 = vmatprep.subr.mxu0 0.0
    %1078 = vmatpush1.msra.mxu0 0.0
    %1079 = vmatprep.subr.mxu0 0.0
    %1080 = vmatpush1.msra.mxu0 0.0
    %1081 = vmatprep.subr.mxu0 0.0
    %1082 = vmatpush1.msra.mxu0 0.0
    %1083 = vmatprep.subr.mxu0 0.0
    %1084 = vmatpush1.msra.mxu0 0.0
    %1085 = vmatprep.subr.mxu0 0.0
    %1086 = vmatpush1.msra.mxu0 0.0
    %1087 = vmatprep.subr.mxu0 0.0
    %1088 = vmatpush1.msra.mxu0 0.0
    %1089 = vmatprep.subr.mxu0 0.0
    %1090 = vmatpush1.msra.mxu0 0.0
    %1091 = vmatprep.subr.mxu0 0.0
    %1092 = vmatpush1.msra.mxu0 0.0
    %1093 = vmatprep.subr.mxu0 0.0
    %1094 = vmatpush1.msra.mxu0 0.0
    %1095 = vmatprep.subr.mxu0 0.0
    %1096 = vmatpush1.msra.mxu0 0.0
    %1097 = vmatprep.subr.mxu0 0.0
    %v1098 = vand.u32 %v100, 4294901760
    %v1099 = vsub.f32 %v100, %v1098
    %v1100 = vand.u32 %v1099, 4294901760
    %1101 = vmatpush1.msra.mxu0 %v1100
    %1102 = vmatprep.subr.mxu0 0.0
    %v1103 = vand.u32 %v99, 4294901760
    %v1104 = vsub.f32 %v99, %v1103
    %v1105 = vand.u32 %v1104, 4294901760
    %1106 = vmatpush1.msra.mxu0 %v1105
    %1107 = vmatprep.subr.mxu0 0.0
    %v1108 = vand.u32 %v98, 4294901760
    %v1109 = vsub.f32 %v98, %v1108
    %v1110 = vand.u32 %v1109, 4294901760
    %1111 = vmatpush1.msra.mxu0 %v1110
    %1112 = vmatprep.subr.mxu0 0.0
    %v1113 = vand.u32 %v97, 4294901760
    %v1114 = vsub.f32 %v97, %v1113
    %v1115 = vand.u32 %v1114, 4294901760
    %1116 = vmatpush1.msra.mxu0 %v1115
    %1117 = vmatprep.subr.mxu0 0.0
    %1118 = vmatpush2.msra.mxu0 0.0
    %1119 = vmatprep.subr.mxu0 0.0
    %1120 = vmatpush2.msra.mxu0 0.0
    %1121 = vmatprep.subr.mxu0 0.0
    %1122 = vmatpush2.msra.mxu0 0.0
    %1123 = vmatprep.subr.mxu0 0.0
    %1124 = vmatpush2.msra.mxu0 0.0
    %1125 = vmatprep.subr.mxu0 0.0
    %1126 = vmatpush2.msra.mxu0 0.0
    %1127 = vmatprep.subr.mxu0 0.0
    %1128 = vmatpush2.msra.mxu0 0.0
    %1129 = vmatprep.subr.mxu0 0.0
    %1130 = vmatpush2.msra.mxu0 0.0
    %1131 = vmatprep.subr.mxu0 0.0
    %1132 = vmatpush2.msra.mxu0 0.0
    %1133 = vmatprep.subr.mxu0 0.0
    %1134 = vmatpush2.msra.mxu0 0.0
    %1135 = vmatprep.subr.mxu0 0.0
    %1136 = vmatpush2.msra.mxu0 0.0
    %1137 = vmatprep.subr.mxu0 0.0
    %1138 = vmatpush2.msra.mxu0 0.0
    %1139 = vmatprep.subr.mxu0 0.0
    %1140 = vmatpush2.msra.mxu0 0.0
    %1141 = vmatprep.subr.mxu0 0.0
    %1142 = vmatpush2.msra.mxu0 0.0
    %1143 = vmatprep.subr.mxu0 0.0
    %1144 = vmatpush2.msra.mxu0 0.0
    %1145 = vmatprep.subr.mxu0 0.0
    %1146 = vmatpush2.msra.mxu0 0.0
    %1147 = vmatprep.subr.mxu0 0.0
    %1148 = vmatpush2.msra.mxu0 0.0
    %1149 = vmatprep.mubr.f32.mxu0 0.0
    %v1150 = vand.u32 %v710, 4294901760
    %1151 = vmatmul.mubr.f32.gmra.mxu0 %v1150
    %v1152 = vpop.f32.mrf.mxu0
    %v1153 = vadd.f32 %v1062, %v1152
    %v1154 = vpop.f32.mrf.mxu0
    %1155 = vmatprep.mubr.f32.mxu0 0.0
    %v1156 = vand.u32 %v713, 4294901760
    %1157 = vmatmul.mubr.f32.gmra.mxu0 %v1156
    %v1158 = vpop.f32.mrf.mxu0
    %v1159 = vadd.f32 %v1070, %v1158
    %v1160 = vpop.f32.mrf.mxu0
    %1161 = vdwg.mxu0
    %1162 = vmatprep.subr.mxu0 0.0
    %1163 = vmatpush1.msra.mxu0 0.0
    %1164 = vmatprep.subr.mxu0 0.0
    %1165 = vmatpush1.msra.mxu0 0.0
    %1166 = vmatprep.subr.mxu0 0.0
    %1167 = vmatpush1.msra.mxu0 0.0
    %1168 = vmatprep.subr.mxu0 0.0
    %1169 = vmatpush1.msra.mxu0 0.0
    %1170 = vmatprep.subr.mxu0 0.0
    %1171 = vmatpush1.msra.mxu0 0.0
    %1172 = vmatprep.subr.mxu0 0.0
    %1173 = vmatpush1.msra.mxu0 0.0
    %1174 = vmatprep.subr.mxu0 0.0
    %1175 = vmatpush1.msra.mxu0 0.0
    %1176 = vmatprep.subr.mxu0 0.0
    %1177 = vmatpush1.msra.mxu0 0.0
    %1178 = vmatprep.subr.mxu0 0.0
    %1179 = vmatpush1.msra.mxu0 0.0
    %1180 = vmatprep.subr.mxu0 0.0
    %1181 = vmatpush1.msra.mxu0 0.0
    %1182 = vmatprep.subr.mxu0 0.0
    %1183 = vmatpush1.msra.mxu0 0.0
    %1184 = vmatprep.subr.mxu0 0.0
    %1185 = vmatpush1.msra.mxu0 0.0
    %1186 = vmatprep.subr.mxu0 0.0
    %v1187 = vand.u32 %v100, 4294901760
    %1188 = vmatpush1.msra.mxu0 %v1187
    %1189 = vmatprep.subr.mxu0 0.0
    %v1190 = vand.u32 %v99, 4294901760
    %1191 = vmatpush1.msra.mxu0 %v1190
    %1192 = vmatprep.subr.mxu0 0.0
    %v1193 = vand.u32 %v98, 4294901760
    %1194 = vmatpush1.msra.mxu0 %v1193
    %1195 = vmatprep.subr.mxu0 0.0
    %v1196 = vand.u32 %v97, 4294901760
    %1197 = vmatpush1.msra.mxu0 %v1196
    %1198 = vmatprep.subr.mxu0 0.0
    %1199 = vmatpush2.msra.mxu0 0.0
    %1200 = vmatprep.subr.mxu0 0.0
    %1201 = vmatpush2.msra.mxu0 0.0
    %1202 = vmatprep.subr.mxu0 0.0
    %1203 = vmatpush2.msra.mxu0 0.0
    %1204 = vmatprep.subr.mxu0 0.0
    %1205 = vmatpush2.msra.mxu0 0.0
    %1206 = vmatprep.subr.mxu0 0.0
    %1207 = vmatpush2.msra.mxu0 0.0
    %1208 = vmatprep.subr.mxu0 0.0
    %1209 = vmatpush2.msra.mxu0 0.0
    %1210 = vmatprep.subr.mxu0 0.0
    %1211 = vmatpush2.msra.mxu0 0.0
    %1212 = vmatprep.subr.mxu0 0.0
    %1213 = vmatpush2.msra.mxu0 0.0
    %1214 = vmatprep.subr.mxu0 0.0
    %1215 = vmatpush2.msra.mxu0 0.0
    %1216 = vmatprep.subr.mxu0 0.0
    %1217 = vmatpush2.msra.mxu0 0.0
    %1218 = vmatprep.subr.mxu0 0.0
    %1219 = vmatpush2.msra.mxu0 0.0
    %1220 = vmatprep.subr.mxu0 0.0
    %1221 = vmatpush2.msra.mxu0 0.0
    %1222 = vmatprep.subr.mxu0 0.0
    %1223 = vmatpush2.msra.mxu0 0.0
    %1224 = vmatprep.subr.mxu0 0.0
    %1225 = vmatpush2.msra.mxu0 0.0
    %1226 = vmatprep.subr.mxu0 0.0
    %1227 = vmatpush2.msra.mxu0 0.0
    %1228 = vmatprep.subr.mxu0 0.0
    %1229 = vmatpush2.msra.mxu0 0.0
    %1230 = vmatprep.mubr.f32.mxu0 0.0
    %v1231 = vand.u32 %v710, 4294901760
    %1232 = vmatmul.mubr.f32.gmra.mxu0 %v1231
    %v1233 = vpop.f32.mrf.mxu0
    %v1234 = vadd.f32 %v1153, %v1233
    %v1235 = vpop.f32.mrf.mxu0
    %1236 = vmatprep.mubr.f32.mxu0 0.0
    %v1237 = vand.u32 %v713, 4294901760
    %1238 = vmatmul.mubr.f32.gmra.mxu0 %v1237
    %v1239 = vpop.f32.mrf.mxu0
    %v1240 = vadd.f32 %v1159, %v1239
    %v1241 = vpop.f32.mrf.mxu0
    %1242 = vdwg.mxu0
    %1245 = vrot.lane.b32.xlu0 %v700, 96
    %v1246 = vpop.permute.xlu0 %1245
    %1247 = vrot.lane.b32.xlu0 %v706, 96
    %v1248 = vpop.permute.xlu0 %1247
    %vm1249 = vcmask 64512
    %v1250 = vsel %vm1249, %v700, 0
    %v1252 = vsel %vm1249, %v706, 0
    %v1254 = vsel %vm1249, %v1246, 0
    %v1256 = vsel %vm1249, %v1248, 0
    %1258 = vmatprep.subr.mxu0 0.0
    %1259 = vmatpush1.xpose.msra.mxu0 0.0
    %1260 = vmatprep.subr.mxu0 0.0
    %1261 = vmatpush1.xpose.msra.mxu0 0.0
    %1262 = vmatprep.subr.mxu0 0.0
    %1263 = vmatpush1.xpose.msra.mxu0 0.0
    %1264 = vmatprep.subr.mxu0 0.0
    %1265 = vmatpush1.xpose.msra.mxu0 0.0
    %1266 = vmatprep.subr.mxu0 0.0
    %1267 = vmatpush1.xpose.msra.mxu0 0.0
    %1268 = vmatprep.subr.mxu0 0.0
    %1269 = vmatpush1.xpose.msra.mxu0 0.0
    %1270 = vmatprep.subr.mxu0 0.0
    %1271 = vmatpush1.xpose.msra.mxu0 0.0
    %1272 = vmatprep.subr.mxu0 0.0
    %1273 = vmatpush1.xpose.msra.mxu0 0.0
    %1274 = vmatprep.subr.mxu0 0.0
    %1275 = vmatpush1.xpose.msra.mxu0 0.0
    %1276 = vmatprep.subr.mxu0 0.0
    %1277 = vmatpush1.xpose.msra.mxu0 0.0
    %1278 = vmatprep.subr.mxu0 0.0
    %1279 = vmatpush1.xpose.msra.mxu0 0.0
    %1280 = vmatprep.subr.mxu0 0.0
    %1281 = vmatpush1.xpose.msra.mxu0 0.0
    %1282 = vmatprep.subr.mxu0 0.0
    %1283 = vmatpush1.xpose.msra.mxu0 0.0
    %1284 = vmatprep.subr.mxu0 0.0
    %1285 = vmatpush1.xpose.msra.mxu0 0.0
    %1286 = vmatprep.subr.mxu0 0.0
    %v1287 = vand.u32 %v1256, 4294901760
    %1288 = vmatpush1.xpose.msra.mxu0 %v1287
    %1289 = vmatprep.subr.mxu0 0.0
    %v1290 = vand.u32 %v1254, 4294901760
    %1291 = vmatpush1.xpose.msra.mxu0 %v1290
    %1292 = vmatprep.subr.mxu0 0.0
    %1293 = vmatpush2.xpose.msra.mxu0 0.0
    %1294 = vmatprep.subr.mxu0 0.0
    %1295 = vmatpush2.xpose.msra.mxu0 0.0
    %1296 = vmatprep.subr.mxu0 0.0
    %1297 = vmatpush2.xpose.msra.mxu0 0.0
    %1298 = vmatprep.subr.mxu0 0.0
    %1299 = vmatpush2.xpose.msra.mxu0 0.0
    %1300 = vmatprep.subr.mxu0 0.0
    %1301 = vmatpush2.xpose.msra.mxu0 0.0
    %1302 = vmatprep.subr.mxu0 0.0
    %1303 = vmatpush2.xpose.msra.mxu0 0.0
    %1304 = vmatprep.subr.mxu0 0.0
    %1305 = vmatpush2.xpose.msra.mxu0 0.0
    %1306 = vmatprep.subr.mxu0 0.0
    %1307 = vmatpush2.xpose.msra.mxu0 0.0
    %1308 = vmatprep.subr.mxu0 0.0
    %1309 = vmatpush2.xpose.msra.mxu0 0.0
    %1310 = vmatprep.subr.mxu0 0.0
    %1311 = vmatpush2.xpose.msra.mxu0 0.0
    %1312 = vmatprep.subr.mxu0 0.0
    %1313 = vmatpush2.xpose.msra.mxu0 0.0
    %1314 = vmatprep.subr.mxu0 0.0
    %1315 = vmatpush2.xpose.msra.mxu0 0.0
    %1316 = vmatprep.subr.mxu0 0.0
    %1317 = vmatpush2.xpose.msra.mxu0 0.0
    %1318 = vmatprep.subr.mxu0 0.0
    %1319 = vmatpush2.xpose.msra.mxu0 0.0
    %1320 = vmatprep.subr.mxu0 0.0
    %1321 = vmatpush2.xpose.msra.mxu0 0.0
    %1322 = vmatprep.subr.mxu0 0.0
    %1323 = vmatpush2.xpose.msra.mxu0 0.0
    %1324 = vmatprep.mubr.f32.mxu0 0.0
    %v1325 = vand.u32 %v1250, 4294901760
    %v1326 = vsub.f32 %v1250, %v1325
    %v1327 = vand.u32 %v1326, 4294901760
    %v1328 = vsub.f32 %v1326, %v1327
    %v1329 = vand.u32 %v1328, 4294901760
    %1330 = vmatmul.mubr.f32.gmra.mxu0 %v1329
    %v1331 = vpop.f32.mrf.mxu0
    %v1332 = vadd.f32 %v91, %v1331
    %v1333 = vpop.f32.mrf.mxu0
    %1334 = vmatprep.mubr.f32.mxu0 0.0
    %v1335 = vand.u32 %v1252, 4294901760
    %v1336 = vsub.f32 %v1252, %v1335
    %v1337 = vand.u32 %v1336, 4294901760
    %v1338 = vsub.f32 %v1336, %v1337
    %v1339 = vand.u32 %v1338, 4294901760
    %1340 = vmatmul.mubr.f32.gmra.mxu0 %v1339
    %v1341 = vpop.f32.mrf.mxu0
    %v1342 = vadd.f32 %v92, %v1341
    %v1343 = vpop.f32.mrf.mxu0
    %1344 = vdwg.mxu0
    %1345 = vmatprep.subr.mxu0 0.0
    %1346 = vmatpush1.xpose.msra.mxu0 0.0
    %1347 = vmatprep.subr.mxu0 0.0
    %1348 = vmatpush1.xpose.msra.mxu0 0.0
    %1349 = vmatprep.subr.mxu0 0.0
    %1350 = vmatpush1.xpose.msra.mxu0 0.0
    %1351 = vmatprep.subr.mxu0 0.0
    %1352 = vmatpush1.xpose.msra.mxu0 0.0
    %1353 = vmatprep.subr.mxu0 0.0
    %1354 = vmatpush1.xpose.msra.mxu0 0.0
    %1355 = vmatprep.subr.mxu0 0.0
    %1356 = vmatpush1.xpose.msra.mxu0 0.0
    %1357 = vmatprep.subr.mxu0 0.0
    %1358 = vmatpush1.xpose.msra.mxu0 0.0
    %1359 = vmatprep.subr.mxu0 0.0
    %1360 = vmatpush1.xpose.msra.mxu0 0.0
    %1361 = vmatprep.subr.mxu0 0.0
    %1362 = vmatpush1.xpose.msra.mxu0 0.0
    %1363 = vmatprep.subr.mxu0 0.0
    %1364 = vmatpush1.xpose.msra.mxu0 0.0
    %1365 = vmatprep.subr.mxu0 0.0
    %1366 = vmatpush1.xpose.msra.mxu0 0.0
    %1367 = vmatprep.subr.mxu0 0.0
    %1368 = vmatpush1.xpose.msra.mxu0 0.0
    %1369 = vmatprep.subr.mxu0 0.0
    %1370 = vmatpush1.xpose.msra.mxu0 0.0
    %1371 = vmatprep.subr.mxu0 0.0
    %1372 = vmatpush1.xpose.msra.mxu0 0.0
    %1373 = vmatprep.subr.mxu0 0.0
    %v1374 = vand.u32 %v1256, 4294901760
    %v1375 = vsub.f32 %v1256, %v1374
    %v1376 = vand.u32 %v1375, 4294901760
    %v1377 = vsub.f32 %v1375, %v1376
    %v1378 = vand.u32 %v1377, 4294901760
    %1379 = vmatpush1.xpose.msra.mxu0 %v1378
    %1380 = vmatprep.subr.mxu0 0.0
    %v1381 = vand.u32 %v1254, 4294901760
    %v1382 = vsub.f32 %v1254, %v1381
    %v1383 = vand.u32 %v1382, 4294901760
    %v1384 = vsub.f32 %v1382, %v1383
    %v1385 = vand.u32 %v1384, 4294901760
    %1386 = vmatpush1.xpose.msra.mxu0 %v1385
    %1387 = vmatprep.subr.mxu0 0.0
    %1388 = vmatpush2.xpose.msra.mxu0 0.0
    %1389 = vmatprep.subr.mxu0 0.0
    %1390 = vmatpush2.xpose.msra.mxu0 0.0
    %1391 = vmatprep.subr.mxu0 0.0
    %1392 = vmatpush2.xpose.msra.mxu0 0.0
    %1393 = vmatprep.subr.mxu0 0.0
    %1394 = vmatpush2.xpose.msra.mxu0 0.0
    %1395 = vmatprep.subr.mxu0 0.0
    %1396 = vmatpush2.xpose.msra.mxu0 0.0
    %1397 = vmatprep.subr.mxu0 0.0
    %1398 = vmatpush2.xpose.msra.mxu0 0.0
    %1399 = vmatprep.subr.mxu0 0.0
    %1400 = vmatpush2.xpose.msra.mxu0 0.0
    %1401 = vmatprep.subr.mxu0 0.0
    %1402 = vmatpush2.xpose.msra.mxu0 0.0
    %1403 = vmatprep.subr.mxu0 0.0
    %1404 = vmatpush2.xpose.msra.mxu0 0.0
    %1405 = vmatprep.subr.mxu0 0.0
    %1406 = vmatpush2.xpose.msra.mxu0 0.0
    %1407 = vmatprep.subr.mxu0 0.0
    %1408 = vmatpush2.xpose.msra.mxu0 0.0
    %1409 = vmatprep.subr.mxu0 0.0
    %1410 = vmatpush2.xpose.msra.mxu0 0.0
    %1411 = vmatprep.subr.mxu0 0.0
    %1412 = vmatpush2.xpose.msra.mxu0 0.0
    %1413 = vmatprep.subr.mxu0 0.0
    %1414 = vmatpush2.xpose.msra.mxu0 0.0
    %1415 = vmatprep.subr.mxu0 0.0
    %1416 = vmatpush2.xpose.msra.mxu0 0.0
    %1417 = vmatprep.subr.mxu0 0.0
    %1418 = vmatpush2.xpose.msra.mxu0 0.0
    %1419 = vmatprep.mubr.f32.mxu0 0.0
    %v1420 = vand.u32 %v1250, 4294901760
    %1421 = vmatmul.mubr.f32.gmra.mxu0 %v1420
    %v1422 = vpop.f32.mrf.mxu0
    %v1423 = vadd.f32 %v1332, %v1422
    %v1424 = vpop.f32.mrf.mxu0
    %1425 = vmatprep.mubr.f32.mxu0 0.0
    %v1426 = vand.u32 %v1252, 4294901760
    %1427 = vmatmul.mubr.f32.gmra.mxu0 %v1426
    %v1428 = vpop.f32.mrf.mxu0
    %v1429 = vadd.f32 %v1342, %v1428
    %v1430 = vpop.f32.mrf.mxu0
    %1431 = vdwg.mxu0
    %1432 = vmatprep.subr.mxu0 0.0
    %1433 = vmatpush1.xpose.msra.mxu0 0.0
    %1434 = vmatprep.subr.mxu0 0.0
    %1435 = vmatpush1.xpose.msra.mxu0 0.0
    %1436 = vmatprep.subr.mxu0 0.0
    %1437 = vmatpush1.xpose.msra.mxu0 0.0
    %1438 = vmatprep.subr.mxu0 0.0
    %1439 = vmatpush1.xpose.msra.mxu0 0.0
    %1440 = vmatprep.subr.mxu0 0.0
    %1441 = vmatpush1.xpose.msra.mxu0 0.0
    %1442 = vmatprep.subr.mxu0 0.0
    %1443 = vmatpush1.xpose.msra.mxu0 0.0
    %1444 = vmatprep.subr.mxu0 0.0
    %1445 = vmatpush1.xpose.msra.mxu0 0.0
    %1446 = vmatprep.subr.mxu0 0.0
    %1447 = vmatpush1.xpose.msra.mxu0 0.0
    %1448 = vmatprep.subr.mxu0 0.0
    %1449 = vmatpush1.xpose.msra.mxu0 0.0
    %1450 = vmatprep.subr.mxu0 0.0
    %1451 = vmatpush1.xpose.msra.mxu0 0.0
    %1452 = vmatprep.subr.mxu0 0.0
    %1453 = vmatpush1.xpose.msra.mxu0 0.0
    %1454 = vmatprep.subr.mxu0 0.0
    %1455 = vmatpush1.xpose.msra.mxu0 0.0
    %1456 = vmatprep.subr.mxu0 0.0
    %1457 = vmatpush1.xpose.msra.mxu0 0.0
    %1458 = vmatprep.subr.mxu0 0.0
    %1459 = vmatpush1.xpose.msra.mxu0 0.0
    %1460 = vmatprep.subr.mxu0 0.0
    %v1461 = vand.u32 %v1256, 4294901760
    %v1462 = vsub.f32 %v1256, %v1461
    %1463 = vmatpush1.xpose.msra.mxu0 %v1462
    %1464 = vmatprep.subr.mxu0 0.0
    %v1465 = vand.u32 %v1254, 4294901760
    %v1466 = vsub.f32 %v1254, %v1465
    %1467 = vmatpush1.xpose.msra.mxu0 %v1466
    %1468 = vmatprep.subr.mxu0 0.0
    %1469 = vmatpush2.xpose.msra.mxu0 0.0
    %1470 = vmatprep.subr.mxu0 0.0
    %1471 = vmatpush2.xpose.msra.mxu0 0.0
    %1472 = vmatprep.subr.mxu0 0.0
    %1473 = vmatpush2.xpose.msra.mxu0 0.0
    %1474 = vmatprep.subr.mxu0 0.0
    %1475 = vmatpush2.xpose.msra.mxu0 0.0
    %1476 = vmatprep.subr.mxu0 0.0
    %1477 = vmatpush2.xpose.msra.mxu0 0.0
    %1478 = vmatprep.subr.mxu0 0.0
    %1479 = vmatpush2.xpose.msra.mxu0 0.0
    %1480 = vmatprep.subr.mxu0 0.0
    %1481 = vmatpush2.xpose.msra.mxu0 0.0
    %1482 = vmatprep.subr.mxu0 0.0
    %1483 = vmatpush2.xpose.msra.mxu0 0.0
    %1484 = vmatprep.subr.mxu0 0.0
    %1485 = vmatpush2.xpose.msra.mxu0 0.0
    %1486 = vmatprep.subr.mxu0 0.0
    %1487 = vmatpush2.xpose.msra.mxu0 0.0
    %1488 = vmatprep.subr.mxu0 0.0
    %1489 = vmatpush2.xpose.msra.mxu0 0.0
    %1490 = vmatprep.subr.mxu0 0.0
    %1491 = vmatpush2.xpose.msra.mxu0 0.0
    %1492 = vmatprep.subr.mxu0 0.0
    %1493 = vmatpush2.xpose.msra.mxu0 0.0
    %1494 = vmatprep.subr.mxu0 0.0
    %1495 = vmatpush2.xpose.msra.mxu0 0.0
    %1496 = vmatprep.subr.mxu0 0.0
    %1497 = vmatpush2.xpose.msra.mxu0 0.0
    %1498 = vmatprep.subr.mxu0 0.0
    %1499 = vmatpush2.xpose.msra.mxu0 0.0
    %1500 = vmatprep.mubr.f32.mxu0 0.0
    %v1501 = vand.u32 %v1250, 4294901760
    %v1502 = vsub.f32 %v1250, %v1501
    %1503 = vmatmul.mubr.f32.gmra.mxu0 %v1502
    %v1504 = vpop.f32.mrf.mxu0
    %v1505 = vadd.f32 %v1423, %v1504
    %v1506 = vpop.f32.mrf.mxu0
    %1507 = vmatprep.mubr.f32.mxu0 0.0
    %v1508 = vand.u32 %v1252, 4294901760
    %v1509 = vsub.f32 %v1252, %v1508
    %1510 = vmatmul.mubr.f32.gmra.mxu0 %v1509
    %v1511 = vpop.f32.mrf.mxu0
    %v1512 = vadd.f32 %v1429, %v1511
    %v1513 = vpop.f32.mrf.mxu0
    %1514 = vdwg.mxu0
    %1515 = vmatprep.subr.mxu0 0.0
    %1516 = vmatpush1.xpose.msra.mxu0 0.0
    %1517 = vmatprep.subr.mxu0 0.0
    %1518 = vmatpush1.xpose.msra.mxu0 0.0
    %1519 = vmatprep.subr.mxu0 0.0
    %1520 = vmatpush1.xpose.msra.mxu0 0.0
    %1521 = vmatprep.subr.mxu0 0.0
    %1522 = vmatpush1.xpose.msra.mxu0 0.0
    %1523 = vmatprep.subr.mxu0 0.0
    %1524 = vmatpush1.xpose.msra.mxu0 0.0
    %1525 = vmatprep.subr.mxu0 0.0
    %1526 = vmatpush1.xpose.msra.mxu0 0.0
    %1527 = vmatprep.subr.mxu0 0.0
    %1528 = vmatpush1.xpose.msra.mxu0 0.0
    %1529 = vmatprep.subr.mxu0 0.0
    %1530 = vmatpush1.xpose.msra.mxu0 0.0
    %1531 = vmatprep.subr.mxu0 0.0
    %1532 = vmatpush1.xpose.msra.mxu0 0.0
    %1533 = vmatprep.subr.mxu0 0.0
    %1534 = vmatpush1.xpose.msra.mxu0 0.0
    %1535 = vmatprep.subr.mxu0 0.0
    %1536 = vmatpush1.xpose.msra.mxu0 0.0
    %1537 = vmatprep.subr.mxu0 0.0
    %1538 = vmatpush1.xpose.msra.mxu0 0.0
    %1539 = vmatprep.subr.mxu0 0.0
    %1540 = vmatpush1.xpose.msra.mxu0 0.0
    %1541 = vmatprep.subr.mxu0 0.0
    %1542 = vmatpush1.xpose.msra.mxu0 0.0
    %1543 = vmatprep.subr.mxu0 0.0
    %v1544 = vand.u32 %v1256, 4294901760
    %1545 = vmatpush1.xpose.msra.mxu0 %v1544
    %1546 = vmatprep.subr.mxu0 0.0
    %v1547 = vand.u32 %v1254, 4294901760
    %1548 = vmatpush1.xpose.msra.mxu0 %v1547
    %1549 = vmatprep.subr.mxu0 0.0
    %1550 = vmatpush2.xpose.msra.mxu0 0.0
    %1551 = vmatprep.subr.mxu0 0.0
    %1552 = vmatpush2.xpose.msra.mxu0 0.0
    %1553 = vmatprep.subr.mxu0 0.0
    %1554 = vmatpush2.xpose.msra.mxu0 0.0
    %1555 = vmatprep.subr.mxu0 0.0
    %1556 = vmatpush2.xpose.msra.mxu0 0.0
    %1557 = vmatprep.subr.mxu0 0.0
    %1558 = vmatpush2.xpose.msra.mxu0 0.0
    %1559 = vmatprep.subr.mxu0 0.0
    %1560 = vmatpush2.xpose.msra.mxu0 0.0
    %1561 = vmatprep.subr.mxu0 0.0
    %1562 = vmatpush2.xpose.msra.mxu0 0.0
    %1563 = vmatprep.subr.mxu0 0.0
    %1564 = vmatpush2.xpose.msra.mxu0 0.0
    %1565 = vmatprep.subr.mxu0 0.0
    %1566 = vmatpush2.xpose.msra.mxu0 0.0
    %1567 = vmatprep.subr.mxu0 0.0
    %1568 = vmatpush2.xpose.msra.mxu0 0.0
    %1569 = vmatprep.subr.mxu0 0.0
    %1570 = vmatpush2.xpose.msra.mxu0 0.0
    %1571 = vmatprep.subr.mxu0 0.0
    %1572 = vmatpush2.xpose.msra.mxu0 0.0
    %1573 = vmatprep.subr.mxu0 0.0
    %1574 = vmatpush2.xpose.msra.mxu0 0.0
    %1575 = vmatprep.subr.mxu0 0.0
    %1576 = vmatpush2.xpose.msra.mxu0 0.0
    %1577 = vmatprep.subr.mxu0 0.0
    %1578 = vmatpush2.xpose.msra.mxu0 0.0
    %1579 = vmatprep.subr.mxu0 0.0
    %1580 = vmatpush2.xpose.msra.mxu0 0.0
    %1581 = vmatprep.mubr.f32.mxu0 0.0
    %v1582 = vand.u32 %v1250, 4294901760
    %v1583 = vsub.f32 %v1250, %v1582
    %v1584 = vand.u32 %v1583, 4294901760
    %1585 = vmatmul.mubr.f32.gmra.mxu0 %v1584
    %v1586 = vpop.f32.mrf.mxu0
    %v1587 = vadd.f32 %v1505, %v1586
    %v1588 = vpop.f32.mrf.mxu0
    %1589 = vmatprep.mubr.f32.mxu0 0.0
    %v1590 = vand.u32 %v1252, 4294901760
    %v1591 = vsub.f32 %v1252, %v1590
    %v1592 = vand.u32 %v1591, 4294901760
    %1593 = vmatmul.mubr.f32.gmra.mxu0 %v1592
    %v1594 = vpop.f32.mrf.mxu0
    %v1595 = vadd.f32 %v1512, %v1594
    %v1596 = vpop.f32.mrf.mxu0
    %1597 = vdwg.mxu0
    %1598 = vmatprep.subr.mxu0 0.0
    %1599 = vmatpush1.xpose.msra.mxu0 0.0
    %1600 = vmatprep.subr.mxu0 0.0
    %1601 = vmatpush1.xpose.msra.mxu0 0.0
    %1602 = vmatprep.subr.mxu0 0.0
    %1603 = vmatpush1.xpose.msra.mxu0 0.0
    %1604 = vmatprep.subr.mxu0 0.0
    %1605 = vmatpush1.xpose.msra.mxu0 0.0
    %1606 = vmatprep.subr.mxu0 0.0
    %1607 = vmatpush1.xpose.msra.mxu0 0.0
    %1608 = vmatprep.subr.mxu0 0.0
    %1609 = vmatpush1.xpose.msra.mxu0 0.0
    %1610 = vmatprep.subr.mxu0 0.0
    %1611 = vmatpush1.xpose.msra.mxu0 0.0
    %1612 = vmatprep.subr.mxu0 0.0
    %1613 = vmatpush1.xpose.msra.mxu0 0.0
    %1614 = vmatprep.subr.mxu0 0.0
    %1615 = vmatpush1.xpose.msra.mxu0 0.0
    %1616 = vmatprep.subr.mxu0 0.0
    %1617 = vmatpush1.xpose.msra.mxu0 0.0
    %1618 = vmatprep.subr.mxu0 0.0
    %1619 = vmatpush1.xpose.msra.mxu0 0.0
    %1620 = vmatprep.subr.mxu0 0.0
    %1621 = vmatpush1.xpose.msra.mxu0 0.0
    %1622 = vmatprep.subr.mxu0 0.0
    %1623 = vmatpush1.xpose.msra.mxu0 0.0
    %1624 = vmatprep.subr.mxu0 0.0
    %1625 = vmatpush1.xpose.msra.mxu0 0.0
    %1626 = vmatprep.subr.mxu0 0.0
    %v1627 = vand.u32 %v1256, 4294901760
    %v1628 = vsub.f32 %v1256, %v1627
    %v1629 = vand.u32 %v1628, 4294901760
    %1630 = vmatpush1.xpose.msra.mxu0 %v1629
    %1631 = vmatprep.subr.mxu0 0.0
    %v1632 = vand.u32 %v1254, 4294901760
    %v1633 = vsub.f32 %v1254, %v1632
    %v1634 = vand.u32 %v1633, 4294901760
    %1635 = vmatpush1.xpose.msra.mxu0 %v1634
    %1636 = vmatprep.subr.mxu0 0.0
    %1637 = vmatpush2.xpose.msra.mxu0 0.0
    %1638 = vmatprep.subr.mxu0 0.0
    %1639 = vmatpush2.xpose.msra.mxu0 0.0
    %1640 = vmatprep.subr.mxu0 0.0
    %1641 = vmatpush2.xpose.msra.mxu0 0.0
    %1642 = vmatprep.subr.mxu0 0.0
    %1643 = vmatpush2.xpose.msra.mxu0 0.0
    %1644 = vmatprep.subr.mxu0 0.0
    %1645 = vmatpush2.xpose.msra.mxu0 0.0
    %1646 = vmatprep.subr.mxu0 0.0
    %1647 = vmatpush2.xpose.msra.mxu0 0.0
    %1648 = vmatprep.subr.mxu0 0.0
    %1649 = vmatpush2.xpose.msra.mxu0 0.0
    %1650 = vmatprep.subr.mxu0 0.0
    %1651 = vmatpush2.xpose.msra.mxu0 0.0
    %1652 = vmatprep.subr.mxu0 0.0
    %1653 = vmatpush2.xpose.msra.mxu0 0.0
    %1654 = vmatprep.subr.mxu0 0.0
    %1655 = vmatpush2.xpose.msra.mxu0 0.0
    %1656 = vmatprep.subr.mxu0 0.0
    %1657 = vmatpush2.xpose.msra.mxu0 0.0
    %1658 = vmatprep.subr.mxu0 0.0
    %1659 = vmatpush2.xpose.msra.mxu0 0.0
    %1660 = vmatprep.subr.mxu0 0.0
    %1661 = vmatpush2.xpose.msra.mxu0 0.0
    %1662 = vmatprep.subr.mxu0 0.0
    %1663 = vmatpush2.xpose.msra.mxu0 0.0
    %1664 = vmatprep.subr.mxu0 0.0
    %1665 = vmatpush2.xpose.msra.mxu0 0.0
    %1666 = vmatprep.subr.mxu0 0.0
    %1667 = vmatpush2.xpose.msra.mxu0 0.0
    %1668 = vmatprep.mubr.f32.mxu0 0.0
    %v1669 = vand.u32 %v1250, 4294901760
    %1670 = vmatmul.mubr.f32.gmra.mxu0 %v1669
    %v1671 = vpop.f32.mrf.mxu0
    %v1672 = vadd.f32 %v1587, %v1671
    %v1673 = vpop.f32.mrf.mxu0
    %1674 = vmatprep.mubr.f32.mxu0 0.0
    %v1675 = vand.u32 %v1252, 4294901760
    %1676 = vmatmul.mubr.f32.gmra.mxu0 %v1675
    %v1677 = vpop.f32.mrf.mxu0
    %v1678 = vadd.f32 %v1595, %v1677
    %v1679 = vpop.f32.mrf.mxu0
    %1680 = vdwg.mxu0
    %1681 = vmatprep.subr.mxu0 0.0
    %1682 = vmatpush1.xpose.msra.mxu0 0.0
    %1683 = vmatprep.subr.mxu0 0.0
    %1684 = vmatpush1.xpose.msra.mxu0 0.0
    %1685 = vmatprep.subr.mxu0 0.0
    %1686 = vmatpush1.xpose.msra.mxu0 0.0
    %1687 = vmatprep.subr.mxu0 0.0
    %1688 = vmatpush1.xpose.msra.mxu0 0.0
    %1689 = vmatprep.subr.mxu0 0.0
    %1690 = vmatpush1.xpose.msra.mxu0 0.0
    %1691 = vmatprep.subr.mxu0 0.0
    %1692 = vmatpush1.xpose.msra.mxu0 0.0
    %1693 = vmatprep.subr.mxu0 0.0
    %1694 = vmatpush1.xpose.msra.mxu0 0.0
    %1695 = vmatprep.subr.mxu0 0.0
    %1696 = vmatpush1.xpose.msra.mxu0 0.0
    %1697 = vmatprep.subr.mxu0 0.0
    %1698 = vmatpush1.xpose.msra.mxu0 0.0
    %1699 = vmatprep.subr.mxu0 0.0
    %1700 = vmatpush1.xpose.msra.mxu0 0.0
    %1701 = vmatprep.subr.mxu0 0.0
    %1702 = vmatpush1.xpose.msra.mxu0 0.0
    %1703 = vmatprep.subr.mxu0 0.0
    %1704 = vmatpush1.xpose.msra.mxu0 0.0
    %1705 = vmatprep.subr.mxu0 0.0
    %1706 = vmatpush1.xpose.msra.mxu0 0.0
    %1707 = vmatprep.subr.mxu0 0.0
    %1708 = vmatpush1.xpose.msra.mxu0 0.0
    %1709 = vmatprep.subr.mxu0 0.0
    %v1710 = vand.u32 %v1256, 4294901760
    %1711 = vmatpush1.xpose.msra.mxu0 %v1710
    %1712 = vmatprep.subr.mxu0 0.0
    %v1713 = vand.u32 %v1254, 4294901760
    %1714 = vmatpush1.xpose.msra.mxu0 %v1713
    %1715 = vmatprep.subr.mxu0 0.0
    %1716 = vmatpush2.xpose.msra.mxu0 0.0
    %1717 = vmatprep.subr.mxu0 0.0
    %1718 = vmatpush2.xpose.msra.mxu0 0.0
    %1719 = vmatprep.subr.mxu0 0.0
    %1720 = vmatpush2.xpose.msra.mxu0 0.0
    %1721 = vmatprep.subr.mxu0 0.0
    %1722 = vmatpush2.xpose.msra.mxu0 0.0
    %1723 = vmatprep.subr.mxu0 0.0
    %1724 = vmatpush2.xpose.msra.mxu0 0.0
    %1725 = vmatprep.subr.mxu0 0.0
    %1726 = vmatpush2.xpose.msra.mxu0 0.0
    %1727 = vmatprep.subr.mxu0 0.0
    %1728 = vmatpush2.xpose.msra.mxu0 0.0
    %1729 = vmatprep.subr.mxu0 0.0
    %1730 = vmatpush2.xpose.msra.mxu0 0.0
    %1731 = vmatprep.subr.mxu0 0.0
    %1732 = vmatpush2.xpose.msra.mxu0 0.0
    %1733 = vmatprep.subr.mxu0 0.0
    %1734 = vmatpush2.xpose.msra.mxu0 0.0
    %1735 = vmatprep.subr.mxu0 0.0
    %1736 = vmatpush2.xpose.msra.mxu0 0.0
    %1737 = vmatprep.subr.mxu0 0.0
    %1738 = vmatpush2.xpose.msra.mxu0 0.0
    %1739 = vmatprep.subr.mxu0 0.0
    %1740 = vmatpush2.xpose.msra.mxu0 0.0
    %1741 = vmatprep.subr.mxu0 0.0
    %1742 = vmatpush2.xpose.msra.mxu0 0.0
    %1743 = vmatprep.subr.mxu0 0.0
    %1744 = vmatpush2.xpose.msra.mxu0 0.0
    %1745 = vmatprep.subr.mxu0 0.0
    %1746 = vmatpush2.xpose.msra.mxu0 0.0
    %1747 = vmatprep.mubr.f32.mxu0 0.0
    %v1748 = vand.u32 %v1250, 4294901760
    %1749 = vmatmul.mubr.f32.gmra.mxu0 %v1748
    %v1750 = vpop.f32.mrf.mxu0
    %v1751 = vadd.f32 %v1672, %v1750
    %v1752 = vpop.f32.mrf.mxu0
    %1753 = vmatprep.mubr.f32.mxu0 0.0
    %v1754 = vand.u32 %v1252, 4294901760
    %1755 = vmatmul.mubr.f32.gmra.mxu0 %v1754
    %v1756 = vpop.f32.mrf.mxu0
    %v1757 = vadd.f32 %v1678, %v1756
    %v1758 = vpop.f32.mrf.mxu0
    %1759 = vdwg.mxu0
    %vm1760 = vcmask 130048
    %v1761 = vsel %vm1760, %v1751, -inf
    %1762 = vmax.xlane.f32.xlu0 %v1761
    %v1763 = vpop.xlane.xlu0 %1762
    %v1764 = vsel %vm1760, %v1757, -inf
    %1765 = vmax.xlane.f32.xlu0 %v1764
    %v1766 = vpop.xlane.xlu0 %1765
    %v1767 = vsub.f32 %v1751, %v1763
    %v1768 = vsub.f32 %v1757, %v1766
    %v1769 = vmul.f32 %v1767, 1.442695
    %v1770 = vpow.pop %v1769
    %v1771 = vmul.f32 %v1768, 1.442695
    %v1772 = vpow.pop %v1771
    %v1773 = vsel %vm1760, %v1770, 0.0
    %1774 = vadd.xlane.f32.xlu0 %v1773
    %v1775 = vpop.xlane.xlu0 %1774
    %v1776 = vsel %vm1760, %v1772, 0.0
    %1777 = vadd.xlane.f32.xlu0 %v1776
    %v1778 = vpop.xlane.xlu0 %1777
    %v1779 = vrcp.pop %v1775
    %v1780 = vmul.f32 %v1770, %v1779
    %v1781 = vrcp.pop %v1778
    %v1782 = vmul.f32 %v1772, %v1781
    %1783 = vrot.lane.b32.xlu0 %v700, 120
    %v1784 = vpop.permute.xlu0 %1783
    %1785 = vrot.lane.b32.xlu0 %v706, 120
    %v1786 = vpop.permute.xlu0 %1785
    %1787 = vrot.lane.b32.xlu0 %v700, 88
    %v1788 = vpop.permute.xlu0 %1787
    %1789 = vrot.lane.b32.xlu0 %v706, 88
    %v1790 = vpop.permute.xlu0 %1789
    %v1791 = vsel %vm1249, %v1784, 0
    %v1793 = vsel %vm1249, %v1786, 0
    %v1795 = vsel %vm1249, %v1788, 0
    %v1797 = vsel %vm1249, %v1790, 0
    %1799 = vmatprep.subr.mxu0 0.0
    %1800 = vmatpush1.xpose.msra.mxu0 0.0
    %1801 = vmatprep.subr.mxu0 0.0
    %1802 = vmatpush1.xpose.msra.mxu0 0.0
    %1803 = vmatprep.subr.mxu0 0.0
    %1804 = vmatpush1.xpose.msra.mxu0 0.0
    %1805 = vmatprep.subr.mxu0 0.0
    %1806 = vmatpush1.xpose.msra.mxu0 0.0
    %1807 = vmatprep.subr.mxu0 0.0
    %1808 = vmatpush1.xpose.msra.mxu0 0.0
    %1809 = vmatprep.subr.mxu0 0.0
    %1810 = vmatpush1.xpose.msra.mxu0 0.0
    %1811 = vmatprep.subr.mxu0 0.0
    %1812 = vmatpush1.xpose.msra.mxu0 0.0
    %1813 = vmatprep.subr.mxu0 0.0
    %1814 = vmatpush1.xpose.msra.mxu0 0.0
    %1815 = vmatprep.subr.mxu0 0.0
    %1816 = vmatpush1.xpose.msra.mxu0 0.0
    %1817 = vmatprep.subr.mxu0 0.0
    %1818 = vmatpush1.xpose.msra.mxu0 0.0
    %1819 = vmatprep.subr.mxu0 0.0
    %1820 = vmatpush1.xpose.msra.mxu0 0.0
    %1821 = vmatprep.subr.mxu0 0.0
    %1822 = vmatpush1.xpose.msra.mxu0 0.0
    %1823 = vmatprep.subr.mxu0 0.0
    %1824 = vmatpush1.xpose.msra.mxu0 0.0
    %1825 = vmatprep.subr.mxu0 0.0
    %1826 = vmatpush1.xpose.msra.mxu0 0.0
    %1827 = vmatprep.subr.mxu0 0.0
    %v1828 = vand.u32 %v1797, 4294901760
    %1829 = vmatpush1.xpose.msra.mxu0 %v1828
    %1830 = vmatprep.subr.mxu0 0.0
    %v1831 = vand.u32 %v1795, 4294901760
    %1832 = vmatpush1.xpose.msra.mxu0 %v1831
    %1833 = vmatprep.subr.mxu0 0.0
    %1834 = vmatpush2.xpose.msra.mxu0 0.0
    %1835 = vmatprep.subr.mxu0 0.0
    %1836 = vmatpush2.xpose.msra.mxu0 0.0
    %1837 = vmatprep.subr.mxu0 0.0
    %1838 = vmatpush2.xpose.msra.mxu0 0.0
    %1839 = vmatprep.subr.mxu0 0.0
    %1840 = vmatpush2.xpose.msra.mxu0 0.0
    %1841 = vmatprep.subr.mxu0 0.0
    %1842 = vmatpush2.xpose.msra.mxu0 0.0
    %1843 = vmatprep.subr.mxu0 0.0
    %1844 = vmatpush2.xpose.msra.mxu0 0.0
    %1845 = vmatprep.subr.mxu0 0.0
    %1846 = vmatpush2.xpose.msra.mxu0 0.0
    %1847 = vmatprep.subr.mxu0 0.0
    %1848 = vmatpush2.xpose.msra.mxu0 0.0
    %1849 = vmatprep.subr.mxu0 0.0
    %1850 = vmatpush2.xpose.msra.mxu0 0.0
    %1851 = vmatprep.subr.mxu0 0.0
    %1852 = vmatpush2.xpose.msra.mxu0 0.0
    %1853 = vmatprep.subr.mxu0 0.0
    %1854 = vmatpush2.xpose.msra.mxu0 0.0
    %1855 = vmatprep.subr.mxu0 0.0
    %1856 = vmatpush2.xpose.msra.mxu0 0.0
    %1857 = vmatprep.subr.mxu0 0.0
    %1858 = vmatpush2.xpose.msra.mxu0 0.0
    %1859 = vmatprep.subr.mxu0 0.0
    %1860 = vmatpush2.xpose.msra.mxu0 0.0
    %1861 = vmatprep.subr.mxu0 0.0
    %1862 = vmatpush2.xpose.msra.mxu0 0.0
    %1863 = vmatprep.subr.mxu0 0.0
    %1864 = vmatpush2.xpose.msra.mxu0 0.0
    %1865 = vmatprep.mubr.f32.mxu0 0.0
    %v1866 = vand.u32 %v1791, 4294901760
    %v1867 = vsub.f32 %v1791, %v1866
    %v1868 = vand.u32 %v1867, 4294901760
    %v1869 = vsub.f32 %v1867, %v1868
    %v1870 = vand.u32 %v1869, 4294901760
    %1871 = vmatmul.mubr.f32.gmra.mxu0 %v1870
    %v1872 = vpop.f32.mrf.mxu0
    %v1873 = vadd.f32 %v91, %v1872
    %v1874 = vpop.f32.mrf.mxu0
    %1875 = vmatprep.mubr.f32.mxu0 0.0
    %v1876 = vand.u32 %v1793, 4294901760
    %v1877 = vsub.f32 %v1793, %v1876
    %v1878 = vand.u32 %v1877, 4294901760
    %v1879 = vsub.f32 %v1877, %v1878
    %v1880 = vand.u32 %v1879, 4294901760
    %1881 = vmatmul.mubr.f32.gmra.mxu0 %v1880
    %v1882 = vpop.f32.mrf.mxu0
    %v1883 = vadd.f32 %v92, %v1882
    %v1884 = vpop.f32.mrf.mxu0
    %1885 = vdwg.mxu0
    %1886 = vmatprep.subr.mxu0 0.0
    %1887 = vmatpush1.xpose.msra.mxu0 0.0
    %1888 = vmatprep.subr.mxu0 0.0
    %1889 = vmatpush1.xpose.msra.mxu0 0.0
    %1890 = vmatprep.subr.mxu0 0.0
    %1891 = vmatpush1.xpose.msra.mxu0 0.0
    %1892 = vmatprep.subr.mxu0 0.0
    %1893 = vmatpush1.xpose.msra.mxu0 0.0
    %1894 = vmatprep.subr.mxu0 0.0
    %1895 = vmatpush1.xpose.msra.mxu0 0.0
    %1896 = vmatprep.subr.mxu0 0.0
    %1897 = vmatpush1.xpose.msra.mxu0 0.0
    %1898 = vmatprep.subr.mxu0 0.0
    %1899 = vmatpush1.xpose.msra.mxu0 0.0
    %1900 = vmatprep.subr.mxu0 0.0
    %1901 = vmatpush1.xpose.msra.mxu0 0.0
    %1902 = vmatprep.subr.mxu0 0.0
    %1903 = vmatpush1.xpose.msra.mxu0 0.0
    %1904 = vmatprep.subr.mxu0 0.0
    %1905 = vmatpush1.xpose.msra.mxu0 0.0
    %1906 = vmatprep.subr.mxu0 0.0
    %1907 = vmatpush1.xpose.msra.mxu0 0.0
    %1908 = vmatprep.subr.mxu0 0.0
    %1909 = vmatpush1.xpose.msra.mxu0 0.0
    %1910 = vmatprep.subr.mxu0 0.0
    %1911 = vmatpush1.xpose.msra.mxu0 0.0
    %1912 = vmatprep.subr.mxu0 0.0
    %1913 = vmatpush1.xpose.msra.mxu0 0.0
    %1914 = vmatprep.subr.mxu0 0.0
    %v1915 = vand.u32 %v1797, 4294901760
    %v1916 = vsub.f32 %v1797, %v1915
    %v1917 = vand.u32 %v1916, 4294901760
    %v1918 = vsub.f32 %v1916, %v1917
    %v1919 = vand.u32 %v1918, 4294901760
    %1920 = vmatpush1.xpose.msra.mxu0 %v1919
    %1921 = vmatprep.subr.mxu0 0.0
    %v1922 = vand.u32 %v1795, 4294901760
    %v1923 = vsub.f32 %v1795, %v1922
    %v1924 = vand.u32 %v1923, 4294901760
    %v1925 = vsub.f32 %v1923, %v1924
    %v1926 = vand.u32 %v1925, 4294901760
    %1927 = vmatpush1.xpose.msra.mxu0 %v1926
    %1928 = vmatprep.subr.mxu0 0.0
    %1929 = vmatpush2.xpose.msra.mxu0 0.0
    %1930 = vmatprep.subr.mxu0 0.0
    %1931 = vmatpush2.xpose.msra.mxu0 0.0
    %1932 = vmatprep.subr.mxu0 0.0
    %1933 = vmatpush2.xpose.msra.mxu0 0.0
    %1934 = vmatprep.subr.mxu0 0.0
    %1935 = vmatpush2.xpose.msra.mxu0 0.0
    %1936 = vmatprep.subr.mxu0 0.0
    %1937 = vmatpush2.xpose.msra.mxu0 0.0
    %1938 = vmatprep.subr.mxu0 0.0
    %1939 = vmatpush2.xpose.msra.mxu0 0.0
    %1940 = vmatprep.subr.mxu0 0.0
    %1941 = vmatpush2.xpose.msra.mxu0 0.0
    %1942 = vmatprep.subr.mxu0 0.0
    %1943 = vmatpush2.xpose.msra.mxu0 0.0
    %1944 = vmatprep.subr.mxu0 0.0
    %1945 = vmatpush2.xpose.msra.mxu0 0.0
    %1946 = vmatprep.subr.mxu0 0.0
    %1947 = vmatpush2.xpose.msra.mxu0 0.0
    %1948 = vmatprep.subr.mxu0 0.0
    %1949 = vmatpush2.xpose.msra.mxu0 0.0
    %1950 = vmatprep.subr.mxu0 0.0
    %1951 = vmatpush2.xpose.msra.mxu0 0.0
    %1952 = vmatprep.subr.mxu0 0.0
    %1953 = vmatpush2.xpose.msra.mxu0 0.0
    %1954 = vmatprep.subr.mxu0 0.0
    %1955 = vmatpush2.xpose.msra.mxu0 0.0
    %1956 = vmatprep.subr.mxu0 0.0
    %1957 = vmatpush2.xpose.msra.mxu0 0.0
    %1958 = vmatprep.subr.mxu0 0.0
    %1959 = vmatpush2.xpose.msra.mxu0 0.0
    %1960 = vmatprep.mubr.f32.mxu0 0.0
    %v1961 = vand.u32 %v1791, 4294901760
    %1962 = vmatmul.mubr.f32.gmra.mxu0 %v1961
    %v1963 = vpop.f32.mrf.mxu0
    %v1964 = vadd.f32 %v1873, %v1963
    %v1965 = vpop.f32.mrf.mxu0
    %1966 = vmatprep.mubr.f32.mxu0 0.0
    %v1967 = vand.u32 %v1793, 4294901760
    %1968 = vmatmul.mubr.f32.gmra.mxu0 %v1967
    %v1969 = vpop.f32.mrf.mxu0
    %v1970 = vadd.f32 %v1883, %v1969
    %v1971 = vpop.f32.mrf.mxu0
    %1972 = vdwg.mxu0
    %1973 = vmatprep.subr.mxu0 0.0
    %1974 = vmatpush1.xpose.msra.mxu0 0.0
    %1975 = vmatprep.subr.mxu0 0.0
    %1976 = vmatpush1.xpose.msra.mxu0 0.0
    %1977 = vmatprep.subr.mxu0 0.0
    %1978 = vmatpush1.xpose.msra.mxu0 0.0
    %1979 = vmatprep.subr.mxu0 0.0
    %1980 = vmatpush1.xpose.msra.mxu0 0.0
    %1981 = vmatprep.subr.mxu0 0.0
    %1982 = vmatpush1.xpose.msra.mxu0 0.0
    %1983 = vmatprep.subr.mxu0 0.0
    %1984 = vmatpush1.xpose.msra.mxu0 0.0
    %1985 = vmatprep.subr.mxu0 0.0
    %1986 = vmatpush1.xpose.msra.mxu0 0.0
    %1987 = vmatprep.subr.mxu0 0.0
    %1988 = vmatpush1.xpose.msra.mxu0 0.0
    %1989 = vmatprep.subr.mxu0 0.0
    %1990 = vmatpush1.xpose.msra.mxu0 0.0
    %1991 = vmatprep.subr.mxu0 0.0
    %1992 = vmatpush1.xpose.msra.mxu0 0.0
    %1993 = vmatprep.subr.mxu0 0.0
    %1994 = vmatpush1.xpose.msra.mxu0 0.0
    %1995 = vmatprep.subr.mxu0 0.0
    %1996 = vmatpush1.xpose.msra.mxu0 0.0
    %1997 = vmatprep.subr.mxu0 0.0
    %1998 = vmatpush1.xpose.msra.mxu0 0.0
    %1999 = vmatprep.subr.mxu0 0.0
    %2000 = vmatpush1.xpose.msra.mxu0 0.0
    %2001 = vmatprep.subr.mxu0 0.0
    %v2002 = vand.u32 %v1797, 4294901760
    %v2003 = vsub.f32 %v1797, %v2002
    %2004 = vmatpush1.xpose.msra.mxu0 %v2003
    %2005 = vmatprep.subr.mxu0 0.0
    %v2006 = vand.u32 %v1795, 4294901760
    %v2007 = vsub.f32 %v1795, %v2006
    %2008 = vmatpush1.xpose.msra.mxu0 %v2007
    %2009 = vmatprep.subr.mxu0 0.0
    %2010 = vmatpush2.xpose.msra.mxu0 0.0
    %2011 = vmatprep.subr.mxu0 0.0
    %2012 = vmatpush2.xpose.msra.mxu0 0.0
    %2013 = vmatprep.subr.mxu0 0.0
    %2014 = vmatpush2.xpose.msra.mxu0 0.0
    %2015 = vmatprep.subr.mxu0 0.0
    %2016 = vmatpush2.xpose.msra.mxu0 0.0
    %2017 = vmatprep.subr.mxu0 0.0
    %2018 = vmatpush2.xpose.msra.mxu0 0.0
    %2019 = vmatprep.subr.mxu0 0.0
    %2020 = vmatpush2.xpose.msra.mxu0 0.0
    %2021 = vmatprep.subr.mxu0 0.0
    %2022 = vmatpush2.xpose.msra.mxu0 0.0
    %2023 = vmatprep.subr.mxu0 0.0
    %2024 = vmatpush2.xpose.msra.mxu0 0.0
    %2025 = vmatprep.subr.mxu0 0.0
    %2026 = vmatpush2.xpose.msra.mxu0 0.0
    %2027 = vmatprep.subr.mxu0 0.0
    %2028 = vmatpush2.xpose.msra.mxu0 0.0
    %2029 = vmatprep.subr.mxu0 0.0
    %2030 = vmatpush2.xpose.msra.mxu0 0.0
    %2031 = vmatprep.subr.mxu0 0.0
    %2032 = vmatpush2.xpose.msra.mxu0 0.0
    %2033 = vmatprep.subr.mxu0 0.0
    %2034 = vmatpush2.xpose.msra.mxu0 0.0
    %2035 = vmatprep.subr.mxu0 0.0
    %2036 = vmatpush2.xpose.msra.mxu0 0.0
    %2037 = vmatprep.subr.mxu0 0.0
    %2038 = vmatpush2.xpose.msra.mxu0 0.0
    %2039 = vmatprep.subr.mxu0 0.0
    %2040 = vmatpush2.xpose.msra.mxu0 0.0
    %2041 = vmatprep.mubr.f32.mxu0 0.0
    %v2042 = vand.u32 %v1791, 4294901760
    %v2043 = vsub.f32 %v1791, %v2042
    %2044 = vmatmul.mubr.f32.gmra.mxu0 %v2043
    %v2045 = vpop.f32.mrf.mxu0
    %v2046 = vadd.f32 %v1964, %v2045
    %v2047 = vpop.f32.mrf.mxu0
    %2048 = vmatprep.mubr.f32.mxu0 0.0
    %v2049 = vand.u32 %v1793, 4294901760
    %v2050 = vsub.f32 %v1793, %v2049
    %2051 = vmatmul.mubr.f32.gmra.mxu0 %v2050
    %v2052 = vpop.f32.mrf.mxu0
    %v2053 = vadd.f32 %v1970, %v2052
    %v2054 = vpop.f32.mrf.mxu0
    %2055 = vdwg.mxu0
    %2056 = vmatprep.subr.mxu0 0.0
    %2057 = vmatpush1.xpose.msra.mxu0 0.0
    %2058 = vmatprep.subr.mxu0 0.0
    %2059 = vmatpush1.xpose.msra.mxu0 0.0
    %2060 = vmatprep.subr.mxu0 0.0
    %2061 = vmatpush1.xpose.msra.mxu0 0.0
    %2062 = vmatprep.subr.mxu0 0.0
    %2063 = vmatpush1.xpose.msra.mxu0 0.0
    %2064 = vmatprep.subr.mxu0 0.0
    %2065 = vmatpush1.xpose.msra.mxu0 0.0
    %2066 = vmatprep.subr.mxu0 0.0
    %2067 = vmatpush1.xpose.msra.mxu0 0.0
    %2068 = vmatprep.subr.mxu0 0.0
    %2069 = vmatpush1.xpose.msra.mxu0 0.0
    %2070 = vmatprep.subr.mxu0 0.0
    %2071 = vmatpush1.xpose.msra.mxu0 0.0
    %2072 = vmatprep.subr.mxu0 0.0
    %2073 = vmatpush1.xpose.msra.mxu0 0.0
    %2074 = vmatprep.subr.mxu0 0.0
    %2075 = vmatpush1.xpose.msra.mxu0 0.0
    %2076 = vmatprep.subr.mxu0 0.0
    %2077 = vmatpush1.xpose.msra.mxu0 0.0
    %2078 = vmatprep.subr.mxu0 0.0
    %2079 = vmatpush1.xpose.msra.mxu0 0.0
    %2080 = vmatprep.subr.mxu0 0.0
    %2081 = vmatpush1.xpose.msra.mxu0 0.0
    %2082 = vmatprep.subr.mxu0 0.0
    %2083 = vmatpush1.xpose.msra.mxu0 0.0
    %2084 = vmatprep.subr.mxu0 0.0
    %v2085 = vand.u32 %v1797, 4294901760
    %2086 = vmatpush1.xpose.msra.mxu0 %v2085
    %2087 = vmatprep.subr.mxu0 0.0
    %v2088 = vand.u32 %v1795, 4294901760
    %2089 = vmatpush1.xpose.msra.mxu0 %v2088
    %2090 = vmatprep.subr.mxu0 0.0
    %2091 = vmatpush2.xpose.msra.mxu0 0.0
    %2092 = vmatprep.subr.mxu0 0.0
    %2093 = vmatpush2.xpose.msra.mxu0 0.0
    %2094 = vmatprep.subr.mxu0 0.0
    %2095 = vmatpush2.xpose.msra.mxu0 0.0
    %2096 = vmatprep.subr.mxu0 0.0
    %2097 = vmatpush2.xpose.msra.mxu0 0.0
    %2098 = vmatprep.subr.mxu0 0.0
    %2099 = vmatpush2.xpose.msra.mxu0 0.0
    %2100 = vmatprep.subr.mxu0 0.0
    %2101 = vmatpush2.xpose.msra.mxu0 0.0
    %2102 = vmatprep.subr.mxu0 0.0
    %2103 = vmatpush2.xpose.msra.mxu0 0.0
    %2104 = vmatprep.subr.mxu0 0.0
    %2105 = vmatpush2.xpose.msra.mxu0 0.0
    %2106 = vmatprep.subr.mxu0 0.0
    %2107 = vmatpush2.xpose.msra.mxu0 0.0
    %2108 = vmatprep.subr.mxu0 0.0
    %2109 = vmatpush2.xpose.msra.mxu0 0.0
    %2110 = vmatprep.subr.mxu0 0.0
    %2111 = vmatpush2.xpose.msra.mxu0 0.0
    %2112 = vmatprep.subr.mxu0 0.0
    %2113 = vmatpush2.xpose.msra.mxu0 0.0
    %2114 = vmatprep.subr.mxu0 0.0
    %2115 = vmatpush2.xpose.msra.mxu0 0.0
    %2116 = vmatprep.subr.mxu0 0.0
    %2117 = vmatpush2.xpose.msra.mxu0 0.0
    %2118 = vmatprep.subr.mxu0 0.0
    %2119 = vmatpush2.xpose.msra.mxu0 0.0
    %2120 = vmatprep.subr.mxu0 0.0
    %2121 = vmatpush2.xpose.msra.mxu0 0.0
    %2122 = vmatprep.mubr.f32.mxu0 0.0
    %v2123 = vand.u32 %v1791, 4294901760
    %v2124 = vsub.f32 %v1791, %v2123
    %v2125 = vand.u32 %v2124, 4294901760
    %2126 = vmatmul.mubr.f32.gmra.mxu0 %v2125
    %v2127 = vpop.f32.mrf.mxu0
    %v2128 = vadd.f32 %v2046, %v2127
    %v2129 = vpop.f32.mrf.mxu0
    %2130 = vmatprep.mubr.f32.mxu0 0.0
    %v2131 = vand.u32 %v1793, 4294901760
    %v2132 = vsub.f32 %v1793, %v2131
    %v2133 = vand.u32 %v2132, 4294901760
    %2134 = vmatmul.mubr.f32.gmra.mxu0 %v2133
    %v2135 = vpop.f32.mrf.mxu0
    %v2136 = vadd.f32 %v2053, %v2135
    %v2137 = vpop.f32.mrf.mxu0
    %2138 = vdwg.mxu0
    %2139 = vmatprep.subr.mxu0 0.0
    %2140 = vmatpush1.xpose.msra.mxu0 0.0
    %2141 = vmatprep.subr.mxu0 0.0
    %2142 = vmatpush1.xpose.msra.mxu0 0.0
    %2143 = vmatprep.subr.mxu0 0.0
    %2144 = vmatpush1.xpose.msra.mxu0 0.0
    %2145 = vmatprep.subr.mxu0 0.0
    %2146 = vmatpush1.xpose.msra.mxu0 0.0
    %2147 = vmatprep.subr.mxu0 0.0
    %2148 = vmatpush1.xpose.msra.mxu0 0.0
    %2149 = vmatprep.subr.mxu0 0.0
    %2150 = vmatpush1.xpose.msra.mxu0 0.0
    %2151 = vmatprep.subr.mxu0 0.0
    %2152 = vmatpush1.xpose.msra.mxu0 0.0
    %2153 = vmatprep.subr.mxu0 0.0
    %2154 = vmatpush1.xpose.msra.mxu0 0.0
    %2155 = vmatprep.subr.mxu0 0.0
    %2156 = vmatpush1.xpose.msra.mxu0 0.0
    %2157 = vmatprep.subr.mxu0 0.0
    %2158 = vmatpush1.xpose.msra.mxu0 0.0
    %2159 = vmatprep.subr.mxu0 0.0
    %2160 = vmatpush1.xpose.msra.mxu0 0.0
    %2161 = vmatprep.subr.mxu0 0.0
    %2162 = vmatpush1.xpose.msra.mxu0 0.0
    %2163 = vmatprep.subr.mxu0 0.0
    %2164 = vmatpush1.xpose.msra.mxu0 0.0
    %2165 = vmatprep.subr.mxu0 0.0
    %2166 = vmatpush1.xpose.msra.mxu0 0.0
    %2167 = vmatprep.subr.mxu0 0.0
    %v2168 = vand.u32 %v1797, 4294901760
    %v2169 = vsub.f32 %v1797, %v2168
    %v2170 = vand.u32 %v2169, 4294901760
    %2171 = vmatpush1.xpose.msra.mxu0 %v2170
    %2172 = vmatprep.subr.mxu0 0.0
    %v2173 = vand.u32 %v1795, 4294901760
    %v2174 = vsub.f32 %v1795, %v2173
    %v2175 = vand.u32 %v2174, 4294901760
    %2176 = vmatpush1.xpose.msra.mxu0 %v2175
    %2177 = vmatprep.subr.mxu0 0.0
    %2178 = vmatpush2.xpose.msra.mxu0 0.0
    %2179 = vmatprep.subr.mxu0 0.0
    %2180 = vmatpush2.xpose.msra.mxu0 0.0
    %2181 = vmatprep.subr.mxu0 0.0
    %2182 = vmatpush2.xpose.msra.mxu0 0.0
    %2183 = vmatprep.subr.mxu0 0.0
    %2184 = vmatpush2.xpose.msra.mxu0 0.0
    %2185 = vmatprep.subr.mxu0 0.0
    %2186 = vmatpush2.xpose.msra.mxu0 0.0
    %2187 = vmatprep.subr.mxu0 0.0
    %2188 = vmatpush2.xpose.msra.mxu0 0.0
    %2189 = vmatprep.subr.mxu0 0.0
    %2190 = vmatpush2.xpose.msra.mxu0 0.0
    %2191 = vmatprep.subr.mxu0 0.0
    %2192 = vmatpush2.xpose.msra.mxu0 0.0
    %2193 = vmatprep.subr.mxu0 0.0
    %2194 = vmatpush2.xpose.msra.mxu0 0.0
    %2195 = vmatprep.subr.mxu0 0.0
    %2196 = vmatpush2.xpose.msra.mxu0 0.0
    %2197 = vmatprep.subr.mxu0 0.0
    %2198 = vmatpush2.xpose.msra.mxu0 0.0
    %2199 = vmatprep.subr.mxu0 0.0
    %2200 = vmatpush2.xpose.msra.mxu0 0.0
    %2201 = vmatprep.subr.mxu0 0.0
    %2202 = vmatpush2.xpose.msra.mxu0 0.0
    %2203 = vmatprep.subr.mxu0 0.0
    %2204 = vmatpush2.xpose.msra.mxu0 0.0
    %2205 = vmatprep.subr.mxu0 0.0
    %2206 = vmatpush2.xpose.msra.mxu0 0.0
    %2207 = vmatprep.subr.mxu0 0.0
    %2208 = vmatpush2.xpose.msra.mxu0 0.0
    %2209 = vmatprep.mubr.f32.mxu0 0.0
    %v2210 = vand.u32 %v1791, 4294901760
    %2211 = vmatmul.mubr.f32.gmra.mxu0 %v2210
    %v2212 = vpop.f32.mrf.mxu0
    %v2213 = vadd.f32 %v2128, %v2212
    %v2214 = vpop.f32.mrf.mxu0
    %2215 = vmatprep.mubr.f32.mxu0 0.0
    %v2216 = vand.u32 %v1793, 4294901760
    %2217 = vmatmul.mubr.f32.gmra.mxu0 %v2216
    %v2218 = vpop.f32.mrf.mxu0
    %v2219 = vadd.f32 %v2136, %v2218
    %v2220 = vpop.f32.mrf.mxu0
    %2221 = vdwg.mxu0
    %2222 = vmatprep.subr.mxu0 0.0
    %2223 = vmatpush1.xpose.msra.mxu0 0.0
    %2224 = vmatprep.subr.mxu0 0.0
    %2225 = vmatpush1.xpose.msra.mxu0 0.0
    %2226 = vmatprep.subr.mxu0 0.0
    %2227 = vmatpush1.xpose.msra.mxu0 0.0
    %2228 = vmatprep.subr.mxu0 0.0
    %2229 = vmatpush1.xpose.msra.mxu0 0.0
    %2230 = vmatprep.subr.mxu0 0.0
    %2231 = vmatpush1.xpose.msra.mxu0 0.0
    %2232 = vmatprep.subr.mxu0 0.0
    %2233 = vmatpush1.xpose.msra.mxu0 0.0
    %2234 = vmatprep.subr.mxu0 0.0
    %2235 = vmatpush1.xpose.msra.mxu0 0.0
    %2236 = vmatprep.subr.mxu0 0.0
    %2237 = vmatpush1.xpose.msra.mxu0 0.0
    %2238 = vmatprep.subr.mxu0 0.0
    %2239 = vmatpush1.xpose.msra.mxu0 0.0
    %2240 = vmatprep.subr.mxu0 0.0
    %2241 = vmatpush1.xpose.msra.mxu0 0.0
    %2242 = vmatprep.subr.mxu0 0.0
    %2243 = vmatpush1.xpose.msra.mxu0 0.0
    %2244 = vmatprep.subr.mxu0 0.0
    %2245 = vmatpush1.xpose.msra.mxu0 0.0
    %2246 = vmatprep.subr.mxu0 0.0
    %2247 = vmatpush1.xpose.msra.mxu0 0.0
    %2248 = vmatprep.subr.mxu0 0.0
    %2249 = vmatpush1.xpose.msra.mxu0 0.0
    %2250 = vmatprep.subr.mxu0 0.0
    %v2251 = vand.u32 %v1797, 4294901760
    %2252 = vmatpush1.xpose.msra.mxu0 %v2251
    %2253 = vmatprep.subr.mxu0 0.0
    %v2254 = vand.u32 %v1795, 4294901760
    %2255 = vmatpush1.xpose.msra.mxu0 %v2254
    %2256 = vmatprep.subr.mxu0 0.0
    %2257 = vmatpush2.xpose.msra.mxu0 0.0
    %2258 = vmatprep.subr.mxu0 0.0
    %2259 = vmatpush2.xpose.msra.mxu0 0.0
    %2260 = vmatprep.subr.mxu0 0.0
    %2261 = vmatpush2.xpose.msra.mxu0 0.0
    %2262 = vmatprep.subr.mxu0 0.0
    %2263 = vmatpush2.xpose.msra.mxu0 0.0
    %2264 = vmatprep.subr.mxu0 0.0
    %2265 = vmatpush2.xpose.msra.mxu0 0.0
    %2266 = vmatprep.subr.mxu0 0.0
    %2267 = vmatpush2.xpose.msra.mxu0 0.0
    %2268 = vmatprep.subr.mxu0 0.0
    %2269 = vmatpush2.xpose.msra.mxu0 0.0
    %2270 = vmatprep.subr.mxu0 0.0
    %2271 = vmatpush2.xpose.msra.mxu0 0.0
    %2272 = vmatprep.subr.mxu0 0.0
    %2273 = vmatpush2.xpose.msra.mxu0 0.0
    %2274 = vmatprep.subr.mxu0 0.0
    %2275 = vmatpush2.xpose.msra.mxu0 0.0
    %2276 = vmatprep.subr.mxu0 0.0
    %2277 = vmatpush2.xpose.msra.mxu0 0.0
    %2278 = vmatprep.subr.mxu0 0.0
    %2279 = vmatpush2.xpose.msra.mxu0 0.0
    %2280 = vmatprep.subr.mxu0 0.0
    %2281 = vmatpush2.xpose.msra.mxu0 0.0
    %2282 = vmatprep.subr.mxu0 0.0
    %2283 = vmatpush2.xpose.msra.mxu0 0.0
    %2284 = vmatprep.subr.mxu0 0.0
    %2285 = vmatpush2.xpose.msra.mxu0 0.0
    %2286 = vmatprep.subr.mxu0 0.0
    %2287 = vmatpush2.xpose.msra.mxu0 0.0
    %2288 = vmatprep.mubr.f32.mxu0 0.0
    %v2289 = vand.u32 %v1791, 4294901760
    %2290 = vmatmul.mubr.f32.gmra.mxu0 %v2289
    %v2291 = vpop.f32.mrf.mxu0
    %v2292 = vadd.f32 %v2213, %v2291
    %v2293 = vpop.f32.mrf.mxu0
    %2294 = vmatprep.mubr.f32.mxu0 0.0
    %v2295 = vand.u32 %v1793, 4294901760
    %2296 = vmatmul.mubr.f32.gmra.mxu0 %v2295
    %v2297 = vpop.f32.mrf.mxu0
    %v2298 = vadd.f32 %v2219, %v2297
    %v2299 = vpop.f32.mrf.mxu0
    %2300 = vdwg.mxu0
    %v2301 = vsel %vm1760, %v2292, -inf
    %2302 = vmax.xlane.f32.xlu0 %v2301
    %v2303 = vpop.xlane.xlu0 %2302
    %v2304 = vsel %vm1760, %v2298, -inf
    %2305 = vmax.xlane.f32.xlu0 %v2304
    %v2306 = vpop.xlane.xlu0 %2305
    %v2307 = vsub.f32 %v2292, %v2303
    %v2308 = vsub.f32 %v2298, %v2306
    %v2309 = vmul.f32 %v2307, 1.442695
    %v2310 = vpow.pop %v2309
    %v2311 = vmul.f32 %v2308, 1.442695
    %v2312 = vpow.pop %v2311
    %v2313 = vsel %vm1760, %v2310, 0.0
    %2314 = vadd.xlane.f32.xlu0 %v2313
    %v2315 = vpop.xlane.xlu0 %2314
    %v2316 = vsel %vm1760, %v2312, 0.0
    %2317 = vadd.xlane.f32.xlu0 %v2316
    %v2318 = vpop.xlane.xlu0 %2317
    %v2319 = vrcp.pop %v2315
    %v2320 = vmul.f32 %v2310, %v2319
    %v2321 = vrcp.pop %v2318
    %v2322 = vmul.f32 %v2312, %v2321
    %2325 = vrot.lane.b32.xlu0 %v1234, 96
    %v2326 = vpop.permute.xlu0 %2325
    %2327 = vrot.lane.b32.xlu0 %v1240, 96
    %v2328 = vpop.permute.xlu0 %2327
    %v2332 = vsel %vm1760, %v2320, 0
    %v2335 = vsel %vm1760, %v2322, 0
    %2337 = vmatprep.subr.mxu0 0.0
    %2338 = vmatpush1.msra.mxu0 0.0
    %2339 = vmatprep.subr.mxu0 0.0
    %2340 = vmatpush1.msra.mxu0 0.0
    %2341 = vmatprep.subr.mxu0 0.0
    %2342 = vmatpush1.msra.mxu0 0.0
    %2343 = vmatprep.subr.mxu0 0.0
    %2344 = vmatpush1.msra.mxu0 0.0
    %2345 = vmatprep.subr.mxu0 0.0
    %2346 = vmatpush1.msra.mxu0 0.0
    %2347 = vmatprep.subr.mxu0 0.0
    %2348 = vmatpush1.msra.mxu0 0.0
    %2349 = vmatprep.subr.mxu0 0.0
    %2350 = vmatpush1.msra.mxu0 0.0
    %2351 = vmatprep.subr.mxu0 0.0
    %2352 = vmatpush1.msra.mxu0 0.0
    %2353 = vmatprep.subr.mxu0 0.0
    %2354 = vmatpush1.msra.mxu0 0.0
    %2355 = vmatprep.subr.mxu0 0.0
    %2356 = vmatpush1.msra.mxu0 0.0
    %2357 = vmatprep.subr.mxu0 0.0
    %2358 = vmatpush1.msra.mxu0 0.0
    %2359 = vmatprep.subr.mxu0 0.0
    %2360 = vmatpush1.msra.mxu0 0.0
    %2361 = vmatprep.subr.mxu0 0.0
    %2362 = vmatpush1.msra.mxu0 0.0
    %2363 = vmatprep.subr.mxu0 0.0
    %2364 = vmatpush1.msra.mxu0 0.0
    %2365 = vmatprep.subr.mxu0 0.0
    %v2366 = vand.u32 %v2328, 4294901760
    %2367 = vmatpush1.msra.mxu0 %v2366
    %2368 = vmatprep.subr.mxu0 0.0
    %v2369 = vand.u32 %v2326, 4294901760
    %2370 = vmatpush1.msra.mxu0 %v2369
    %2371 = vmatprep.subr.mxu0 0.0
    %2372 = vmatpush2.msra.mxu0 0.0
    %2373 = vmatprep.subr.mxu0 0.0
    %2374 = vmatpush2.msra.mxu0 0.0
    %2375 = vmatprep.subr.mxu0 0.0
    %2376 = vmatpush2.msra.mxu0 0.0
    %2377 = vmatprep.subr.mxu0 0.0
    %2378 = vmatpush2.msra.mxu0 0.0
    %2379 = vmatprep.subr.mxu0 0.0
    %2380 = vmatpush2.msra.mxu0 0.0
    %2381 = vmatprep.subr.mxu0 0.0
    %2382 = vmatpush2.msra.mxu0 0.0
    %2383 = vmatprep.subr.mxu0 0.0
    %2384 = vmatpush2.msra.mxu0 0.0
    %2385 = vmatprep.subr.mxu0 0.0
    %2386 = vmatpush2.msra.mxu0 0.0
    %2387 = vmatprep.subr.mxu0 0.0
    %2388 = vmatpush2.msra.mxu0 0.0
    %2389 = vmatprep.subr.mxu0 0.0
    %2390 = vmatpush2.msra.mxu0 0.0
    %2391 = vmatprep.subr.mxu0 0.0
    %2392 = vmatpush2.msra.mxu0 0.0
    %2393 = vmatprep.subr.mxu0 0.0
    %2394 = vmatpush2.msra.mxu0 0.0
    %2395 = vmatprep.subr.mxu0 0.0
    %2396 = vmatpush2.msra.mxu0 0.0
    %2397 = vmatprep.subr.mxu0 0.0
    %2398 = vmatpush2.msra.mxu0 0.0
    %2399 = vmatprep.subr.mxu0 0.0
    %2400 = vmatpush2.msra.mxu0 0.0
    %2401 = vmatprep.subr.mxu0 0.0
    %2402 = vmatpush2.msra.mxu0 0.0
    %2403 = vmatprep.mubr.f32.mxu0 0.0
    %v2404 = vand.u32 %v2332, 4294901760
    %v2405 = vsub.f32 %v2332, %v2404
    %v2406 = vand.u32 %v2405, 4294901760
    %v2407 = vsub.f32 %v2405, %v2406
    %v2408 = vand.u32 %v2407, 4294901760
    %2409 = vmatmul.mubr.f32.gmra.mxu0 %v2408
    %v2410 = vpop.f32.mrf.mxu0
    %v2411 = vadd.f32 0.0, %v2410
    %v2412 = vpop.f32.mrf.mxu0
    %2413 = vmatprep.mubr.f32.mxu0 0.0
    %v2414 = vand.u32 %v2335, 4294901760
    %v2415 = vsub.f32 %v2335, %v2414
    %v2416 = vand.u32 %v2415, 4294901760
    %v2417 = vsub.f32 %v2415, %v2416
    %v2418 = vand.u32 %v2417, 4294901760
    %2419 = vmatmul.mubr.f32.gmra.mxu0 %v2418
    %v2420 = vpop.f32.mrf.mxu0
    %v2421 = vadd.f32 0.0, %v2420
    %v2422 = vpop.f32.mrf.mxu0
    %2423 = vdwg.mxu0
    %2424 = vmatprep.subr.mxu0 0.0
    %2425 = vmatpush1.msra.mxu0 0.0
    %2426 = vmatprep.subr.mxu0 0.0
    %2427 = vmatpush1.msra.mxu0 0.0
    %2428 = vmatprep.subr.mxu0 0.0
    %2429 = vmatpush1.msra.mxu0 0.0
    %2430 = vmatprep.subr.mxu0 0.0
    %2431 = vmatpush1.msra.mxu0 0.0
    %2432 = vmatprep.subr.mxu0 0.0
    %2433 = vmatpush1.msra.mxu0 0.0
    %2434 = vmatprep.subr.mxu0 0.0
    %2435 = vmatpush1.msra.mxu0 0.0
    %2436 = vmatprep.subr.mxu0 0.0
    %2437 = vmatpush1.msra.mxu0 0.0
    %2438 = vmatprep.subr.mxu0 0.0
    %2439 = vmatpush1.msra.mxu0 0.0
    %2440 = vmatprep.subr.mxu0 0.0
    %2441 = vmatpush1.msra.mxu0 0.0
    %2442 = vmatprep.subr.mxu0 0.0
    %2443 = vmatpush1.msra.mxu0 0.0
    %2444 = vmatprep.subr.mxu0 0.0
    %2445 = vmatpush1.msra.mxu0 0.0
    %2446 = vmatprep.subr.mxu0 0.0
    %2447 = vmatpush1.msra.mxu0 0.0
    %2448 = vmatprep.subr.mxu0 0.0
    %2449 = vmatpush1.msra.mxu0 0.0
    %2450 = vmatprep.subr.mxu0 0.0
    %2451 = vmatpush1.msra.mxu0 0.0
    %2452 = vmatprep.subr.mxu0 0.0
    %v2453 = vand.u32 %v2328, 4294901760
    %v2454 = vsub.f32 %v2328, %v2453
    %v2455 = vand.u32 %v2454, 4294901760
    %v2456 = vsub.f32 %v2454, %v2455
    %v2457 = vand.u32 %v2456, 4294901760
    %2458 = vmatpush1.msra.mxu0 %v2457
    %2459 = vmatprep.subr.mxu0 0.0
    %v2460 = vand.u32 %v2326, 4294901760
    %v2461 = vsub.f32 %v2326, %v2460
    %v2462 = vand.u32 %v2461, 4294901760
    %v2463 = vsub.f32 %v2461, %v2462
    %v2464 = vand.u32 %v2463, 4294901760
    %2465 = vmatpush1.msra.mxu0 %v2464
    %2466 = vmatprep.subr.mxu0 0.0
    %2467 = vmatpush2.msra.mxu0 0.0
    %2468 = vmatprep.subr.mxu0 0.0
    %2469 = vmatpush2.msra.mxu0 0.0
    %2470 = vmatprep.subr.mxu0 0.0
    %2471 = vmatpush2.msra.mxu0 0.0
    %2472 = vmatprep.subr.mxu0 0.0
    %2473 = vmatpush2.msra.mxu0 0.0
    %2474 = vmatprep.subr.mxu0 0.0
    %2475 = vmatpush2.msra.mxu0 0.0
    %2476 = vmatprep.subr.mxu0 0.0
    %2477 = vmatpush2.msra.mxu0 0.0
    %2478 = vmatprep.subr.mxu0 0.0
    %2479 = vmatpush2.msra.mxu0 0.0
    %2480 = vmatprep.subr.mxu0 0.0
    %2481 = vmatpush2.msra.mxu0 0.0
    %2482 = vmatprep.subr.mxu0 0.0
    %2483 = vmatpush2.msra.mxu0 0.0
    %2484 = vmatprep.subr.mxu0 0.0
    %2485 = vmatpush2.msra.mxu0 0.0
    %2486 = vmatprep.subr.mxu0 0.0
    %2487 = vmatpush2.msra.mxu0 0.0
    %2488 = vmatprep.subr.mxu0 0.0
    %2489 = vmatpush2.msra.mxu0 0.0
    %2490 = vmatprep.subr.mxu0 0.0
    %2491 = vmatpush2.msra.mxu0 0.0
    %2492 = vmatprep.subr.mxu0 0.0
    %2493 = vmatpush2.msra.mxu0 0.0
    %2494 = vmatprep.subr.mxu0 0.0
    %2495 = vmatpush2.msra.mxu0 0.0
    %2496 = vmatprep.subr.mxu0 0.0
    %2497 = vmatpush2.msra.mxu0 0.0
    %2498 = vmatprep.mubr.f32.mxu0 0.0
    %v2499 = vand.u32 %v2332, 4294901760
    %2500 = vmatmul.mubr.f32.gmra.mxu0 %v2499
    %v2501 = vpop.f32.mrf.mxu0
    %v2502 = vadd.f32 %v2411, %v2501
    %v2503 = vpop.f32.mrf.mxu0
    %2504 = vmatprep.mubr.f32.mxu0 0.0
    %v2505 = vand.u32 %v2335, 4294901760
    %2506 = vmatmul.mubr.f32.gmra.mxu0 %v2505
    %v2507 = vpop.f32.mrf.mxu0
    %v2508 = vadd.f32 %v2421, %v2507
    %v2509 = vpop.f32.mrf.mxu0
    %2510 = vdwg.mxu0
    %2511 = vmatprep.subr.mxu0 0.0
    %2512 = vmatpush1.msra.mxu0 0.0
    %2513 = vmatprep.subr.mxu0 0.0
    %2514 = vmatpush1.msra.mxu0 0.0
    %2515 = vmatprep.subr.mxu0 0.0
    %2516 = vmatpush1.msra.mxu0 0.0
    %2517 = vmatprep.subr.mxu0 0.0
    %2518 = vmatpush1.msra.mxu0 0.0
    %2519 = vmatprep.subr.mxu0 0.0
    %2520 = vmatpush1.msra.mxu0 0.0
    %2521 = vmatprep.subr.mxu0 0.0
    %2522 = vmatpush1.msra.mxu0 0.0
    %2523 = vmatprep.subr.mxu0 0.0
    %2524 = vmatpush1.msra.mxu0 0.0
    %2525 = vmatprep.subr.mxu0 0.0
    %2526 = vmatpush1.msra.mxu0 0.0
    %2527 = vmatprep.subr.mxu0 0.0
    %2528 = vmatpush1.msra.mxu0 0.0
    %2529 = vmatprep.subr.mxu0 0.0
    %2530 = vmatpush1.msra.mxu0 0.0
    %2531 = vmatprep.subr.mxu0 0.0
    %2532 = vmatpush1.msra.mxu0 0.0
    %2533 = vmatprep.subr.mxu0 0.0
    %2534 = vmatpush1.msra.mxu0 0.0
    %2535 = vmatprep.subr.mxu0 0.0
    %2536 = vmatpush1.msra.mxu0 0.0
    %2537 = vmatprep.subr.mxu0 0.0
    %2538 = vmatpush1.msra.mxu0 0.0
    %2539 = vmatprep.subr.mxu0 0.0
    %v2540 = vand.u32 %v2328, 4294901760
    %v2541 = vsub.f32 %v2328, %v2540
    %2542 = vmatpush1.msra.mxu0 %v2541
    %2543 = vmatprep.subr.mxu0 0.0
    %v2544 = vand.u32 %v2326, 4294901760
    %v2545 = vsub.f32 %v2326, %v2544
    %2546 = vmatpush1.msra.mxu0 %v2545
    %2547 = vmatprep.subr.mxu0 0.0
    %2548 = vmatpush2.msra.mxu0 0.0
    %2549 = vmatprep.subr.mxu0 0.0
    %2550 = vmatpush2.msra.mxu0 0.0
    %2551 = vmatprep.subr.mxu0 0.0
    %2552 = vmatpush2.msra.mxu0 0.0
    %2553 = vmatprep.subr.mxu0 0.0
    %2554 = vmatpush2.msra.mxu0 0.0
    %2555 = vmatprep.subr.mxu0 0.0
    %2556 = vmatpush2.msra.mxu0 0.0
    %2557 = vmatprep.subr.mxu0 0.0
    %2558 = vmatpush2.msra.mxu0 0.0
    %2559 = vmatprep.subr.mxu0 0.0
    %2560 = vmatpush2.msra.mxu0 0.0
    %2561 = vmatprep.subr.mxu0 0.0
    %2562 = vmatpush2.msra.mxu0 0.0
    %2563 = vmatprep.subr.mxu0 0.0
    %2564 = vmatpush2.msra.mxu0 0.0
    %2565 = vmatprep.subr.mxu0 0.0
    %2566 = vmatpush2.msra.mxu0 0.0
    %2567 = vmatprep.subr.mxu0 0.0
    %2568 = vmatpush2.msra.mxu0 0.0
    %2569 = vmatprep.subr.mxu0 0.0
    %2570 = vmatpush2.msra.mxu0 0.0
    %2571 = vmatprep.subr.mxu0 0.0
    %2572 = vmatpush2.msra.mxu0 0.0
    %2573 = vmatprep.subr.mxu0 0.0
    %2574 = vmatpush2.msra.mxu0 0.0
    %2575 = vmatprep.subr.mxu0 0.0
    %2576 = vmatpush2.msra.mxu0 0.0
    %2577 = vmatprep.subr.mxu0 0.0
    %2578 = vmatpush2.msra.mxu0 0.0
    %2579 = vmatprep.mubr.f32.mxu0 0.0
    %v2580 = vand.u32 %v2332, 4294901760
    %v2581 = vsub.f32 %v2332, %v2580
    %2582 = vmatmul.mubr.f32.gmra.mxu0 %v2581
    %v2583 = vpop.f32.mrf.mxu0
    %v2584 = vadd.f32 %v2502, %v2583
    %v2585 = vpop.f32.mrf.mxu0
    %2586 = vmatprep.mubr.f32.mxu0 0.0
    %v2587 = vand.u32 %v2335, 4294901760
    %v2588 = vsub.f32 %v2335, %v2587
    %2589 = vmatmul.mubr.f32.gmra.mxu0 %v2588
    %v2590 = vpop.f32.mrf.mxu0
    %v2591 = vadd.f32 %v2508, %v2590
    %v2592 = vpop.f32.mrf.mxu0
    %2593 = vdwg.mxu0
    %2594 = vmatprep.subr.mxu0 0.0
    %2595 = vmatpush1.msra.mxu0 0.0
    %2596 = vmatprep.subr.mxu0 0.0
    %2597 = vmatpush1.msra.mxu0 0.0
    %2598 = vmatprep.subr.mxu0 0.0
    %2599 = vmatpush1.msra.mxu0 0.0
    %2600 = vmatprep.subr.mxu0 0.0
    %2601 = vmatpush1.msra.mxu0 0.0
    %2602 = vmatprep.subr.mxu0 0.0
    %2603 = vmatpush1.msra.mxu0 0.0
    %2604 = vmatprep.subr.mxu0 0.0
    %2605 = vmatpush1.msra.mxu0 0.0
    %2606 = vmatprep.subr.mxu0 0.0
    %2607 = vmatpush1.msra.mxu0 0.0
    %2608 = vmatprep.subr.mxu0 0.0
    %2609 = vmatpush1.msra.mxu0 0.0
    %2610 = vmatprep.subr.mxu0 0.0
    %2611 = vmatpush1.msra.mxu0 0.0
    %2612 = vmatprep.subr.mxu0 0.0
    %2613 = vmatpush1.msra.mxu0 0.0
    %2614 = vmatprep.subr.mxu0 0.0
    %2615 = vmatpush1.msra.mxu0 0.0
    %2616 = vmatprep.subr.mxu0 0.0
    %2617 = vmatpush1.msra.mxu0 0.0
    %2618 = vmatprep.subr.mxu0 0.0
    %2619 = vmatpush1.msra.mxu0 0.0
    %2620 = vmatprep.subr.mxu0 0.0
    %2621 = vmatpush1.msra.mxu0 0.0
    %2622 = vmatprep.subr.mxu0 0.0
    %v2623 = vand.u32 %v2328, 4294901760
    %2624 = vmatpush1.msra.mxu0 %v2623
    %2625 = vmatprep.subr.mxu0 0.0
    %v2626 = vand.u32 %v2326, 4294901760
    %2627 = vmatpush1.msra.mxu0 %v2626
    %2628 = vmatprep.subr.mxu0 0.0
    %2629 = vmatpush2.msra.mxu0 0.0
    %2630 = vmatprep.subr.mxu0 0.0
    %2631 = vmatpush2.msra.mxu0 0.0
    %2632 = vmatprep.subr.mxu0 0.0
    %2633 = vmatpush2.msra.mxu0 0.0
    %2634 = vmatprep.subr.mxu0 0.0
    %2635 = vmatpush2.msra.mxu0 0.0
    %2636 = vmatprep.subr.mxu0 0.0
    %2637 = vmatpush2.msra.mxu0 0.0
    %2638 = vmatprep.subr.mxu0 0.0
    %2639 = vmatpush2.msra.mxu0 0.0
    %2640 = vmatprep.subr.mxu0 0.0
    %2641 = vmatpush2.msra.mxu0 0.0
    %2642 = vmatprep.subr.mxu0 0.0
    %2643 = vmatpush2.msra.mxu0 0.0
    %2644 = vmatprep.subr.mxu0 0.0
    %2645 = vmatpush2.msra.mxu0 0.0
    %2646 = vmatprep.subr.mxu0 0.0
    %2647 = vmatpush2.msra.mxu0 0.0
    %2648 = vmatprep.subr.mxu0 0.0
    %2649 = vmatpush2.msra.mxu0 0.0
    %2650 = vmatprep.subr.mxu0 0.0
    %2651 = vmatpush2.msra.mxu0 0.0
    %2652 = vmatprep.subr.mxu0 0.0
    %2653 = vmatpush2.msra.mxu0 0.0
    %2654 = vmatprep.subr.mxu0 0.0
    %2655 = vmatpush2.msra.mxu0 0.0
    %2656 = vmatprep.subr.mxu0 0.0
    %2657 = vmatpush2.msra.mxu0 0.0
    %2658 = vmatprep.subr.mxu0 0.0
    %2659 = vmatpush2.msra.mxu0 0.0
    %2660 = vmatprep.mubr.f32.mxu0 0.0
    %v2661 = vand.u32 %v2332, 4294901760
    %v2662 = vsub.f32 %v2332, %v2661
    %v2663 = vand.u32 %v2662, 4294901760
    %2664 = vmatmul.mubr.f32.gmra.mxu0 %v2663
    %v2665 = vpop.f32.mrf.mxu0
    %v2666 = vadd.f32 %v2584, %v2665
    %v2667 = vpop.f32.mrf.mxu0
    %2668 = vmatprep.mubr.f32.mxu0 0.0
    %v2669 = vand.u32 %v2335, 4294901760
    %v2670 = vsub.f32 %v2335, %v2669
    %v2671 = vand.u32 %v2670, 4294901760
    %2672 = vmatmul.mubr.f32.gmra.mxu0 %v2671
    %v2673 = vpop.f32.mrf.mxu0
    %v2674 = vadd.f32 %v2591, %v2673
    %v2675 = vpop.f32.mrf.mxu0
    %2676 = vdwg.mxu0
    %2677 = vmatprep.subr.mxu0 0.0
    %2678 = vmatpush1.msra.mxu0 0.0
    %2679 = vmatprep.subr.mxu0 0.0
    %2680 = vmatpush1.msra.mxu0 0.0
    %2681 = vmatprep.subr.mxu0 0.0
    %2682 = vmatpush1.msra.mxu0 0.0
    %2683 = vmatprep.subr.mxu0 0.0
    %2684 = vmatpush1.msra.mxu0 0.0
    %2685 = vmatprep.subr.mxu0 0.0
    %2686 = vmatpush1.msra.mxu0 0.0
    %2687 = vmatprep.subr.mxu0 0.0
    %2688 = vmatpush1.msra.mxu0 0.0
    %2689 = vmatprep.subr.mxu0 0.0
    %2690 = vmatpush1.msra.mxu0 0.0
    %2691 = vmatprep.subr.mxu0 0.0
    %2692 = vmatpush1.msra.mxu0 0.0
    %2693 = vmatprep.subr.mxu0 0.0
    %2694 = vmatpush1.msra.mxu0 0.0
    %2695 = vmatprep.subr.mxu0 0.0
    %2696 = vmatpush1.msra.mxu0 0.0
    %2697 = vmatprep.subr.mxu0 0.0
    %2698 = vmatpush1.msra.mxu0 0.0
    %2699 = vmatprep.subr.mxu0 0.0
    %2700 = vmatpush1.msra.mxu0 0.0
    %2701 = vmatprep.subr.mxu0 0.0
    %2702 = vmatpush1.msra.mxu0 0.0
    %2703 = vmatprep.subr.mxu0 0.0
    %2704 = vmatpush1.msra.mxu0 0.0
    %2705 = vmatprep.subr.mxu0 0.0
    %v2706 = vand.u32 %v2328, 4294901760
    %v2707 = vsub.f32 %v2328, %v2706
    %v2708 = vand.u32 %v2707, 4294901760
    %2709 = vmatpush1.msra.mxu0 %v2708
    %2710 = vmatprep.subr.mxu0 0.0
    %v2711 = vand.u32 %v2326, 4294901760
    %v2712 = vsub.f32 %v2326, %v2711
    %v2713 = vand.u32 %v2712, 4294901760
    %2714 = vmatpush1.msra.mxu0 %v2713
    %2715 = vmatprep.subr.mxu0 0.0
    %2716 = vmatpush2.msra.mxu0 0.0
    %2717 = vmatprep.subr.mxu0 0.0
    %2718 = vmatpush2.msra.mxu0 0.0
    %2719 = vmatprep.subr.mxu0 0.0
    %2720 = vmatpush2.msra.mxu0 0.0
    %2721 = vmatprep.subr.mxu0 0.0
    %2722 = vmatpush2.msra.mxu0 0.0
    %2723 = vmatprep.subr.mxu0 0.0
    %2724 = vmatpush2.msra.mxu0 0.0
    %2725 = vmatprep.subr.mxu0 0.0
    %2726 = vmatpush2.msra.mxu0 0.0
    %2727 = vmatprep.subr.mxu0 0.0
    %2728 = vmatpush2.msra.mxu0 0.0
    %2729 = vmatprep.subr.mxu0 0.0
    %2730 = vmatpush2.msra.mxu0 0.0
    %2731 = vmatprep.subr.mxu0 0.0
    %2732 = vmatpush2.msra.mxu0 0.0
    %2733 = vmatprep.subr.mxu0 0.0
    %2734 = vmatpush2.msra.mxu0 0.0
    %2735 = vmatprep.subr.mxu0 0.0
    %2736 = vmatpush2.msra.mxu0 0.0
    %2737 = vmatprep.subr.mxu0 0.0
    %2738 = vmatpush2.msra.mxu0 0.0
    %2739 = vmatprep.subr.mxu0 0.0
    %2740 = vmatpush2.msra.mxu0 0.0
    %2741 = vmatprep.subr.mxu0 0.0
    %2742 = vmatpush2.msra.mxu0 0.0
    %2743 = vmatprep.subr.mxu0 0.0
    %2744 = vmatpush2.msra.mxu0 0.0
    %2745 = vmatprep.subr.mxu0 0.0
    %2746 = vmatpush2.msra.mxu0 0.0
    %2747 = vmatprep.mubr.f32.mxu0 0.0
    %v2748 = vand.u32 %v2332, 4294901760
    %2749 = vmatmul.mubr.f32.gmra.mxu0 %v2748
    %v2750 = vpop.f32.mrf.mxu0
    %v2751 = vadd.f32 %v2666, %v2750
    %v2752 = vpop.f32.mrf.mxu0
    %2753 = vmatprep.mubr.f32.mxu0 0.0
    %v2754 = vand.u32 %v2335, 4294901760
    %2755 = vmatmul.mubr.f32.gmra.mxu0 %v2754
    %v2756 = vpop.f32.mrf.mxu0
    %v2757 = vadd.f32 %v2674, %v2756
    %v2758 = vpop.f32.mrf.mxu0
    %2759 = vdwg.mxu0
    %2760 = vmatprep.subr.mxu0 0.0
    %2761 = vmatpush1.msra.mxu0 0.0
    %2762 = vmatprep.subr.mxu0 0.0
    %2763 = vmatpush1.msra.mxu0 0.0
    %2764 = vmatprep.subr.mxu0 0.0
    %2765 = vmatpush1.msra.mxu0 0.0
    %2766 = vmatprep.subr.mxu0 0.0
    %2767 = vmatpush1.msra.mxu0 0.0
    %2768 = vmatprep.subr.mxu0 0.0
    %2769 = vmatpush1.msra.mxu0 0.0
    %2770 = vmatprep.subr.mxu0 0.0
    %2771 = vmatpush1.msra.mxu0 0.0
    %2772 = vmatprep.subr.mxu0 0.0
    %2773 = vmatpush1.msra.mxu0 0.0
    %2774 = vmatprep.subr.mxu0 0.0
    %2775 = vmatpush1.msra.mxu0 0.0
    %2776 = vmatprep.subr.mxu0 0.0
    %2777 = vmatpush1.msra.mxu0 0.0
    %2778 = vmatprep.subr.mxu0 0.0
    %2779 = vmatpush1.msra.mxu0 0.0
    %2780 = vmatprep.subr.mxu0 0.0
    %2781 = vmatpush1.msra.mxu0 0.0
    %2782 = vmatprep.subr.mxu0 0.0
    %2783 = vmatpush1.msra.mxu0 0.0
    %2784 = vmatprep.subr.mxu0 0.0
    %2785 = vmatpush1.msra.mxu0 0.0
    %2786 = vmatprep.subr.mxu0 0.0
    %2787 = vmatpush1.msra.mxu0 0.0
    %2788 = vmatprep.subr.mxu0 0.0
    %v2789 = vand.u32 %v2328, 4294901760
    %2790 = vmatpush1.msra.mxu0 %v2789
    %2791 = vmatprep.subr.mxu0 0.0
    %v2792 = vand.u32 %v2326, 4294901760
    %2793 = vmatpush1.msra.mxu0 %v2792
    %2794 = vmatprep.subr.mxu0 0.0
    %2795 = vmatpush2.msra.mxu0 0.0
    %2796 = vmatprep.subr.mxu0 0.0
    %2797 = vmatpush2.msra.mxu0 0.0
    %2798 = vmatprep.subr.mxu0 0.0
    %2799 = vmatpush2.msra.mxu0 0.0
    %2800 = vmatprep.subr.mxu0 0.0
    %2801 = vmatpush2.msra.mxu0 0.0
    %2802 = vmatprep.subr.mxu0 0.0
    %2803 = vmatpush2.msra.mxu0 0.0
    %2804 = vmatprep.subr.mxu0 0.0
    %2805 = vmatpush2.msra.mxu0 0.0
    %2806 = vmatprep.subr.mxu0 0.0
    %2807 = vmatpush2.msra.mxu0 0.0
    %2808 = vmatprep.subr.mxu0 0.0
    %2809 = vmatpush2.msra.mxu0 0.0
    %2810 = vmatprep.subr.mxu0 0.0
    %2811 = vmatpush2.msra.mxu0 0.0
    %2812 = vmatprep.subr.mxu0 0.0
    %2813 = vmatpush2.msra.mxu0 0.0
    %2814 = vmatprep.subr.mxu0 0.0
    %2815 = vmatpush2.msra.mxu0 0.0
    %2816 = vmatprep.subr.mxu0 0.0
    %2817 = vmatpush2.msra.mxu0 0.0
    %2818 = vmatprep.subr.mxu0 0.0
    %2819 = vmatpush2.msra.mxu0 0.0
    %2820 = vmatprep.subr.mxu0 0.0
    %2821 = vmatpush2.msra.mxu0 0.0
    %2822 = vmatprep.subr.mxu0 0.0
    %2823 = vmatpush2.msra.mxu0 0.0
    %2824 = vmatprep.subr.mxu0 0.0
    %2825 = vmatpush2.msra.mxu0 0.0
    %2826 = vmatprep.mubr.f32.mxu0 0.0
    %v2827 = vand.u32 %v2332, 4294901760
    %2828 = vmatmul.mubr.f32.gmra.mxu0 %v2827
    %v2829 = vpop.f32.mrf.mxu0
    %v2830 = vadd.f32 %v2751, %v2829
    %v2831 = vpop.f32.mrf.mxu0
    %2832 = vmatprep.mubr.f32.mxu0 0.0
    %v2833 = vand.u32 %v2335, 4294901760
    %2834 = vmatmul.mubr.f32.gmra.mxu0 %v2833
    %v2835 = vpop.f32.mrf.mxu0
    %v2836 = vadd.f32 %v2757, %v2835
    %v2837 = vpop.f32.mrf.mxu0
    %2838 = vdwg.mxu0
    %v2840 = vsel %vm1760, %v1780, 0
    %v2843 = vsel %vm1760, %v1782, 0
    %2845 = vmatprep.subr.mxu0 0.0
    %2846 = vmatpush1.msra.mxu0 0.0
    %2847 = vmatprep.subr.mxu0 0.0
    %2848 = vmatpush1.msra.mxu0 0.0
    %2849 = vmatprep.subr.mxu0 0.0
    %2850 = vmatpush1.msra.mxu0 0.0
    %2851 = vmatprep.subr.mxu0 0.0
    %2852 = vmatpush1.msra.mxu0 0.0
    %2853 = vmatprep.subr.mxu0 0.0
    %2854 = vmatpush1.msra.mxu0 0.0
    %2855 = vmatprep.subr.mxu0 0.0
    %2856 = vmatpush1.msra.mxu0 0.0
    %2857 = vmatprep.subr.mxu0 0.0
    %2858 = vmatpush1.msra.mxu0 0.0
    %2859 = vmatprep.subr.mxu0 0.0
    %2860 = vmatpush1.msra.mxu0 0.0
    %2861 = vmatprep.subr.mxu0 0.0
    %2862 = vmatpush1.msra.mxu0 0.0
    %2863 = vmatprep.subr.mxu0 0.0
    %2864 = vmatpush1.msra.mxu0 0.0
    %2865 = vmatprep.subr.mxu0 0.0
    %2866 = vmatpush1.msra.mxu0 0.0
    %2867 = vmatprep.subr.mxu0 0.0
    %2868 = vmatpush1.msra.mxu0 0.0
    %2869 = vmatprep.subr.mxu0 0.0
    %2870 = vmatpush1.msra.mxu0 0.0
    %2871 = vmatprep.subr.mxu0 0.0
    %2872 = vmatpush1.msra.mxu0 0.0
    %2873 = vmatprep.subr.mxu0 0.0
    %v2874 = vand.u32 %v1240, 4294901760
    %2875 = vmatpush1.msra.mxu0 %v2874
    %2876 = vmatprep.subr.mxu0 0.0
    %v2877 = vand.u32 %v1234, 4294901760
    %2878 = vmatpush1.msra.mxu0 %v2877
    %2879 = vmatprep.subr.mxu0 0.0
    %2880 = vmatpush2.msra.mxu0 0.0
    %2881 = vmatprep.subr.mxu0 0.0
    %2882 = vmatpush2.msra.mxu0 0.0
    %2883 = vmatprep.subr.mxu0 0.0
    %2884 = vmatpush2.msra.mxu0 0.0
    %2885 = vmatprep.subr.mxu0 0.0
    %2886 = vmatpush2.msra.mxu0 0.0
    %2887 = vmatprep.subr.mxu0 0.0
    %2888 = vmatpush2.msra.mxu0 0.0
    %2889 = vmatprep.subr.mxu0 0.0
    %2890 = vmatpush2.msra.mxu0 0.0
    %2891 = vmatprep.subr.mxu0 0.0
    %2892 = vmatpush2.msra.mxu0 0.0
    %2893 = vmatprep.subr.mxu0 0.0
    %2894 = vmatpush2.msra.mxu0 0.0
    %2895 = vmatprep.subr.mxu0 0.0
    %2896 = vmatpush2.msra.mxu0 0.0
    %2897 = vmatprep.subr.mxu0 0.0
    %2898 = vmatpush2.msra.mxu0 0.0
    %2899 = vmatprep.subr.mxu0 0.0
    %2900 = vmatpush2.msra.mxu0 0.0
    %2901 = vmatprep.subr.mxu0 0.0
    %2902 = vmatpush2.msra.mxu0 0.0
    %2903 = vmatprep.subr.mxu0 0.0
    %2904 = vmatpush2.msra.mxu0 0.0
    %2905 = vmatprep.subr.mxu0 0.0
    %2906 = vmatpush2.msra.mxu0 0.0
    %2907 = vmatprep.subr.mxu0 0.0
    %2908 = vmatpush2.msra.mxu0 0.0
    %2909 = vmatprep.subr.mxu0 0.0
    %2910 = vmatpush2.msra.mxu0 0.0
    %2911 = vmatprep.mubr.f32.mxu0 0.0
    %v2912 = vand.u32 %v2840, 4294901760
    %v2913 = vsub.f32 %v2840, %v2912
    %v2914 = vand.u32 %v2913, 4294901760
    %v2915 = vsub.f32 %v2913, %v2914
    %v2916 = vand.u32 %v2915, 4294901760
    %2917 = vmatmul.mubr.f32.gmra.mxu0 %v2916
    %v2918 = vpop.f32.mrf.mxu0
    %v2919 = vadd.f32 %v2830, %v2918
    %v2920 = vpop.f32.mrf.mxu0
    %2921 = vmatprep.mubr.f32.mxu0 0.0
    %v2922 = vand.u32 %v2843, 4294901760
    %v2923 = vsub.f32 %v2843, %v2922
    %v2924 = vand.u32 %v2923, 4294901760
    %v2925 = vsub.f32 %v2923, %v2924
    %v2926 = vand.u32 %v2925, 4294901760
    %2927 = vmatmul.mubr.f32.gmra.mxu0 %v2926
    %v2928 = vpop.f32.mrf.mxu0
    %v2929 = vadd.f32 %v2836, %v2928
    %v2930 = vpop.f32.mrf.mxu0
    %2931 = vdwg.mxu0
    %2932 = vmatprep.subr.mxu0 0.0
    %2933 = vmatpush1.msra.mxu0 0.0
    %2934 = vmatprep.subr.mxu0 0.0
    %2935 = vmatpush1.msra.mxu0 0.0
    %2936 = vmatprep.subr.mxu0 0.0
    %2937 = vmatpush1.msra.mxu0 0.0
    %2938 = vmatprep.subr.mxu0 0.0
    %2939 = vmatpush1.msra.mxu0 0.0
    %2940 = vmatprep.subr.mxu0 0.0
    %2941 = vmatpush1.msra.mxu0 0.0
    %2942 = vmatprep.subr.mxu0 0.0
    %2943 = vmatpush1.msra.mxu0 0.0
    %2944 = vmatprep.subr.mxu0 0.0
    %2945 = vmatpush1.msra.mxu0 0.0
    %2946 = vmatprep.subr.mxu0 0.0
    %2947 = vmatpush1.msra.mxu0 0.0
    %2948 = vmatprep.subr.mxu0 0.0
    %2949 = vmatpush1.msra.mxu0 0.0
    %2950 = vmatprep.subr.mxu0 0.0
    %2951 = vmatpush1.msra.mxu0 0.0
    %2952 = vmatprep.subr.mxu0 0.0
    %2953 = vmatpush1.msra.mxu0 0.0
    %2954 = vmatprep.subr.mxu0 0.0
    %2955 = vmatpush1.msra.mxu0 0.0
    %2956 = vmatprep.subr.mxu0 0.0
    %2957 = vmatpush1.msra.mxu0 0.0
    %2958 = vmatprep.subr.mxu0 0.0
    %2959 = vmatpush1.msra.mxu0 0.0
    %2960 = vmatprep.subr.mxu0 0.0
    %v2961 = vand.u32 %v1240, 4294901760
    %v2962 = vsub.f32 %v1240, %v2961
    %v2963 = vand.u32 %v2962, 4294901760
    %v2964 = vsub.f32 %v2962, %v2963
    %v2965 = vand.u32 %v2964, 4294901760
    %2966 = vmatpush1.msra.mxu0 %v2965
    %2967 = vmatprep.subr.mxu0 0.0
    %v2968 = vand.u32 %v1234, 4294901760
    %v2969 = vsub.f32 %v1234, %v2968
    %v2970 = vand.u32 %v2969, 4294901760
    %v2971 = vsub.f32 %v2969, %v2970
    %v2972 = vand.u32 %v2971, 4294901760
    %2973 = vmatpush1.msra.mxu0 %v2972
    %2974 = vmatprep.subr.mxu0 0.0
    %2975 = vmatpush2.msra.mxu0 0.0
    %2976 = vmatprep.subr.mxu0 0.0
    %2977 = vmatpush2.msra.mxu0 0.0
    %2978 = vmatprep.subr.mxu0 0.0
    %2979 = vmatpush2.msra.mxu0 0.0
    %2980 = vmatprep.subr.mxu0 0.0
    %2981 = vmatpush2.msra.mxu0 0.0
    %2982 = vmatprep.subr.mxu0 0.0
    %2983 = vmatpush2.msra.mxu0 0.0
    %2984 = vmatprep.subr.mxu0 0.0
    %2985 = vmatpush2.msra.mxu0 0.0
    %2986 = vmatprep.subr.mxu0 0.0
    %2987 = vmatpush2.msra.mxu0 0.0
    %2988 = vmatprep.subr.mxu0 0.0
    %2989 = vmatpush2.msra.mxu0 0.0
    %2990 = vmatprep.subr.mxu0 0.0
    %2991 = vmatpush2.msra.mxu0 0.0
    %2992 = vmatprep.subr.mxu0 0.0
    %2993 = vmatpush2.msra.mxu0 0.0
    %2994 = vmatprep.subr.mxu0 0.0
    %2995 = vmatpush2.msra.mxu0 0.0
    %2996 = vmatprep.subr.mxu0 0.0
    %2997 = vmatpush2.msra.mxu0 0.0
    %2998 = vmatprep.subr.mxu0 0.0
    %2999 = vmatpush2.msra.mxu0 0.0
    %3000 = vmatprep.subr.mxu0 0.0
    %3001 = vmatpush2.msra.mxu0 0.0
    %3002 = vmatprep.subr.mxu0 0.0
    %3003 = vmatpush2.msra.mxu0 0.0
    %3004 = vmatprep.subr.mxu0 0.0
    %3005 = vmatpush2.msra.mxu0 0.0
    %3006 = vmatprep.mubr.f32.mxu0 0.0
    %v3007 = vand.u32 %v2840, 4294901760
    %3008 = vmatmul.mubr.f32.gmra.mxu0 %v3007
    %v3009 = vpop.f32.mrf.mxu0
    %v3010 = vadd.f32 %v2919, %v3009
    %v3011 = vpop.f32.mrf.mxu0
    %3012 = vmatprep.mubr.f32.mxu0 0.0
    %v3013 = vand.u32 %v2843, 4294901760
    %3014 = vmatmul.mubr.f32.gmra.mxu0 %v3013
    %v3015 = vpop.f32.mrf.mxu0
    %v3016 = vadd.f32 %v2929, %v3015
    %v3017 = vpop.f32.mrf.mxu0
    %3018 = vdwg.mxu0
    %3019 = vmatprep.subr.mxu0 0.0
    %3020 = vmatpush1.msra.mxu0 0.0
    %3021 = vmatprep.subr.mxu0 0.0
    %3022 = vmatpush1.msra.mxu0 0.0
    %3023 = vmatprep.subr.mxu0 0.0
    %3024 = vmatpush1.msra.mxu0 0.0
    %3025 = vmatprep.subr.mxu0 0.0
    %3026 = vmatpush1.msra.mxu0 0.0
    %3027 = vmatprep.subr.mxu0 0.0
    %3028 = vmatpush1.msra.mxu0 0.0
    %3029 = vmatprep.subr.mxu0 0.0
    %3030 = vmatpush1.msra.mxu0 0.0
    %3031 = vmatprep.subr.mxu0 0.0
    %3032 = vmatpush1.msra.mxu0 0.0
    %3033 = vmatprep.subr.mxu0 0.0
    %3034 = vmatpush1.msra.mxu0 0.0
    %3035 = vmatprep.subr.mxu0 0.0
    %3036 = vmatpush1.msra.mxu0 0.0
    %3037 = vmatprep.subr.mxu0 0.0
    %3038 = vmatpush1.msra.mxu0 0.0
    %3039 = vmatprep.subr.mxu0 0.0
    %3040 = vmatpush1.msra.mxu0 0.0
    %3041 = vmatprep.subr.mxu0 0.0
    %3042 = vmatpush1.msra.mxu0 0.0
    %3043 = vmatprep.subr.mxu0 0.0
    %3044 = vmatpush1.msra.mxu0 0.0
    %3045 = vmatprep.subr.mxu0 0.0
    %3046 = vmatpush1.msra.mxu0 0.0
    %3047 = vmatprep.subr.mxu0 0.0
    %v3048 = vand.u32 %v1240, 4294901760
    %v3049 = vsub.f32 %v1240, %v3048
    %3050 = vmatpush1.msra.mxu0 %v3049
    %3051 = vmatprep.subr.mxu0 0.0
    %v3052 = vand.u32 %v1234, 4294901760
    %v3053 = vsub.f32 %v1234, %v3052
    %3054 = vmatpush1.msra.mxu0 %v3053
    %3055 = vmatprep.subr.mxu0 0.0
    %3056 = vmatpush2.msra.mxu0 0.0
    %3057 = vmatprep.subr.mxu0 0.0
    %3058 = vmatpush2.msra.mxu0 0.0
    %3059 = vmatprep.subr.mxu0 0.0
    %3060 = vmatpush2.msra.mxu0 0.0
    %3061 = vmatprep.subr.mxu0 0.0
    %3062 = vmatpush2.msra.mxu0 0.0
    %3063 = vmatprep.subr.mxu0 0.0
    %3064 = vmatpush2.msra.mxu0 0.0
    %3065 = vmatprep.subr.mxu0 0.0
    %3066 = vmatpush2.msra.mxu0 0.0
    %3067 = vmatprep.subr.mxu0 0.0
    %3068 = vmatpush2.msra.mxu0 0.0
    %3069 = vmatprep.subr.mxu0 0.0
    %3070 = vmatpush2.msra.mxu0 0.0
    %3071 = vmatprep.subr.mxu0 0.0
    %3072 = vmatpush2.msra.mxu0 0.0
    %3073 = vmatprep.subr.mxu0 0.0
    %3074 = vmatpush2.msra.mxu0 0.0
    %3075 = vmatprep.subr.mxu0 0.0
    %3076 = vmatpush2.msra.mxu0 0.0
    %3077 = vmatprep.subr.mxu0 0.0
    %3078 = vmatpush2.msra.mxu0 0.0
    %3079 = vmatprep.subr.mxu0 0.0
    %3080 = vmatpush2.msra.mxu0 0.0
    %3081 = vmatprep.subr.mxu0 0.0
    %3082 = vmatpush2.msra.mxu0 0.0
    %3083 = vmatprep.subr.mxu0 0.0
    %3084 = vmatpush2.msra.mxu0 0.0
    %3085 = vmatprep.subr.mxu0 0.0
    %3086 = vmatpush2.msra.mxu0 0.0
    %3087 = vmatprep.mubr.f32.mxu0 0.0
    %v3088 = vand.u32 %v2840, 4294901760
    %v3089 = vsub.f32 %v2840, %v3088
    %3090 = vmatmul.mubr.f32.gmra.mxu0 %v3089
    %v3091 = vpop.f32.mrf.mxu0
    %v3092 = vadd.f32 %v3010, %v3091
    %v3093 = vpop.f32.mrf.mxu0
    %3094 = vmatprep.mubr.f32.mxu0 0.0
    %v3095 = vand.u32 %v2843, 4294901760
    %v3096 = vsub.f32 %v2843, %v3095
    %3097 = vmatmul.mubr.f32.gmra.mxu0 %v3096
    %v3098 = vpop.f32.mrf.mxu0
    %v3099 = vadd.f32 %v3016, %v3098
    %v3100 = vpop.f32.mrf.mxu0
    %3101 = vdwg.mxu0
    %3102 = vmatprep.subr.mxu0 0.0
    %3103 = vmatpush1.msra.mxu0 0.0
    %3104 = vmatprep.subr.mxu0 0.0
    %3105 = vmatpush1.msra.mxu0 0.0
    %3106 = vmatprep.subr.mxu0 0.0
    %3107 = vmatpush1.msra.mxu0 0.0
    %3108 = vmatprep.subr.mxu0 0.0
    %3109 = vmatpush1.msra.mxu0 0.0
    %3110 = vmatprep.subr.mxu0 0.0
    %3111 = vmatpush1.msra.mxu0 0.0
    %3112 = vmatprep.subr.mxu0 0.0
    %3113 = vmatpush1.msra.mxu0 0.0
    %3114 = vmatprep.subr.mxu0 0.0
    %3115 = vmatpush1.msra.mxu0 0.0
    %3116 = vmatprep.subr.mxu0 0.0
    %3117 = vmatpush1.msra.mxu0 0.0
    %3118 = vmatprep.subr.mxu0 0.0
    %3119 = vmatpush1.msra.mxu0 0.0
    %3120 = vmatprep.subr.mxu0 0.0
    %3121 = vmatpush1.msra.mxu0 0.0
    %3122 = vmatprep.subr.mxu0 0.0
    %3123 = vmatpush1.msra.mxu0 0.0
    %3124 = vmatprep.subr.mxu0 0.0
    %3125 = vmatpush1.msra.mxu0 0.0
    %3126 = vmatprep.subr.mxu0 0.0
    %3127 = vmatpush1.msra.mxu0 0.0
    %3128 = vmatprep.subr.mxu0 0.0
    %3129 = vmatpush1.msra.mxu0 0.0
    %3130 = vmatprep.subr.mxu0 0.0
    %v3131 = vand.u32 %v1240, 4294901760
    %3132 = vmatpush1.msra.mxu0 %v3131
    %3133 = vmatprep.subr.mxu0 0.0
    %v3134 = vand.u32 %v1234, 4294901760
    %3135 = vmatpush1.msra.mxu0 %v3134
    %3136 = vmatprep.subr.mxu0 0.0
    %3137 = vmatpush2.msra.mxu0 0.0
    %3138 = vmatprep.subr.mxu0 0.0
    %3139 = vmatpush2.msra.mxu0 0.0
    %3140 = vmatprep.subr.mxu0 0.0
    %3141 = vmatpush2.msra.mxu0 0.0
    %3142 = vmatprep.subr.mxu0 0.0
    %3143 = vmatpush2.msra.mxu0 0.0
    %3144 = vmatprep.subr.mxu0 0.0
    %3145 = vmatpush2.msra.mxu0 0.0
    %3146 = vmatprep.subr.mxu0 0.0
    %3147 = vmatpush2.msra.mxu0 0.0
    %3148 = vmatprep.subr.mxu0 0.0
    %3149 = vmatpush2.msra.mxu0 0.0
    %3150 = vmatprep.subr.mxu0 0.0
    %3151 = vmatpush2.msra.mxu0 0.0
    %3152 = vmatprep.subr.mxu0 0.0
    %3153 = vmatpush2.msra.mxu0 0.0
    %3154 = vmatprep.subr.mxu0 0.0
    %3155 = vmatpush2.msra.mxu0 0.0
    %3156 = vmatprep.subr.mxu0 0.0
    %3157 = vmatpush2.msra.mxu0 0.0
    %3158 = vmatprep.subr.mxu0 0.0
    %3159 = vmatpush2.msra.mxu0 0.0
    %3160 = vmatprep.subr.mxu0 0.0
    %3161 = vmatpush2.msra.mxu0 0.0
    %3162 = vmatprep.subr.mxu0 0.0
    %3163 = vmatpush2.msra.mxu0 0.0
    %3164 = vmatprep.subr.mxu0 0.0
    %3165 = vmatpush2.msra.mxu0 0.0
    %3166 = vmatprep.subr.mxu0 0.0
    %3167 = vmatpush2.msra.mxu0 0.0
    %3168 = vmatprep.mubr.f32.mxu0 0.0
    %v3169 = vand.u32 %v2840, 4294901760
    %v3170 = vsub.f32 %v2840, %v3169
    %v3171 = vand.u32 %v3170, 4294901760
    %3172 = vmatmul.mubr.f32.gmra.mxu0 %v3171
    %v3173 = vpop.f32.mrf.mxu0
    %v3174 = vadd.f32 %v3092, %v3173
    %v3175 = vpop.f32.mrf.mxu0
    %3176 = vmatprep.mubr.f32.mxu0 0.0
    %v3177 = vand.u32 %v2843, 4294901760
    %v3178 = vsub.f32 %v2843, %v3177
    %v3179 = vand.u32 %v3178, 4294901760
    %3180 = vmatmul.mubr.f32.gmra.mxu0 %v3179
    %v3181 = vpop.f32.mrf.mxu0
    %v3182 = vadd.f32 %v3099, %v3181
    %v3183 = vpop.f32.mrf.mxu0
    %3184 = vdwg.mxu0
    %3185 = vmatprep.subr.mxu0 0.0
    %3186 = vmatpush1.msra.mxu0 0.0
    %3187 = vmatprep.subr.mxu0 0.0
    %3188 = vmatpush1.msra.mxu0 0.0
    %3189 = vmatprep.subr.mxu0 0.0
    %3190 = vmatpush1.msra.mxu0 0.0
    %3191 = vmatprep.subr.mxu0 0.0
    %3192 = vmatpush1.msra.mxu0 0.0
    %3193 = vmatprep.subr.mxu0 0.0
    %3194 = vmatpush1.msra.mxu0 0.0
    %3195 = vmatprep.subr.mxu0 0.0
    %3196 = vmatpush1.msra.mxu0 0.0
    %3197 = vmatprep.subr.mxu0 0.0
    %3198 = vmatpush1.msra.mxu0 0.0
    %3199 = vmatprep.subr.mxu0 0.0
    %3200 = vmatpush1.msra.mxu0 0.0
    %3201 = vmatprep.subr.mxu0 0.0
    %3202 = vmatpush1.msra.mxu0 0.0
    %3203 = vmatprep.subr.mxu0 0.0
    %3204 = vmatpush1.msra.mxu0 0.0
    %3205 = vmatprep.subr.mxu0 0.0
    %3206 = vmatpush1.msra.mxu0 0.0
    %3207 = vmatprep.subr.mxu0 0.0
    %3208 = vmatpush1.msra.mxu0 0.0
    %3209 = vmatprep.subr.mxu0 0.0
    %3210 = vmatpush1.msra.mxu0 0.0
    %3211 = vmatprep.subr.mxu0 0.0
    %3212 = vmatpush1.msra.mxu0 0.0
    %3213 = vmatprep.subr.mxu0 0.0
    %v3214 = vand.u32 %v1240, 4294901760
    %v3215 = vsub.f32 %v1240, %v3214
    %v3216 = vand.u32 %v3215, 4294901760
    %3217 = vmatpush1.msra.mxu0 %v3216
    %3218 = vmatprep.subr.mxu0 0.0
    %v3219 = vand.u32 %v1234, 4294901760
    %v3220 = vsub.f32 %v1234, %v3219
    %v3221 = vand.u32 %v3220, 4294901760
    %3222 = vmatpush1.msra.mxu0 %v3221
    %3223 = vmatprep.subr.mxu0 0.0
    %3224 = vmatpush2.msra.mxu0 0.0
    %3225 = vmatprep.subr.mxu0 0.0
    %3226 = vmatpush2.msra.mxu0 0.0
    %3227 = vmatprep.subr.mxu0 0.0
    %3228 = vmatpush2.msra.mxu0 0.0
    %3229 = vmatprep.subr.mxu0 0.0
    %3230 = vmatpush2.msra.mxu0 0.0
    %3231 = vmatprep.subr.mxu0 0.0
    %3232 = vmatpush2.msra.mxu0 0.0
    %3233 = vmatprep.subr.mxu0 0.0
    %3234 = vmatpush2.msra.mxu0 0.0
    %3235 = vmatprep.subr.mxu0 0.0
    %3236 = vmatpush2.msra.mxu0 0.0
    %3237 = vmatprep.subr.mxu0 0.0
    %3238 = vmatpush2.msra.mxu0 0.0
    %3239 = vmatprep.subr.mxu0 0.0
    %3240 = vmatpush2.msra.mxu0 0.0
    %3241 = vmatprep.subr.mxu0 0.0
    %3242 = vmatpush2.msra.mxu0 0.0
    %3243 = vmatprep.subr.mxu0 0.0
    %3244 = vmatpush2.msra.mxu0 0.0
    %3245 = vmatprep.subr.mxu0 0.0
    %3246 = vmatpush2.msra.mxu0 0.0
    %3247 = vmatprep.subr.mxu0 0.0
    %3248 = vmatpush2.msra.mxu0 0.0
    %3249 = vmatprep.subr.mxu0 0.0
    %3250 = vmatpush2.msra.mxu0 0.0
    %3251 = vmatprep.subr.mxu0 0.0
    %3252 = vmatpush2.msra.mxu0 0.0
    %3253 = vmatprep.subr.mxu0 0.0
    %3254 = vmatpush2.msra.mxu0 0.0
    %3255 = vmatprep.mubr.f32.mxu0 0.0
    %v3256 = vand.u32 %v2840, 4294901760
    %3257 = vmatmul.mubr.f32.gmra.mxu0 %v3256
    %v3258 = vpop.f32.mrf.mxu0
    %v3259 = vadd.f32 %v3174, %v3258
    %v3260 = vpop.f32.mrf.mxu0
    %3261 = vmatprep.mubr.f32.mxu0 0.0
    %v3262 = vand.u32 %v2843, 4294901760
    %3263 = vmatmul.mubr.f32.gmra.mxu0 %v3262
    %v3264 = vpop.f32.mrf.mxu0
    %v3265 = vadd.f32 %v3182, %v3264
    %v3266 = vpop.f32.mrf.mxu0
    %3267 = vdwg.mxu0
    %3268 = vmatprep.subr.mxu0 0.0
    %3269 = vmatpush1.msra.mxu0 0.0
    %3270 = vmatprep.subr.mxu0 0.0
    %3271 = vmatpush1.msra.mxu0 0.0
    %3272 = vmatprep.subr.mxu0 0.0
    %3273 = vmatpush1.msra.mxu0 0.0
    %3274 = vmatprep.subr.mxu0 0.0
    %3275 = vmatpush1.msra.mxu0 0.0
    %3276 = vmatprep.subr.mxu0 0.0
    %3277 = vmatpush1.msra.mxu0 0.0
    %3278 = vmatprep.subr.mxu0 0.0
    %3279 = vmatpush1.msra.mxu0 0.0
    %3280 = vmatprep.subr.mxu0 0.0
    %3281 = vmatpush1.msra.mxu0 0.0
    %3282 = vmatprep.subr.mxu0 0.0
    %3283 = vmatpush1.msra.mxu0 0.0
    %3284 = vmatprep.subr.mxu0 0.0
    %3285 = vmatpush1.msra.mxu0 0.0
    %3286 = vmatprep.subr.mxu0 0.0
    %3287 = vmatpush1.msra.mxu0 0.0
    %3288 = vmatprep.subr.mxu0 0.0
    %3289 = vmatpush1.msra.mxu0 0.0
    %3290 = vmatprep.subr.mxu0 0.0
    %3291 = vmatpush1.msra.mxu0 0.0
    %3292 = vmatprep.subr.mxu0 0.0
    %3293 = vmatpush1.msra.mxu0 0.0
    %3294 = vmatprep.subr.mxu0 0.0
    %3295 = vmatpush1.msra.mxu0 0.0
    %3296 = vmatprep.subr.mxu0 0.0
    %v3297 = vand.u32 %v1240, 4294901760
    %3298 = vmatpush1.msra.mxu0 %v3297
    %3299 = vmatprep.subr.mxu0 0.0
    %v3300 = vand.u32 %v1234, 4294901760
    %3301 = vmatpush1.msra.mxu0 %v3300
    %3302 = vmatprep.subr.mxu0 0.0
    %3303 = vmatpush2.msra.mxu0 0.0
    %3304 = vmatprep.subr.mxu0 0.0
    %3305 = vmatpush2.msra.mxu0 0.0
    %3306 = vmatprep.subr.mxu0 0.0
    %3307 = vmatpush2.msra.mxu0 0.0
    %3308 = vmatprep.subr.mxu0 0.0
    %3309 = vmatpush2.msra.mxu0 0.0
    %3310 = vmatprep.subr.mxu0 0.0
    %3311 = vmatpush2.msra.mxu0 0.0
    %3312 = vmatprep.subr.mxu0 0.0
    %3313 = vmatpush2.msra.mxu0 0.0
    %3314 = vmatprep.subr.mxu0 0.0
    %3315 = vmatpush2.msra.mxu0 0.0
    %3316 = vmatprep.subr.mxu0 0.0
    %3317 = vmatpush2.msra.mxu0 0.0
    %3318 = vmatprep.subr.mxu0 0.0
    %3319 = vmatpush2.msra.mxu0 0.0
    %3320 = vmatprep.subr.mxu0 0.0
    %3321 = vmatpush2.msra.mxu0 0.0
    %3322 = vmatprep.subr.mxu0 0.0
    %3323 = vmatpush2.msra.mxu0 0.0
    %3324 = vmatprep.subr.mxu0 0.0
    %3325 = vmatpush2.msra.mxu0 0.0
    %3326 = vmatprep.subr.mxu0 0.0
    %3327 = vmatpush2.msra.mxu0 0.0
    %3328 = vmatprep.subr.mxu0 0.0
    %3329 = vmatpush2.msra.mxu0 0.0
    %3330 = vmatprep.subr.mxu0 0.0
    %3331 = vmatpush2.msra.mxu0 0.0
    %3332 = vmatprep.subr.mxu0 0.0
    %3333 = vmatpush2.msra.mxu0 0.0
    %3334 = vmatprep.mubr.f32.mxu0 0.0
    %v3335 = vand.u32 %v2840, 4294901760
    %3336 = vmatmul.mubr.f32.gmra.mxu0 %v3335
    %v3337 = vpop.f32.mrf.mxu0
    %v3338 = vadd.f32 %v3259, %v3337
    %v3339 = vpop.f32.mrf.mxu0
    %3340 = vmatprep.mubr.f32.mxu0 0.0
    %v3341 = vand.u32 %v2843, 4294901760
    %3342 = vmatmul.mubr.f32.gmra.mxu0 %v3341
    %v3343 = vpop.f32.mrf.mxu0
    %v3344 = vadd.f32 %v3265, %v3343
    %v3345 = vpop.f32.mrf.mxu0
    %3346 = vdwg.mxu0
    %3347 = vrot.lane.b32.xlu0 %v700, 112
    %v3348 = vpop.permute.xlu0 %3347
    %3349 = vrot.lane.b32.xlu0 %v706, 112
    %v3350 = vpop.permute.xlu0 %3349
    %3351 = vrot.lane.b32.xlu0 %v700, 80
    %v3352 = vpop.permute.xlu0 %3351
    %3353 = vrot.lane.b32.xlu0 %v706, 80
    %v3354 = vpop.permute.xlu0 %3353
    %v3355 = vsel %vm1249, %v3348, 0
    %v3357 = vsel %vm1249, %v3350, 0
    %v3359 = vsel %vm1249, %v3352, 0
    %v3361 = vsel %vm1249, %v3354, 0
    %3363 = vmatprep.subr.mxu0 0.0
    %3364 = vmatpush1.xpose.msra.mxu0 0.0
    %3365 = vmatprep.subr.mxu0 0.0
    %3366 = vmatpush1.xpose.msra.mxu0 0.0
    %3367 = vmatprep.subr.mxu0 0.0
    %3368 = vmatpush1.xpose.msra.mxu0 0.0
    %3369 = vmatprep.subr.mxu0 0.0
    %3370 = vmatpush1.xpose.msra.mxu0 0.0
    %3371 = vmatprep.subr.mxu0 0.0
    %3372 = vmatpush1.xpose.msra.mxu0 0.0
    %3373 = vmatprep.subr.mxu0 0.0
    %3374 = vmatpush1.xpose.msra.mxu0 0.0
    %3375 = vmatprep.subr.mxu0 0.0
    %3376 = vmatpush1.xpose.msra.mxu0 0.0
    %3377 = vmatprep.subr.mxu0 0.0
    %3378 = vmatpush1.xpose.msra.mxu0 0.0
    %3379 = vmatprep.subr.mxu0 0.0
    %3380 = vmatpush1.xpose.msra.mxu0 0.0
    %3381 = vmatprep.subr.mxu0 0.0
    %3382 = vmatpush1.xpose.msra.mxu0 0.0
    %3383 = vmatprep.subr.mxu0 0.0
    %3384 = vmatpush1.xpose.msra.mxu0 0.0
    %3385 = vmatprep.subr.mxu0 0.0
    %3386 = vmatpush1.xpose.msra.mxu0 0.0
    %3387 = vmatprep.subr.mxu0 0.0
    %3388 = vmatpush1.xpose.msra.mxu0 0.0
    %3389 = vmatprep.subr.mxu0 0.0
    %3390 = vmatpush1.xpose.msra.mxu0 0.0
    %3391 = vmatprep.subr.mxu0 0.0
    %v3392 = vand.u32 %v3361, 4294901760
    %3393 = vmatpush1.xpose.msra.mxu0 %v3392
    %3394 = vmatprep.subr.mxu0 0.0
    %v3395 = vand.u32 %v3359, 4294901760
    %3396 = vmatpush1.xpose.msra.mxu0 %v3395
    %3397 = vmatprep.subr.mxu0 0.0
    %3398 = vmatpush2.xpose.msra.mxu0 0.0
    %3399 = vmatprep.subr.mxu0 0.0
    %3400 = vmatpush2.xpose.msra.mxu0 0.0
    %3401 = vmatprep.subr.mxu0 0.0
    %3402 = vmatpush2.xpose.msra.mxu0 0.0
    %3403 = vmatprep.subr.mxu0 0.0
    %3404 = vmatpush2.xpose.msra.mxu0 0.0
    %3405 = vmatprep.subr.mxu0 0.0
    %3406 = vmatpush2.xpose.msra.mxu0 0.0
    %3407 = vmatprep.subr.mxu0 0.0
    %3408 = vmatpush2.xpose.msra.mxu0 0.0
    %3409 = vmatprep.subr.mxu0 0.0
    %3410 = vmatpush2.xpose.msra.mxu0 0.0
    %3411 = vmatprep.subr.mxu0 0.0
    %3412 = vmatpush2.xpose.msra.mxu0 0.0
    %3413 = vmatprep.subr.mxu0 0.0
    %3414 = vmatpush2.xpose.msra.mxu0 0.0
    %3415 = vmatprep.subr.mxu0 0.0
    %3416 = vmatpush2.xpose.msra.mxu0 0.0
    %3417 = vmatprep.subr.mxu0 0.0
    %3418 = vmatpush2.xpose.msra.mxu0 0.0
    %3419 = vmatprep.subr.mxu0 0.0
    %3420 = vmatpush2.xpose.msra.mxu0 0.0
    %3421 = vmatprep.subr.mxu0 0.0
    %3422 = vmatpush2.xpose.msra.mxu0 0.0
    %3423 = vmatprep.subr.mxu0 0.0
    %3424 = vmatpush2.xpose.msra.mxu0 0.0
    %3425 = vmatprep.subr.mxu0 0.0
    %3426 = vmatpush2.xpose.msra.mxu0 0.0
    %3427 = vmatprep.subr.mxu0 0.0
    %3428 = vmatpush2.xpose.msra.mxu0 0.0
    %3429 = vmatprep.mubr.f32.mxu0 0.0
    %v3430 = vand.u32 %v3355, 4294901760
    %v3431 = vsub.f32 %v3355, %v3430
    %v3432 = vand.u32 %v3431, 4294901760
    %v3433 = vsub.f32 %v3431, %v3432
    %v3434 = vand.u32 %v3433, 4294901760
    %3435 = vmatmul.mubr.f32.gmra.mxu0 %v3434
    %v3436 = vpop.f32.mrf.mxu0
    %v3437 = vadd.f32 %v91, %v3436
    %v3438 = vpop.f32.mrf.mxu0
    %3439 = vmatprep.mubr.f32.mxu0 0.0
    %v3440 = vand.u32 %v3357, 4294901760
    %v3441 = vsub.f32 %v3357, %v3440
    %v3442 = vand.u32 %v3441, 4294901760
    %v3443 = vsub.f32 %v3441, %v3442
    %v3444 = vand.u32 %v3443, 4294901760
    %3445 = vmatmul.mubr.f32.gmra.mxu0 %v3444
    %v3446 = vpop.f32.mrf.mxu0
    %v3447 = vadd.f32 %v92, %v3446
    %v3448 = vpop.f32.mrf.mxu0
    %3449 = vdwg.mxu0
    %3450 = vmatprep.subr.mxu0 0.0
    %3451 = vmatpush1.xpose.msra.mxu0 0.0
    %3452 = vmatprep.subr.mxu0 0.0
    %3453 = vmatpush1.xpose.msra.mxu0 0.0
    %3454 = vmatprep.subr.mxu0 0.0
    %3455 = vmatpush1.xpose.msra.mxu0 0.0
    %3456 = vmatprep.subr.mxu0 0.0
    %3457 = vmatpush1.xpose.msra.mxu0 0.0
    %3458 = vmatprep.subr.mxu0 0.0
    %3459 = vmatpush1.xpose.msra.mxu0 0.0
    %3460 = vmatprep.subr.mxu0 0.0
    %3461 = vmatpush1.xpose.msra.mxu0 0.0
    %3462 = vmatprep.subr.mxu0 0.0
    %3463 = vmatpush1.xpose.msra.mxu0 0.0
    %3464 = vmatprep.subr.mxu0 0.0
    %3465 = vmatpush1.xpose.msra.mxu0 0.0
    %3466 = vmatprep.subr.mxu0 0.0
    %3467 = vmatpush1.xpose.msra.mxu0 0.0
    %3468 = vmatprep.subr.mxu0 0.0
    %3469 = vmatpush1.xpose.msra.mxu0 0.0
    %3470 = vmatprep.subr.mxu0 0.0
    %3471 = vmatpush1.xpose.msra.mxu0 0.0
    %3472 = vmatprep.subr.mxu0 0.0
    %3473 = vmatpush1.xpose.msra.mxu0 0.0
    %3474 = vmatprep.subr.mxu0 0.0
    %3475 = vmatpush1.xpose.msra.mxu0 0.0
    %3476 = vmatprep.subr.mxu0 0.0
    %3477 = vmatpush1.xpose.msra.mxu0 0.0
    %3478 = vmatprep.subr.mxu0 0.0
    %v3479 = vand.u32 %v3361, 4294901760
    %v3480 = vsub.f32 %v3361, %v3479
    %v3481 = vand.u32 %v3480, 4294901760
    %v3482 = vsub.f32 %v3480, %v3481
    %v3483 = vand.u32 %v3482, 4294901760
    %3484 = vmatpush1.xpose.msra.mxu0 %v3483
    %3485 = vmatprep.subr.mxu0 0.0
    %v3486 = vand.u32 %v3359, 4294901760
    %v3487 = vsub.f32 %v3359, %v3486
    %v3488 = vand.u32 %v3487, 4294901760
    %v3489 = vsub.f32 %v3487, %v3488
    %v3490 = vand.u32 %v3489, 4294901760
    %3491 = vmatpush1.xpose.msra.mxu0 %v3490
    %3492 = vmatprep.subr.mxu0 0.0
    %3493 = vmatpush2.xpose.msra.mxu0 0.0
    %3494 = vmatprep.subr.mxu0 0.0
    %3495 = vmatpush2.xpose.msra.mxu0 0.0
    %3496 = vmatprep.subr.mxu0 0.0
    %3497 = vmatpush2.xpose.msra.mxu0 0.0
    %3498 = vmatprep.subr.mxu0 0.0
    %3499 = vmatpush2.xpose.msra.mxu0 0.0
    %3500 = vmatprep.subr.mxu0 0.0
    %3501 = vmatpush2.xpose.msra.mxu0 0.0
    %3502 = vmatprep.subr.mxu0 0.0
    %3503 = vmatpush2.xpose.msra.mxu0 0.0
    %3504 = vmatprep.subr.mxu0 0.0
    %3505 = vmatpush2.xpose.msra.mxu0 0.0
    %3506 = vmatprep.subr.mxu0 0.0
    %3507 = vmatpush2.xpose.msra.mxu0 0.0
    %3508 = vmatprep.subr.mxu0 0.0
    %3509 = vmatpush2.xpose.msra.mxu0 0.0
    %3510 = vmatprep.subr.mxu0 0.0
    %3511 = vmatpush2.xpose.msra.mxu0 0.0
    %3512 = vmatprep.subr.mxu0 0.0
    %3513 = vmatpush2.xpose.msra.mxu0 0.0
    %3514 = vmatprep.subr.mxu0 0.0
    %3515 = vmatpush2.xpose.msra.mxu0 0.0
    %3516 = vmatprep.subr.mxu0 0.0
    %3517 = vmatpush2.xpose.msra.mxu0 0.0
    %3518 = vmatprep.subr.mxu0 0.0
    %3519 = vmatpush2.xpose.msra.mxu0 0.0
    %3520 = vmatprep.subr.mxu0 0.0
    %3521 = vmatpush2.xpose.msra.mxu0 0.0
    %3522 = vmatprep.subr.mxu0 0.0
    %3523 = vmatpush2.xpose.msra.mxu0 0.0
    %3524 = vmatprep.mubr.f32.mxu0 0.0
    %v3525 = vand.u32 %v3355, 4294901760
    %3526 = vmatmul.mubr.f32.gmra.mxu0 %v3525
    %v3527 = vpop.f32.mrf.mxu0
    %v3528 = vadd.f32 %v3437, %v3527
    %v3529 = vpop.f32.mrf.mxu0
    %3530 = vmatprep.mubr.f32.mxu0 0.0
    %v3531 = vand.u32 %v3357, 4294901760
    %3532 = vmatmul.mubr.f32.gmra.mxu0 %v3531
    %v3533 = vpop.f32.mrf.mxu0
    %v3534 = vadd.f32 %v3447, %v3533
    %v3535 = vpop.f32.mrf.mxu0
    %3536 = vdwg.mxu0
    %3537 = vmatprep.subr.mxu0 0.0
    %3538 = vmatpush1.xpose.msra.mxu0 0.0
    %3539 = vmatprep.subr.mxu0 0.0
    %3540 = vmatpush1.xpose.msra.mxu0 0.0
    %3541 = vmatprep.subr.mxu0 0.0
    %3542 = vmatpush1.xpose.msra.mxu0 0.0
    %3543 = vmatprep.subr.mxu0 0.0
    %3544 = vmatpush1.xpose.msra.mxu0 0.0
    %3545 = vmatprep.subr.mxu0 0.0
    %3546 = vmatpush1.xpose.msra.mxu0 0.0
    %3547 = vmatprep.subr.mxu0 0.0
    %3548 = vmatpush1.xpose.msra.mxu0 0.0
    %3549 = vmatprep.subr.mxu0 0.0
    %3550 = vmatpush1.xpose.msra.mxu0 0.0
    %3551 = vmatprep.subr.mxu0 0.0
    %3552 = vmatpush1.xpose.msra.mxu0 0.0
    %3553 = vmatprep.subr.mxu0 0.0
    %3554 = vmatpush1.xpose.msra.mxu0 0.0
    %3555 = vmatprep.subr.mxu0 0.0
    %3556 = vmatpush1.xpose.msra.mxu0 0.0
    %3557 = vmatprep.subr.mxu0 0.0
    %3558 = vmatpush1.xpose.msra.mxu0 0.0
    %3559 = vmatprep.subr.mxu0 0.0
    %3560 = vmatpush1.xpose.msra.mxu0 0.0
    %3561 = vmatprep.subr.mxu0 0.0
    %3562 = vmatpush1.xpose.msra.mxu0 0.0
    %3563 = vmatprep.subr.mxu0 0.0
    %3564 = vmatpush1.xpose.msra.mxu0 0.0
    %3565 = vmatprep.subr.mxu0 0.0
    %v3566 = vand.u32 %v3361, 4294901760
    %v3567 = vsub.f32 %v3361, %v3566
    %3568 = vmatpush1.xpose.msra.mxu0 %v3567
    %3569 = vmatprep.subr.mxu0 0.0
    %v3570 = vand.u32 %v3359, 4294901760
    %v3571 = vsub.f32 %v3359, %v3570
    %3572 = vmatpush1.xpose.msra.mxu0 %v3571
    %3573 = vmatprep.subr.mxu0 0.0
    %3574 = vmatpush2.xpose.msra.mxu0 0.0
    %3575 = vmatprep.subr.mxu0 0.0
    %3576 = vmatpush2.xpose.msra.mxu0 0.0
    %3577 = vmatprep.subr.mxu0 0.0
    %3578 = vmatpush2.xpose.msra.mxu0 0.0
    %3579 = vmatprep.subr.mxu0 0.0
    %3580 = vmatpush2.xpose.msra.mxu0 0.0
    %3581 = vmatprep.subr.mxu0 0.0
    %3582 = vmatpush2.xpose.msra.mxu0 0.0
    %3583 = vmatprep.subr.mxu0 0.0
    %3584 = vmatpush2.xpose.msra.mxu0 0.0
    %3585 = vmatprep.subr.mxu0 0.0
    %3586 = vmatpush2.xpose.msra.mxu0 0.0
    %3587 = vmatprep.subr.mxu0 0.0
    %3588 = vmatpush2.xpose.msra.mxu0 0.0
    %3589 = vmatprep.subr.mxu0 0.0
    %3590 = vmatpush2.xpose.msra.mxu0 0.0
    %3591 = vmatprep.subr.mxu0 0.0
    %3592 = vmatpush2.xpose.msra.mxu0 0.0
    %3593 = vmatprep.subr.mxu0 0.0
    %3594 = vmatpush2.xpose.msra.mxu0 0.0
    %3595 = vmatprep.subr.mxu0 0.0
    %3596 = vmatpush2.xpose.msra.mxu0 0.0
    %3597 = vmatprep.subr.mxu0 0.0
    %3598 = vmatpush2.xpose.msra.mxu0 0.0
    %3599 = vmatprep.subr.mxu0 0.0
    %3600 = vmatpush2.xpose.msra.mxu0 0.0
    %3601 = vmatprep.subr.mxu0 0.0
    %3602 = vmatpush2.xpose.msra.mxu0 0.0
    %3603 = vmatprep.subr.mxu0 0.0
    %3604 = vmatpush2.xpose.msra.mxu0 0.0
    %3605 = vmatprep.mubr.f32.mxu0 0.0
    %v3606 = vand.u32 %v3355, 4294901760
    %v3607 = vsub.f32 %v3355, %v3606
    %3608 = vmatmul.mubr.f32.gmra.mxu0 %v3607
    %v3609 = vpop.f32.mrf.mxu0
    %v3610 = vadd.f32 %v3528, %v3609
    %v3611 = vpop.f32.mrf.mxu0
    %3612 = vmatprep.mubr.f32.mxu0 0.0
    %v3613 = vand.u32 %v3357, 4294901760
    %v3614 = vsub.f32 %v3357, %v3613
    %3615 = vmatmul.mubr.f32.gmra.mxu0 %v3614
    %v3616 = vpop.f32.mrf.mxu0
    %v3617 = vadd.f32 %v3534, %v3616
    %v3618 = vpop.f32.mrf.mxu0
    %3619 = vdwg.mxu0
    %3620 = vmatprep.subr.mxu0 0.0
    %3621 = vmatpush1.xpose.msra.mxu0 0.0
    %3622 = vmatprep.subr.mxu0 0.0
    %3623 = vmatpush1.xpose.msra.mxu0 0.0
    %3624 = vmatprep.subr.mxu0 0.0
    %3625 = vmatpush1.xpose.msra.mxu0 0.0
    %3626 = vmatprep.subr.mxu0 0.0
    %3627 = vmatpush1.xpose.msra.mxu0 0.0
    %3628 = vmatprep.subr.mxu0 0.0
    %3629 = vmatpush1.xpose.msra.mxu0 0.0
    %3630 = vmatprep.subr.mxu0 0.0
    %3631 = vmatpush1.xpose.msra.mxu0 0.0
    %3632 = vmatprep.subr.mxu0 0.0
    %3633 = vmatpush1.xpose.msra.mxu0 0.0
    %3634 = vmatprep.subr.mxu0 0.0
    %3635 = vmatpush1.xpose.msra.mxu0 0.0
    %3636 = vmatprep.subr.mxu0 0.0
    %3637 = vmatpush1.xpose.msra.mxu0 0.0
    %3638 = vmatprep.subr.mxu0 0.0
    %3639 = vmatpush1.xpose.msra.mxu0 0.0
    %3640 = vmatprep.subr.mxu0 0.0
    %3641 = vmatpush1.xpose.msra.mxu0 0.0
    %3642 = vmatprep.subr.mxu0 0.0
    %3643 = vmatpush1.xpose.msra.mxu0 0.0
    %3644 = vmatprep.subr.mxu0 0.0
    %3645 = vmatpush1.xpose.msra.mxu0 0.0
    %3646 = vmatprep.subr.mxu0 0.0
    %3647 = vmatpush1.xpose.msra.mxu0 0.0
    %3648 = vmatprep.subr.mxu0 0.0
    %v3649 = vand.u32 %v3361, 4294901760
    %3650 = vmatpush1.xpose.msra.mxu0 %v3649
    %3651 = vmatprep.subr.mxu0 0.0
    %v3652 = vand.u32 %v3359, 4294901760
    %3653 = vmatpush1.xpose.msra.mxu0 %v3652
    %3654 = vmatprep.subr.mxu0 0.0
    %3655 = vmatpush2.xpose.msra.mxu0 0.0
    %3656 = vmatprep.subr.mxu0 0.0
    %3657 = vmatpush2.xpose.msra.mxu0 0.0
    %3658 = vmatprep.subr.mxu0 0.0
    %3659 = vmatpush2.xpose.msra.mxu0 0.0
    %3660 = vmatprep.subr.mxu0 0.0
    %3661 = vmatpush2.xpose.msra.mxu0 0.0
    %3662 = vmatprep.subr.mxu0 0.0
    %3663 = vmatpush2.xpose.msra.mxu0 0.0
    %3664 = vmatprep.subr.mxu0 0.0
    %3665 = vmatpush2.xpose.msra.mxu0 0.0
    %3666 = vmatprep.subr.mxu0 0.0
    %3667 = vmatpush2.xpose.msra.mxu0 0.0
    %3668 = vmatprep.subr.mxu0 0.0
    %3669 = vmatpush2.xpose.msra.mxu0 0.0
    %3670 = vmatprep.subr.mxu0 0.0
    %3671 = vmatpush2.xpose.msra.mxu0 0.0
    %3672 = vmatprep.subr.mxu0 0.0
    %3673 = vmatpush2.xpose.msra.mxu0 0.0
    %3674 = vmatprep.subr.mxu0 0.0
    %3675 = vmatpush2.xpose.msra.mxu0 0.0
    %3676 = vmatprep.subr.mxu0 0.0
    %3677 = vmatpush2.xpose.msra.mxu0 0.0
    %3678 = vmatprep.subr.mxu0 0.0
    %3679 = vmatpush2.xpose.msra.mxu0 0.0
    %3680 = vmatprep.subr.mxu0 0.0
    %3681 = vmatpush2.xpose.msra.mxu0 0.0
    %3682 = vmatprep.subr.mxu0 0.0
    %3683 = vmatpush2.xpose.msra.mxu0 0.0
    %3684 = vmatprep.subr.mxu0 0.0
    %3685 = vmatpush2.xpose.msra.mxu0 0.0
    %3686 = vmatprep.mubr.f32.mxu0 0.0
    %v3687 = vand.u32 %v3355, 4294901760
    %v3688 = vsub.f32 %v3355, %v3687
    %v3689 = vand.u32 %v3688, 4294901760
    %3690 = vmatmul.mubr.f32.gmra.mxu0 %v3689
    %v3691 = vpop.f32.mrf.mxu0
    %v3692 = vadd.f32 %v3610, %v3691
    %v3693 = vpop.f32.mrf.mxu0
    %3694 = vmatprep.mubr.f32.mxu0 0.0
    %v3695 = vand.u32 %v3357, 4294901760
    %v3696 = vsub.f32 %v3357, %v3695
    %v3697 = vand.u32 %v3696, 4294901760
    %3698 = vmatmul.mubr.f32.gmra.mxu0 %v3697
    %v3699 = vpop.f32.mrf.mxu0
    %v3700 = vadd.f32 %v3617, %v3699
    %v3701 = vpop.f32.mrf.mxu0
    %3702 = vdwg.mxu0
    %3703 = vmatprep.subr.mxu0 0.0
    %3704 = vmatpush1.xpose.msra.mxu0 0.0
    %3705 = vmatprep.subr.mxu0 0.0
    %3706 = vmatpush1.xpose.msra.mxu0 0.0
    %3707 = vmatprep.subr.mxu0 0.0
    %3708 = vmatpush1.xpose.msra.mxu0 0.0
    %3709 = vmatprep.subr.mxu0 0.0
    %3710 = vmatpush1.xpose.msra.mxu0 0.0
    %3711 = vmatprep.subr.mxu0 0.0
    %3712 = vmatpush1.xpose.msra.mxu0 0.0
    %3713 = vmatprep.subr.mxu0 0.0
    %3714 = vmatpush1.xpose.msra.mxu0 0.0
    %3715 = vmatprep.subr.mxu0 0.0
    %3716 = vmatpush1.xpose.msra.mxu0 0.0
    %3717 = vmatprep.subr.mxu0 0.0
    %3718 = vmatpush1.xpose.msra.mxu0 0.0
    %3719 = vmatprep.subr.mxu0 0.0
    %3720 = vmatpush1.xpose.msra.mxu0 0.0
    %3721 = vmatprep.subr.mxu0 0.0
    %3722 = vmatpush1.xpose.msra.mxu0 0.0
    %3723 = vmatprep.subr.mxu0 0.0
    %3724 = vmatpush1.xpose.msra.mxu0 0.0
    %3725 = vmatprep.subr.mxu0 0.0
    %3726 = vmatpush1.xpose.msra.mxu0 0.0
    %3727 = vmatprep.subr.mxu0 0.0
    %3728 = vmatpush1.xpose.msra.mxu0 0.0
    %3729 = vmatprep.subr.mxu0 0.0
    %3730 = vmatpush1.xpose.msra.mxu0 0.0
    %3731 = vmatprep.subr.mxu0 0.0
    %v3732 = vand.u32 %v3361, 4294901760
    %v3733 = vsub.f32 %v3361, %v3732
    %v3734 = vand.u32 %v3733, 4294901760
    %3735 = vmatpush1.xpose.msra.mxu0 %v3734
    %3736 = vmatprep.subr.mxu0 0.0
    %v3737 = vand.u32 %v3359, 4294901760
    %v3738 = vsub.f32 %v3359, %v3737
    %v3739 = vand.u32 %v3738, 4294901760
    %3740 = vmatpush1.xpose.msra.mxu0 %v3739
    %3741 = vmatprep.subr.mxu0 0.0
    %3742 = vmatpush2.xpose.msra.mxu0 0.0
    %3743 = vmatprep.subr.mxu0 0.0
    %3744 = vmatpush2.xpose.msra.mxu0 0.0
    %3745 = vmatprep.subr.mxu0 0.0
    %3746 = vmatpush2.xpose.msra.mxu0 0.0
    %3747 = vmatprep.subr.mxu0 0.0
    %3748 = vmatpush2.xpose.msra.mxu0 0.0
    %3749 = vmatprep.subr.mxu0 0.0
    %3750 = vmatpush2.xpose.msra.mxu0 0.0
    %3751 = vmatprep.subr.mxu0 0.0
    %3752 = vmatpush2.xpose.msra.mxu0 0.0
    %3753 = vmatprep.subr.mxu0 0.0
    %3754 = vmatpush2.xpose.msra.mxu0 0.0
    %3755 = vmatprep.subr.mxu0 0.0
    %3756 = vmatpush2.xpose.msra.mxu0 0.0
    %3757 = vmatprep.subr.mxu0 0.0
    %3758 = vmatpush2.xpose.msra.mxu0 0.0
    %3759 = vmatprep.subr.mxu0 0.0
    %3760 = vmatpush2.xpose.msra.mxu0 0.0
    %3761 = vmatprep.subr.mxu0 0.0
    %3762 = vmatpush2.xpose.msra.mxu0 0.0
    %3763 = vmatprep.subr.mxu0 0.0
    %3764 = vmatpush2.xpose.msra.mxu0 0.0
    %3765 = vmatprep.subr.mxu0 0.0
    %3766 = vmatpush2.xpose.msra.mxu0 0.0
    %3767 = vmatprep.subr.mxu0 0.0
    %3768 = vmatpush2.xpose.msra.mxu0 0.0
    %3769 = vmatprep.subr.mxu0 0.0
    %3770 = vmatpush2.xpose.msra.mxu0 0.0
    %3771 = vmatprep.subr.mxu0 0.0
    %3772 = vmatpush2.xpose.msra.mxu0 0.0
    %3773 = vmatprep.mubr.f32.mxu0 0.0
    %v3774 = vand.u32 %v3355, 4294901760
    %3775 = vmatmul.mubr.f32.gmra.mxu0 %v3774
    %v3776 = vpop.f32.mrf.mxu0
    %v3777 = vadd.f32 %v3692, %v3776
    %v3778 = vpop.f32.mrf.mxu0
    %3779 = vmatprep.mubr.f32.mxu0 0.0
    %v3780 = vand.u32 %v3357, 4294901760
    %3781 = vmatmul.mubr.f32.gmra.mxu0 %v3780
    %v3782 = vpop.f32.mrf.mxu0
    %v3783 = vadd.f32 %v3700, %v3782
    %v3784 = vpop.f32.mrf.mxu0
    %3785 = vdwg.mxu0
    %3786 = vmatprep.subr.mxu0 0.0
    %3787 = vmatpush1.xpose.msra.mxu0 0.0
    %3788 = vmatprep.subr.mxu0 0.0
    %3789 = vmatpush1.xpose.msra.mxu0 0.0
    %3790 = vmatprep.subr.mxu0 0.0
    %3791 = vmatpush1.xpose.msra.mxu0 0.0
    %3792 = vmatprep.subr.mxu0 0.0
    %3793 = vmatpush1.xpose.msra.mxu0 0.0
    %3794 = vmatprep.subr.mxu0 0.0
    %3795 = vmatpush1.xpose.msra.mxu0 0.0
    %3796 = vmatprep.subr.mxu0 0.0
    %3797 = vmatpush1.xpose.msra.mxu0 0.0
    %3798 = vmatprep.subr.mxu0 0.0
    %3799 = vmatpush1.xpose.msra.mxu0 0.0
    %3800 = vmatprep.subr.mxu0 0.0
    %3801 = vmatpush1.xpose.msra.mxu0 0.0
    %3802 = vmatprep.subr.mxu0 0.0
    %3803 = vmatpush1.xpose.msra.mxu0 0.0
    %3804 = vmatprep.subr.mxu0 0.0
    %3805 = vmatpush1.xpose.msra.mxu0 0.0
    %3806 = vmatprep.subr.mxu0 0.0
    %3807 = vmatpush1.xpose.msra.mxu0 0.0
    %3808 = vmatprep.subr.mxu0 0.0
    %3809 = vmatpush1.xpose.msra.mxu0 0.0
    %3810 = vmatprep.subr.mxu0 0.0
    %3811 = vmatpush1.xpose.msra.mxu0 0.0
    %3812 = vmatprep.subr.mxu0 0.0
    %3813 = vmatpush1.xpose.msra.mxu0 0.0
    %3814 = vmatprep.subr.mxu0 0.0
    %v3815 = vand.u32 %v3361, 4294901760
    %3816 = vmatpush1.xpose.msra.mxu0 %v3815
    %3817 = vmatprep.subr.mxu0 0.0
    %v3818 = vand.u32 %v3359, 4294901760
    %3819 = vmatpush1.xpose.msra.mxu0 %v3818
    %3820 = vmatprep.subr.mxu0 0.0
    %3821 = vmatpush2.xpose.msra.mxu0 0.0
    %3822 = vmatprep.subr.mxu0 0.0
    %3823 = vmatpush2.xpose.msra.mxu0 0.0
    %3824 = vmatprep.subr.mxu0 0.0
    %3825 = vmatpush2.xpose.msra.mxu0 0.0
    %3826 = vmatprep.subr.mxu0 0.0
    %3827 = vmatpush2.xpose.msra.mxu0 0.0
    %3828 = vmatprep.subr.mxu0 0.0
    %3829 = vmatpush2.xpose.msra.mxu0 0.0
    %3830 = vmatprep.subr.mxu0 0.0
    %3831 = vmatpush2.xpose.msra.mxu0 0.0
    %3832 = vmatprep.subr.mxu0 0.0
    %3833 = vmatpush2.xpose.msra.mxu0 0.0
    %3834 = vmatprep.subr.mxu0 0.0
    %3835 = vmatpush2.xpose.msra.mxu0 0.0
    %3836 = vmatprep.subr.mxu0 0.0
    %3837 = vmatpush2.xpose.msra.mxu0 0.0
    %3838 = vmatprep.subr.mxu0 0.0
    %3839 = vmatpush2.xpose.msra.mxu0 0.0
    %3840 = vmatprep.subr.mxu0 0.0
    %3841 = vmatpush2.xpose.msra.mxu0 0.0
    %3842 = vmatprep.subr.mxu0 0.0
    %3843 = vmatpush2.xpose.msra.mxu0 0.0
    %3844 = vmatprep.subr.mxu0 0.0
    %3845 = vmatpush2.xpose.msra.mxu0 0.0
    %3846 = vmatprep.subr.mxu0 0.0
    %3847 = vmatpush2.xpose.msra.mxu0 0.0
    %3848 = vmatprep.subr.mxu0 0.0
    %3849 = vmatpush2.xpose.msra.mxu0 0.0
    %3850 = vmatprep.subr.mxu0 0.0
    %3851 = vmatpush2.xpose.msra.mxu0 0.0
    %3852 = vmatprep.mubr.f32.mxu0 0.0
    %v3853 = vand.u32 %v3355, 4294901760
    %3854 = vmatmul.mubr.f32.gmra.mxu0 %v3853
    %v3855 = vpop.f32.mrf.mxu0
    %v3856 = vadd.f32 %v3777, %v3855
    %v3857 = vpop.f32.mrf.mxu0
    %3858 = vmatprep.mubr.f32.mxu0 0.0
    %v3859 = vand.u32 %v3357, 4294901760
    %3860 = vmatmul.mubr.f32.gmra.mxu0 %v3859
    %v3861 = vpop.f32.mrf.mxu0
    %v3862 = vadd.f32 %v3783, %v3861
    %v3863 = vpop.f32.mrf.mxu0
    %3864 = vdwg.mxu0
    %v3865 = vsel %vm1760, %v3856, -inf
    %3866 = vmax.xlane.f32.xlu0 %v3865
    %v3867 = vpop.xlane.xlu0 %3866
    %v3868 = vsel %vm1760, %v3862, -inf
    %3869 = vmax.xlane.f32.xlu0 %v3868
    %v3870 = vpop.xlane.xlu0 %3869
    %v3871 = vsub.f32 %v3856, %v3867
    %v3872 = vsub.f32 %v3862, %v3870
    %v3873 = vmul.f32 %v3871, 1.442695
    %v3874 = vpow.pop %v3873
    %v3875 = vmul.f32 %v3872, 1.442695
    %v3876 = vpow.pop %v3875
    %v3877 = vsel %vm1760, %v3874, 0.0
    %3878 = vadd.xlane.f32.xlu0 %v3877
    %v3879 = vpop.xlane.xlu0 %3878
    %v3880 = vsel %vm1760, %v3876, 0.0
    %3881 = vadd.xlane.f32.xlu0 %v3880
    %v3882 = vpop.xlane.xlu0 %3881
    %v3883 = vrcp.pop %v3879
    %v3884 = vmul.f32 %v3874, %v3883
    %v3885 = vrcp.pop %v3882
    %v3886 = vmul.f32 %v3876, %v3885
    %3887 = vrot.lane.b32.xlu0 %v1234, 64
    %v3888 = vpop.permute.xlu0 %3887
    %3889 = vrot.lane.b32.xlu0 %v1240, 64
    %v3890 = vpop.permute.xlu0 %3889
    %v3894 = vsel %vm1760, %v3884, 0
    %v3897 = vsel %vm1760, %v3886, 0
    %3899 = vmatprep.subr.mxu0 0.0
    %3900 = vmatpush1.msra.mxu0 0.0
    %3901 = vmatprep.subr.mxu0 0.0
    %3902 = vmatpush1.msra.mxu0 0.0
    %3903 = vmatprep.subr.mxu0 0.0
    %3904 = vmatpush1.msra.mxu0 0.0
    %3905 = vmatprep.subr.mxu0 0.0
    %3906 = vmatpush1.msra.mxu0 0.0
    %3907 = vmatprep.subr.mxu0 0.0
    %3908 = vmatpush1.msra.mxu0 0.0
    %3909 = vmatprep.subr.mxu0 0.0
    %3910 = vmatpush1.msra.mxu0 0.0
    %3911 = vmatprep.subr.mxu0 0.0
    %3912 = vmatpush1.msra.mxu0 0.0
    %3913 = vmatprep.subr.mxu0 0.0
    %3914 = vmatpush1.msra.mxu0 0.0
    %3915 = vmatprep.subr.mxu0 0.0
    %3916 = vmatpush1.msra.mxu0 0.0
    %3917 = vmatprep.subr.mxu0 0.0
    %3918 = vmatpush1.msra.mxu0 0.0
    %3919 = vmatprep.subr.mxu0 0.0
    %3920 = vmatpush1.msra.mxu0 0.0
    %3921 = vmatprep.subr.mxu0 0.0
    %3922 = vmatpush1.msra.mxu0 0.0
    %3923 = vmatprep.subr.mxu0 0.0
    %3924 = vmatpush1.msra.mxu0 0.0
    %3925 = vmatprep.subr.mxu0 0.0
    %3926 = vmatpush1.msra.mxu0 0.0
    %3927 = vmatprep.subr.mxu0 0.0
    %v3928 = vand.u32 %v3890, 4294901760
    %3929 = vmatpush1.msra.mxu0 %v3928
    %3930 = vmatprep.subr.mxu0 0.0
    %v3931 = vand.u32 %v3888, 4294901760
    %3932 = vmatpush1.msra.mxu0 %v3931
    %3933 = vmatprep.subr.mxu0 0.0
    %3934 = vmatpush2.msra.mxu0 0.0
    %3935 = vmatprep.subr.mxu0 0.0
    %3936 = vmatpush2.msra.mxu0 0.0
    %3937 = vmatprep.subr.mxu0 0.0
    %3938 = vmatpush2.msra.mxu0 0.0
    %3939 = vmatprep.subr.mxu0 0.0
    %3940 = vmatpush2.msra.mxu0 0.0
    %3941 = vmatprep.subr.mxu0 0.0
    %3942 = vmatpush2.msra.mxu0 0.0
    %3943 = vmatprep.subr.mxu0 0.0
    %3944 = vmatpush2.msra.mxu0 0.0
    %3945 = vmatprep.subr.mxu0 0.0
    %3946 = vmatpush2.msra.mxu0 0.0
    %3947 = vmatprep.subr.mxu0 0.0
    %3948 = vmatpush2.msra.mxu0 0.0
    %3949 = vmatprep.subr.mxu0 0.0
    %3950 = vmatpush2.msra.mxu0 0.0
    %3951 = vmatprep.subr.mxu0 0.0
    %3952 = vmatpush2.msra.mxu0 0.0
    %3953 = vmatprep.subr.mxu0 0.0
    %3954 = vmatpush2.msra.mxu0 0.0
    %3955 = vmatprep.subr.mxu0 0.0
    %3956 = vmatpush2.msra.mxu0 0.0
    %3957 = vmatprep.subr.mxu0 0.0
    %3958 = vmatpush2.msra.mxu0 0.0
    %3959 = vmatprep.subr.mxu0 0.0
    %3960 = vmatpush2.msra.mxu0 0.0
    %3961 = vmatprep.subr.mxu0 0.0
    %3962 = vmatpush2.msra.mxu0 0.0
    %3963 = vmatprep.subr.mxu0 0.0
    %3964 = vmatpush2.msra.mxu0 0.0
    %3965 = vmatprep.mubr.f32.mxu0 0.0
    %v3966 = vand.u32 %v3894, 4294901760
    %v3967 = vsub.f32 %v3894, %v3966
    %v3968 = vand.u32 %v3967, 4294901760
    %v3969 = vsub.f32 %v3967, %v3968
    %v3970 = vand.u32 %v3969, 4294901760
    %3971 = vmatmul.mubr.f32.gmra.mxu0 %v3970
    %v3972 = vpop.f32.mrf.mxu0
    %v3973 = vadd.f32 0.0, %v3972
    %v3974 = vpop.f32.mrf.mxu0
    %3975 = vmatprep.mubr.f32.mxu0 0.0
    %v3976 = vand.u32 %v3897, 4294901760
    %v3977 = vsub.f32 %v3897, %v3976
    %v3978 = vand.u32 %v3977, 4294901760
    %v3979 = vsub.f32 %v3977, %v3978
    %v3980 = vand.u32 %v3979, 4294901760
    %3981 = vmatmul.mubr.f32.gmra.mxu0 %v3980
    %v3982 = vpop.f32.mrf.mxu0
    %v3983 = vadd.f32 0.0, %v3982
    %v3984 = vpop.f32.mrf.mxu0
    %3985 = vdwg.mxu0
    %3986 = vmatprep.subr.mxu0 0.0
    %3987 = vmatpush1.msra.mxu0 0.0
    %3988 = vmatprep.subr.mxu0 0.0
    %3989 = vmatpush1.msra.mxu0 0.0
    %3990 = vmatprep.subr.mxu0 0.0
    %3991 = vmatpush1.msra.mxu0 0.0
    %3992 = vmatprep.subr.mxu0 0.0
    %3993 = vmatpush1.msra.mxu0 0.0
    %3994 = vmatprep.subr.mxu0 0.0
    %3995 = vmatpush1.msra.mxu0 0.0
    %3996 = vmatprep.subr.mxu0 0.0
    %3997 = vmatpush1.msra.mxu0 0.0
    %3998 = vmatprep.subr.mxu0 0.0
    %3999 = vmatpush1.msra.mxu0 0.0
    %4000 = vmatprep.subr.mxu0 0.0
    %4001 = vmatpush1.msra.mxu0 0.0
    %4002 = vmatprep.subr.mxu0 0.0
    %4003 = vmatpush1.msra.mxu0 0.0
    %4004 = vmatprep.subr.mxu0 0.0
    %4005 = vmatpush1.msra.mxu0 0.0
    %4006 = vmatprep.subr.mxu0 0.0
    %4007 = vmatpush1.msra.mxu0 0.0
    %4008 = vmatprep.subr.mxu0 0.0
    %4009 = vmatpush1.msra.mxu0 0.0
    %4010 = vmatprep.subr.mxu0 0.0
    %4011 = vmatpush1.msra.mxu0 0.0
    %4012 = vmatprep.subr.mxu0 0.0
    %4013 = vmatpush1.msra.mxu0 0.0
    %4014 = vmatprep.subr.mxu0 0.0
    %v4015 = vand.u32 %v3890, 4294901760
    %v4016 = vsub.f32 %v3890, %v4015
    %v4017 = vand.u32 %v4016, 4294901760
    %v4018 = vsub.f32 %v4016, %v4017
    %v4019 = vand.u32 %v4018, 4294901760
    %4020 = vmatpush1.msra.mxu0 %v4019
    %4021 = vmatprep.subr.mxu0 0.0
    %v4022 = vand.u32 %v3888, 4294901760
    %v4023 = vsub.f32 %v3888, %v4022
    %v4024 = vand.u32 %v4023, 4294901760
    %v4025 = vsub.f32 %v4023, %v4024
    %v4026 = vand.u32 %v4025, 4294901760
    %4027 = vmatpush1.msra.mxu0 %v4026
    %4028 = vmatprep.subr.mxu0 0.0
    %4029 = vmatpush2.msra.mxu0 0.0
    %4030 = vmatprep.subr.mxu0 0.0
    %4031 = vmatpush2.msra.mxu0 0.0
    %4032 = vmatprep.subr.mxu0 0.0
    %4033 = vmatpush2.msra.mxu0 0.0
    %4034 = vmatprep.subr.mxu0 0.0
    %4035 = vmatpush2.msra.mxu0 0.0
    %4036 = vmatprep.subr.mxu0 0.0
    %4037 = vmatpush2.msra.mxu0 0.0
    %4038 = vmatprep.subr.mxu0 0.0
    %4039 = vmatpush2.msra.mxu0 0.0
    %4040 = vmatprep.subr.mxu0 0.0
    %4041 = vmatpush2.msra.mxu0 0.0
    %4042 = vmatprep.subr.mxu0 0.0
    %4043 = vmatpush2.msra.mxu0 0.0
    %4044 = vmatprep.subr.mxu0 0.0
    %4045 = vmatpush2.msra.mxu0 0.0
    %4046 = vmatprep.subr.mxu0 0.0
    %4047 = vmatpush2.msra.mxu0 0.0
    %4048 = vmatprep.subr.mxu0 0.0
    %4049 = vmatpush2.msra.mxu0 0.0
    %4050 = vmatprep.subr.mxu0 0.0
    %4051 = vmatpush2.msra.mxu0 0.0
    %4052 = vmatprep.subr.mxu0 0.0
    %4053 = vmatpush2.msra.mxu0 0.0
    %4054 = vmatprep.subr.mxu0 0.0
    %4055 = vmatpush2.msra.mxu0 0.0
    %4056 = vmatprep.subr.mxu0 0.0
    %4057 = vmatpush2.msra.mxu0 0.0
    %4058 = vmatprep.subr.mxu0 0.0
    %4059 = vmatpush2.msra.mxu0 0.0
    %4060 = vmatprep.mubr.f32.mxu0 0.0
    %v4061 = vand.u32 %v3894, 4294901760
    %4062 = vmatmul.mubr.f32.gmra.mxu0 %v4061
    %v4063 = vpop.f32.mrf.mxu0
    %v4064 = vadd.f32 %v3973, %v4063
    %v4065 = vpop.f32.mrf.mxu0
    %4066 = vmatprep.mubr.f32.mxu0 0.0
    %v4067 = vand.u32 %v3897, 4294901760
    %4068 = vmatmul.mubr.f32.gmra.mxu0 %v4067
    %v4069 = vpop.f32.mrf.mxu0
    %v4070 = vadd.f32 %v3983, %v4069
    %v4071 = vpop.f32.mrf.mxu0
    %4072 = vdwg.mxu0
    %4073 = vmatprep.subr.mxu0 0.0
    %4074 = vmatpush1.msra.mxu0 0.0
    %4075 = vmatprep.subr.mxu0 0.0
    %4076 = vmatpush1.msra.mxu0 0.0
    %4077 = vmatprep.subr.mxu0 0.0
    %4078 = vmatpush1.msra.mxu0 0.0
    %4079 = vmatprep.subr.mxu0 0.0
    %4080 = vmatpush1.msra.mxu0 0.0
    %4081 = vmatprep.subr.mxu0 0.0
    %4082 = vmatpush1.msra.mxu0 0.0
    %4083 = vmatprep.subr.mxu0 0.0
    %4084 = vmatpush1.msra.mxu0 0.0
    %4085 = vmatprep.subr.mxu0 0.0
    %4086 = vmatpush1.msra.mxu0 0.0
    %4087 = vmatprep.subr.mxu0 0.0
    %4088 = vmatpush1.msra.mxu0 0.0
    %4089 = vmatprep.subr.mxu0 0.0
    %4090 = vmatpush1.msra.mxu0 0.0
    %4091 = vmatprep.subr.mxu0 0.0
    %4092 = vmatpush1.msra.mxu0 0.0
    %4093 = vmatprep.subr.mxu0 0.0
    %4094 = vmatpush1.msra.mxu0 0.0
    %4095 = vmatprep.subr.mxu0 0.0
    %4096 = vmatpush1.msra.mxu0 0.0
    %4097 = vmatprep.subr.mxu0 0.0
    %4098 = vmatpush1.msra.mxu0 0.0
    %4099 = vmatprep.subr.mxu0 0.0
    %4100 = vmatpush1.msra.mxu0 0.0
    %4101 = vmatprep.subr.mxu0 0.0
    %v4102 = vand.u32 %v3890, 4294901760
    %v4103 = vsub.f32 %v3890, %v4102
    %4104 = vmatpush1.msra.mxu0 %v4103
    %4105 = vmatprep.subr.mxu0 0.0
    %v4106 = vand.u32 %v3888, 4294901760
    %v4107 = vsub.f32 %v3888, %v4106
    %4108 = vmatpush1.msra.mxu0 %v4107
    %4109 = vmatprep.subr.mxu0 0.0
    %4110 = vmatpush2.msra.mxu0 0.0
    %4111 = vmatprep.subr.mxu0 0.0
    %4112 = vmatpush2.msra.mxu0 0.0
    %4113 = vmatprep.subr.mxu0 0.0
    %4114 = vmatpush2.msra.mxu0 0.0
    %4115 = vmatprep.subr.mxu0 0.0
    %4116 = vmatpush2.msra.mxu0 0.0
    %4117 = vmatprep.subr.mxu0 0.0
    %4118 = vmatpush2.msra.mxu0 0.0
    %4119 = vmatprep.subr.mxu0 0.0
    %4120 = vmatpush2.msra.mxu0 0.0
    %4121 = vmatprep.subr.mxu0 0.0
    %4122 = vmatpush2.msra.mxu0 0.0
    %4123 = vmatprep.subr.mxu0 0.0
    %4124 = vmatpush2.msra.mxu0 0.0
    %4125 = vmatprep.subr.mxu0 0.0
    %4126 = vmatpush2.msra.mxu0 0.0
    %4127 = vmatprep.subr.mxu0 0.0
    %4128 = vmatpush2.msra.mxu0 0.0
    %4129 = vmatprep.subr.mxu0 0.0
    %4130 = vmatpush2.msra.mxu0 0.0
    %4131 = vmatprep.subr.mxu0 0.0
    %4132 = vmatpush2.msra.mxu0 0.0
    %4133 = vmatprep.subr.mxu0 0.0
    %4134 = vmatpush2.msra.mxu0 0.0
    %4135 = vmatprep.subr.mxu0 0.0
    %4136 = vmatpush2.msra.mxu0 0.0
    %4137 = vmatprep.subr.mxu0 0.0
    %4138 = vmatpush2.msra.mxu0 0.0
    %4139 = vmatprep.subr.mxu0 0.0
    %4140 = vmatpush2.msra.mxu0 0.0
    %4141 = vmatprep.mubr.f32.mxu0 0.0
    %v4142 = vand.u32 %v3894, 4294901760
    %v4143 = vsub.f32 %v3894, %v4142
    %4144 = vmatmul.mubr.f32.gmra.mxu0 %v4143
    %v4145 = vpop.f32.mrf.mxu0
    %v4146 = vadd.f32 %v4064, %v4145
    %v4147 = vpop.f32.mrf.mxu0
    %4148 = vmatprep.mubr.f32.mxu0 0.0
    %v4149 = vand.u32 %v3897, 4294901760
    %v4150 = vsub.f32 %v3897, %v4149
    %4151 = vmatmul.mubr.f32.gmra.mxu0 %v4150
    %v4152 = vpop.f32.mrf.mxu0
    %v4153 = vadd.f32 %v4070, %v4152
    %v4154 = vpop.f32.mrf.mxu0
    %4155 = vdwg.mxu0
    %4156 = vmatprep.subr.mxu0 0.0
    %4157 = vmatpush1.msra.mxu0 0.0
    %4158 = vmatprep.subr.mxu0 0.0
    %4159 = vmatpush1.msra.mxu0 0.0
    %4160 = vmatprep.subr.mxu0 0.0
    %4161 = vmatpush1.msra.mxu0 0.0
    %4162 = vmatprep.subr.mxu0 0.0
    %4163 = vmatpush1.msra.mxu0 0.0
    %4164 = vmatprep.subr.mxu0 0.0
    %4165 = vmatpush1.msra.mxu0 0.0
    %4166 = vmatprep.subr.mxu0 0.0
    %4167 = vmatpush1.msra.mxu0 0.0
    %4168 = vmatprep.subr.mxu0 0.0
    %4169 = vmatpush1.msra.mxu0 0.0
    %4170 = vmatprep.subr.mxu0 0.0
    %4171 = vmatpush1.msra.mxu0 0.0
    %4172 = vmatprep.subr.mxu0 0.0
    %4173 = vmatpush1.msra.mxu0 0.0
    %4174 = vmatprep.subr.mxu0 0.0
    %4175 = vmatpush1.msra.mxu0 0.0
    %4176 = vmatprep.subr.mxu0 0.0
    %4177 = vmatpush1.msra.mxu0 0.0
    %4178 = vmatprep.subr.mxu0 0.0
    %4179 = vmatpush1.msra.mxu0 0.0
    %4180 = vmatprep.subr.mxu0 0.0
    %4181 = vmatpush1.msra.mxu0 0.0
    %4182 = vmatprep.subr.mxu0 0.0
    %4183 = vmatpush1.msra.mxu0 0.0
    %4184 = vmatprep.subr.mxu0 0.0
    %v4185 = vand.u32 %v3890, 4294901760
    %4186 = vmatpush1.msra.mxu0 %v4185
    %4187 = vmatprep.subr.mxu0 0.0
    %v4188 = vand.u32 %v3888, 4294901760
    %4189 = vmatpush1.msra.mxu0 %v4188
    %4190 = vmatprep.subr.mxu0 0.0
    %4191 = vmatpush2.msra.mxu0 0.0
    %4192 = vmatprep.subr.mxu0 0.0
    %4193 = vmatpush2.msra.mxu0 0.0
    %4194 = vmatprep.subr.mxu0 0.0
    %4195 = vmatpush2.msra.mxu0 0.0
    %4196 = vmatprep.subr.mxu0 0.0
    %4197 = vmatpush2.msra.mxu0 0.0
    %4198 = vmatprep.subr.mxu0 0.0
    %4199 = vmatpush2.msra.mxu0 0.0
    %4200 = vmatprep.subr.mxu0 0.0
    %4201 = vmatpush2.msra.mxu0 0.0
    %4202 = vmatprep.subr.mxu0 0.0
    %4203 = vmatpush2.msra.mxu0 0.0
    %4204 = vmatprep.subr.mxu0 0.0
    %4205 = vmatpush2.msra.mxu0 0.0
    %4206 = vmatprep.subr.mxu0 0.0
    %4207 = vmatpush2.msra.mxu0 0.0
    %4208 = vmatprep.subr.mxu0 0.0
    %4209 = vmatpush2.msra.mxu0 0.0
    %4210 = vmatprep.subr.mxu0 0.0
    %4211 = vmatpush2.msra.mxu0 0.0
    %4212 = vmatprep.subr.mxu0 0.0
    %4213 = vmatpush2.msra.mxu0 0.0
    %4214 = vmatprep.subr.mxu0 0.0
    %4215 = vmatpush2.msra.mxu0 0.0
    %4216 = vmatprep.subr.mxu0 0.0
    %4217 = vmatpush2.msra.mxu0 0.0
    %4218 = vmatprep.subr.mxu0 0.0
    %4219 = vmatpush2.msra.mxu0 0.0
    %4220 = vmatprep.subr.mxu0 0.0
    %4221 = vmatpush2.msra.mxu0 0.0
    %4222 = vmatprep.mubr.f32.mxu0 0.0
    %v4223 = vand.u32 %v3894, 4294901760
    %v4224 = vsub.f32 %v3894, %v4223
    %v4225 = vand.u32 %v4224, 4294901760
    %4226 = vmatmul.mubr.f32.gmra.mxu0 %v4225
    %v4227 = vpop.f32.mrf.mxu0
    %v4228 = vadd.f32 %v4146, %v4227
    %v4229 = vpop.f32.mrf.mxu0
    %4230 = vmatprep.mubr.f32.mxu0 0.0
    %v4231 = vand.u32 %v3897, 4294901760
    %v4232 = vsub.f32 %v3897, %v4231
    %v4233 = vand.u32 %v4232, 4294901760
    %4234 = vmatmul.mubr.f32.gmra.mxu0 %v4233
    %v4235 = vpop.f32.mrf.mxu0
    %v4236 = vadd.f32 %v4153, %v4235
    %v4237 = vpop.f32.mrf.mxu0
    %4238 = vdwg.mxu0
    %4239 = vmatprep.subr.mxu0 0.0
    %4240 = vmatpush1.msra.mxu0 0.0
    %4241 = vmatprep.subr.mxu0 0.0
    %4242 = vmatpush1.msra.mxu0 0.0
    %4243 = vmatprep.subr.mxu0 0.0
    %4244 = vmatpush1.msra.mxu0 0.0
    %4245 = vmatprep.subr.mxu0 0.0
    %4246 = vmatpush1.msra.mxu0 0.0
    %4247 = vmatprep.subr.mxu0 0.0
    %4248 = vmatpush1.msra.mxu0 0.0
    %4249 = vmatprep.subr.mxu0 0.0
    %4250 = vmatpush1.msra.mxu0 0.0
    %4251 = vmatprep.subr.mxu0 0.0
    %4252 = vmatpush1.msra.mxu0 0.0
    %4253 = vmatprep.subr.mxu0 0.0
    %4254 = vmatpush1.msra.mxu0 0.0
    %4255 = vmatprep.subr.mxu0 0.0
    %4256 = vmatpush1.msra.mxu0 0.0
    %4257 = vmatprep.subr.mxu0 0.0
    %4258 = vmatpush1.msra.mxu0 0.0
    %4259 = vmatprep.subr.mxu0 0.0
    %4260 = vmatpush1.msra.mxu0 0.0
    %4261 = vmatprep.subr.mxu0 0.0
    %4262 = vmatpush1.msra.mxu0 0.0
    %4263 = vmatprep.subr.mxu0 0.0
    %4264 = vmatpush1.msra.mxu0 0.0
    %4265 = vmatprep.subr.mxu0 0.0
    %4266 = vmatpush1.msra.mxu0 0.0
    %4267 = vmatprep.subr.mxu0 0.0
    %v4268 = vand.u32 %v3890, 4294901760
    %v4269 = vsub.f32 %v3890, %v4268
    %v4270 = vand.u32 %v4269, 4294901760
    %4271 = vmatpush1.msra.mxu0 %v4270
    %4272 = vmatprep.subr.mxu0 0.0
    %v4273 = vand.u32 %v3888, 4294901760
    %v4274 = vsub.f32 %v3888, %v4273
    %v4275 = vand.u32 %v4274, 4294901760
    %4276 = vmatpush1.msra.mxu0 %v4275
    %4277 = vmatprep.subr.mxu0 0.0
    %4278 = vmatpush2.msra.mxu0 0.0
    %4279 = vmatprep.subr.mxu0 0.0
    %4280 = vmatpush2.msra.mxu0 0.0
    %4281 = vmatprep.subr.mxu0 0.0
    %4282 = vmatpush2.msra.mxu0 0.0
    %4283 = vmatprep.subr.mxu0 0.0
    %4284 = vmatpush2.msra.mxu0 0.0
    %4285 = vmatprep.subr.mxu0 0.0
    %4286 = vmatpush2.msra.mxu0 0.0
    %4287 = vmatprep.subr.mxu0 0.0
    %4288 = vmatpush2.msra.mxu0 0.0
    %4289 = vmatprep.subr.mxu0 0.0
    %4290 = vmatpush2.msra.mxu0 0.0
    %4291 = vmatprep.subr.mxu0 0.0
    %4292 = vmatpush2.msra.mxu0 0.0
    %4293 = vmatprep.subr.mxu0 0.0
    %4294 = vmatpush2.msra.mxu0 0.0
    %4295 = vmatprep.subr.mxu0 0.0
    %4296 = vmatpush2.msra.mxu0 0.0
    %4297 = vmatprep.subr.mxu0 0.0
    %4298 = vmatpush2.msra.mxu0 0.0
    %4299 = vmatprep.subr.mxu0 0.0
    %4300 = vmatpush2.msra.mxu0 0.0
    %4301 = vmatprep.subr.mxu0 0.0
    %4302 = vmatpush2.msra.mxu0 0.0
    %4303 = vmatprep.subr.mxu0 0.0
    %4304 = vmatpush2.msra.mxu0 0.0
    %4305 = vmatprep.subr.mxu0 0.0
    %4306 = vmatpush2.msra.mxu0 0.0
    %4307 = vmatprep.subr.mxu0 0.0
    %4308 = vmatpush2.msra.mxu0 0.0
    %4309 = vmatprep.mubr.f32.mxu0 0.0
    %v4310 = vand.u32 %v3894, 4294901760
    %4311 = vmatmul.mubr.f32.gmra.mxu0 %v4310
    %v4312 = vpop.f32.mrf.mxu0
    %v4313 = vadd.f32 %v4228, %v4312
    %v4314 = vpop.f32.mrf.mxu0
    %4315 = vmatprep.mubr.f32.mxu0 0.0
    %v4316 = vand.u32 %v3897, 4294901760
    %4317 = vmatmul.mubr.f32.gmra.mxu0 %v4316
    %v4318 = vpop.f32.mrf.mxu0
    %v4319 = vadd.f32 %v4236, %v4318
    %v4320 = vpop.f32.mrf.mxu0
    %4321 = vdwg.mxu0
    %4322 = vmatprep.subr.mxu0 0.0
    %4323 = vmatpush1.msra.mxu0 0.0
    %4324 = vmatprep.subr.mxu0 0.0
    %4325 = vmatpush1.msra.mxu0 0.0
    %4326 = vmatprep.subr.mxu0 0.0
    %4327 = vmatpush1.msra.mxu0 0.0
    %4328 = vmatprep.subr.mxu0 0.0
    %4329 = vmatpush1.msra.mxu0 0.0
    %4330 = vmatprep.subr.mxu0 0.0
    %4331 = vmatpush1.msra.mxu0 0.0
    %4332 = vmatprep.subr.mxu0 0.0
    %4333 = vmatpush1.msra.mxu0 0.0
    %4334 = vmatprep.subr.mxu0 0.0
    %4335 = vmatpush1.msra.mxu0 0.0
    %4336 = vmatprep.subr.mxu0 0.0
    %4337 = vmatpush1.msra.mxu0 0.0
    %4338 = vmatprep.subr.mxu0 0.0
    %4339 = vmatpush1.msra.mxu0 0.0
    %4340 = vmatprep.subr.mxu0 0.0
    %4341 = vmatpush1.msra.mxu0 0.0
    %4342 = vmatprep.subr.mxu0 0.0
    %4343 = vmatpush1.msra.mxu0 0.0
    %4344 = vmatprep.subr.mxu0 0.0
    %4345 = vmatpush1.msra.mxu0 0.0
    %4346 = vmatprep.subr.mxu0 0.0
    %4347 = vmatpush1.msra.mxu0 0.0
    %4348 = vmatprep.subr.mxu0 0.0
    %4349 = vmatpush1.msra.mxu0 0.0
    %4350 = vmatprep.subr.mxu0 0.0
    %v4351 = vand.u32 %v3890, 4294901760
    %4352 = vmatpush1.msra.mxu0 %v4351
    %4353 = vmatprep.subr.mxu0 0.0
    %v4354 = vand.u32 %v3888, 4294901760
    %4355 = vmatpush1.msra.mxu0 %v4354
    %4356 = vmatprep.subr.mxu0 0.0
    %4357 = vmatpush2.msra.mxu0 0.0
    %4358 = vmatprep.subr.mxu0 0.0
    %4359 = vmatpush2.msra.mxu0 0.0
    %4360 = vmatprep.subr.mxu0 0.0
    %4361 = vmatpush2.msra.mxu0 0.0
    %4362 = vmatprep.subr.mxu0 0.0
    %4363 = vmatpush2.msra.mxu0 0.0
    %4364 = vmatprep.subr.mxu0 0.0
    %4365 = vmatpush2.msra.mxu0 0.0
    %4366 = vmatprep.subr.mxu0 0.0
    %4367 = vmatpush2.msra.mxu0 0.0
    %4368 = vmatprep.subr.mxu0 0.0
    %4369 = vmatpush2.msra.mxu0 0.0
    %4370 = vmatprep.subr.mxu0 0.0
    %4371 = vmatpush2.msra.mxu0 0.0
    %4372 = vmatprep.subr.mxu0 0.0
    %4373 = vmatpush2.msra.mxu0 0.0
    %4374 = vmatprep.subr.mxu0 0.0
    %4375 = vmatpush2.msra.mxu0 0.0
    %4376 = vmatprep.subr.mxu0 0.0
    %4377 = vmatpush2.msra.mxu0 0.0
    %4378 = vmatprep.subr.mxu0 0.0
    %4379 = vmatpush2.msra.mxu0 0.0
    %4380 = vmatprep.subr.mxu0 0.0
    %4381 = vmatpush2.msra.mxu0 0.0
    %4382 = vmatprep.subr.mxu0 0.0
    %4383 = vmatpush2.msra.mxu0 0.0
    %4384 = vmatprep.subr.mxu0 0.0
    %4385 = vmatpush2.msra.mxu0 0.0
    %4386 = vmatprep.subr.mxu0 0.0
    %4387 = vmatpush2.msra.mxu0 0.0
    %4388 = vmatprep.mubr.f32.mxu0 0.0
    %v4389 = vand.u32 %v3894, 4294901760
    %4390 = vmatmul.mubr.f32.gmra.mxu0 %v4389
    %v4391 = vpop.f32.mrf.mxu0
    %v4392 = vadd.f32 %v4313, %v4391
    %v4393 = vpop.f32.mrf.mxu0
    %4394 = vmatprep.mubr.f32.mxu0 0.0
    %v4395 = vand.u32 %v3897, 4294901760
    %4396 = vmatmul.mubr.f32.gmra.mxu0 %v4395
    %v4397 = vpop.f32.mrf.mxu0
    %v4398 = vadd.f32 %v4319, %v4397
    %v4399 = vpop.f32.mrf.mxu0
    %4400 = vdwg.mxu0
    %v4401 = vadd.f32 %v3338, %v4392
    %v4402 = vadd.f32 %v3344, %v4398
    %4403 = vrot.lane.b32.xlu0 %v700, 104
    %v4404 = vpop.permute.xlu0 %4403
    %4405 = vrot.lane.b32.xlu0 %v706, 104
    %v4406 = vpop.permute.xlu0 %4405
    %4407 = vrot.lane.b32.xlu0 %v700, 72
    %v4408 = vpop.permute.xlu0 %4407
    %4409 = vrot.lane.b32.xlu0 %v706, 72
    %v4410 = vpop.permute.xlu0 %4409
    %v4411 = vsel %vm1249, %v4404, 0
    %v4413 = vsel %vm1249, %v4406, 0
    %v4415 = vsel %vm1249, %v4408, 0
    %v4417 = vsel %vm1249, %v4410, 0
    %4419 = vmatprep.subr.mxu0 0.0
    %4420 = vmatpush1.xpose.msra.mxu0 0.0
    %4421 = vmatprep.subr.mxu0 0.0
    %4422 = vmatpush1.xpose.msra.mxu0 0.0
    %4423 = vmatprep.subr.mxu0 0.0
    %4424 = vmatpush1.xpose.msra.mxu0 0.0
    %4425 = vmatprep.subr.mxu0 0.0
    %4426 = vmatpush1.xpose.msra.mxu0 0.0
    %4427 = vmatprep.subr.mxu0 0.0
    %4428 = vmatpush1.xpose.msra.mxu0 0.0
    %4429 = vmatprep.subr.mxu0 0.0
    %4430 = vmatpush1.xpose.msra.mxu0 0.0
    %4431 = vmatprep.subr.mxu0 0.0
    %4432 = vmatpush1.xpose.msra.mxu0 0.0
    %4433 = vmatprep.subr.mxu0 0.0
    %4434 = vmatpush1.xpose.msra.mxu0 0.0
    %4435 = vmatprep.subr.mxu0 0.0
    %4436 = vmatpush1.xpose.msra.mxu0 0.0
    %4437 = vmatprep.subr.mxu0 0.0
    %4438 = vmatpush1.xpose.msra.mxu0 0.0
    %4439 = vmatprep.subr.mxu0 0.0
    %4440 = vmatpush1.xpose.msra.mxu0 0.0
    %4441 = vmatprep.subr.mxu0 0.0
    %4442 = vmatpush1.xpose.msra.mxu0 0.0
    %4443 = vmatprep.subr.mxu0 0.0
    %4444 = vmatpush1.xpose.msra.mxu0 0.0
    %4445 = vmatprep.subr.mxu0 0.0
    %4446 = vmatpush1.xpose.msra.mxu0 0.0
    %4447 = vmatprep.subr.mxu0 0.0
    %v4448 = vand.u32 %v4417, 4294901760
    %4449 = vmatpush1.xpose.msra.mxu0 %v4448
    %4450 = vmatprep.subr.mxu0 0.0
    %v4451 = vand.u32 %v4415, 4294901760
    %4452 = vmatpush1.xpose.msra.mxu0 %v4451
    %4453 = vmatprep.subr.mxu0 0.0
    %4454 = vmatpush2.xpose.msra.mxu0 0.0
    %4455 = vmatprep.subr.mxu0 0.0
    %4456 = vmatpush2.xpose.msra.mxu0 0.0
    %4457 = vmatprep.subr.mxu0 0.0
    %4458 = vmatpush2.xpose.msra.mxu0 0.0
    %4459 = vmatprep.subr.mxu0 0.0
    %4460 = vmatpush2.xpose.msra.mxu0 0.0
    %4461 = vmatprep.subr.mxu0 0.0
    %4462 = vmatpush2.xpose.msra.mxu0 0.0
    %4463 = vmatprep.subr.mxu0 0.0
    %4464 = vmatpush2.xpose.msra.mxu0 0.0
    %4465 = vmatprep.subr.mxu0 0.0
    %4466 = vmatpush2.xpose.msra.mxu0 0.0
    %4467 = vmatprep.subr.mxu0 0.0
    %4468 = vmatpush2.xpose.msra.mxu0 0.0
    %4469 = vmatprep.subr.mxu0 0.0
    %4470 = vmatpush2.xpose.msra.mxu0 0.0
    %4471 = vmatprep.subr.mxu0 0.0
    %4472 = vmatpush2.xpose.msra.mxu0 0.0
    %4473 = vmatprep.subr.mxu0 0.0
    %4474 = vmatpush2.xpose.msra.mxu0 0.0
    %4475 = vmatprep.subr.mxu0 0.0
    %4476 = vmatpush2.xpose.msra.mxu0 0.0
    %4477 = vmatprep.subr.mxu0 0.0
    %4478 = vmatpush2.xpose.msra.mxu0 0.0
    %4479 = vmatprep.subr.mxu0 0.0
    %4480 = vmatpush2.xpose.msra.mxu0 0.0
    %4481 = vmatprep.subr.mxu0 0.0
    %4482 = vmatpush2.xpose.msra.mxu0 0.0
    %4483 = vmatprep.subr.mxu0 0.0
    %4484 = vmatpush2.xpose.msra.mxu0 0.0
    %4485 = vmatprep.mubr.f32.mxu0 0.0
    %v4486 = vand.u32 %v4411, 4294901760
    %v4487 = vsub.f32 %v4411, %v4486
    %v4488 = vand.u32 %v4487, 4294901760
    %v4489 = vsub.f32 %v4487, %v4488
    %v4490 = vand.u32 %v4489, 4294901760
    %4491 = vmatmul.mubr.f32.gmra.mxu0 %v4490
    %v4492 = vpop.f32.mrf.mxu0
    %v4493 = vadd.f32 %v91, %v4492
    %v4494 = vpop.f32.mrf.mxu0
    %4495 = vmatprep.mubr.f32.mxu0 0.0
    %v4496 = vand.u32 %v4413, 4294901760
    %v4497 = vsub.f32 %v4413, %v4496
    %v4498 = vand.u32 %v4497, 4294901760
    %v4499 = vsub.f32 %v4497, %v4498
    %v4500 = vand.u32 %v4499, 4294901760
    %4501 = vmatmul.mubr.f32.gmra.mxu0 %v4500
    %v4502 = vpop.f32.mrf.mxu0
    %v4503 = vadd.f32 %v92, %v4502
    %v4504 = vpop.f32.mrf.mxu0
    %4505 = vdwg.mxu0
    %4506 = vmatprep.subr.mxu0 0.0
    %4507 = vmatpush1.xpose.msra.mxu0 0.0
    %4508 = vmatprep.subr.mxu0 0.0
    %4509 = vmatpush1.xpose.msra.mxu0 0.0
    %4510 = vmatprep.subr.mxu0 0.0
    %4511 = vmatpush1.xpose.msra.mxu0 0.0
    %4512 = vmatprep.subr.mxu0 0.0
    %4513 = vmatpush1.xpose.msra.mxu0 0.0
    %4514 = vmatprep.subr.mxu0 0.0
    %4515 = vmatpush1.xpose.msra.mxu0 0.0
    %4516 = vmatprep.subr.mxu0 0.0
    %4517 = vmatpush1.xpose.msra.mxu0 0.0
    %4518 = vmatprep.subr.mxu0 0.0
    %4519 = vmatpush1.xpose.msra.mxu0 0.0
    %4520 = vmatprep.subr.mxu0 0.0
    %4521 = vmatpush1.xpose.msra.mxu0 0.0
    %4522 = vmatprep.subr.mxu0 0.0
    %4523 = vmatpush1.xpose.msra.mxu0 0.0
    %4524 = vmatprep.subr.mxu0 0.0
    %4525 = vmatpush1.xpose.msra.mxu0 0.0
    %4526 = vmatprep.subr.mxu0 0.0
    %4527 = vmatpush1.xpose.msra.mxu0 0.0
    %4528 = vmatprep.subr.mxu0 0.0
    %4529 = vmatpush1.xpose.msra.mxu0 0.0
    %4530 = vmatprep.subr.mxu0 0.0
    %4531 = vmatpush1.xpose.msra.mxu0 0.0
    %4532 = vmatprep.subr.mxu0 0.0
    %4533 = vmatpush1.xpose.msra.mxu0 0.0
    %4534 = vmatprep.subr.mxu0 0.0
    %v4535 = vand.u32 %v4417, 4294901760
    %v4536 = vsub.f32 %v4417, %v4535
    %v4537 = vand.u32 %v4536, 4294901760
    %v4538 = vsub.f32 %v4536, %v4537
    %v4539 = vand.u32 %v4538, 4294901760
    %4540 = vmatpush1.xpose.msra.mxu0 %v4539
    %4541 = vmatprep.subr.mxu0 0.0
    %v4542 = vand.u32 %v4415, 4294901760
    %v4543 = vsub.f32 %v4415, %v4542
    %v4544 = vand.u32 %v4543, 4294901760
    %v4545 = vsub.f32 %v4543, %v4544
    %v4546 = vand.u32 %v4545, 4294901760
    %4547 = vmatpush1.xpose.msra.mxu0 %v4546
    %4548 = vmatprep.subr.mxu0 0.0
    %4549 = vmatpush2.xpose.msra.mxu0 0.0
    %4550 = vmatprep.subr.mxu0 0.0
    %4551 = vmatpush2.xpose.msra.mxu0 0.0
    %4552 = vmatprep.subr.mxu0 0.0
    %4553 = vmatpush2.xpose.msra.mxu0 0.0
    %4554 = vmatprep.subr.mxu0 0.0
    %4555 = vmatpush2.xpose.msra.mxu0 0.0
    %4556 = vmatprep.subr.mxu0 0.0
    %4557 = vmatpush2.xpose.msra.mxu0 0.0
    %4558 = vmatprep.subr.mxu0 0.0
    %4559 = vmatpush2.xpose.msra.mxu0 0.0
    %4560 = vmatprep.subr.mxu0 0.0
    %4561 = vmatpush2.xpose.msra.mxu0 0.0
    %4562 = vmatprep.subr.mxu0 0.0
    %4563 = vmatpush2.xpose.msra.mxu0 0.0
    %4564 = vmatprep.subr.mxu0 0.0
    %4565 = vmatpush2.xpose.msra.mxu0 0.0
    %4566 = vmatprep.subr.mxu0 0.0
    %4567 = vmatpush2.xpose.msra.mxu0 0.0
    %4568 = vmatprep.subr.mxu0 0.0
    %4569 = vmatpush2.xpose.msra.mxu0 0.0
    %4570 = vmatprep.subr.mxu0 0.0
    %4571 = vmatpush2.xpose.msra.mxu0 0.0
    %4572 = vmatprep.subr.mxu0 0.0
    %4573 = vmatpush2.xpose.msra.mxu0 0.0
    %4574 = vmatprep.subr.mxu0 0.0
    %4575 = vmatpush2.xpose.msra.mxu0 0.0
    %4576 = vmatprep.subr.mxu0 0.0
    %4577 = vmatpush2.xpose.msra.mxu0 0.0
    %4578 = vmatprep.subr.mxu0 0.0
    %4579 = vmatpush2.xpose.msra.mxu0 0.0
    %4580 = vmatprep.mubr.f32.mxu0 0.0
    %v4581 = vand.u32 %v4411, 4294901760
    %4582 = vmatmul.mubr.f32.gmra.mxu0 %v4581
    %v4583 = vpop.f32.mrf.mxu0
    %v4584 = vadd.f32 %v4493, %v4583
    %v4585 = vpop.f32.mrf.mxu0
    %4586 = vmatprep.mubr.f32.mxu0 0.0
    %v4587 = vand.u32 %v4413, 4294901760
    %4588 = vmatmul.mubr.f32.gmra.mxu0 %v4587
    %v4589 = vpop.f32.mrf.mxu0
    %v4590 = vadd.f32 %v4503, %v4589
    %v4591 = vpop.f32.mrf.mxu0
    %4592 = vdwg.mxu0
    %4593 = vmatprep.subr.mxu0 0.0
    %4594 = vmatpush1.xpose.msra.mxu0 0.0
    %4595 = vmatprep.subr.mxu0 0.0
    %4596 = vmatpush1.xpose.msra.mxu0 0.0
    %4597 = vmatprep.subr.mxu0 0.0
    %4598 = vmatpush1.xpose.msra.mxu0 0.0
    %4599 = vmatprep.subr.mxu0 0.0
    %4600 = vmatpush1.xpose.msra.mxu0 0.0
    %4601 = vmatprep.subr.mxu0 0.0
    %4602 = vmatpush1.xpose.msra.mxu0 0.0
    %4603 = vmatprep.subr.mxu0 0.0
    %4604 = vmatpush1.xpose.msra.mxu0 0.0
    %4605 = vmatprep.subr.mxu0 0.0
    %4606 = vmatpush1.xpose.msra.mxu0 0.0
    %4607 = vmatprep.subr.mxu0 0.0
    %4608 = vmatpush1.xpose.msra.mxu0 0.0
    %4609 = vmatprep.subr.mxu0 0.0
    %4610 = vmatpush1.xpose.msra.mxu0 0.0
    %4611 = vmatprep.subr.mxu0 0.0
    %4612 = vmatpush1.xpose.msra.mxu0 0.0
    %4613 = vmatprep.subr.mxu0 0.0
    %4614 = vmatpush1.xpose.msra.mxu0 0.0
    %4615 = vmatprep.subr.mxu0 0.0
    %4616 = vmatpush1.xpose.msra.mxu0 0.0
    %4617 = vmatprep.subr.mxu0 0.0
    %4618 = vmatpush1.xpose.msra.mxu0 0.0
    %4619 = vmatprep.subr.mxu0 0.0
    %4620 = vmatpush1.xpose.msra.mxu0 0.0
    %4621 = vmatprep.subr.mxu0 0.0
    %v4622 = vand.u32 %v4417, 4294901760
    %v4623 = vsub.f32 %v4417, %v4622
    %4624 = vmatpush1.xpose.msra.mxu0 %v4623
    %4625 = vmatprep.subr.mxu0 0.0
    %v4626 = vand.u32 %v4415, 4294901760
    %v4627 = vsub.f32 %v4415, %v4626
    %4628 = vmatpush1.xpose.msra.mxu0 %v4627
    %4629 = vmatprep.subr.mxu0 0.0
    %4630 = vmatpush2.xpose.msra.mxu0 0.0
    %4631 = vmatprep.subr.mxu0 0.0
    %4632 = vmatpush2.xpose.msra.mxu0 0.0
    %4633 = vmatprep.subr.mxu0 0.0
    %4634 = vmatpush2.xpose.msra.mxu0 0.0
    %4635 = vmatprep.subr.mxu0 0.0
    %4636 = vmatpush2.xpose.msra.mxu0 0.0
    %4637 = vmatprep.subr.mxu0 0.0
    %4638 = vmatpush2.xpose.msra.mxu0 0.0
    %4639 = vmatprep.subr.mxu0 0.0
    %4640 = vmatpush2.xpose.msra.mxu0 0.0
    %4641 = vmatprep.subr.mxu0 0.0
    %4642 = vmatpush2.xpose.msra.mxu0 0.0
    %4643 = vmatprep.subr.mxu0 0.0
    %4644 = vmatpush2.xpose.msra.mxu0 0.0
    %4645 = vmatprep.subr.mxu0 0.0
    %4646 = vmatpush2.xpose.msra.mxu0 0.0
    %4647 = vmatprep.subr.mxu0 0.0
    %4648 = vmatpush2.xpose.msra.mxu0 0.0
    %4649 = vmatprep.subr.mxu0 0.0
    %4650 = vmatpush2.xpose.msra.mxu0 0.0
    %4651 = vmatprep.subr.mxu0 0.0
    %4652 = vmatpush2.xpose.msra.mxu0 0.0
    %4653 = vmatprep.subr.mxu0 0.0
    %4654 = vmatpush2.xpose.msra.mxu0 0.0
    %4655 = vmatprep.subr.mxu0 0.0
    %4656 = vmatpush2.xpose.msra.mxu0 0.0
    %4657 = vmatprep.subr.mxu0 0.0
    %4658 = vmatpush2.xpose.msra.mxu0 0.0
    %4659 = vmatprep.subr.mxu0 0.0
    %4660 = vmatpush2.xpose.msra.mxu0 0.0
    %4661 = vmatprep.mubr.f32.mxu0 0.0
    %v4662 = vand.u32 %v4411, 4294901760
    %v4663 = vsub.f32 %v4411, %v4662
    %4664 = vmatmul.mubr.f32.gmra.mxu0 %v4663
    %v4665 = vpop.f32.mrf.mxu0
    %v4666 = vadd.f32 %v4584, %v4665
    %v4667 = vpop.f32.mrf.mxu0
    %4668 = vmatprep.mubr.f32.mxu0 0.0
    %v4669 = vand.u32 %v4413, 4294901760
    %v4670 = vsub.f32 %v4413, %v4669
    %4671 = vmatmul.mubr.f32.gmra.mxu0 %v4670
    %v4672 = vpop.f32.mrf.mxu0
    %v4673 = vadd.f32 %v4590, %v4672
    %v4674 = vpop.f32.mrf.mxu0
    %4675 = vdwg.mxu0
    %4676 = vmatprep.subr.mxu0 0.0
    %4677 = vmatpush1.xpose.msra.mxu0 0.0
    %4678 = vmatprep.subr.mxu0 0.0
    %4679 = vmatpush1.xpose.msra.mxu0 0.0
    %4680 = vmatprep.subr.mxu0 0.0
    %4681 = vmatpush1.xpose.msra.mxu0 0.0
    %4682 = vmatprep.subr.mxu0 0.0
    %4683 = vmatpush1.xpose.msra.mxu0 0.0
    %4684 = vmatprep.subr.mxu0 0.0
    %4685 = vmatpush1.xpose.msra.mxu0 0.0
    %4686 = vmatprep.subr.mxu0 0.0
    %4687 = vmatpush1.xpose.msra.mxu0 0.0
    %4688 = vmatprep.subr.mxu0 0.0
    %4689 = vmatpush1.xpose.msra.mxu0 0.0
    %4690 = vmatprep.subr.mxu0 0.0
    %4691 = vmatpush1.xpose.msra.mxu0 0.0
    %4692 = vmatprep.subr.mxu0 0.0
    %4693 = vmatpush1.xpose.msra.mxu0 0.0
    %4694 = vmatprep.subr.mxu0 0.0
    %4695 = vmatpush1.xpose.msra.mxu0 0.0
    %4696 = vmatprep.subr.mxu0 0.0
    %4697 = vmatpush1.xpose.msra.mxu0 0.0
    %4698 = vmatprep.subr.mxu0 0.0
    %4699 = vmatpush1.xpose.msra.mxu0 0.0
    %4700 = vmatprep.subr.mxu0 0.0
    %4701 = vmatpush1.xpose.msra.mxu0 0.0
    %4702 = vmatprep.subr.mxu0 0.0
    %4703 = vmatpush1.xpose.msra.mxu0 0.0
    %4704 = vmatprep.subr.mxu0 0.0
    %v4705 = vand.u32 %v4417, 4294901760
    %4706 = vmatpush1.xpose.msra.mxu0 %v4705
    %4707 = vmatprep.subr.mxu0 0.0
    %v4708 = vand.u32 %v4415, 4294901760
    %4709 = vmatpush1.xpose.msra.mxu0 %v4708
    %4710 = vmatprep.subr.mxu0 0.0
    %4711 = vmatpush2.xpose.msra.mxu0 0.0
    %4712 = vmatprep.subr.mxu0 0.0
    %4713 = vmatpush2.xpose.msra.mxu0 0.0
    %4714 = vmatprep.subr.mxu0 0.0
    %4715 = vmatpush2.xpose.msra.mxu0 0.0
    %4716 = vmatprep.subr.mxu0 0.0
    %4717 = vmatpush2.xpose.msra.mxu0 0.0
    %4718 = vmatprep.subr.mxu0 0.0
    %4719 = vmatpush2.xpose.msra.mxu0 0.0
    %4720 = vmatprep.subr.mxu0 0.0
    %4721 = vmatpush2.xpose.msra.mxu0 0.0
    %4722 = vmatprep.subr.mxu0 0.0
    %4723 = vmatpush2.xpose.msra.mxu0 0.0
    %4724 = vmatprep.subr.mxu0 0.0
    %4725 = vmatpush2.xpose.msra.mxu0 0.0
    %4726 = vmatprep.subr.mxu0 0.0
    %4727 = vmatpush2.xpose.msra.mxu0 0.0
    %4728 = vmatprep.subr.mxu0 0.0
    %4729 = vmatpush2.xpose.msra.mxu0 0.0
    %4730 = vmatprep.subr.mxu0 0.0
    %4731 = vmatpush2.xpose.msra.mxu0 0.0
    %4732 = vmatprep.subr.mxu0 0.0
    %4733 = vmatpush2.xpose.msra.mxu0 0.0
    %4734 = vmatprep.subr.mxu0 0.0
    %4735 = vmatpush2.xpose.msra.mxu0 0.0
    %4736 = vmatprep.subr.mxu0 0.0
    %4737 = vmatpush2.xpose.msra.mxu0 0.0
    %4738 = vmatprep.subr.mxu0 0.0
    %4739 = vmatpush2.xpose.msra.mxu0 0.0
    %4740 = vmatprep.subr.mxu0 0.0
    %4741 = vmatpush2.xpose.msra.mxu0 0.0
    %4742 = vmatprep.mubr.f32.mxu0 0.0
    %v4743 = vand.u32 %v4411, 4294901760
    %v4744 = vsub.f32 %v4411, %v4743
    %v4745 = vand.u32 %v4744, 4294901760
    %4746 = vmatmul.mubr.f32.gmra.mxu0 %v4745
    %v4747 = vpop.f32.mrf.mxu0
    %v4748 = vadd.f32 %v4666, %v4747
    %v4749 = vpop.f32.mrf.mxu0
    %4750 = vmatprep.mubr.f32.mxu0 0.0
    %v4751 = vand.u32 %v4413, 4294901760
    %v4752 = vsub.f32 %v4413, %v4751
    %v4753 = vand.u32 %v4752, 4294901760
    %4754 = vmatmul.mubr.f32.gmra.mxu0 %v4753
    %v4755 = vpop.f32.mrf.mxu0
    %v4756 = vadd.f32 %v4673, %v4755
    %v4757 = vpop.f32.mrf.mxu0
    %4758 = vdwg.mxu0
    %4759 = vmatprep.subr.mxu0 0.0
    %4760 = vmatpush1.xpose.msra.mxu0 0.0
    %4761 = vmatprep.subr.mxu0 0.0
    %4762 = vmatpush1.xpose.msra.mxu0 0.0
    %4763 = vmatprep.subr.mxu0 0.0
    %4764 = vmatpush1.xpose.msra.mxu0 0.0
    %4765 = vmatprep.subr.mxu0 0.0
    %4766 = vmatpush1.xpose.msra.mxu0 0.0
    %4767 = vmatprep.subr.mxu0 0.0
    %4768 = vmatpush1.xpose.msra.mxu0 0.0
    %4769 = vmatprep.subr.mxu0 0.0
    %4770 = vmatpush1.xpose.msra.mxu0 0.0
    %4771 = vmatprep.subr.mxu0 0.0
    %4772 = vmatpush1.xpose.msra.mxu0 0.0
    %4773 = vmatprep.subr.mxu0 0.0
    %4774 = vmatpush1.xpose.msra.mxu0 0.0
    %4775 = vmatprep.subr.mxu0 0.0
    %4776 = vmatpush1.xpose.msra.mxu0 0.0
    %4777 = vmatprep.subr.mxu0 0.0
    %4778 = vmatpush1.xpose.msra.mxu0 0.0
    %4779 = vmatprep.subr.mxu0 0.0
    %4780 = vmatpush1.xpose.msra.mxu0 0.0
    %4781 = vmatprep.subr.mxu0 0.0
    %4782 = vmatpush1.xpose.msra.mxu0 0.0
    %4783 = vmatprep.subr.mxu0 0.0
    %4784 = vmatpush1.xpose.msra.mxu0 0.0
    %4785 = vmatprep.subr.mxu0 0.0
    %4786 = vmatpush1.xpose.msra.mxu0 0.0
    %4787 = vmatprep.subr.mxu0 0.0
    %v4788 = vand.u32 %v4417, 4294901760
    %v4789 = vsub.f32 %v4417, %v4788
    %v4790 = vand.u32 %v4789, 4294901760
    %4791 = vmatpush1.xpose.msra.mxu0 %v4790
    %4792 = vmatprep.subr.mxu0 0.0
    %v4793 = vand.u32 %v4415, 4294901760
    %v4794 = vsub.f32 %v4415, %v4793
    %v4795 = vand.u32 %v4794, 4294901760
    %4796 = vmatpush1.xpose.msra.mxu0 %v4795
    %4797 = vmatprep.subr.mxu0 0.0
    %4798 = vmatpush2.xpose.msra.mxu0 0.0
    %4799 = vmatprep.subr.mxu0 0.0
    %4800 = vmatpush2.xpose.msra.mxu0 0.0
    %4801 = vmatprep.subr.mxu0 0.0
    %4802 = vmatpush2.xpose.msra.mxu0 0.0
    %4803 = vmatprep.subr.mxu0 0.0
    %4804 = vmatpush2.xpose.msra.mxu0 0.0
    %4805 = vmatprep.subr.mxu0 0.0
    %4806 = vmatpush2.xpose.msra.mxu0 0.0
    %4807 = vmatprep.subr.mxu0 0.0
    %4808 = vmatpush2.xpose.msra.mxu0 0.0
    %4809 = vmatprep.subr.mxu0 0.0
    %4810 = vmatpush2.xpose.msra.mxu0 0.0
    %4811 = vmatprep.subr.mxu0 0.0
    %4812 = vmatpush2.xpose.msra.mxu0 0.0
    %4813 = vmatprep.subr.mxu0 0.0
    %4814 = vmatpush2.xpose.msra.mxu0 0.0
    %4815 = vmatprep.subr.mxu0 0.0
    %4816 = vmatpush2.xpose.msra.mxu0 0.0
    %4817 = vmatprep.subr.mxu0 0.0
    %4818 = vmatpush2.xpose.msra.mxu0 0.0
    %4819 = vmatprep.subr.mxu0 0.0
    %4820 = vmatpush2.xpose.msra.mxu0 0.0
    %4821 = vmatprep.subr.mxu0 0.0
    %4822 = vmatpush2.xpose.msra.mxu0 0.0
    %4823 = vmatprep.subr.mxu0 0.0
    %4824 = vmatpush2.xpose.msra.mxu0 0.0
    %4825 = vmatprep.subr.mxu0 0.0
    %4826 = vmatpush2.xpose.msra.mxu0 0.0
    %4827 = vmatprep.subr.mxu0 0.0
    %4828 = vmatpush2.xpose.msra.mxu0 0.0
    %4829 = vmatprep.mubr.f32.mxu0 0.0
    %v4830 = vand.u32 %v4411, 4294901760
    %4831 = vmatmul.mubr.f32.gmra.mxu0 %v4830
    %v4832 = vpop.f32.mrf.mxu0
    %v4833 = vadd.f32 %v4748, %v4832
    %v4834 = vpop.f32.mrf.mxu0
    %4835 = vmatprep.mubr.f32.mxu0 0.0
    %v4836 = vand.u32 %v4413, 4294901760
    %4837 = vmatmul.mubr.f32.gmra.mxu0 %v4836
    %v4838 = vpop.f32.mrf.mxu0
    %v4839 = vadd.f32 %v4756, %v4838
    %v4840 = vpop.f32.mrf.mxu0
    %4841 = vdwg.mxu0
    %4842 = vmatprep.subr.mxu0 0.0
    %4843 = vmatpush1.xpose.msra.mxu0 0.0
    %4844 = vmatprep.subr.mxu0 0.0
    %4845 = vmatpush1.xpose.msra.mxu0 0.0
    %4846 = vmatprep.subr.mxu0 0.0
    %4847 = vmatpush1.xpose.msra.mxu0 0.0
    %4848 = vmatprep.subr.mxu0 0.0
    %4849 = vmatpush1.xpose.msra.mxu0 0.0
    %4850 = vmatprep.subr.mxu0 0.0
    %4851 = vmatpush1.xpose.msra.mxu0 0.0
    %4852 = vmatprep.subr.mxu0 0.0
    %4853 = vmatpush1.xpose.msra.mxu0 0.0
    %4854 = vmatprep.subr.mxu0 0.0
    %4855 = vmatpush1.xpose.msra.mxu0 0.0
    %4856 = vmatprep.subr.mxu0 0.0
    %4857 = vmatpush1.xpose.msra.mxu0 0.0
    %4858 = vmatprep.subr.mxu0 0.0
    %4859 = vmatpush1.xpose.msra.mxu0 0.0
    %4860 = vmatprep.subr.mxu0 0.0
    %4861 = vmatpush1.xpose.msra.mxu0 0.0
    %4862 = vmatprep.subr.mxu0 0.0
    %4863 = vmatpush1.xpose.msra.mxu0 0.0
    %4864 = vmatprep.subr.mxu0 0.0
    %4865 = vmatpush1.xpose.msra.mxu0 0.0
    %4866 = vmatprep.subr.mxu0 0.0
    %4867 = vmatpush1.xpose.msra.mxu0 0.0
    %4868 = vmatprep.subr.mxu0 0.0
    %4869 = vmatpush1.xpose.msra.mxu0 0.0
    %4870 = vmatprep.subr.mxu0 0.0
    %v4871 = vand.u32 %v4417, 4294901760
    %4872 = vmatpush1.xpose.msra.mxu0 %v4871
    %4873 = vmatprep.subr.mxu0 0.0
    %v4874 = vand.u32 %v4415, 4294901760
    %4875 = vmatpush1.xpose.msra.mxu0 %v4874
    %4876 = vmatprep.subr.mxu0 0.0
    %4877 = vmatpush2.xpose.msra.mxu0 0.0
    %4878 = vmatprep.subr.mxu0 0.0
    %4879 = vmatpush2.xpose.msra.mxu0 0.0
    %4880 = vmatprep.subr.mxu0 0.0
    %4881 = vmatpush2.xpose.msra.mxu0 0.0
    %4882 = vmatprep.subr.mxu0 0.0
    %4883 = vmatpush2.xpose.msra.mxu0 0.0
    %4884 = vmatprep.subr.mxu0 0.0
    %4885 = vmatpush2.xpose.msra.mxu0 0.0
    %4886 = vmatprep.subr.mxu0 0.0
    %4887 = vmatpush2.xpose.msra.mxu0 0.0
    %4888 = vmatprep.subr.mxu0 0.0
    %4889 = vmatpush2.xpose.msra.mxu0 0.0
    %4890 = vmatprep.subr.mxu0 0.0
    %4891 = vmatpush2.xpose.msra.mxu0 0.0
    %4892 = vmatprep.subr.mxu0 0.0
    %4893 = vmatpush2.xpose.msra.mxu0 0.0
    %4894 = vmatprep.subr.mxu0 0.0
    %4895 = vmatpush2.xpose.msra.mxu0 0.0
    %4896 = vmatprep.subr.mxu0 0.0
    %4897 = vmatpush2.xpose.msra.mxu0 0.0
    %4898 = vmatprep.subr.mxu0 0.0
    %4899 = vmatpush2.xpose.msra.mxu0 0.0
    %4900 = vmatprep.subr.mxu0 0.0
    %4901 = vmatpush2.xpose.msra.mxu0 0.0
    %4902 = vmatprep.subr.mxu0 0.0
    %4903 = vmatpush2.xpose.msra.mxu0 0.0
    %4904 = vmatprep.subr.mxu0 0.0
    %4905 = vmatpush2.xpose.msra.mxu0 0.0
    %4906 = vmatprep.subr.mxu0 0.0
    %4907 = vmatpush2.xpose.msra.mxu0 0.0
    %4908 = vmatprep.mubr.f32.mxu0 0.0
    %v4909 = vand.u32 %v4411, 4294901760
    %4910 = vmatmul.mubr.f32.gmra.mxu0 %v4909
    %v4911 = vpop.f32.mrf.mxu0
    %v4912 = vadd.f32 %v4833, %v4911
    %v4913 = vpop.f32.mrf.mxu0
    %4914 = vmatprep.mubr.f32.mxu0 0.0
    %v4915 = vand.u32 %v4413, 4294901760
    %4916 = vmatmul.mubr.f32.gmra.mxu0 %v4915
    %v4917 = vpop.f32.mrf.mxu0
    %v4918 = vadd.f32 %v4839, %v4917
    %v4919 = vpop.f32.mrf.mxu0
    %4920 = vdwg.mxu0
    %v4921 = vsel %vm1760, %v4912, -inf
    %4922 = vmax.xlane.f32.xlu0 %v4921
    %v4923 = vpop.xlane.xlu0 %4922
    %v4924 = vsel %vm1760, %v4918, -inf
    %4925 = vmax.xlane.f32.xlu0 %v4924
    %v4926 = vpop.xlane.xlu0 %4925
    %v4927 = vsub.f32 %v4912, %v4923
    %v4928 = vsub.f32 %v4918, %v4926
    %v4929 = vmul.f32 %v4927, 1.442695
    %v4930 = vpow.pop %v4929
    %v4931 = vmul.f32 %v4928, 1.442695
    %v4932 = vpow.pop %v4931
    %v4933 = vsel %vm1760, %v4930, 0.0
    %4934 = vadd.xlane.f32.xlu0 %v4933
    %v4935 = vpop.xlane.xlu0 %4934
    %v4936 = vsel %vm1760, %v4932, 0.0
    %4937 = vadd.xlane.f32.xlu0 %v4936
    %v4938 = vpop.xlane.xlu0 %4937
    %v4939 = vrcp.pop %v4935
    %v4940 = vmul.f32 %v4930, %v4939
    %v4941 = vrcp.pop %v4938
    %v4942 = vmul.f32 %v4932, %v4941
    %4943 = vrot.lane.b32.xlu0 %v1234, 32
    %v4944 = vpop.permute.xlu0 %4943
    %4945 = vrot.lane.b32.xlu0 %v1240, 32
    %v4946 = vpop.permute.xlu0 %4945
    %v4950 = vsel %vm1760, %v4940, 0
    %v4953 = vsel %vm1760, %v4942, 0
    %4955 = vmatprep.subr.mxu0 0.0
    %4956 = vmatpush1.msra.mxu0 0.0
    %4957 = vmatprep.subr.mxu0 0.0
    %4958 = vmatpush1.msra.mxu0 0.0
    %4959 = vmatprep.subr.mxu0 0.0
    %4960 = vmatpush1.msra.mxu0 0.0
    %4961 = vmatprep.subr.mxu0 0.0
    %4962 = vmatpush1.msra.mxu0 0.0
    %4963 = vmatprep.subr.mxu0 0.0
    %4964 = vmatpush1.msra.mxu0 0.0
    %4965 = vmatprep.subr.mxu0 0.0
    %4966 = vmatpush1.msra.mxu0 0.0
    %4967 = vmatprep.subr.mxu0 0.0
    %4968 = vmatpush1.msra.mxu0 0.0
    %4969 = vmatprep.subr.mxu0 0.0
    %4970 = vmatpush1.msra.mxu0 0.0
    %4971 = vmatprep.subr.mxu0 0.0
    %4972 = vmatpush1.msra.mxu0 0.0
    %4973 = vmatprep.subr.mxu0 0.0
    %4974 = vmatpush1.msra.mxu0 0.0
    %4975 = vmatprep.subr.mxu0 0.0
    %4976 = vmatpush1.msra.mxu0 0.0
    %4977 = vmatprep.subr.mxu0 0.0
    %4978 = vmatpush1.msra.mxu0 0.0
    %4979 = vmatprep.subr.mxu0 0.0
    %4980 = vmatpush1.msra.mxu0 0.0
    %4981 = vmatprep.subr.mxu0 0.0
    %4982 = vmatpush1.msra.mxu0 0.0
    %4983 = vmatprep.subr.mxu0 0.0
    %v4984 = vand.u32 %v4946, 4294901760
    %4985 = vmatpush1.msra.mxu0 %v4984
    %4986 = vmatprep.subr.mxu0 0.0
    %v4987 = vand.u32 %v4944, 4294901760
    %4988 = vmatpush1.msra.mxu0 %v4987
    %4989 = vmatprep.subr.mxu0 0.0
    %4990 = vmatpush2.msra.mxu0 0.0
    %4991 = vmatprep.subr.mxu0 0.0
    %4992 = vmatpush2.msra.mxu0 0.0
    %4993 = vmatprep.subr.mxu0 0.0
    %4994 = vmatpush2.msra.mxu0 0.0
    %4995 = vmatprep.subr.mxu0 0.0
    %4996 = vmatpush2.msra.mxu0 0.0
    %4997 = vmatprep.subr.mxu0 0.0
    %4998 = vmatpush2.msra.mxu0 0.0
    %4999 = vmatprep.subr.mxu0 0.0
    %5000 = vmatpush2.msra.mxu0 0.0
    %5001 = vmatprep.subr.mxu0 0.0
    %5002 = vmatpush2.msra.mxu0 0.0
    %5003 = vmatprep.subr.mxu0 0.0
    %5004 = vmatpush2.msra.mxu0 0.0
    %5005 = vmatprep.subr.mxu0 0.0
    %5006 = vmatpush2.msra.mxu0 0.0
    %5007 = vmatprep.subr.mxu0 0.0
    %5008 = vmatpush2.msra.mxu0 0.0
    %5009 = vmatprep.subr.mxu0 0.0
    %5010 = vmatpush2.msra.mxu0 0.0
    %5011 = vmatprep.subr.mxu0 0.0
    %5012 = vmatpush2.msra.mxu0 0.0
    %5013 = vmatprep.subr.mxu0 0.0
    %5014 = vmatpush2.msra.mxu0 0.0
    %5015 = vmatprep.subr.mxu0 0.0
    %5016 = vmatpush2.msra.mxu0 0.0
    %5017 = vmatprep.subr.mxu0 0.0
    %5018 = vmatpush2.msra.mxu0 0.0
    %5019 = vmatprep.subr.mxu0 0.0
    %5020 = vmatpush2.msra.mxu0 0.0
    %5021 = vmatprep.mubr.f32.mxu0 0.0
    %v5022 = vand.u32 %v4950, 4294901760
    %v5023 = vsub.f32 %v4950, %v5022
    %v5024 = vand.u32 %v5023, 4294901760
    %v5025 = vsub.f32 %v5023, %v5024
    %v5026 = vand.u32 %v5025, 4294901760
    %5027 = vmatmul.mubr.f32.gmra.mxu0 %v5026
    %v5028 = vpop.f32.mrf.mxu0
    %v5029 = vadd.f32 0.0, %v5028
    %v5030 = vpop.f32.mrf.mxu0
    %5031 = vmatprep.mubr.f32.mxu0 0.0
    %v5032 = vand.u32 %v4953, 4294901760
    %v5033 = vsub.f32 %v4953, %v5032
    %v5034 = vand.u32 %v5033, 4294901760
    %v5035 = vsub.f32 %v5033, %v5034
    %v5036 = vand.u32 %v5035, 4294901760
    %5037 = vmatmul.mubr.f32.gmra.mxu0 %v5036
    %v5038 = vpop.f32.mrf.mxu0
    %v5039 = vadd.f32 0.0, %v5038
    %v5040 = vpop.f32.mrf.mxu0
    %5041 = vdwg.mxu0
    %5042 = vmatprep.subr.mxu0 0.0
    %5043 = vmatpush1.msra.mxu0 0.0
    %5044 = vmatprep.subr.mxu0 0.0
    %5045 = vmatpush1.msra.mxu0 0.0
    %5046 = vmatprep.subr.mxu0 0.0
    %5047 = vmatpush1.msra.mxu0 0.0
    %5048 = vmatprep.subr.mxu0 0.0
    %5049 = vmatpush1.msra.mxu0 0.0
    %5050 = vmatprep.subr.mxu0 0.0
    %5051 = vmatpush1.msra.mxu0 0.0
    %5052 = vmatprep.subr.mxu0 0.0
    %5053 = vmatpush1.msra.mxu0 0.0
    %5054 = vmatprep.subr.mxu0 0.0
    %5055 = vmatpush1.msra.mxu0 0.0
    %5056 = vmatprep.subr.mxu0 0.0
    %5057 = vmatpush1.msra.mxu0 0.0
    %5058 = vmatprep.subr.mxu0 0.0
    %5059 = vmatpush1.msra.mxu0 0.0
    %5060 = vmatprep.subr.mxu0 0.0
    %5061 = vmatpush1.msra.mxu0 0.0
    %5062 = vmatprep.subr.mxu0 0.0
    %5063 = vmatpush1.msra.mxu0 0.0
    %5064 = vmatprep.subr.mxu0 0.0
    %5065 = vmatpush1.msra.mxu0 0.0
    %5066 = vmatprep.subr.mxu0 0.0
    %5067 = vmatpush1.msra.mxu0 0.0
    %5068 = vmatprep.subr.mxu0 0.0
    %5069 = vmatpush1.msra.mxu0 0.0
    %5070 = vmatprep.subr.mxu0 0.0
    %v5071 = vand.u32 %v4946, 4294901760
    %v5072 = vsub.f32 %v4946, %v5071
    %v5073 = vand.u32 %v5072, 4294901760
    %v5074 = vsub.f32 %v5072, %v5073
    %v5075 = vand.u32 %v5074, 4294901760
    %5076 = vmatpush1.msra.mxu0 %v5075
    %5077 = vmatprep.subr.mxu0 0.0
    %v5078 = vand.u32 %v4944, 4294901760
    %v5079 = vsub.f32 %v4944, %v5078
    %v5080 = vand.u32 %v5079, 4294901760
    %v5081 = vsub.f32 %v5079, %v5080
    %v5082 = vand.u32 %v5081, 4294901760
    %5083 = vmatpush1.msra.mxu0 %v5082
    %5084 = vmatprep.subr.mxu0 0.0
    %5085 = vmatpush2.msra.mxu0 0.0
    %5086 = vmatprep.subr.mxu0 0.0
    %5087 = vmatpush2.msra.mxu0 0.0
    %5088 = vmatprep.subr.mxu0 0.0
    %5089 = vmatpush2.msra.mxu0 0.0
    %5090 = vmatprep.subr.mxu0 0.0
    %5091 = vmatpush2.msra.mxu0 0.0
    %5092 = vmatprep.subr.mxu0 0.0
    %5093 = vmatpush2.msra.mxu0 0.0
    %5094 = vmatprep.subr.mxu0 0.0
    %5095 = vmatpush2.msra.mxu0 0.0
    %5096 = vmatprep.subr.mxu0 0.0
    %5097 = vmatpush2.msra.mxu0 0.0
    %5098 = vmatprep.subr.mxu0 0.0
    %5099 = vmatpush2.msra.mxu0 0.0
    %5100 = vmatprep.subr.mxu0 0.0
    %5101 = vmatpush2.msra.mxu0 0.0
    %5102 = vmatprep.subr.mxu0 0.0
    %5103 = vmatpush2.msra.mxu0 0.0
    %5104 = vmatprep.subr.mxu0 0.0
    %5105 = vmatpush2.msra.mxu0 0.0
    %5106 = vmatprep.subr.mxu0 0.0
    %5107 = vmatpush2.msra.mxu0 0.0
    %5108 = vmatprep.subr.mxu0 0.0
    %5109 = vmatpush2.msra.mxu0 0.0
    %5110 = vmatprep.subr.mxu0 0.0
    %5111 = vmatpush2.msra.mxu0 0.0
    %5112 = vmatprep.subr.mxu0 0.0
    %5113 = vmatpush2.msra.mxu0 0.0
    %5114 = vmatprep.subr.mxu0 0.0
    %5115 = vmatpush2.msra.mxu0 0.0
    %5116 = vmatprep.mubr.f32.mxu0 0.0
    %v5117 = vand.u32 %v4950, 4294901760
    %5118 = vmatmul.mubr.f32.gmra.mxu0 %v5117
    %v5119 = vpop.f32.mrf.mxu0
    %v5120 = vadd.f32 %v5029, %v5119
    %v5121 = vpop.f32.mrf.mxu0
    %5122 = vmatprep.mubr.f32.mxu0 0.0
    %v5123 = vand.u32 %v4953, 4294901760
    %5124 = vmatmul.mubr.f32.gmra.mxu0 %v5123
    %v5125 = vpop.f32.mrf.mxu0
    %v5126 = vadd.f32 %v5039, %v5125
    %v5127 = vpop.f32.mrf.mxu0
    %5128 = vdwg.mxu0
    %5129 = vmatprep.subr.mxu0 0.0
    %5130 = vmatpush1.msra.mxu0 0.0
    %5131 = vmatprep.subr.mxu0 0.0
    %5132 = vmatpush1.msra.mxu0 0.0
    %5133 = vmatprep.subr.mxu0 0.0
    %5134 = vmatpush1.msra.mxu0 0.0
    %5135 = vmatprep.subr.mxu0 0.0
    %5136 = vmatpush1.msra.mxu0 0.0
    %5137 = vmatprep.subr.mxu0 0.0
    %5138 = vmatpush1.msra.mxu0 0.0
    %5139 = vmatprep.subr.mxu0 0.0
    %5140 = vmatpush1.msra.mxu0 0.0
    %5141 = vmatprep.subr.mxu0 0.0
    %5142 = vmatpush1.msra.mxu0 0.0
    %5143 = vmatprep.subr.mxu0 0.0
    %5144 = vmatpush1.msra.mxu0 0.0
    %5145 = vmatprep.subr.mxu0 0.0
    %5146 = vmatpush1.msra.mxu0 0.0
    %5147 = vmatprep.subr.mxu0 0.0
    %5148 = vmatpush1.msra.mxu0 0.0
    %5149 = vmatprep.subr.mxu0 0.0
    %5150 = vmatpush1.msra.mxu0 0.0
    %5151 = vmatprep.subr.mxu0 0.0
    %5152 = vmatpush1.msra.mxu0 0.0
    %5153 = vmatprep.subr.mxu0 0.0
    %5154 = vmatpush1.msra.mxu0 0.0
    %5155 = vmatprep.subr.mxu0 0.0
    %5156 = vmatpush1.msra.mxu0 0.0
    %5157 = vmatprep.subr.mxu0 0.0
    %v5158 = vand.u32 %v4946, 4294901760
    %v5159 = vsub.f32 %v4946, %v5158
    %5160 = vmatpush1.msra.mxu0 %v5159
    %5161 = vmatprep.subr.mxu0 0.0
    %v5162 = vand.u32 %v4944, 4294901760
    %v5163 = vsub.f32 %v4944, %v5162
    %5164 = vmatpush1.msra.mxu0 %v5163
    %5165 = vmatprep.subr.mxu0 0.0
    %5166 = vmatpush2.msra.mxu0 0.0
    %5167 = vmatprep.subr.mxu0 0.0
    %5168 = vmatpush2.msra.mxu0 0.0
    %5169 = vmatprep.subr.mxu0 0.0
    %5170 = vmatpush2.msra.mxu0 0.0
    %5171 = vmatprep.subr.mxu0 0.0
    %5172 = vmatpush2.msra.mxu0 0.0
    %5173 = vmatprep.subr.mxu0 0.0
    %5174 = vmatpush2.msra.mxu0 0.0
    %5175 = vmatprep.subr.mxu0 0.0
    %5176 = vmatpush2.msra.mxu0 0.0
    %5177 = vmatprep.subr.mxu0 0.0
    %5178 = vmatpush2.msra.mxu0 0.0
    %5179 = vmatprep.subr.mxu0 0.0
    %5180 = vmatpush2.msra.mxu0 0.0
    %5181 = vmatprep.subr.mxu0 0.0
    %5182 = vmatpush2.msra.mxu0 0.0
    %5183 = vmatprep.subr.mxu0 0.0
    %5184 = vmatpush2.msra.mxu0 0.0
    %5185 = vmatprep.subr.mxu0 0.0
    %5186 = vmatpush2.msra.mxu0 0.0
    %5187 = vmatprep.subr.mxu0 0.0
    %5188 = vmatpush2.msra.mxu0 0.0
    %5189 = vmatprep.subr.mxu0 0.0
    %5190 = vmatpush2.msra.mxu0 0.0
    %5191 = vmatprep.subr.mxu0 0.0
    %5192 = vmatpush2.msra.mxu0 0.0
    %5193 = vmatprep.subr.mxu0 0.0
    %5194 = vmatpush2.msra.mxu0 0.0
    %5195 = vmatprep.subr.mxu0 0.0
    %5196 = vmatpush2.msra.mxu0 0.0
    %5197 = vmatprep.mubr.f32.mxu0 0.0
    %v5198 = vand.u32 %v4950, 4294901760
    %v5199 = vsub.f32 %v4950, %v5198
    %5200 = vmatmul.mubr.f32.gmra.mxu0 %v5199
    %v5201 = vpop.f32.mrf.mxu0
    %v5202 = vadd.f32 %v5120, %v5201
    %v5203 = vpop.f32.mrf.mxu0
    %5204 = vmatprep.mubr.f32.mxu0 0.0
    %v5205 = vand.u32 %v4953, 4294901760
    %v5206 = vsub.f32 %v4953, %v5205
    %5207 = vmatmul.mubr.f32.gmra.mxu0 %v5206
    %v5208 = vpop.f32.mrf.mxu0
    %v5209 = vadd.f32 %v5126, %v5208
    %v5210 = vpop.f32.mrf.mxu0
    %5211 = vdwg.mxu0
    %5212 = vmatprep.subr.mxu0 0.0
    %5213 = vmatpush1.msra.mxu0 0.0
    %5214 = vmatprep.subr.mxu0 0.0
    %5215 = vmatpush1.msra.mxu0 0.0
    %5216 = vmatprep.subr.mxu0 0.0
    %5217 = vmatpush1.msra.mxu0 0.0
    %5218 = vmatprep.subr.mxu0 0.0
    %5219 = vmatpush1.msra.mxu0 0.0
    %5220 = vmatprep.subr.mxu0 0.0
    %5221 = vmatpush1.msra.mxu0 0.0
    %5222 = vmatprep.subr.mxu0 0.0
    %5223 = vmatpush1.msra.mxu0 0.0
    %5224 = vmatprep.subr.mxu0 0.0
    %5225 = vmatpush1.msra.mxu0 0.0
    %5226 = vmatprep.subr.mxu0 0.0
    %5227 = vmatpush1.msra.mxu0 0.0
    %5228 = vmatprep.subr.mxu0 0.0
    %5229 = vmatpush1.msra.mxu0 0.0
    %5230 = vmatprep.subr.mxu0 0.0
    %5231 = vmatpush1.msra.mxu0 0.0
    %5232 = vmatprep.subr.mxu0 0.0
    %5233 = vmatpush1.msra.mxu0 0.0
    %5234 = vmatprep.subr.mxu0 0.0
    %5235 = vmatpush1.msra.mxu0 0.0
    %5236 = vmatprep.subr.mxu0 0.0
    %5237 = vmatpush1.msra.mxu0 0.0
    %5238 = vmatprep.subr.mxu0 0.0
    %5239 = vmatpush1.msra.mxu0 0.0
    %5240 = vmatprep.subr.mxu0 0.0
    %v5241 = vand.u32 %v4946, 4294901760
    %5242 = vmatpush1.msra.mxu0 %v5241
    %5243 = vmatprep.subr.mxu0 0.0
    %v5244 = vand.u32 %v4944, 4294901760
    %5245 = vmatpush1.msra.mxu0 %v5244
    %5246 = vmatprep.subr.mxu0 0.0
    %5247 = vmatpush2.msra.mxu0 0.0
    %5248 = vmatprep.subr.mxu0 0.0
    %5249 = vmatpush2.msra.mxu0 0.0
    %5250 = vmatprep.subr.mxu0 0.0
    %5251 = vmatpush2.msra.mxu0 0.0
    %5252 = vmatprep.subr.mxu0 0.0
    %5253 = vmatpush2.msra.mxu0 0.0
    %5254 = vmatprep.subr.mxu0 0.0
    %5255 = vmatpush2.msra.mxu0 0.0
    %5256 = vmatprep.subr.mxu0 0.0
    %5257 = vmatpush2.msra.mxu0 0.0
    %5258 = vmatprep.subr.mxu0 0.0
    %5259 = vmatpush2.msra.mxu0 0.0
    %5260 = vmatprep.subr.mxu0 0.0
    %5261 = vmatpush2.msra.mxu0 0.0
    %5262 = vmatprep.subr.mxu0 0.0
    %5263 = vmatpush2.msra.mxu0 0.0
    %5264 = vmatprep.subr.mxu0 0.0
    %5265 = vmatpush2.msra.mxu0 0.0
    %5266 = vmatprep.subr.mxu0 0.0
    %5267 = vmatpush2.msra.mxu0 0.0
    %5268 = vmatprep.subr.mxu0 0.0
    %5269 = vmatpush2.msra.mxu0 0.0
    %5270 = vmatprep.subr.mxu0 0.0
    %5271 = vmatpush2.msra.mxu0 0.0
    %5272 = vmatprep.subr.mxu0 0.0
    %5273 = vmatpush2.msra.mxu0 0.0
    %5274 = vmatprep.subr.mxu0 0.0
    %5275 = vmatpush2.msra.mxu0 0.0
    %5276 = vmatprep.subr.mxu0 0.0
    %5277 = vmatpush2.msra.mxu0 0.0
    %5278 = vmatprep.mubr.f32.mxu0 0.0
    %v5279 = vand.u32 %v4950, 4294901760
    %v5280 = vsub.f32 %v4950, %v5279
    %v5281 = vand.u32 %v5280, 4294901760
    %5282 = vmatmul.mubr.f32.gmra.mxu0 %v5281
    %v5283 = vpop.f32.mrf.mxu0
    %v5284 = vadd.f32 %v5202, %v5283
    %v5285 = vpop.f32.mrf.mxu0
    %5286 = vmatprep.mubr.f32.mxu0 0.0
    %v5287 = vand.u32 %v4953, 4294901760
    %v5288 = vsub.f32 %v4953, %v5287
    %v5289 = vand.u32 %v5288, 4294901760
    %5290 = vmatmul.mubr.f32.gmra.mxu0 %v5289
    %v5291 = vpop.f32.mrf.mxu0
    %v5292 = vadd.f32 %v5209, %v5291
    %v5293 = vpop.f32.mrf.mxu0
    %5294 = vdwg.mxu0
    %5295 = vmatprep.subr.mxu0 0.0
    %5296 = vmatpush1.msra.mxu0 0.0
    %5297 = vmatprep.subr.mxu0 0.0
    %5298 = vmatpush1.msra.mxu0 0.0
    %5299 = vmatprep.subr.mxu0 0.0
    %5300 = vmatpush1.msra.mxu0 0.0
    %5301 = vmatprep.subr.mxu0 0.0
    %5302 = vmatpush1.msra.mxu0 0.0
    %5303 = vmatprep.subr.mxu0 0.0
    %5304 = vmatpush1.msra.mxu0 0.0
    %5305 = vmatprep.subr.mxu0 0.0
    %5306 = vmatpush1.msra.mxu0 0.0
    %5307 = vmatprep.subr.mxu0 0.0
    %5308 = vmatpush1.msra.mxu0 0.0
    %5309 = vmatprep.subr.mxu0 0.0
    %5310 = vmatpush1.msra.mxu0 0.0
    %5311 = vmatprep.subr.mxu0 0.0
    %5312 = vmatpush1.msra.mxu0 0.0
    %5313 = vmatprep.subr.mxu0 0.0
    %5314 = vmatpush1.msra.mxu0 0.0
    %5315 = vmatprep.subr.mxu0 0.0
    %5316 = vmatpush1.msra.mxu0 0.0
    %5317 = vmatprep.subr.mxu0 0.0
    %5318 = vmatpush1.msra.mxu0 0.0
    %5319 = vmatprep.subr.mxu0 0.0
    %5320 = vmatpush1.msra.mxu0 0.0
    %5321 = vmatprep.subr.mxu0 0.0
    %5322 = vmatpush1.msra.mxu0 0.0
    %5323 = vmatprep.subr.mxu0 0.0
    %v5324 = vand.u32 %v4946, 4294901760
    %v5325 = vsub.f32 %v4946, %v5324
    %v5326 = vand.u32 %v5325, 4294901760
    %5327 = vmatpush1.msra.mxu0 %v5326
    %5328 = vmatprep.subr.mxu0 0.0
    %v5329 = vand.u32 %v4944, 4294901760
    %v5330 = vsub.f32 %v4944, %v5329
    %v5331 = vand.u32 %v5330, 4294901760
    %5332 = vmatpush1.msra.mxu0 %v5331
    %5333 = vmatprep.subr.mxu0 0.0
    %5334 = vmatpush2.msra.mxu0 0.0
    %5335 = vmatprep.subr.mxu0 0.0
    %5336 = vmatpush2.msra.mxu0 0.0
    %5337 = vmatprep.subr.mxu0 0.0
    %5338 = vmatpush2.msra.mxu0 0.0
    %5339 = vmatprep.subr.mxu0 0.0
    %5340 = vmatpush2.msra.mxu0 0.0
    %5341 = vmatprep.subr.mxu0 0.0
    %5342 = vmatpush2.msra.mxu0 0.0
    %5343 = vmatprep.subr.mxu0 0.0
    %5344 = vmatpush2.msra.mxu0 0.0
    %5345 = vmatprep.subr.mxu0 0.0
    %5346 = vmatpush2.msra.mxu0 0.0
    %5347 = vmatprep.subr.mxu0 0.0
    %5348 = vmatpush2.msra.mxu0 0.0
    %5349 = vmatprep.subr.mxu0 0.0
    %5350 = vmatpush2.msra.mxu0 0.0
    %5351 = vmatprep.subr.mxu0 0.0
    %5352 = vmatpush2.msra.mxu0 0.0
    %5353 = vmatprep.subr.mxu0 0.0
    %5354 = vmatpush2.msra.mxu0 0.0
    %5355 = vmatprep.subr.mxu0 0.0
    %5356 = vmatpush2.msra.mxu0 0.0
    %5357 = vmatprep.subr.mxu0 0.0
    %5358 = vmatpush2.msra.mxu0 0.0
    %5359 = vmatprep.subr.mxu0 0.0
    %5360 = vmatpush2.msra.mxu0 0.0
    %5361 = vmatprep.subr.mxu0 0.0
    %5362 = vmatpush2.msra.mxu0 0.0
    %5363 = vmatprep.subr.mxu0 0.0
    %5364 = vmatpush2.msra.mxu0 0.0
    %5365 = vmatprep.mubr.f32.mxu0 0.0
    %v5366 = vand.u32 %v4950, 4294901760
    %5367 = vmatmul.mubr.f32.gmra.mxu0 %v5366
    %v5368 = vpop.f32.mrf.mxu0
    %v5369 = vadd.f32 %v5284, %v5368
    %v5370 = vpop.f32.mrf.mxu0
    %5371 = vmatprep.mubr.f32.mxu0 0.0
    %v5372 = vand.u32 %v4953, 4294901760
    %5373 = vmatmul.mubr.f32.gmra.mxu0 %v5372
    %v5374 = vpop.f32.mrf.mxu0
    %v5375 = vadd.f32 %v5292, %v5374
    %v5376 = vpop.f32.mrf.mxu0
    %5377 = vdwg.mxu0
    %5378 = vmatprep.subr.mxu0 0.0
    %5379 = vmatpush1.msra.mxu0 0.0
    %5380 = vmatprep.subr.mxu0 0.0
    %5381 = vmatpush1.msra.mxu0 0.0
    %5382 = vmatprep.subr.mxu0 0.0
    %5383 = vmatpush1.msra.mxu0 0.0
    %5384 = vmatprep.subr.mxu0 0.0
    %5385 = vmatpush1.msra.mxu0 0.0
    %5386 = vmatprep.subr.mxu0 0.0
    %5387 = vmatpush1.msra.mxu0 0.0
    %5388 = vmatprep.subr.mxu0 0.0
    %5389 = vmatpush1.msra.mxu0 0.0
    %5390 = vmatprep.subr.mxu0 0.0
    %5391 = vmatpush1.msra.mxu0 0.0
    %5392 = vmatprep.subr.mxu0 0.0
    %5393 = vmatpush1.msra.mxu0 0.0
    %5394 = vmatprep.subr.mxu0 0.0
    %5395 = vmatpush1.msra.mxu0 0.0
    %5396 = vmatprep.subr.mxu0 0.0
    %5397 = vmatpush1.msra.mxu0 0.0
    %5398 = vmatprep.subr.mxu0 0.0
    %5399 = vmatpush1.msra.mxu0 0.0
    %5400 = vmatprep.subr.mxu0 0.0
    %5401 = vmatpush1.msra.mxu0 0.0
    %5402 = vmatprep.subr.mxu0 0.0
    %5403 = vmatpush1.msra.mxu0 0.0
    %5404 = vmatprep.subr.mxu0 0.0
    %5405 = vmatpush1.msra.mxu0 0.0
    %5406 = vmatprep.subr.mxu0 0.0
    %v5407 = vand.u32 %v4946, 4294901760
    %5408 = vmatpush1.msra.mxu0 %v5407
    %5409 = vmatprep.subr.mxu0 0.0
    %v5410 = vand.u32 %v4944, 4294901760
    %5411 = vmatpush1.msra.mxu0 %v5410
    %5412 = vmatprep.subr.mxu0 0.0
    %5413 = vmatpush2.msra.mxu0 0.0
    %5414 = vmatprep.subr.mxu0 0.0
    %5415 = vmatpush2.msra.mxu0 0.0
    %5416 = vmatprep.subr.mxu0 0.0
    %5417 = vmatpush2.msra.mxu0 0.0
    %5418 = vmatprep.subr.mxu0 0.0
    %5419 = vmatpush2.msra.mxu0 0.0
    %5420 = vmatprep.subr.mxu0 0.0
    %5421 = vmatpush2.msra.mxu0 0.0
    %5422 = vmatprep.subr.mxu0 0.0
    %5423 = vmatpush2.msra.mxu0 0.0
    %5424 = vmatprep.subr.mxu0 0.0
    %5425 = vmatpush2.msra.mxu0 0.0
    %5426 = vmatprep.subr.mxu0 0.0
    %5427 = vmatpush2.msra.mxu0 0.0
    %5428 = vmatprep.subr.mxu0 0.0
    %5429 = vmatpush2.msra.mxu0 0.0
    %5430 = vmatprep.subr.mxu0 0.0
    %5431 = vmatpush2.msra.mxu0 0.0
    %5432 = vmatprep.subr.mxu0 0.0
    %5433 = vmatpush2.msra.mxu0 0.0
    %5434 = vmatprep.subr.mxu0 0.0
    %5435 = vmatpush2.msra.mxu0 0.0
    %5436 = vmatprep.subr.mxu0 0.0
    %5437 = vmatpush2.msra.mxu0 0.0
    %5438 = vmatprep.subr.mxu0 0.0
    %5439 = vmatpush2.msra.mxu0 0.0
    %5440 = vmatprep.subr.mxu0 0.0
    %5441 = vmatpush2.msra.mxu0 0.0
    %5442 = vmatprep.subr.mxu0 0.0
    %5443 = vmatpush2.msra.mxu0 0.0
    %5444 = vmatprep.mubr.f32.mxu0 0.0
    %v5445 = vand.u32 %v4950, 4294901760
    %5446 = vmatmul.mubr.f32.gmra.mxu0 %v5445
    %v5447 = vpop.f32.mrf.mxu0
    %v5448 = vadd.f32 %v5369, %v5447
    %v5449 = vpop.f32.mrf.mxu0
    %5450 = vmatprep.mubr.f32.mxu0 0.0
    %v5451 = vand.u32 %v4953, 4294901760
    %5452 = vmatmul.mubr.f32.gmra.mxu0 %v5451
    %v5453 = vpop.f32.mrf.mxu0
    %v5454 = vadd.f32 %v5375, %v5453
    %v5455 = vpop.f32.mrf.mxu0
    %5456 = vdwg.mxu0
    %v5457 = vadd.f32 %v4401, %v5448
    %v5458 = vadd.f32 %v4402, %v5454
    %v5459 = vlaneseq
    %v5460 = vshrl.u32 %v5459, 7
    %v5461 = vsub.s32 0, %v5460
    %v5462 = vrot.slane %v126, %v5461
    %v5463 = vadd.f32 %v5457, %v5462
    %v5464 = vadd.f32 %v5458, %v5462
    %v5465 = vadd.f32 %v87, %v5463
    %v5466 = vadd.f32 %v88, %v5464
    %v5467 = vsel %vm129, %v5465, 0.0
    %5468 = vadd.xlane.f32.xlu0 %v5467
    %v5469 = vpop.xlane.xlu0 %5468
    %v5470 = vsel %vm129, %v5466, 0.0
    %5471 = vadd.xlane.f32.xlu0 %v5470
    %v5472 = vpop.xlane.xlu0 %5471
    %v5473 = vmul.f32 %v5469, %v136
    %v5474 = vmul.f32 %v5472, %v136
    %v5475 = vsub.f32 %v5465, %v5473
    %v5476 = vsub.f32 %v5466, %v5474
    %v5477 = vmul.f32 %v5475, %v5475
    %v5478 = vmul.f32 %v5476, %v5476
    %v5479 = vsel %vm129, %v5477, 0.0
    %5480 = vadd.xlane.f32.xlu0 %v5479
    %v5481 = vpop.xlane.xlu0 %5480
    %v5482 = vsel %vm129, %v5478, 0.0
    %5483 = vadd.xlane.f32.xlu0 %v5482
    %v5484 = vpop.xlane.xlu0 %5483
    %v5485 = vmul.f32 %v5481, %v136
    %v5486 = vmul.f32 %v5484, %v136
    %v5487 = vadd.f32 %v5485, 1e-05
    %v5488 = vadd.f32 %v5486, 1e-05
    %v5489 = vrsqrt.pop %v5487
    %v5490 = vrsqrt.pop %v5488
    %v5491 = vmul.f32 %v5475, %v5489
    %v5492 = vmul.f32 %v5476, %v5490
    %v5493 = vlaneseq
    %v5494 = vshrl.u32 %v5493, 7
    %v5495 = vsub.s32 0, %v5494
    %v5496 = vrot.slane %v123, %v5495
    %v5497 = vmul.f32 %v5491, %v5496
    %v5498 = vmul.f32 %v5492, %v5496
    %v5499 = vlaneseq
    %v5500 = vshrl.u32 %v5499, 7
    %v5501 = vsub.s32 0, %v5500
    %v5502 = vrot.slane %v124, %v5501
    %v5503 = vadd.f32 %v5497, %v5502
    %v5504 = vadd.f32 %v5498, %v5502
    %v5505 = vlaneseq
    %v5506 = vshrl.u32 %v5505, 7
    %v5507 = vsub.s32 0, %v5506
    %v5508 = vrot.slane %v127, %v5507
    %v5510 = vsel %vm129, %v5503, 0
    %v5513 = vsel %vm129, %v5504, 0
    %5515 = vmatprep.subr.mxu0 0.0
    %5516 = vmatpush1.msra.mxu0 0.0
    %5517 = vmatprep.subr.mxu0 0.0
    %5518 = vmatpush1.msra.mxu0 0.0
    %5519 = vmatprep.subr.mxu0 0.0
    %5520 = vmatpush1.msra.mxu0 0.0
    %5521 = vmatprep.subr.mxu0 0.0
    %5522 = vmatpush1.msra.mxu0 0.0
    %5523 = vmatprep.subr.mxu0 0.0
    %5524 = vmatpush1.msra.mxu0 0.0
    %5525 = vmatprep.subr.mxu0 0.0
    %5526 = vmatpush1.msra.mxu0 0.0
    %5527 = vmatprep.subr.mxu0 0.0
    %5528 = vmatpush1.msra.mxu0 0.0
    %5529 = vmatprep.subr.mxu0 0.0
    %5530 = vmatpush1.msra.mxu0 0.0
    %5531 = vmatprep.subr.mxu0 0.0
    %5532 = vmatpush1.msra.mxu0 0.0
    %5533 = vmatprep.subr.mxu0 0.0
    %5534 = vmatpush1.msra.mxu0 0.0
    %5535 = vmatprep.subr.mxu0 0.0
    %5536 = vmatpush1.msra.mxu0 0.0
    %5537 = vmatprep.subr.mxu0 0.0
    %5538 = vmatpush1.msra.mxu0 0.0
    %5539 = vmatprep.subr.mxu0 0.0
    %v5540 = vand.u32 %v104, 4294901760
    %5541 = vmatpush1.msra.mxu0 %v5540
    %5542 = vmatprep.subr.mxu0 0.0
    %v5543 = vand.u32 %v103, 4294901760
    %5544 = vmatpush1.msra.mxu0 %v5543
    %5545 = vmatprep.subr.mxu0 0.0
    %v5546 = vand.u32 %v102, 4294901760
    %5547 = vmatpush1.msra.mxu0 %v5546
    %5548 = vmatprep.subr.mxu0 0.0
    %v5549 = vand.u32 %v101, 4294901760
    %5550 = vmatpush1.msra.mxu0 %v5549
    %5551 = vmatprep.subr.mxu0 0.0
    %5552 = vmatpush2.msra.mxu0 0.0
    %5553 = vmatprep.subr.mxu0 0.0
    %5554 = vmatpush2.msra.mxu0 0.0
    %5555 = vmatprep.subr.mxu0 0.0
    %5556 = vmatpush2.msra.mxu0 0.0
    %5557 = vmatprep.subr.mxu0 0.0
    %5558 = vmatpush2.msra.mxu0 0.0
    %5559 = vmatprep.subr.mxu0 0.0
    %5560 = vmatpush2.msra.mxu0 0.0
    %5561 = vmatprep.subr.mxu0 0.0
    %5562 = vmatpush2.msra.mxu0 0.0
    %5563 = vmatprep.subr.mxu0 0.0
    %5564 = vmatpush2.msra.mxu0 0.0
    %5565 = vmatprep.subr.mxu0 0.0
    %5566 = vmatpush2.msra.mxu0 0.0
    %5567 = vmatprep.subr.mxu0 0.0
    %5568 = vmatpush2.msra.mxu0 0.0
    %5569 = vmatprep.subr.mxu0 0.0
    %5570 = vmatpush2.msra.mxu0 0.0
    %5571 = vmatprep.subr.mxu0 0.0
    %5572 = vmatpush2.msra.mxu0 0.0
    %5573 = vmatprep.subr.mxu0 0.0
    %5574 = vmatpush2.msra.mxu0 0.0
    %5575 = vmatprep.subr.mxu0 0.0
    %5576 = vmatpush2.msra.mxu0 0.0
    %5577 = vmatprep.subr.mxu0 0.0
    %5578 = vmatpush2.msra.mxu0 0.0
    %5579 = vmatprep.subr.mxu0 0.0
    %5580 = vmatpush2.msra.mxu0 0.0
    %5581 = vmatprep.subr.mxu0 0.0
    %5582 = vmatpush2.msra.mxu0 0.0
    %5583 = vmatprep.mubr.f32.mxu0 0.0
    %v5584 = vand.u32 %v5510, 4294901760
    %v5585 = vsub.f32 %v5510, %v5584
    %v5586 = vand.u32 %v5585, 4294901760
    %v5587 = vsub.f32 %v5585, %v5586
    %v5588 = vand.u32 %v5587, 4294901760
    %5589 = vmatmul.mubr.f32.gmra.mxu0 %v5588
    %v5590 = vpop.f32.mrf.mxu0
    %v5591 = vadd.f32 %v5508, %v5590
    %v5592 = vpop.f32.mrf.mxu0
    %5593 = vmatprep.mubr.f32.mxu0 0.0
    %v5594 = vand.u32 %v5513, 4294901760
    %v5595 = vsub.f32 %v5513, %v5594
    %v5596 = vand.u32 %v5595, 4294901760
    %v5597 = vsub.f32 %v5595, %v5596
    %v5598 = vand.u32 %v5597, 4294901760
    %5599 = vmatmul.mubr.f32.gmra.mxu0 %v5598
    %v5600 = vpop.f32.mrf.mxu0
    %v5601 = vadd.f32 %v5508, %v5600
    %v5602 = vpop.f32.mrf.mxu0
    %5603 = vdwg.mxu0
    %5604 = vmatprep.subr.mxu0 0.0
    %5605 = vmatpush1.msra.mxu0 0.0
    %5606 = vmatprep.subr.mxu0 0.0
    %5607 = vmatpush1.msra.mxu0 0.0
    %5608 = vmatprep.subr.mxu0 0.0
    %5609 = vmatpush1.msra.mxu0 0.0
    %5610 = vmatprep.subr.mxu0 0.0
    %5611 = vmatpush1.msra.mxu0 0.0
    %5612 = vmatprep.subr.mxu0 0.0
    %5613 = vmatpush1.msra.mxu0 0.0
    %5614 = vmatprep.subr.mxu0 0.0
    %5615 = vmatpush1.msra.mxu0 0.0
    %5616 = vmatprep.subr.mxu0 0.0
    %5617 = vmatpush1.msra.mxu0 0.0
    %5618 = vmatprep.subr.mxu0 0.0
    %5619 = vmatpush1.msra.mxu0 0.0
    %5620 = vmatprep.subr.mxu0 0.0
    %5621 = vmatpush1.msra.mxu0 0.0
    %5622 = vmatprep.subr.mxu0 0.0
    %5623 = vmatpush1.msra.mxu0 0.0
    %5624 = vmatprep.subr.mxu0 0.0
    %5625 = vmatpush1.msra.mxu0 0.0
    %5626 = vmatprep.subr.mxu0 0.0
    %5627 = vmatpush1.msra.mxu0 0.0
    %5628 = vmatprep.subr.mxu0 0.0
    %v5629 = vand.u32 %v104, 4294901760
    %v5630 = vsub.f32 %v104, %v5629
    %v5631 = vand.u32 %v5630, 4294901760
    %v5632 = vsub.f32 %v5630, %v5631
    %v5633 = vand.u32 %v5632, 4294901760
    %5634 = vmatpush1.msra.mxu0 %v5633
    %5635 = vmatprep.subr.mxu0 0.0
    %v5636 = vand.u32 %v103, 4294901760
    %v5637 = vsub.f32 %v103, %v5636
    %v5638 = vand.u32 %v5637, 4294901760
    %v5639 = vsub.f32 %v5637, %v5638
    %v5640 = vand.u32 %v5639, 4294901760
    %5641 = vmatpush1.msra.mxu0 %v5640
    %5642 = vmatprep.subr.mxu0 0.0
    %v5643 = vand.u32 %v102, 4294901760
    %v5644 = vsub.f32 %v102, %v5643
    %v5645 = vand.u32 %v5644, 4294901760
    %v5646 = vsub.f32 %v5644, %v5645
    %v5647 = vand.u32 %v5646, 4294901760
    %5648 = vmatpush1.msra.mxu0 %v5647
    %5649 = vmatprep.subr.mxu0 0.0
    %v5650 = vand.u32 %v101, 4294901760
    %v5651 = vsub.f32 %v101, %v5650
    %v5652 = vand.u32 %v5651, 4294901760
    %v5653 = vsub.f32 %v5651, %v5652
    %v5654 = vand.u32 %v5653, 4294901760
    %5655 = vmatpush1.msra.mxu0 %v5654
    %5656 = vmatprep.subr.mxu0 0.0
    %5657 = vmatpush2.msra.mxu0 0.0
    %5658 = vmatprep.subr.mxu0 0.0
    %5659 = vmatpush2.msra.mxu0 0.0
    %5660 = vmatprep.subr.mxu0 0.0
    %5661 = vmatpush2.msra.mxu0 0.0
    %5662 = vmatprep.subr.mxu0 0.0
    %5663 = vmatpush2.msra.mxu0 0.0
    %5664 = vmatprep.subr.mxu0 0.0
    %5665 = vmatpush2.msra.mxu0 0.0
    %5666 = vmatprep.subr.mxu0 0.0
    %5667 = vmatpush2.msra.mxu0 0.0
    %5668 = vmatprep.subr.mxu0 0.0
    %5669 = vmatpush2.msra.mxu0 0.0
    %5670 = vmatprep.subr.mxu0 0.0
    %5671 = vmatpush2.msra.mxu0 0.0
    %5672 = vmatprep.subr.mxu0 0.0
    %5673 = vmatpush2.msra.mxu0 0.0
    %5674 = vmatprep.subr.mxu0 0.0
    %5675 = vmatpush2.msra.mxu0 0.0
    %5676 = vmatprep.subr.mxu0 0.0
    %5677 = vmatpush2.msra.mxu0 0.0
    %5678 = vmatprep.subr.mxu0 0.0
    %5679 = vmatpush2.msra.mxu0 0.0
    %5680 = vmatprep.subr.mxu0 0.0
    %5681 = vmatpush2.msra.mxu0 0.0
    %5682 = vmatprep.subr.mxu0 0.0
    %5683 = vmatpush2.msra.mxu0 0.0
    %5684 = vmatprep.subr.mxu0 0.0
    %5685 = vmatpush2.msra.mxu0 0.0
    %5686 = vmatprep.subr.mxu0 0.0
    %5687 = vmatpush2.msra.mxu0 0.0
    %5688 = vmatprep.mubr.f32.mxu0 0.0
    %v5689 = vand.u32 %v5510, 4294901760
    %5690 = vmatmul.mubr.f32.gmra.mxu0 %v5689
    %v5691 = vpop.f32.mrf.mxu0
    %v5692 = vadd.f32 %v5591, %v5691
    %v5693 = vpop.f32.mrf.mxu0
    %5694 = vmatprep.mubr.f32.mxu0 0.0
    %v5695 = vand.u32 %v5513, 4294901760
    %5696 = vmatmul.mubr.f32.gmra.mxu0 %v5695
    %v5697 = vpop.f32.mrf.mxu0
    %v5698 = vadd.f32 %v5601, %v5697
    %v5699 = vpop.f32.mrf.mxu0
    %5700 = vdwg.mxu0
    %5701 = vmatprep.subr.mxu0 0.0
    %5702 = vmatpush1.msra.mxu0 0.0
    %5703 = vmatprep.subr.mxu0 0.0
    %5704 = vmatpush1.msra.mxu0 0.0
    %5705 = vmatprep.subr.mxu0 0.0
    %5706 = vmatpush1.msra.mxu0 0.0
    %5707 = vmatprep.subr.mxu0 0.0
    %5708 = vmatpush1.msra.mxu0 0.0
    %5709 = vmatprep.subr.mxu0 0.0
    %5710 = vmatpush1.msra.mxu0 0.0
    %5711 = vmatprep.subr.mxu0 0.0
    %5712 = vmatpush1.msra.mxu0 0.0
    %5713 = vmatprep.subr.mxu0 0.0
    %5714 = vmatpush1.msra.mxu0 0.0
    %5715 = vmatprep.subr.mxu0 0.0
    %5716 = vmatpush1.msra.mxu0 0.0
    %5717 = vmatprep.subr.mxu0 0.0
    %5718 = vmatpush1.msra.mxu0 0.0
    %5719 = vmatprep.subr.mxu0 0.0
    %5720 = vmatpush1.msra.mxu0 0.0
    %5721 = vmatprep.subr.mxu0 0.0
    %5722 = vmatpush1.msra.mxu0 0.0
    %5723 = vmatprep.subr.mxu0 0.0
    %5724 = vmatpush1.msra.mxu0 0.0
    %5725 = vmatprep.subr.mxu0 0.0
    %v5726 = vand.u32 %v104, 4294901760
    %v5727 = vsub.f32 %v104, %v5726
    %5728 = vmatpush1.msra.mxu0 %v5727
    %5729 = vmatprep.subr.mxu0 0.0
    %v5730 = vand.u32 %v103, 4294901760
    %v5731 = vsub.f32 %v103, %v5730
    %5732 = vmatpush1.msra.mxu0 %v5731
    %5733 = vmatprep.subr.mxu0 0.0
    %v5734 = vand.u32 %v102, 4294901760
    %v5735 = vsub.f32 %v102, %v5734
    %5736 = vmatpush1.msra.mxu0 %v5735
    %5737 = vmatprep.subr.mxu0 0.0
    %v5738 = vand.u32 %v101, 4294901760
    %v5739 = vsub.f32 %v101, %v5738
    %5740 = vmatpush1.msra.mxu0 %v5739
    %5741 = vmatprep.subr.mxu0 0.0
    %5742 = vmatpush2.msra.mxu0 0.0
    %5743 = vmatprep.subr.mxu0 0.0
    %5744 = vmatpush2.msra.mxu0 0.0
    %5745 = vmatprep.subr.mxu0 0.0
    %5746 = vmatpush2.msra.mxu0 0.0
    %5747 = vmatprep.subr.mxu0 0.0
    %5748 = vmatpush2.msra.mxu0 0.0
    %5749 = vmatprep.subr.mxu0 0.0
    %5750 = vmatpush2.msra.mxu0 0.0
    %5751 = vmatprep.subr.mxu0 0.0
    %5752 = vmatpush2.msra.mxu0 0.0
    %5753 = vmatprep.subr.mxu0 0.0
    %5754 = vmatpush2.msra.mxu0 0.0
    %5755 = vmatprep.subr.mxu0 0.0
    %5756 = vmatpush2.msra.mxu0 0.0
    %5757 = vmatprep.subr.mxu0 0.0
    %5758 = vmatpush2.msra.mxu0 0.0
    %5759 = vmatprep.subr.mxu0 0.0
    %5760 = vmatpush2.msra.mxu0 0.0
    %5761 = vmatprep.subr.mxu0 0.0
    %5762 = vmatpush2.msra.mxu0 0.0
    %5763 = vmatprep.subr.mxu0 0.0
    %5764 = vmatpush2.msra.mxu0 0.0
    %5765 = vmatprep.subr.mxu0 0.0
    %5766 = vmatpush2.msra.mxu0 0.0
    %5767 = vmatprep.subr.mxu0 0.0
    %5768 = vmatpush2.msra.mxu0 0.0
    %5769 = vmatprep.subr.mxu0 0.0
    %5770 = vmatpush2.msra.mxu0 0.0
    %5771 = vmatprep.subr.mxu0 0.0
    %5772 = vmatpush2.msra.mxu0 0.0
    %5773 = vmatprep.mubr.f32.mxu0 0.0
    %v5774 = vand.u32 %v5510, 4294901760
    %v5775 = vsub.f32 %v5510, %v5774
    %5776 = vmatmul.mubr.f32.gmra.mxu0 %v5775
    %v5777 = vpop.f32.mrf.mxu0
    %v5778 = vadd.f32 %v5692, %v5777
    %v5779 = vpop.f32.mrf.mxu0
    %5780 = vmatprep.mubr.f32.mxu0 0.0
    %v5781 = vand.u32 %v5513, 4294901760
    %v5782 = vsub.f32 %v5513, %v5781
    %5783 = vmatmul.mubr.f32.gmra.mxu0 %v5782
    %v5784 = vpop.f32.mrf.mxu0
    %v5785 = vadd.f32 %v5698, %v5784
    %v5786 = vpop.f32.mrf.mxu0
    %5787 = vdwg.mxu0
    %5788 = vmatprep.subr.mxu0 0.0
    %5789 = vmatpush1.msra.mxu0 0.0
    %5790 = vmatprep.subr.mxu0 0.0
    %5791 = vmatpush1.msra.mxu0 0.0
    %5792 = vmatprep.subr.mxu0 0.0
    %5793 = vmatpush1.msra.mxu0 0.0
    %5794 = vmatprep.subr.mxu0 0.0
    %5795 = vmatpush1.msra.mxu0 0.0
    %5796 = vmatprep.subr.mxu0 0.0
    %5797 = vmatpush1.msra.mxu0 0.0
    %5798 = vmatprep.subr.mxu0 0.0
    %5799 = vmatpush1.msra.mxu0 0.0
    %5800 = vmatprep.subr.mxu0 0.0
    %5801 = vmatpush1.msra.mxu0 0.0
    %5802 = vmatprep.subr.mxu0 0.0
    %5803 = vmatpush1.msra.mxu0 0.0
    %5804 = vmatprep.subr.mxu0 0.0
    %5805 = vmatpush1.msra.mxu0 0.0
    %5806 = vmatprep.subr.mxu0 0.0
    %5807 = vmatpush1.msra.mxu0 0.0
    %5808 = vmatprep.subr.mxu0 0.0
    %5809 = vmatpush1.msra.mxu0 0.0
    %5810 = vmatprep.subr.mxu0 0.0
    %5811 = vmatpush1.msra.mxu0 0.0
    %5812 = vmatprep.subr.mxu0 0.0
    %v5813 = vand.u32 %v104, 4294901760
    %5814 = vmatpush1.msra.mxu0 %v5813
    %5815 = vmatprep.subr.mxu0 0.0
    %v5816 = vand.u32 %v103, 4294901760
    %5817 = vmatpush1.msra.mxu0 %v5816
    %5818 = vmatprep.subr.mxu0 0.0
    %v5819 = vand.u32 %v102, 4294901760
    %5820 = vmatpush1.msra.mxu0 %v5819
    %5821 = vmatprep.subr.mxu0 0.0
    %v5822 = vand.u32 %v101, 4294901760
    %5823 = vmatpush1.msra.mxu0 %v5822
    %5824 = vmatprep.subr.mxu0 0.0
    %5825 = vmatpush2.msra.mxu0 0.0
    %5826 = vmatprep.subr.mxu0 0.0
    %5827 = vmatpush2.msra.mxu0 0.0
    %5828 = vmatprep.subr.mxu0 0.0
    %5829 = vmatpush2.msra.mxu0 0.0
    %5830 = vmatprep.subr.mxu0 0.0
    %5831 = vmatpush2.msra.mxu0 0.0
    %5832 = vmatprep.subr.mxu0 0.0
    %5833 = vmatpush2.msra.mxu0 0.0
    %5834 = vmatprep.subr.mxu0 0.0
    %5835 = vmatpush2.msra.mxu0 0.0
    %5836 = vmatprep.subr.mxu0 0.0
    %5837 = vmatpush2.msra.mxu0 0.0
    %5838 = vmatprep.subr.mxu0 0.0
    %5839 = vmatpush2.msra.mxu0 0.0
    %5840 = vmatprep.subr.mxu0 0.0
    %5841 = vmatpush2.msra.mxu0 0.0
    %5842 = vmatprep.subr.mxu0 0.0
    %5843 = vmatpush2.msra.mxu0 0.0
    %5844 = vmatprep.subr.mxu0 0.0
    %5845 = vmatpush2.msra.mxu0 0.0
    %5846 = vmatprep.subr.mxu0 0.0
    %5847 = vmatpush2.msra.mxu0 0.0
    %5848 = vmatprep.subr.mxu0 0.0
    %5849 = vmatpush2.msra.mxu0 0.0
    %5850 = vmatprep.subr.mxu0 0.0
    %5851 = vmatpush2.msra.mxu0 0.0
    %5852 = vmatprep.subr.mxu0 0.0
    %5853 = vmatpush2.msra.mxu0 0.0
    %5854 = vmatprep.subr.mxu0 0.0
    %5855 = vmatpush2.msra.mxu0 0.0
    %5856 = vmatprep.mubr.f32.mxu0 0.0
    %v5857 = vand.u32 %v5510, 4294901760
    %v5858 = vsub.f32 %v5510, %v5857
    %v5859 = vand.u32 %v5858, 4294901760
    %5860 = vmatmul.mubr.f32.gmra.mxu0 %v5859
    %v5861 = vpop.f32.mrf.mxu0
    %v5862 = vadd.f32 %v5778, %v5861
    %v5863 = vpop.f32.mrf.mxu0
    %5864 = vmatprep.mubr.f32.mxu0 0.0
    %v5865 = vand.u32 %v5513, 4294901760
    %v5866 = vsub.f32 %v5513, %v5865
    %v5867 = vand.u32 %v5866, 4294901760
    %5868 = vmatmul.mubr.f32.gmra.mxu0 %v5867
    %v5869 = vpop.f32.mrf.mxu0
    %v5870 = vadd.f32 %v5785, %v5869
    %v5871 = vpop.f32.mrf.mxu0
    %5872 = vdwg.mxu0
    %5873 = vmatprep.subr.mxu0 0.0
    %5874 = vmatpush1.msra.mxu0 0.0
    %5875 = vmatprep.subr.mxu0 0.0
    %5876 = vmatpush1.msra.mxu0 0.0
    %5877 = vmatprep.subr.mxu0 0.0
    %5878 = vmatpush1.msra.mxu0 0.0
    %5879 = vmatprep.subr.mxu0 0.0
    %5880 = vmatpush1.msra.mxu0 0.0
    %5881 = vmatprep.subr.mxu0 0.0
    %5882 = vmatpush1.msra.mxu0 0.0
    %5883 = vmatprep.subr.mxu0 0.0
    %5884 = vmatpush1.msra.mxu0 0.0
    %5885 = vmatprep.subr.mxu0 0.0
    %5886 = vmatpush1.msra.mxu0 0.0
    %5887 = vmatprep.subr.mxu0 0.0
    %5888 = vmatpush1.msra.mxu0 0.0
    %5889 = vmatprep.subr.mxu0 0.0
    %5890 = vmatpush1.msra.mxu0 0.0
    %5891 = vmatprep.subr.mxu0 0.0
    %5892 = vmatpush1.msra.mxu0 0.0
    %5893 = vmatprep.subr.mxu0 0.0
    %5894 = vmatpush1.msra.mxu0 0.0
    %5895 = vmatprep.subr.mxu0 0.0
    %5896 = vmatpush1.msra.mxu0 0.0
    %5897 = vmatprep.subr.mxu0 0.0
    %v5898 = vand.u32 %v104, 4294901760
    %v5899 = vsub.f32 %v104, %v5898
    %v5900 = vand.u32 %v5899, 4294901760
    %5901 = vmatpush1.msra.mxu0 %v5900
    %5902 = vmatprep.subr.mxu0 0.0
    %v5903 = vand.u32 %v103, 4294901760
    %v5904 = vsub.f32 %v103, %v5903
    %v5905 = vand.u32 %v5904, 4294901760
    %5906 = vmatpush1.msra.mxu0 %v5905
    %5907 = vmatprep.subr.mxu0 0.0
    %v5908 = vand.u32 %v102, 4294901760
    %v5909 = vsub.f32 %v102, %v5908
    %v5910 = vand.u32 %v5909, 4294901760
    %5911 = vmatpush1.msra.mxu0 %v5910
    %5912 = vmatprep.subr.mxu0 0.0
    %v5913 = vand.u32 %v101, 4294901760
    %v5914 = vsub.f32 %v101, %v5913
    %v5915 = vand.u32 %v5914, 4294901760
    %5916 = vmatpush1.msra.mxu0 %v5915
    %5917 = vmatprep.subr.mxu0 0.0
    %5918 = vmatpush2.msra.mxu0 0.0
    %5919 = vmatprep.subr.mxu0 0.0
    %5920 = vmatpush2.msra.mxu0 0.0
    %5921 = vmatprep.subr.mxu0 0.0
    %5922 = vmatpush2.msra.mxu0 0.0
    %5923 = vmatprep.subr.mxu0 0.0
    %5924 = vmatpush2.msra.mxu0 0.0
    %5925 = vmatprep.subr.mxu0 0.0
    %5926 = vmatpush2.msra.mxu0 0.0
    %5927 = vmatprep.subr.mxu0 0.0
    %5928 = vmatpush2.msra.mxu0 0.0
    %5929 = vmatprep.subr.mxu0 0.0
    %5930 = vmatpush2.msra.mxu0 0.0
    %5931 = vmatprep.subr.mxu0 0.0
    %5932 = vmatpush2.msra.mxu0 0.0
    %5933 = vmatprep.subr.mxu0 0.0
    %5934 = vmatpush2.msra.mxu0 0.0
    %5935 = vmatprep.subr.mxu0 0.0
    %5936 = vmatpush2.msra.mxu0 0.0
    %5937 = vmatprep.subr.mxu0 0.0
    %5938 = vmatpush2.msra.mxu0 0.0
    %5939 = vmatprep.subr.mxu0 0.0
    %5940 = vmatpush2.msra.mxu0 0.0
    %5941 = vmatprep.subr.mxu0 0.0
    %5942 = vmatpush2.msra.mxu0 0.0
    %5943 = vmatprep.subr.mxu0 0.0
    %5944 = vmatpush2.msra.mxu0 0.0
    %5945 = vmatprep.subr.mxu0 0.0
    %5946 = vmatpush2.msra.mxu0 0.0
    %5947 = vmatprep.subr.mxu0 0.0
    %5948 = vmatpush2.msra.mxu0 0.0
    %5949 = vmatprep.mubr.f32.mxu0 0.0
    %v5950 = vand.u32 %v5510, 4294901760
    %5951 = vmatmul.mubr.f32.gmra.mxu0 %v5950
    %v5952 = vpop.f32.mrf.mxu0
    %v5953 = vadd.f32 %v5862, %v5952
    %v5954 = vpop.f32.mrf.mxu0
    %5955 = vmatprep.mubr.f32.mxu0 0.0
    %v5956 = vand.u32 %v5513, 4294901760
    %5957 = vmatmul.mubr.f32.gmra.mxu0 %v5956
    %v5958 = vpop.f32.mrf.mxu0
    %v5959 = vadd.f32 %v5870, %v5958
    %v5960 = vpop.f32.mrf.mxu0
    %5961 = vdwg.mxu0
    %5962 = vmatprep.subr.mxu0 0.0
    %5963 = vmatpush1.msra.mxu0 0.0
    %5964 = vmatprep.subr.mxu0 0.0
    %5965 = vmatpush1.msra.mxu0 0.0
    %5966 = vmatprep.subr.mxu0 0.0
    %5967 = vmatpush1.msra.mxu0 0.0
    %5968 = vmatprep.subr.mxu0 0.0
    %5969 = vmatpush1.msra.mxu0 0.0
    %5970 = vmatprep.subr.mxu0 0.0
    %5971 = vmatpush1.msra.mxu0 0.0
    %5972 = vmatprep.subr.mxu0 0.0
    %5973 = vmatpush1.msra.mxu0 0.0
    %5974 = vmatprep.subr.mxu0 0.0
    %5975 = vmatpush1.msra.mxu0 0.0
    %5976 = vmatprep.subr.mxu0 0.0
    %5977 = vmatpush1.msra.mxu0 0.0
    %5978 = vmatprep.subr.mxu0 0.0
    %5979 = vmatpush1.msra.mxu0 0.0
    %5980 = vmatprep.subr.mxu0 0.0
    %5981 = vmatpush1.msra.mxu0 0.0
    %5982 = vmatprep.subr.mxu0 0.0
    %5983 = vmatpush1.msra.mxu0 0.0
    %5984 = vmatprep.subr.mxu0 0.0
    %5985 = vmatpush1.msra.mxu0 0.0
    %5986 = vmatprep.subr.mxu0 0.0
    %v5987 = vand.u32 %v104, 4294901760
    %5988 = vmatpush1.msra.mxu0 %v5987
    %5989 = vmatprep.subr.mxu0 0.0
    %v5990 = vand.u32 %v103, 4294901760
    %5991 = vmatpush1.msra.mxu0 %v5990
    %5992 = vmatprep.subr.mxu0 0.0
    %v5993 = vand.u32 %v102, 4294901760
    %5994 = vmatpush1.msra.mxu0 %v5993
    %5995 = vmatprep.subr.mxu0 0.0
    %v5996 = vand.u32 %v101, 4294901760
    %5997 = vmatpush1.msra.mxu0 %v5996
    %5998 = vmatprep.subr.mxu0 0.0
    %5999 = vmatpush2.msra.mxu0 0.0
    %6000 = vmatprep.subr.mxu0 0.0
    %6001 = vmatpush2.msra.mxu0 0.0
    %6002 = vmatprep.subr.mxu0 0.0
    %6003 = vmatpush2.msra.mxu0 0.0
    %6004 = vmatprep.subr.mxu0 0.0
    %6005 = vmatpush2.msra.mxu0 0.0
    %6006 = vmatprep.subr.mxu0 0.0
    %6007 = vmatpush2.msra.mxu0 0.0
    %6008 = vmatprep.subr.mxu0 0.0
    %6009 = vmatpush2.msra.mxu0 0.0
    %6010 = vmatprep.subr.mxu0 0.0
    %6011 = vmatpush2.msra.mxu0 0.0
    %6012 = vmatprep.subr.mxu0 0.0
    %6013 = vmatpush2.msra.mxu0 0.0
    %6014 = vmatprep.subr.mxu0 0.0
    %6015 = vmatpush2.msra.mxu0 0.0
    %6016 = vmatprep.subr.mxu0 0.0
    %6017 = vmatpush2.msra.mxu0 0.0
    %6018 = vmatprep.subr.mxu0 0.0
    %6019 = vmatpush2.msra.mxu0 0.0
    %6020 = vmatprep.subr.mxu0 0.0
    %6021 = vmatpush2.msra.mxu0 0.0
    %6022 = vmatprep.subr.mxu0 0.0
    %6023 = vmatpush2.msra.mxu0 0.0
    %6024 = vmatprep.subr.mxu0 0.0
    %6025 = vmatpush2.msra.mxu0 0.0
    %6026 = vmatprep.subr.mxu0 0.0
    %6027 = vmatpush2.msra.mxu0 0.0
    %6028 = vmatprep.subr.mxu0 0.0
    %6029 = vmatpush2.msra.mxu0 0.0
    %6030 = vmatprep.mubr.f32.mxu0 0.0
    %v6031 = vand.u32 %v5510, 4294901760
    %6032 = vmatmul.mubr.f32.gmra.mxu0 %v6031
    %v6033 = vpop.f32.mrf.mxu0
    %v6034 = vadd.f32 %v5953, %v6033
    %v6035 = vpop.f32.mrf.mxu0
    %6036 = vmatprep.mubr.f32.mxu0 0.0
    %v6037 = vand.u32 %v5513, 4294901760
    %6038 = vmatmul.mubr.f32.gmra.mxu0 %v6037
    %v6039 = vpop.f32.mrf.mxu0
    %v6040 = vadd.f32 %v5959, %v6039
    %v6041 = vpop.f32.mrf.mxu0
    %6042 = vdwg.mxu0
    %v6043 = vmax.f32 %v6034, 0.0
    %v6044 = vmax.f32 %v6040, 0.0
    %v6045 = vlaneseq
    %v6046 = vshrl.u32 %v6045, 7
    %v6047 = vsub.s32 0, %v6046
    %v6048 = vrot.slane %v128, %v6047
    %6049 = vmatprep.subr.mxu0 0.0
    %v6050 = vand.u32 %v120, 4294901760
    %6051 = vmatpush1.msra.mxu0 %v6050
    %6052 = vmatprep.subr.mxu0 0.0
    %v6053 = vand.u32 %v119, 4294901760
    %6054 = vmatpush1.msra.mxu0 %v6053
    %6055 = vmatprep.subr.mxu0 0.0
    %v6056 = vand.u32 %v118, 4294901760
    %6057 = vmatpush1.msra.mxu0 %v6056
    %6058 = vmatprep.subr.mxu0 0.0
    %v6059 = vand.u32 %v117, 4294901760
    %6060 = vmatpush1.msra.mxu0 %v6059
    %6061 = vmatprep.subr.mxu0 0.0
    %v6062 = vand.u32 %v116, 4294901760
    %6063 = vmatpush1.msra.mxu0 %v6062
    %6064 = vmatprep.subr.mxu0 0.0
    %v6065 = vand.u32 %v115, 4294901760
    %6066 = vmatpush1.msra.mxu0 %v6065
    %6067 = vmatprep.subr.mxu0 0.0
    %v6068 = vand.u32 %v114, 4294901760
    %6069 = vmatpush1.msra.mxu0 %v6068
    %6070 = vmatprep.subr.mxu0 0.0
    %v6071 = vand.u32 %v113, 4294901760
    %6072 = vmatpush1.msra.mxu0 %v6071
    %6073 = vmatprep.subr.mxu0 0.0
    %v6074 = vand.u32 %v112, 4294901760
    %6075 = vmatpush1.msra.mxu0 %v6074
    %6076 = vmatprep.subr.mxu0 0.0
    %v6077 = vand.u32 %v111, 4294901760
    %6078 = vmatpush1.msra.mxu0 %v6077
    %6079 = vmatprep.subr.mxu0 0.0
    %v6080 = vand.u32 %v110, 4294901760
    %6081 = vmatpush1.msra.mxu0 %v6080
    %6082 = vmatprep.subr.mxu0 0.0
    %v6083 = vand.u32 %v109, 4294901760
    %6084 = vmatpush1.msra.mxu0 %v6083
    %6085 = vmatprep.subr.mxu0 0.0
    %v6086 = vand.u32 %v108, 4294901760
    %6087 = vmatpush1.msra.mxu0 %v6086
    %6088 = vmatprep.subr.mxu0 0.0
    %v6089 = vand.u32 %v107, 4294901760
    %6090 = vmatpush1.msra.mxu0 %v6089
    %6091 = vmatprep.subr.mxu0 0.0
    %v6092 = vand.u32 %v106, 4294901760
    %6093 = vmatpush1.msra.mxu0 %v6092
    %6094 = vmatprep.subr.mxu0 0.0
    %v6095 = vand.u32 %v105, 4294901760
    %6096 = vmatpush1.msra.mxu0 %v6095
    %6097 = vmatprep.subr.mxu0 0.0
    %6098 = vmatpush2.msra.mxu0 0.0
    %6099 = vmatprep.subr.mxu0 0.0
    %6100 = vmatpush2.msra.mxu0 0.0
    %6101 = vmatprep.subr.mxu0 0.0
    %6102 = vmatpush2.msra.mxu0 0.0
    %6103 = vmatprep.subr.mxu0 0.0
    %6104 = vmatpush2.msra.mxu0 0.0
    %6105 = vmatprep.subr.mxu0 0.0
    %6106 = vmatpush2.msra.mxu0 0.0
    %6107 = vmatprep.subr.mxu0 0.0
    %6108 = vmatpush2.msra.mxu0 0.0
    %6109 = vmatprep.subr.mxu0 0.0
    %6110 = vmatpush2.msra.mxu0 0.0
    %6111 = vmatprep.subr.mxu0 0.0
    %6112 = vmatpush2.msra.mxu0 0.0
    %6113 = vmatprep.subr.mxu0 0.0
    %6114 = vmatpush2.msra.mxu0 0.0
    %6115 = vmatprep.subr.mxu0 0.0
    %6116 = vmatpush2.msra.mxu0 0.0
    %6117 = vmatprep.subr.mxu0 0.0
    %6118 = vmatpush2.msra.mxu0 0.0
    %6119 = vmatprep.subr.mxu0 0.0
    %6120 = vmatpush2.msra.mxu0 0.0
    %6121 = vmatprep.subr.mxu0 0.0
    %6122 = vmatpush2.msra.mxu0 0.0
    %6123 = vmatprep.subr.mxu0 0.0
    %6124 = vmatpush2.msra.mxu0 0.0
    %6125 = vmatprep.subr.mxu0 0.0
    %6126 = vmatpush2.msra.mxu0 0.0
    %6127 = vmatprep.subr.mxu0 0.0
    %6128 = vmatpush2.msra.mxu0 0.0
    %6129 = vmatprep.mubr.f32.mxu0 0.0
    %v6130 = vand.u32 %v6043, 4294901760
    %v6131 = vsub.f32 %v6043, %v6130
    %v6132 = vand.u32 %v6131, 4294901760
    %v6133 = vsub.f32 %v6131, %v6132
    %v6134 = vand.u32 %v6133, 4294901760
    %6135 = vmatmul.mubr.f32.gmra.mxu0 %v6134
    %v6136 = vpop.f32.mrf.mxu0
    %v6137 = vadd.f32 %v6048, %v6136
    %v6138 = vpop.f32.mrf.mxu0
    %6139 = vmatprep.mubr.f32.mxu0 0.0
    %v6140 = vand.u32 %v6044, 4294901760
    %v6141 = vsub.f32 %v6044, %v6140
    %v6142 = vand.u32 %v6141, 4294901760
    %v6143 = vsub.f32 %v6141, %v6142
    %v6144 = vand.u32 %v6143, 4294901760
    %6145 = vmatmul.mubr.f32.gmra.mxu0 %v6144
    %v6146 = vpop.f32.mrf.mxu0
    %v6147 = vadd.f32 %v6048, %v6146
    %v6148 = vpop.f32.mrf.mxu0
    %6149 = vdwg.mxu0
    %6150 = vmatprep.subr.mxu0 0.0
    %v6151 = vand.u32 %v120, 4294901760
    %v6152 = vsub.f32 %v120, %v6151
    %v6153 = vand.u32 %v6152, 4294901760
    %v6154 = vsub.f32 %v6152, %v6153
    %v6155 = vand.u32 %v6154, 4294901760
    %6156 = vmatpush1.msra.mxu0 %v6155
    %6157 = vmatprep.subr.mxu0 0.0
    %v6158 = vand.u32 %v119, 4294901760
    %v6159 = vsub.f32 %v119, %v6158
    %v6160 = vand.u32 %v6159, 4294901760
    %v6161 = vsub.f32 %v6159, %v6160
    %v6162 = vand.u32 %v6161, 4294901760
    %6163 = vmatpush1.msra.mxu0 %v6162
    %6164 = vmatprep.subr.mxu0 0.0
    %v6165 = vand.u32 %v118, 4294901760
    %v6166 = vsub.f32 %v118, %v6165
    %v6167 = vand.u32 %v6166, 4294901760
    %v6168 = vsub.f32 %v6166, %v6167
    %v6169 = vand.u32 %v6168, 4294901760
    %6170 = vmatpush1.msra.mxu0 %v6169
    %6171 = vmatprep.subr.mxu0 0.0
    %v6172 = vand.u32 %v117, 4294901760
    %v6173 = vsub.f32 %v117, %v6172
    %v6174 = vand.u32 %v6173, 4294901760
    %v6175 = vsub.f32 %v6173, %v6174
    %v6176 = vand.u32 %v6175, 4294901760
    %6177 = vmatpush1.msra.mxu0 %v6176
    %6178 = vmatprep.subr.mxu0 0.0
    %v6179 = vand.u32 %v116, 4294901760
    %v6180 = vsub.f32 %v116, %v6179
    %v6181 = vand.u32 %v6180, 4294901760
    %v6182 = vsub.f32 %v6180, %v6181
    %v6183 = vand.u32 %v6182, 4294901760
    %6184 = vmatpush1.msra.mxu0 %v6183
    %6185 = vmatprep.subr.mxu0 0.0
    %v6186 = vand.u32 %v115, 4294901760
    %v6187 = vsub.f32 %v115, %v6186
    %v6188 = vand.u32 %v6187, 4294901760
    %v6189 = vsub.f32 %v6187, %v6188
    %v6190 = vand.u32 %v6189, 4294901760
    %6191 = vmatpush1.msra.mxu0 %v6190
    %6192 = vmatprep.subr.mxu0 0.0
    %v6193 = vand.u32 %v114, 4294901760
    %v6194 = vsub.f32 %v114, %v6193
    %v6195 = vand.u32 %v6194, 4294901760
    %v6196 = vsub.f32 %v6194, %v6195
    %v6197 = vand.u32 %v6196, 4294901760
    %6198 = vmatpush1.msra.mxu0 %v6197
    %6199 = vmatprep.subr.mxu0 0.0
    %v6200 = vand.u32 %v113, 4294901760
    %v6201 = vsub.f32 %v113, %v6200
    %v6202 = vand.u32 %v6201, 4294901760
    %v6203 = vsub.f32 %v6201, %v6202
    %v6204 = vand.u32 %v6203, 4294901760
    %6205 = vmatpush1.msra.mxu0 %v6204
    %6206 = vmatprep.subr.mxu0 0.0
    %v6207 = vand.u32 %v112, 4294901760
    %v6208 = vsub.f32 %v112, %v6207
    %v6209 = vand.u32 %v6208, 4294901760
    %v6210 = vsub.f32 %v6208, %v6209
    %v6211 = vand.u32 %v6210, 4294901760
    %6212 = vmatpush1.msra.mxu0 %v6211
    %6213 = vmatprep.subr.mxu0 0.0
    %v6214 = vand.u32 %v111, 4294901760
    %v6215 = vsub.f32 %v111, %v6214
    %v6216 = vand.u32 %v6215, 4294901760
    %v6217 = vsub.f32 %v6215, %v6216
    %v6218 = vand.u32 %v6217, 4294901760
    %6219 = vmatpush1.msra.mxu0 %v6218
    %6220 = vmatprep.subr.mxu0 0.0
    %v6221 = vand.u32 %v110, 4294901760
    %v6222 = vsub.f32 %v110, %v6221
    %v6223 = vand.u32 %v6222, 4294901760
    %v6224 = vsub.f32 %v6222, %v6223
    %v6225 = vand.u32 %v6224, 4294901760
    %6226 = vmatpush1.msra.mxu0 %v6225
    %6227 = vmatprep.subr.mxu0 0.0
    %v6228 = vand.u32 %v109, 4294901760
    %v6229 = vsub.f32 %v109, %v6228
    %v6230 = vand.u32 %v6229, 4294901760
    %v6231 = vsub.f32 %v6229, %v6230
    %v6232 = vand.u32 %v6231, 4294901760
    %6233 = vmatpush1.msra.mxu0 %v6232
    %6234 = vmatprep.subr.mxu0 0.0
    %v6235 = vand.u32 %v108, 4294901760
    %v6236 = vsub.f32 %v108, %v6235
    %v6237 = vand.u32 %v6236, 4294901760
    %v6238 = vsub.f32 %v6236, %v6237
    %v6239 = vand.u32 %v6238, 4294901760
    %6240 = vmatpush1.msra.mxu0 %v6239
    %6241 = vmatprep.subr.mxu0 0.0
    %v6242 = vand.u32 %v107, 4294901760
    %v6243 = vsub.f32 %v107, %v6242
    %v6244 = vand.u32 %v6243, 4294901760
    %v6245 = vsub.f32 %v6243, %v6244
    %v6246 = vand.u32 %v6245, 4294901760
    %6247 = vmatpush1.msra.mxu0 %v6246
    %6248 = vmatprep.subr.mxu0 0.0
    %v6249 = vand.u32 %v106, 4294901760
    %v6250 = vsub.f32 %v106, %v6249
    %v6251 = vand.u32 %v6250, 4294901760
    %v6252 = vsub.f32 %v6250, %v6251
    %v6253 = vand.u32 %v6252, 4294901760
    %6254 = vmatpush1.msra.mxu0 %v6253
    %6255 = vmatprep.subr.mxu0 0.0
    %v6256 = vand.u32 %v105, 4294901760
    %v6257 = vsub.f32 %v105, %v6256
    %v6258 = vand.u32 %v6257, 4294901760
    %v6259 = vsub.f32 %v6257, %v6258
    %v6260 = vand.u32 %v6259, 4294901760
    %6261 = vmatpush1.msra.mxu0 %v6260
    %6262 = vmatprep.subr.mxu0 0.0
    %6263 = vmatpush2.msra.mxu0 0.0
    %6264 = vmatprep.subr.mxu0 0.0
    %6265 = vmatpush2.msra.mxu0 0.0
    %6266 = vmatprep.subr.mxu0 0.0
    %6267 = vmatpush2.msra.mxu0 0.0
    %6268 = vmatprep.subr.mxu0 0.0
    %6269 = vmatpush2.msra.mxu0 0.0
    %6270 = vmatprep.subr.mxu0 0.0
    %6271 = vmatpush2.msra.mxu0 0.0
    %6272 = vmatprep.subr.mxu0 0.0
    %6273 = vmatpush2.msra.mxu0 0.0
    %6274 = vmatprep.subr.mxu0 0.0
    %6275 = vmatpush2.msra.mxu0 0.0
    %6276 = vmatprep.subr.mxu0 0.0
    %6277 = vmatpush2.msra.mxu0 0.0
    %6278 = vmatprep.subr.mxu0 0.0
    %6279 = vmatpush2.msra.mxu0 0.0
    %6280 = vmatprep.subr.mxu0 0.0
    %6281 = vmatpush2.msra.mxu0 0.0
    %6282 = vmatprep.subr.mxu0 0.0
    %6283 = vmatpush2.msra.mxu0 0.0
    %6284 = vmatprep.subr.mxu0 0.0
    %6285 = vmatpush2.msra.mxu0 0.0
    %6286 = vmatprep.subr.mxu0 0.0
    %6287 = vmatpush2.msra.mxu0 0.0
    %6288 = vmatprep.subr.mxu0 0.0
    %6289 = vmatpush2.msra.mxu0 0.0
    %6290 = vmatprep.subr.mxu0 0.0
    %6291 = vmatpush2.msra.mxu0 0.0
    %6292 = vmatprep.subr.mxu0 0.0
    %6293 = vmatpush2.msra.mxu0 0.0
    %6294 = vmatprep.mubr.f32.mxu0 0.0
    %v6295 = vand.u32 %v6043, 4294901760
    %6296 = vmatmul.mubr.f32.gmra.mxu0 %v6295
    %v6297 = vpop.f32.mrf.mxu0
    %v6298 = vadd.f32 %v6137, %v6297
    %v6299 = vpop.f32.mrf.mxu0
    %6300 = vmatprep.mubr.f32.mxu0 0.0
    %v6301 = vand.u32 %v6044, 4294901760
    %6302 = vmatmul.mubr.f32.gmra.mxu0 %v6301
    %v6303 = vpop.f32.mrf.mxu0
    %v6304 = vadd.f32 %v6147, %v6303
    %v6305 = vpop.f32.mrf.mxu0
    %6306 = vdwg.mxu0
    %6307 = vmatprep.subr.mxu0 0.0
    %v6308 = vand.u32 %v120, 4294901760
    %v6309 = vsub.f32 %v120, %v6308
    %6310 = vmatpush1.msra.mxu0 %v6309
    %6311 = vmatprep.subr.mxu0 0.0
    %v6312 = vand.u32 %v119, 4294901760
    %v6313 = vsub.f32 %v119, %v6312
    %6314 = vmatpush1.msra.mxu0 %v6313
    %6315 = vmatprep.subr.mxu0 0.0
    %v6316 = vand.u32 %v118, 4294901760
    %v6317 = vsub.f32 %v118, %v6316
    %6318 = vmatpush1.msra.mxu0 %v6317
    %6319 = vmatprep.subr.mxu0 0.0
    %v6320 = vand.u32 %v117, 4294901760
    %v6321 = vsub.f32 %v117, %v6320
    %6322 = vmatpush1.msra.mxu0 %v6321
    %6323 = vmatprep.subr.mxu0 0.0
    %v6324 = vand.u32 %v116, 4294901760
    %v6325 = vsub.f32 %v116, %v6324
    %6326 = vmatpush1.msra.mxu0 %v6325
    %6327 = vmatprep.subr.mxu0 0.0
    %v6328 = vand.u32 %v115, 4294901760
    %v6329 = vsub.f32 %v115, %v6328
    %6330 = vmatpush1.msra.mxu0 %v6329
    %6331 = vmatprep.subr.mxu0 0.0
    %v6332 = vand.u32 %v114, 4294901760
    %v6333 = vsub.f32 %v114, %v6332
    %6334 = vmatpush1.msra.mxu0 %v6333
    %6335 = vmatprep.subr.mxu0 0.0
    %v6336 = vand.u32 %v113, 4294901760
    %v6337 = vsub.f32 %v113, %v6336
    %6338 = vmatpush1.msra.mxu0 %v6337
    %6339 = vmatprep.subr.mxu0 0.0
    %v6340 = vand.u32 %v112, 4294901760
    %v6341 = vsub.f32 %v112, %v6340
    %6342 = vmatpush1.msra.mxu0 %v6341
    %6343 = vmatprep.subr.mxu0 0.0
    %v6344 = vand.u32 %v111, 4294901760
    %v6345 = vsub.f32 %v111, %v6344
    %6346 = vmatpush1.msra.mxu0 %v6345
    %6347 = vmatprep.subr.mxu0 0.0
    %v6348 = vand.u32 %v110, 4294901760
    %v6349 = vsub.f32 %v110, %v6348
    %6350 = vmatpush1.msra.mxu0 %v6349
    %6351 = vmatprep.subr.mxu0 0.0
    %v6352 = vand.u32 %v109, 4294901760
    %v6353 = vsub.f32 %v109, %v6352
    %6354 = vmatpush1.msra.mxu0 %v6353
    %6355 = vmatprep.subr.mxu0 0.0
    %v6356 = vand.u32 %v108, 4294901760
    %v6357 = vsub.f32 %v108, %v6356
    %6358 = vmatpush1.msra.mxu0 %v6357
    %6359 = vmatprep.subr.mxu0 0.0
    %v6360 = vand.u32 %v107, 4294901760
    %v6361 = vsub.f32 %v107, %v6360
    %6362 = vmatpush1.msra.mxu0 %v6361
    %6363 = vmatprep.subr.mxu0 0.0
    %v6364 = vand.u32 %v106, 4294901760
    %v6365 = vsub.f32 %v106, %v6364
    %6366 = vmatpush1.msra.mxu0 %v6365
    %6367 = vmatprep.subr.mxu0 0.0
    %v6368 = vand.u32 %v105, 4294901760
    %v6369 = vsub.f32 %v105, %v6368
    %6370 = vmatpush1.msra.mxu0 %v6369
    %6371 = vmatprep.subr.mxu0 0.0
    %6372 = vmatpush2.msra.mxu0 0.0
    %6373 = vmatprep.subr.mxu0 0.0
    %6374 = vmatpush2.msra.mxu0 0.0
    %6375 = vmatprep.subr.mxu0 0.0
    %6376 = vmatpush2.msra.mxu0 0.0
    %6377 = vmatprep.subr.mxu0 0.0
    %6378 = vmatpush2.msra.mxu0 0.0
    %6379 = vmatprep.subr.mxu0 0.0
    %6380 = vmatpush2.msra.mxu0 0.0
    %6381 = vmatprep.subr.mxu0 0.0
    %6382 = vmatpush2.msra.mxu0 0.0
    %6383 = vmatprep.subr.mxu0 0.0
    %6384 = vmatpush2.msra.mxu0 0.0
    %6385 = vmatprep.subr.mxu0 0.0
    %6386 = vmatpush2.msra.mxu0 0.0
    %6387 = vmatprep.subr.mxu0 0.0
    %6388 = vmatpush2.msra.mxu0 0.0
    %6389 = vmatprep.subr.mxu0 0.0
    %6390 = vmatpush2.msra.mxu0 0.0
    %6391 = vmatprep.subr.mxu0 0.0
    %6392 = vmatpush2.msra.mxu0 0.0
    %6393 = vmatprep.subr.mxu0 0.0
    %6394 = vmatpush2.msra.mxu0 0.0
    %6395 = vmatprep.subr.mxu0 0.0
    %6396 = vmatpush2.msra.mxu0 0.0
    %6397 = vmatprep.subr.mxu0 0.0
    %6398 = vmatpush2.msra.mxu0 0.0
    %6399 = vmatprep.subr.mxu0 0.0
    %6400 = vmatpush2.msra.mxu0 0.0
    %6401 = vmatprep.subr.mxu0 0.0
    %6402 = vmatpush2.msra.mxu0 0.0
    %6403 = vmatprep.mubr.f32.mxu0 0.0
    %v6404 = vand.u32 %v6043, 4294901760
    %v6405 = vsub.f32 %v6043, %v6404
    %6406 = vmatmul.mubr.f32.gmra.mxu0 %v6405
    %v6407 = vpop.f32.mrf.mxu0
    %v6408 = vadd.f32 %v6298, %v6407
    %v6409 = vpop.f32.mrf.mxu0
    %6410 = vmatprep.mubr.f32.mxu0 0.0
    %v6411 = vand.u32 %v6044, 4294901760
    %v6412 = vsub.f32 %v6044, %v6411
    %6413 = vmatmul.mubr.f32.gmra.mxu0 %v6412
    %v6414 = vpop.f32.mrf.mxu0
    %v6415 = vadd.f32 %v6304, %v6414
    %v6416 = vpop.f32.mrf.mxu0
    %6417 = vdwg.mxu0
    %6418 = vmatprep.subr.mxu0 0.0
    %v6419 = vand.u32 %v120, 4294901760
    %6420 = vmatpush1.msra.mxu0 %v6419
    %6421 = vmatprep.subr.mxu0 0.0
    %v6422 = vand.u32 %v119, 4294901760
    %6423 = vmatpush1.msra.mxu0 %v6422
    %6424 = vmatprep.subr.mxu0 0.0
    %v6425 = vand.u32 %v118, 4294901760
    %6426 = vmatpush1.msra.mxu0 %v6425
    %6427 = vmatprep.subr.mxu0 0.0
    %v6428 = vand.u32 %v117, 4294901760
    %6429 = vmatpush1.msra.mxu0 %v6428
    %6430 = vmatprep.subr.mxu0 0.0
    %v6431 = vand.u32 %v116, 4294901760
    %6432 = vmatpush1.msra.mxu0 %v6431
    %6433 = vmatprep.subr.mxu0 0.0
    %v6434 = vand.u32 %v115, 4294901760
    %6435 = vmatpush1.msra.mxu0 %v6434
    %6436 = vmatprep.subr.mxu0 0.0
    %v6437 = vand.u32 %v114, 4294901760
    %6438 = vmatpush1.msra.mxu0 %v6437
    %6439 = vmatprep.subr.mxu0 0.0
    %v6440 = vand.u32 %v113, 4294901760
    %6441 = vmatpush1.msra.mxu0 %v6440
    %6442 = vmatprep.subr.mxu0 0.0
    %v6443 = vand.u32 %v112, 4294901760
    %6444 = vmatpush1.msra.mxu0 %v6443
    %6445 = vmatprep.subr.mxu0 0.0
    %v6446 = vand.u32 %v111, 4294901760
    %6447 = vmatpush1.msra.mxu0 %v6446
    %6448 = vmatprep.subr.mxu0 0.0
    %v6449 = vand.u32 %v110, 4294901760
    %6450 = vmatpush1.msra.mxu0 %v6449
    %6451 = vmatprep.subr.mxu0 0.0
    %v6452 = vand.u32 %v109, 4294901760
    %6453 = vmatpush1.msra.mxu0 %v6452
    %6454 = vmatprep.subr.mxu0 0.0
    %v6455 = vand.u32 %v108, 4294901760
    %6456 = vmatpush1.msra.mxu0 %v6455
    %6457 = vmatprep.subr.mxu0 0.0
    %v6458 = vand.u32 %v107, 4294901760
    %6459 = vmatpush1.msra.mxu0 %v6458
    %6460 = vmatprep.subr.mxu0 0.0
    %v6461 = vand.u32 %v106, 4294901760
    %6462 = vmatpush1.msra.mxu0 %v6461
    %6463 = vmatprep.subr.mxu0 0.0
    %v6464 = vand.u32 %v105, 4294901760
    %6465 = vmatpush1.msra.mxu0 %v6464
    %6466 = vmatprep.subr.mxu0 0.0
    %6467 = vmatpush2.msra.mxu0 0.0
    %6468 = vmatprep.subr.mxu0 0.0
    %6469 = vmatpush2.msra.mxu0 0.0
    %6470 = vmatprep.subr.mxu0 0.0
    %6471 = vmatpush2.msra.mxu0 0.0
    %6472 = vmatprep.subr.mxu0 0.0
    %6473 = vmatpush2.msra.mxu0 0.0
    %6474 = vmatprep.subr.mxu0 0.0
    %6475 = vmatpush2.msra.mxu0 0.0
    %6476 = vmatprep.subr.mxu0 0.0
    %6477 = vmatpush2.msra.mxu0 0.0
    %6478 = vmatprep.subr.mxu0 0.0
    %6479 = vmatpush2.msra.mxu0 0.0
    %6480 = vmatprep.subr.mxu0 0.0
    %6481 = vmatpush2.msra.mxu0 0.0
    %6482 = vmatprep.subr.mxu0 0.0
    %6483 = vmatpush2.msra.mxu0 0.0
    %6484 = vmatprep.subr.mxu0 0.0
    %6485 = vmatpush2.msra.mxu0 0.0
    %6486 = vmatprep.subr.mxu0 0.0
    %6487 = vmatpush2.msra.mxu0 0.0
    %6488 = vmatprep.subr.mxu0 0.0
    %6489 = vmatpush2.msra.mxu0 0.0
    %6490 = vmatprep.subr.mxu0 0.0
    %6491 = vmatpush2.msra.mxu0 0.0
    %6492 = vmatprep.subr.mxu0 0.0
    %6493 = vmatpush2.msra.mxu0 0.0
    %6494 = vmatprep.subr.mxu0 0.0
    %6495 = vmatpush2.msra.mxu0 0.0
    %6496 = vmatprep.subr.mxu0 0.0
    %6497 = vmatpush2.msra.mxu0 0.0
    %6498 = vmatprep.mubr.f32.mxu0 0.0
    %v6499 = vand.u32 %v6043, 4294901760
    %v6500 = vsub.f32 %v6043, %v6499
    %v6501 = vand.u32 %v6500, 4294901760
    %6502 = vmatmul.mubr.f32.gmra.mxu0 %v6501
    %v6503 = vpop.f32.mrf.mxu0
    %v6504 = vadd.f32 %v6408, %v6503
    %v6505 = vpop.f32.mrf.mxu0
    %6506 = vmatprep.mubr.f32.mxu0 0.0
    %v6507 = vand.u32 %v6044, 4294901760
    %v6508 = vsub.f32 %v6044, %v6507
    %v6509 = vand.u32 %v6508, 4294901760
    %6510 = vmatmul.mubr.f32.gmra.mxu0 %v6509
    %v6511 = vpop.f32.mrf.mxu0
    %v6512 = vadd.f32 %v6415, %v6511
    %v6513 = vpop.f32.mrf.mxu0
    %6514 = vdwg.mxu0
    %6515 = vmatprep.subr.mxu0 0.0
    %v6516 = vand.u32 %v120, 4294901760
    %v6517 = vsub.f32 %v120, %v6516
    %v6518 = vand.u32 %v6517, 4294901760
    %6519 = vmatpush1.msra.mxu0 %v6518
    %6520 = vmatprep.subr.mxu0 0.0
    %v6521 = vand.u32 %v119, 4294901760
    %v6522 = vsub.f32 %v119, %v6521
    %v6523 = vand.u32 %v6522, 4294901760
    %6524 = vmatpush1.msra.mxu0 %v6523
    %6525 = vmatprep.subr.mxu0 0.0
    %v6526 = vand.u32 %v118, 4294901760
    %v6527 = vsub.f32 %v118, %v6526
    %v6528 = vand.u32 %v6527, 4294901760
    %6529 = vmatpush1.msra.mxu0 %v6528
    %6530 = vmatprep.subr.mxu0 0.0
    %v6531 = vand.u32 %v117, 4294901760
    %v6532 = vsub.f32 %v117, %v6531
    %v6533 = vand.u32 %v6532, 4294901760
    %6534 = vmatpush1.msra.mxu0 %v6533
    %6535 = vmatprep.subr.mxu0 0.0
    %v6536 = vand.u32 %v116, 4294901760
    %v6537 = vsub.f32 %v116, %v6536
    %v6538 = vand.u32 %v6537, 4294901760
    %6539 = vmatpush1.msra.mxu0 %v6538
    %6540 = vmatprep.subr.mxu0 0.0
    %v6541 = vand.u32 %v115, 4294901760
    %v6542 = vsub.f32 %v115, %v6541
    %v6543 = vand.u32 %v6542, 4294901760
    %6544 = vmatpush1.msra.mxu0 %v6543
    %6545 = vmatprep.subr.mxu0 0.0
    %v6546 = vand.u32 %v114, 4294901760
    %v6547 = vsub.f32 %v114, %v6546
    %v6548 = vand.u32 %v6547, 4294901760
    %6549 = vmatpush1.msra.mxu0 %v6548
    %6550 = vmatprep.subr.mxu0 0.0
    %v6551 = vand.u32 %v113, 4294901760
    %v6552 = vsub.f32 %v113, %v6551
    %v6553 = vand.u32 %v6552, 4294901760
    %6554 = vmatpush1.msra.mxu0 %v6553
    %6555 = vmatprep.subr.mxu0 0.0
    %v6556 = vand.u32 %v112, 4294901760
    %v6557 = vsub.f32 %v112, %v6556
    %v6558 = vand.u32 %v6557, 4294901760
    %6559 = vmatpush1.msra.mxu0 %v6558
    %6560 = vmatprep.subr.mxu0 0.0
    %v6561 = vand.u32 %v111, 4294901760
    %v6562 = vsub.f32 %v111, %v6561
    %v6563 = vand.u32 %v6562, 4294901760
    %6564 = vmatpush1.msra.mxu0 %v6563
    %6565 = vmatprep.subr.mxu0 0.0
    %v6566 = vand.u32 %v110, 4294901760
    %v6567 = vsub.f32 %v110, %v6566
    %v6568 = vand.u32 %v6567, 4294901760
    %6569 = vmatpush1.msra.mxu0 %v6568
    %6570 = vmatprep.subr.mxu0 0.0
    %v6571 = vand.u32 %v109, 4294901760
    %v6572 = vsub.f32 %v109, %v6571
    %v6573 = vand.u32 %v6572, 4294901760
    %6574 = vmatpush1.msra.mxu0 %v6573
    %6575 = vmatprep.subr.mxu0 0.0
    %v6576 = vand.u32 %v108, 4294901760
    %v6577 = vsub.f32 %v108, %v6576
    %v6578 = vand.u32 %v6577, 4294901760
    %6579 = vmatpush1.msra.mxu0 %v6578
    %6580 = vmatprep.subr.mxu0 0.0
    %v6581 = vand.u32 %v107, 4294901760
    %v6582 = vsub.f32 %v107, %v6581
    %v6583 = vand.u32 %v6582, 4294901760
    %6584 = vmatpush1.msra.mxu0 %v6583
    %6585 = vmatprep.subr.mxu0 0.0
    %v6586 = vand.u32 %v106, 4294901760
    %v6587 = vsub.f32 %v106, %v6586
    %v6588 = vand.u32 %v6587, 4294901760
    %6589 = vmatpush1.msra.mxu0 %v6588
    %6590 = vmatprep.subr.mxu0 0.0
    %v6591 = vand.u32 %v105, 4294901760
    %v6592 = vsub.f32 %v105, %v6591
    %v6593 = vand.u32 %v6592, 4294901760
    %6594 = vmatpush1.msra.mxu0 %v6593
    %6595 = vmatprep.subr.mxu0 0.0
    %6596 = vmatpush2.msra.mxu0 0.0
    %6597 = vmatprep.subr.mxu0 0.0
    %6598 = vmatpush2.msra.mxu0 0.0
    %6599 = vmatprep.subr.mxu0 0.0
    %6600 = vmatpush2.msra.mxu0 0.0
    %6601 = vmatprep.subr.mxu0 0.0
    %6602 = vmatpush2.msra.mxu0 0.0
    %6603 = vmatprep.subr.mxu0 0.0
    %6604 = vmatpush2.msra.mxu0 0.0
    %6605 = vmatprep.subr.mxu0 0.0
    %6606 = vmatpush2.msra.mxu0 0.0
    %6607 = vmatprep.subr.mxu0 0.0
    %6608 = vmatpush2.msra.mxu0 0.0
    %6609 = vmatprep.subr.mxu0 0.0
    %6610 = vmatpush2.msra.mxu0 0.0
    %6611 = vmatprep.subr.mxu0 0.0
    %6612 = vmatpush2.msra.mxu0 0.0
    %6613 = vmatprep.subr.mxu0 0.0
    %6614 = vmatpush2.msra.mxu0 0.0
    %6615 = vmatprep.subr.mxu0 0.0
    %6616 = vmatpush2.msra.mxu0 0.0
    %6617 = vmatprep.subr.mxu0 0.0
    %6618 = vmatpush2.msra.mxu0 0.0
    %6619 = vmatprep.subr.mxu0 0.0
    %6620 = vmatpush2.msra.mxu0 0.0
    %6621 = vmatprep.subr.mxu0 0.0
    %6622 = vmatpush2.msra.mxu0 0.0
    %6623 = vmatprep.subr.mxu0 0.0
    %6624 = vmatpush2.msra.mxu0 0.0
    %6625 = vmatprep.subr.mxu0 0.0
    %6626 = vmatpush2.msra.mxu0 0.0
    %6627 = vmatprep.mubr.f32.mxu0 0.0
    %v6628 = vand.u32 %v6043, 4294901760
    %6629 = vmatmul.mubr.f32.gmra.mxu0 %v6628
    %v6630 = vpop.f32.mrf.mxu0
    %v6631 = vadd.f32 %v6504, %v6630
    %v6632 = vpop.f32.mrf.mxu0
    %6633 = vmatprep.mubr.f32.mxu0 0.0
    %v6634 = vand.u32 %v6044, 4294901760
    %6635 = vmatmul.mubr.f32.gmra.mxu0 %v6634
    %v6636 = vpop.f32.mrf.mxu0
    %v6637 = vadd.f32 %v6512, %v6636
    %v6638 = vpop.f32.mrf.mxu0
    %6639 = vdwg.mxu0
    %6640 = vmatprep.subr.mxu0 0.0
    %v6641 = vand.u32 %v120, 4294901760
    %6642 = vmatpush1.msra.mxu0 %v6641
    %6643 = vmatprep.subr.mxu0 0.0
    %v6644 = vand.u32 %v119, 4294901760
    %6645 = vmatpush1.msra.mxu0 %v6644
    %6646 = vmatprep.subr.mxu0 0.0
    %v6647 = vand.u32 %v118, 4294901760
    %6648 = vmatpush1.msra.mxu0 %v6647
    %6649 = vmatprep.subr.mxu0 0.0
    %v6650 = vand.u32 %v117, 4294901760
    %6651 = vmatpush1.msra.mxu0 %v6650
    %6652 = vmatprep.subr.mxu0 0.0
    %v6653 = vand.u32 %v116, 4294901760
    %6654 = vmatpush1.msra.mxu0 %v6653
    %6655 = vmatprep.subr.mxu0 0.0
    %v6656 = vand.u32 %v115, 4294901760
    %6657 = vmatpush1.msra.mxu0 %v6656
    %6658 = vmatprep.subr.mxu0 0.0
    %v6659 = vand.u32 %v114, 4294901760
    %6660 = vmatpush1.msra.mxu0 %v6659
    %6661 = vmatprep.subr.mxu0 0.0
    %v6662 = vand.u32 %v113, 4294901760
    %6663 = vmatpush1.msra.mxu0 %v6662
    %6664 = vmatprep.subr.mxu0 0.0
    %v6665 = vand.u32 %v112, 4294901760
    %6666 = vmatpush1.msra.mxu0 %v6665
    %6667 = vmatprep.subr.mxu0 0.0
    %v6668 = vand.u32 %v111, 4294901760
    %6669 = vmatpush1.msra.mxu0 %v6668
    %6670 = vmatprep.subr.mxu0 0.0
    %v6671 = vand.u32 %v110, 4294901760
    %6672 = vmatpush1.msra.mxu0 %v6671
    %6673 = vmatprep.subr.mxu0 0.0
    %v6674 = vand.u32 %v109, 4294901760
    %6675 = vmatpush1.msra.mxu0 %v6674
    %6676 = vmatprep.subr.mxu0 0.0
    %v6677 = vand.u32 %v108, 4294901760
    %6678 = vmatpush1.msra.mxu0 %v6677
    %6679 = vmatprep.subr.mxu0 0.0
    %v6680 = vand.u32 %v107, 4294901760
    %6681 = vmatpush1.msra.mxu0 %v6680
    %6682 = vmatprep.subr.mxu0 0.0
    %v6683 = vand.u32 %v106, 4294901760
    %6684 = vmatpush1.msra.mxu0 %v6683
    %6685 = vmatprep.subr.mxu0 0.0
    %v6686 = vand.u32 %v105, 4294901760
    %6687 = vmatpush1.msra.mxu0 %v6686
    %6688 = vmatprep.subr.mxu0 0.0
    %6689 = vmatpush2.msra.mxu0 0.0
    %6690 = vmatprep.subr.mxu0 0.0
    %6691 = vmatpush2.msra.mxu0 0.0
    %6692 = vmatprep.subr.mxu0 0.0
    %6693 = vmatpush2.msra.mxu0 0.0
    %6694 = vmatprep.subr.mxu0 0.0
    %6695 = vmatpush2.msra.mxu0 0.0
    %6696 = vmatprep.subr.mxu0 0.0
    %6697 = vmatpush2.msra.mxu0 0.0
    %6698 = vmatprep.subr.mxu0 0.0
    %6699 = vmatpush2.msra.mxu0 0.0
    %6700 = vmatprep.subr.mxu0 0.0
    %6701 = vmatpush2.msra.mxu0 0.0
    %6702 = vmatprep.subr.mxu0 0.0
    %6703 = vmatpush2.msra.mxu0 0.0
    %6704 = vmatprep.subr.mxu0 0.0
    %6705 = vmatpush2.msra.mxu0 0.0
    %6706 = vmatprep.subr.mxu0 0.0
    %6707 = vmatpush2.msra.mxu0 0.0
    %6708 = vmatprep.subr.mxu0 0.0
    %6709 = vmatpush2.msra.mxu0 0.0
    %6710 = vmatprep.subr.mxu0 0.0
    %6711 = vmatpush2.msra.mxu0 0.0
    %6712 = vmatprep.subr.mxu0 0.0
    %6713 = vmatpush2.msra.mxu0 0.0
    %6714 = vmatprep.subr.mxu0 0.0
    %6715 = vmatpush2.msra.mxu0 0.0
    %6716 = vmatprep.subr.mxu0 0.0
    %6717 = vmatpush2.msra.mxu0 0.0
    %6718 = vmatprep.subr.mxu0 0.0
    %6719 = vmatpush2.msra.mxu0 0.0
    %6720 = vmatprep.mubr.f32.mxu0 0.0
    %v6721 = vand.u32 %v6043, 4294901760
    %6722 = vmatmul.mubr.f32.gmra.mxu0 %v6721
    %v6723 = vpop.f32.mrf.mxu0
    %v6724 = vadd.f32 %v6631, %v6723
    %v6725 = vpop.f32.mrf.mxu0
    %6726 = vmatprep.mubr.f32.mxu0 0.0
    %v6727 = vand.u32 %v6044, 4294901760
    %6728 = vmatmul.mubr.f32.gmra.mxu0 %v6727
    %v6729 = vpop.f32.mrf.mxu0
    %v6730 = vadd.f32 %v6637, %v6729
    %v6731 = vpop.f32.mrf.mxu0
    %6732 = vdwg.mxu0
    %v6733 = vadd.f32 %v5465, %v6724
    %v6734 = vadd.f32 %v5466, %v6730
    %6735 = vst.msk [vmem:[#allocation11] sm:$0xff] %vm129, %v6733
    %6736 = vst.msk [vmem:[#allocation11 + $0x8] sm:$0xff] %vm129, %v6734
    // Predicated region
    $region42: #{tpu_custom_call.1} parent=1 // pred_check
      _
    $region43: #{tpu_custom_call.1} parent=1 // pred_check_branch
      %6738 = sbr.rel (0) target = $region45
    $region44: #{tpu_custom_call.1} parent=1 // pred_region
      %s6740 = ssub.s32 256, 256
      %6741 = vsyncadd [#allocation4], %s6740
      %s6742 = sshll.u32 [#allocation11], 4
      %s6743 = int_to_ptr.vmem [resolvable:$true] %s6742
      %6748 = dma.vmem_to_hbm [thread:$0]  %s6743, 256, %s5, [#allocation4], 128, 128, 8
    $region45: #{tpu_custom_call.1} parent=1 // pred_fallthru
      _
    // Predicated region
    $region46: #{tpu_custom_call.1} parent=1 // pred_check
      _
    $region47: #{tpu_custom_call.1} parent=1 // pred_check_branch
      %6750 = sbr.rel (0) target = $region49
    $region48: #{tpu_custom_call.1} parent=1 // pred_region
      %6751 = dma.done [#allocation4], 256
    $region49: #{tpu_custom_call.1} parent=1 // pred_fallthru
      _
    %6752 = vsyncpa [#allocation3], 1
    %6753 = vsyncpa [#allocation6], 1
    %6754 = vsyncpa [#allocation9], 1
    %6755 = vsyncpa [#allocation4], 1

</llo_original>
